<compile_context>
chip_gen: v7x
topology: tpu7x:2x2x1
jax: 0.10.0
libtpu: 0.0.40
codegen_flags: <defaults>
</compile_context>

<pallas_src>
import functools

import jax
import jax.numpy as jnp
from jax.experimental import pallas as pl
from jax.experimental.pallas import tpu as pltpu

N_MELS = 128                 # torchaudio MelSpectrogram default
MAX_ROW_TILE = 512           # frame-axis tile (multiple of 16 for bf16 packing)
MEL_EPS = 1e-5
LOG_MEAN = -4.0
INV_LOG_STD = 1.0 / 4.0
SC_EPS = 1e-8
FRAME_DTYPE = jnp.bfloat16   # frames at rest / DMA in bf16 (MXU-native)
BASIS_DTYPE = jnp.bfloat16   # cos/sin bases in bf16 (MXU-native, halves residency)
VMEM_LIMIT_BYTES = 48 * 1024 * 1024


def _round_up(x, m):
    return (x + m - 1) // m * m


# --------------------------------------------------------------------------- consts

def _padded_hann(n_fft, win_length):
    """torch.hann_window(win_length) (periodic) zero-padded (centred) to n_fft."""
    n = jnp.arange(win_length, dtype=jnp.float32)
    win = 0.5 - 0.5 * jnp.cos(2.0 * jnp.pi * n / win_length)
    lpad = (n_fft - win_length) // 2
    return jnp.zeros((n_fft,), jnp.float32).at[lpad:lpad + win_length].set(win)


def _windowed_dft_matrices(n_fft, win, nf_pad, dtype=BASIS_DTYPE):
    """Window-folded real-DFT bases, zero-padded on the freq axis to nf_pad."""
    n_freq = n_fft // 2 + 1
    k = jnp.arange(n_fft, dtype=jnp.int32)[:, None]
    f = jnp.arange(nf_pad, dtype=jnp.int32)[None, :]
    # exact modular reduction keeps cos/sin accurate at large k*f in float32
    ang = (2.0 * jnp.pi / n_fft) * ((k * f) % n_fft).astype(jnp.float32)
    col = (f < n_freq).astype(jnp.float32)
    cw = (win[:, None] * jnp.cos(ang) * col).astype(dtype)
    sw = (-win[:, None] * jnp.sin(ang) * col).astype(dtype)
    return cw, sw


def _mel_filterbank(n_fft, nf_pad, sample_rate, n_mels=N_MELS):
    """torchaudio.functional.melscale_fbanks: HTK scale, norm=None, f_min=0, f_max=sr/2."""
    n_freq = n_fft // 2 + 1
    all_freqs = jnp.linspace(0.0, sample_rate / 2.0, n_freq)

    def hz_to_mel(f):
        return 2595.0 * jnp.log10(1.0 + f / 700.0)

    m_pts = jnp.linspace(hz_to_mel(0.0), hz_to_mel(sample_rate / 2.0), n_mels + 2)
    f_pts = 700.0 * (10.0 ** (m_pts / 2595.0) - 1.0)
    f_diff = f_pts[1:] - f_pts[:-1]                     # (n_mels + 1,)
    slopes = f_pts[None, :] - all_freqs[:, None]        # (n_freq, n_mels + 2)
    down = -slopes[:, :-2] / f_diff[:-1]
    up = slopes[:, 2:] / f_diff[1:]
    fb = jnp.maximum(0.0, jnp.minimum(down, up))        # (n_freq, n_mels)
    return jnp.zeros((nf_pad, n_mels), jnp.float32).at[:n_freq].set(fb)


def _frame_signal(x, n_fft, hop):
    """(B, L) -> (B * n_frames, n_fft) frames; torch.stft center=True reflect padding."""
    # TODO(synk): build frames in-kernel with overlapping manual DMAs (pl.ANY + pl.ds)
    # to avoid the ~n_fft/hop-fold duplication of the waveform in HBM at long lengths.
    B, L = x.shape
    pad = n_fft // 2
    xp = jnp.pad(x, ((0, 0), (pad, pad)), mode="reflect")
    n_frames = 1 + L // hop
    idx = (hop * jnp.arange(n_frames, dtype=jnp.int32)[:, None]
           + jnp.arange(n_fft, dtype=jnp.int32)[None, :])
    return xp[:, idx].reshape(B * n_frames, n_fft)


# --------------------------------------------------------------------------- kernel

def _mel_sc_kernel(fx_ref, fy_ref, cw_ref, sw_ref, fb_ref,
                   sum_d_ref, sum_y_ref, *, row_tile, n_valid_rows):
    """Grid = (row_tiles,).  Bases are whole-array VMEM-resident (constant index_map).

    Per step: full-width bf16 DFT of one row tile of frames for both signals on the
    MXU, f32 power -> mel -> log-mel normalisation, then masked row-sums of |y - x|
    and |y| written as this tile's (1, 1, 128) lane-dense partial outputs (cross-lane
    and cross-tile reduction is deferred to the host wrapper, keeping the grid axis
    fully parallel for the v7x megacore).
    """
    i = pl.program_id(0)

    cw = cw_ref[...]          # (n_fft, nf_pad) bf16, resident
    sw = sw_ref[...]
    fb = fb_ref[...]          # (nf_pad, n_mels) f32, resident

    def logmel(frames):       # frames: (row_tile, n_fft) bf16, fed straight to MXU
        re = jnp.dot(frames, cw, preferred_element_type=jnp.float32)
        im = jnp.dot(frames, sw, preferred_element_type=jnp.float32)
        mel = jnp.dot(re * re + im * im, fb, preferred_element_type=jnp.float32)
        return (jnp.log(mel + MEL_EPS) - LOG_MEAN) * INV_LOG_STD

    xm = logmel(fx_ref[...])
    ym = logmel(fy_ref[...])

    row = i * row_tile + jax.lax.broadcasted_iota(jnp.int32, (row_tile, 1), 0)
    valid = row < n_valid_rows                          # mask zero-padded frames
    d = jnp.sum(jnp.where(valid, jnp.abs(ym - xm), 0.0), axis=0, keepdims=True)
    yv = jnp.sum(jnp.where(valid, jnp.abs(ym), 0.0), axis=0, keepdims=True)
    sum_d_ref[...] = d[None]                            # (1, 1, n_mels) partial
    sum_y_ref[...] = yv[None]


def _spectral_convergence_pallas(fx, fy, cw, sw, fb):
    """fx, fy: (R, n_fft) un-windowed bf16 frames.  Returns the scalar SC loss."""
    R, n_fft = fx.shape
    nf_pad, n_mels = fb.shape

    row_tile = min(MAX_ROW_TILE, _round_up(R, 16))      # 16-aligned for bf16 tiles
    r_pad = _round_up(R, row_tile)
    if r_pad != R:
        fx = jnp.pad(fx, ((0, r_pad - R), (0, 0)))
        fy = jnp.pad(fy, ((0, r_pad - R), (0, 0)))
    n_row_tiles = r_pad // row_tile

    kernel = functools.partial(_mel_sc_kernel, row_tile=row_tile, n_valid_rows=R)

    flops = (8 * r_pad * n_fft * nf_pad          # 2 signals x 2 DFT matmuls
             + 4 * r_pad * nf_pad * n_mels       # 2 signals x mel projection
             + 6 * r_pad * nf_pad                # power spectrum
             + 12 * r_pad * n_mels)              # log-norm + abs + sums (rough)
    transcendentals = 2 * r_pad * n_mels
    bytes_accessed = (2 * r_pad * n_fft * 2                      # bf16 frames (x, y)
                      + (int(cw.size) + int(sw.size)) * 2        # bf16 bases, once
                      + int(fb.size) * 4
                      + 2 * n_row_tiles * n_mels * 4)

    resident = dict(pipeline_mode=pl.Buffered(1))   # bases never change -> 1 buffer

    sum_d, sum_y = pl.pallas_call(
        kernel,
        grid=(n_row_tiles,),
        in_specs=[
            pl.BlockSpec((row_tile, n_fft), lambda i: (i, 0)),
            pl.BlockSpec((row_tile, n_fft), lambda i: (i, 0)),
            pl.BlockSpec((n_fft, nf_pad), lambda i: (0, 0), **resident),
            pl.BlockSpec((n_fft, nf_pad), lambda i: (0, 0), **resident),
            pl.BlockSpec((nf_pad, n_mels), lambda i: (0, 0), **resident),
        ],
        out_specs=[
            pl.BlockSpec((1, 1, n_mels), lambda i: (i, 0, 0)),
            pl.BlockSpec((1, 1, n_mels), lambda i: (i, 0, 0)),
        ],
        out_shape=[
            jax.ShapeDtypeStruct((n_row_tiles, 1, n_mels), jnp.float32),
            jax.ShapeDtypeStruct((n_row_tiles, 1, n_mels), jnp.float32),
        ],
        compiler_params=pltpu.CompilerParams(
            dimension_semantics=("parallel",),      # per-tile partials -> megacore ok
            vmem_limit_bytes=VMEM_LIMIT_BYTES,
        ),
        cost_estimate=pl.CostEstimate(
            flops=int(flops),
            transcendentals=int(transcendentals),
            bytes_accessed=int(bytes_accessed),
        ),
    )(fx, fy, cw, sw, fb)

    return jnp.sum(sum_d) / (jnp.sum(sum_y) + SC_EPS)


# --------------------------------------------------------------------------- module

class MultiResolutionSTFTLossPallas:
    """Pallas re-implementation of MultiResolutionSTFTLoss.forward."""

    def __init__(self, fft_sizes=(1024, 2048, 512), hop_sizes=(120, 240, 50),
                 win_lengths=(600, 1200, 240), sample_rate=24000):
        assert len(fft_sizes) == len(hop_sizes) == len(win_lengths)
        self.resolutions = []
        for n_fft, hop, win_length in zip(fft_sizes, hop_sizes, win_lengths):
            nf_pad = _round_up(n_fft // 2 + 1, 128)
            win = _padded_hann(n_fft, win_length)
            cw, sw = _windowed_dft_matrices(n_fft, win, nf_pad)   # bf16
            fb = _mel_filterbank(n_fft, nf_pad, sample_rate)      # f32
            self.resolutions.append(
                dict(n_fft=n_fft, hop=hop, win=win, cw=cw, sw=sw, fb=fb))

    def forward(self, x, y):
        sc_losses = []
        for r in self.resolutions:
            fx = _frame_signal(x, r["n_fft"], r["hop"]).astype(FRAME_DTYPE)
            fy = _frame_signal(y, r["n_fft"], r["hop"]).astype(FRAME_DTYPE)
            sc_losses.append(
                _spectral_convergence_pallas(fx, fy, r["cw"], r["sw"], r["fb"]))
        return jnp.stack(sc_losses).mean()

    # pure-JAX reference (float32, FFT-based) for sanity checking the Pallas path
    def forward_ref(self, x, y):
        sc_losses = []
        for r in self.resolutions:
            n_fft, hop = r["n_fft"], r["hop"]
            n_freq = n_fft // 2 + 1
            fb = r["fb"][:n_freq, :]
            win = r["win"]
            fx = _frame_signal(x, n_fft, hop)
            fy = _frame_signal(y, n_fft, hop)

            def logmel(fr):
                spec = jnp.fft.rfft(fr * win[None, :], axis=-1)
                power = jnp.real(spec) ** 2 + jnp.imag(spec) ** 2
                mel = power @ fb
                return (jnp.log(mel + MEL_EPS) - LOG_MEAN) * INV_LOG_STD

            xm, ym = logmel(fx), logmel(fy)
            sc_losses.append(jnp.sum(jnp.abs(ym - xm))
                             / (jnp.sum(jnp.abs(ym)) + SC_EPS))
        return jnp.stack(sc_losses).mean()


# --------------------------------------------------------------------------- main

if __name__ == "__main__":
    key = jax.random.PRNGKey(0)
    k_y, k_n = jax.random.split(key)

    B, T = 2, 4800   # 0.2 s of 24 kHz audio per batch item (small, but > n_fft)
    y = jax.random.normal(k_y, (B, T), jnp.float32)                    # groundtruth
    x = 0.8 * y + 0.2 * jax.random.normal(k_n, (B, T), jnp.float32)    # predicted

    loss_mod = MultiResolutionSTFTLossPallas()

    loss = jax.block_until_ready(loss_mod.forward(x, y))
    ref = jax.block_until_ready(loss_mod.forward_ref(x, y))

    assert jnp.isfinite(loss), loss
    # tolerance covers bf16 frame + bf16 cos/sin-basis storage (f32 MXU accumulation)
    assert jnp.allclose(loss, ref, rtol=2.5e-2, atol=1e-3), (loss, ref)

    print("KERNEL_OK")
</pallas_src>

<mosaic_0001>
module attributes {stable_mosaic.version = 11 : i64} {
  func.func @_mel_sc_kernel(%arg0: i32, %arg1: memref<96x1024xbf16, #tpu.memory_space<vmem>>, %arg2: memref<96x1024xbf16, #tpu.memory_space<vmem>>, %arg3: memref<1024x640xbf16, #tpu.memory_space<vmem>>, %arg4: memref<1024x640xbf16, #tpu.memory_space<vmem>>, %arg5: memref<640x128xf32, #tpu.memory_space<vmem>>, %arg6: memref<1x1x128xf32, #tpu.memory_space<vmem>>, %arg7: memref<1x1x128xf32, #tpu.memory_space<vmem>>) attributes {dimension_semantics = [#tpu.dimension_semantics<parallel>], iteration_bounds = array<i64: 1>, scalar_prefetch = 0 : i64, scratch_operands = 0 : i64, tpu.core_type = #tpu.core_type<tc>, window_params = [{transform_indices = @transform_0, window_bounds = array<i64: 96, 1024>}, {transform_indices = @transform_1, window_bounds = array<i64: 96, 1024>}, {pipeline_mode = #tpu.pipeline_mode<synchronous>, transform_indices = @transform_2, window_bounds = array<i64: 1024, 640>}, {pipeline_mode = #tpu.pipeline_mode<synchronous>, transform_indices = @transform_3, window_bounds = array<i64: 1024, 640>}, {pipeline_mode = #tpu.pipeline_mode<synchronous>, transform_indices = @transform_4, window_bounds = array<i64: 640, 128>}, {transform_indices = @transform_5, window_bounds = array<i64: 1, 1, 128>}, {transform_indices = @transform_6, window_bounds = array<i64: 1, 1, 128>}]} {
    %c0 = arith.constant 0 : index
    %c0_0 = arith.constant 0 : index
    %0 = vector.load %arg3[%c0, %c0_0] : memref<1024x640xbf16, #tpu.memory_space<vmem>>, vector<1024x640xbf16>
    %c0_1 = arith.constant 0 : index
    %c0_2 = arith.constant 0 : index
    %1 = vector.load %arg4[%c0_1, %c0_2] : memref<1024x640xbf16, #tpu.memory_space<vmem>>, vector<1024x640xbf16>
    %c0_3 = arith.constant 0 : index
    %c0_4 = arith.constant 0 : index
    %2 = vector.load %arg5[%c0_3, %c0_4] : memref<640x128xf32, #tpu.memory_space<vmem>>, vector<640x128xf32>
    %c0_5 = arith.constant 0 : index
    %c0_6 = arith.constant 0 : index
    %3 = vector.load %arg1[%c0_5, %c0_6] : memref<96x1024xbf16, #tpu.memory_space<vmem>>, vector<96x1024xbf16>
    %cst = arith.constant dense<0.000000e+00> : vector<96x640xf32>
    %4 = tpu.matmul %3, %0, %cst {dimension_numbers = #tpu.dot_dimension_numbers<[1], [0], [0], [1], [0, 0, 1, 1], [], []>} : vector<96x1024xbf16>, vector<1024x640xbf16>, vector<96x640xf32> -> vector<96x640xf32>
    %cst_7 = arith.constant dense<0.000000e+00> : vector<96x640xf32>
    %5 = tpu.matmul %3, %1, %cst_7 {dimension_numbers = #tpu.dot_dimension_numbers<[1], [0], [0], [1], [0, 0, 1, 1], [], []>} : vector<96x1024xbf16>, vector<1024x640xbf16>, vector<96x640xf32> -> vector<96x640xf32>
    %6 = arith.mulf %4, %4 : vector<96x640xf32>
    %7 = arith.mulf %5, %5 : vector<96x640xf32>
    %8 = arith.addf %6, %7 : vector<96x640xf32>
    %cst_8 = arith.constant dense<0.000000e+00> : vector<96x128xf32>
    %9 = tpu.matmul %8, %2, %cst_8 {dimension_numbers = #tpu.dot_dimension_numbers<[1], [0], [0], [1], [0, 0, 1, 1], [], []>} : vector<96x640xf32>, vector<640x128xf32>, vector<96x128xf32> -> vector<96x128xf32>
    %cst_9 = arith.constant 9.99999974E-6 : f32
    %10 = vector.broadcast %cst_9 : f32 to vector<96x128xf32>
    %11 = arith.addf %9, %10 : vector<96x128xf32>
    %12 = math.log %11 : vector<96x128xf32>
    %cst_10 = arith.constant -4.000000e+00 : f32
    %13 = vector.broadcast %cst_10 : f32 to vector<96x128xf32>
    %14 = arith.subf %12, %13 : vector<96x128xf32>
    %cst_11 = arith.constant 2.500000e-01 : f32
    %15 = vector.broadcast %cst_11 : f32 to vector<96x128xf32>
    %16 = arith.mulf %14, %15 : vector<96x128xf32>
    %c0_12 = arith.constant 0 : index
    %c0_13 = arith.constant 0 : index
    %17 = vector.load %arg2[%c0_12, %c0_13] : memref<96x1024xbf16, #tpu.memory_space<vmem>>, vector<96x1024xbf16>
    %cst_14 = arith.constant dense<0.000000e+00> : vector<96x640xf32>
    %18 = tpu.matmul %17, %0, %cst_14 {dimension_numbers = #tpu.dot_dimension_numbers<[1], [0], [0], [1], [0, 0, 1, 1], [], []>} : vector<96x1024xbf16>, vector<1024x640xbf16>, vector<96x640xf32> -> vector<96x640xf32>
    %cst_15 = arith.constant dense<0.000000e+00> : vector<96x640xf32>
    %19 = tpu.matmul %17, %1, %cst_15 {dimension_numbers = #tpu.dot_dimension_numbers<[1], [0], [0], [1], [0, 0, 1, 1], [], []>} : vector<96x1024xbf16>, vector<1024x640xbf16>, vector<96x640xf32> -> vector<96x640xf32>
    %20 = arith.mulf %18, %18 : vector<96x640xf32>
    %21 = arith.mulf %19, %19 : vector<96x640xf32>
    %22 = arith.addf %20, %21 : vector<96x640xf32>
    %cst_16 = arith.constant dense<0.000000e+00> : vector<96x128xf32>
    %23 = tpu.matmul %22, %2, %cst_16 {dimension_numbers = #tpu.dot_dimension_numbers<[1], [0], [0], [1], [0, 0, 1, 1], [], []>} : vector<96x640xf32>, vector<640x128xf32>, vector<96x128xf32> -> vector<96x128xf32>
    %cst_17 = arith.constant 9.99999974E-6 : f32
    %24 = vector.broadcast %cst_17 : f32 to vector<96x128xf32>
    %25 = arith.addf %23, %24 : vector<96x128xf32>
    %26 = math.log %25 : vector<96x128xf32>
    %cst_18 = arith.constant -4.000000e+00 : f32
    %27 = vector.broadcast %cst_18 : f32 to vector<96x128xf32>
    %28 = arith.subf %26, %27 : vector<96x128xf32>
    %cst_19 = arith.constant 2.500000e-01 : f32
    %29 = vector.broadcast %cst_19 : f32 to vector<96x128xf32>
    %30 = arith.mulf %28, %29 : vector<96x128xf32>
    %c96_i32 = arith.constant 96 : i32
    %31 = arith.muli %arg0, %c96_i32 : i32
    %32 = tpu.iota {dimensions = array<i32: 0>} : vector<96x1xi32>
    %33 = vector.broadcast %31 : i32 to vector<96x1xi32>
    %34 = arith.addi %33, %32 : vector<96x1xi32>
    %c82_i32 = arith.constant 82 : i32
    %35 = vector.broadcast %c82_i32 : i32 to vector<96x1xi32>
    %36 = arith.cmpi slt, %34, %35 : vector<96x1xi32>
    %37 = arith.subf %30, %16 : vector<96x128xf32>
    %38 = math.absf %37 : vector<96x128xf32>
    %cst_20 = arith.constant 0.000000e+00 : f32
    %39 = vector.shape_cast %36 : vector<96x1xi1> to vector<96x1xi1>
    %40 = vector.broadcast %39 : vector<96x1xi1> to vector<96x128xi1>
    %41 = vector.broadcast %cst_20 : f32 to vector<96x128xf32>
    %42 = arith.select %40, %38, %41 : vector<96x128xi1>, vector<96x128xf32>
    %cst_21 = arith.constant dense<0.000000e+00> : vector<128xf32>
    %43 = vector.multi_reduction <add>, %42, %cst_21 [0] : vector<96x128xf32> to vector<128xf32>
    %44 = vector.shape_cast %43 : vector<128xf32> to vector<1x128xf32>
    %45 = math.absf %30 : vector<96x128xf32>
    %cst_22 = arith.constant 0.000000e+00 : f32
    %46 = vector.shape_cast %36 : vector<96x1xi1> to vector<96x1xi1>
    %47 = vector.broadcast %46 : vector<96x1xi1> to vector<96x128xi1>
    %48 = vector.broadcast %cst_22 : f32 to vector<96x128xf32>
    %49 = arith.select %47, %45, %48 : vector<96x128xi1>, vector<96x128xf32>
    %cst_23 = arith.constant dense<0.000000e+00> : vector<128xf32>
    %50 = vector.multi_reduction <add>, %49, %cst_23 [0] : vector<96x128xf32> to vector<128xf32>
    %51 = vector.shape_cast %50 : vector<128xf32> to vector<1x128xf32>
    %52 = vector.shape_cast %44 : vector<1x128xf32> to vector<1x1x128xf32>
    %c0_24 = arith.constant 0 : index
    %c0_25 = arith.constant 0 : index
    %c0_26 = arith.constant 0 : index
    %53 = vector.load %arg6[%c0_24, %c0_25, %c0_26] : memref<1x1x128xf32, #tpu.memory_space<vmem>>, vector<1x1x128xf32>
    tpu.vector_store %arg6[%c0_24, %c0_25, %c0_26], %52 {strides = array<i32>} : memref<1x1x128xf32, #tpu.memory_space<vmem>>, vector<1x1x128xf32>,
    %54 = vector.shape_cast %51 : vector<1x128xf32> to vector<1x1x128xf32>
    %c0_27 = arith.constant 0 : index
    %c0_28 = arith.constant 0 : index
    %c0_29 = arith.constant 0 : index
    %55 = vector.load %arg7[%c0_27, %c0_28, %c0_29] : memref<1x1x128xf32, #tpu.memory_space<vmem>>, vector<1x1x128xf32>
    tpu.vector_store %arg7[%c0_27, %c0_28, %c0_29], %54 {strides = array<i32>} : memref<1x1x128xf32, #tpu.memory_space<vmem>>, vector<1x1x128xf32>,
    return
  }
  func.func @transform_0(%arg0: i32) -> (i32, i32) {
    %c0_i32 = arith.constant 0 : i32
    %c0_i32_0 = arith.constant 0 : i32
    return %arg0, %c0_i32 : i32, i32
  }
  func.func @transform_1(%arg0: i32) -> (i32, i32) {
    %c0_i32 = arith.constant 0 : i32
    %c0_i32_0 = arith.constant 0 : i32
    return %arg0, %c0_i32 : i32, i32
  }
  func.func @transform_2(%arg0: i32) -> (i32, i32) {
    %c0_i32 = arith.constant 0 : i32
    %c0_i32_0 = arith.constant 0 : i32
    %c0_i32_1 = arith.constant 0 : i32
    return %c0_i32, %c0_i32_0 : i32, i32
  }
  func.func @transform_3(%arg0: i32) -> (i32, i32) {
    %c0_i32 = arith.constant 0 : i32
    %c0_i32_0 = arith.constant 0 : i32
    %c0_i32_1 = arith.constant 0 : i32
    return %c0_i32, %c0_i32_0 : i32, i32
  }
  func.func @transform_4(%arg0: i32) -> (i32, i32) {
    %c0_i32 = arith.constant 0 : i32
    %c0_i32_0 = arith.constant 0 : i32
    %c0_i32_1 = arith.constant 0 : i32
    return %c0_i32, %c0_i32_0 : i32, i32
  }
  func.func @transform_5(%arg0: i32) -> (i32, i32, i32) {
    %c0_i32 = arith.constant 0 : i32
    %c0_i32_0 = arith.constant 0 : i32
    %c0_i32_1 = arith.constant 0 : i32
    return %arg0, %c0_i32, %c0_i32_0 : i32, i32, i32
  }
  func.func @transform_6(%arg0: i32) -> (i32, i32, i32) {
    %c0_i32 = arith.constant 0 : i32
    %c0_i32_0 = arith.constant 0 : i32
    %c0_i32_1 = arith.constant 0 : i32
    return %arg0, %c0_i32, %c0_i32_0 : i32, i32, i32
  }
}

</mosaic_0001>

<llo_original>
// kernel: tpu_custom_call.1
$region0: #{tpu_custom_call.1}
  #allocation0 [shape = 'u32[]', space=smem, size = 0x4, offset = 0x4, fixed_abs, tag = 'smem constant byte address 0x4 - core index']
  #allocation1 [shape = 'u32[144,128]{1,0:T(1,128)}', space=vmem, size = 0x12000, scoped, tag = 'internal scratch']
  %s0 = inlined_call_operand.hbm [shape: bf16[96,1024], index: 0, kind: input, shape index: {}]
  %s1 = inlined_call_operand.hbm [shape: bf16[96,1024], index: 1, kind: input, shape index: {}]
  %s2 = inlined_call_operand.hbm [shape: bf16[1024,640], index: 2, kind: input, shape index: {}]
  %s3 = inlined_call_operand.hbm [shape: bf16[1024,640], index: 3, kind: input, shape index: {}]
  %s4 = inlined_call_operand.hbm [shape: f32[640,128], index: 4, kind: input, shape index: {}]
  %s5 = inlined_call_operand.hbm [shape: f32[1,1,128], index: 5, kind: output, shape index: {0}]
  %s6 = inlined_call_operand.hbm [shape: f32[1,1,128], index: 6, kind: output, shape index: {1}]
  %7 = xla_tuple %s5, %s6
  %s8 = sld [smem:[#allocation0]]
  $region58: #{tpu_custom_call.1} parent=0
    _
  %s10 = ssub.s32 1, %s8
  %s11 = scalar_select 0, %s10, %s8
  $region1: #{tpu_custom_call.1} parent=0
    #allocation2 [shape = 'u8[196608]{0}', space=vmem, size = 0x30000, scoped, tag = 'input window, operand 0, single buffered']
    #allocation3 [shape = 's32[1]{0}', space=sflag, size = 0x4, scoped, tag = 'scoped memory for tpu_custom_call.1']
    #allocation4 [shape = 's32[1]{0}', space=sflag, size = 0x4, scoped, tag = 'scoped memory for tpu_custom_call.1']
    #allocation5 [shape = 'u8[196608]{0}', space=vmem, size = 0x30000, scoped, tag = 'input window, operand 1, single buffered']
    #allocation6 [shape = 's32[1]{0}', space=sflag, size = 0x4, scoped, tag = 'scoped memory for tpu_custom_call.1']
    #allocation7 [shape = 'u8[1310720]{0}', space=vmem, size = 0x140000, scoped, tag = 'input window, operand 2, single buffered']
    #allocation8 [shape = 'u8[1310720]{0}', space=vmem, size = 0x140000, scoped, tag = 'input window, operand 3, single buffered']
    #allocation9 [shape = 's32[1]{0}', space=sflag, size = 0x4, scoped, tag = 'scoped memory for tpu_custom_call.1']
    #allocation10 [shape = 'u8[327680]{0}', space=vmem, size = 0x50000, scoped, tag = 'input window, operand 4, single buffered']
    #allocation11 [shape = 'u8[512]{0}', space=vmem, size = 0x400, scoped, tag = 'output window, operand 0, single buffered']
    #allocation12 [shape = 'u8[512]{0}', space=vmem, size = 0x400, scoped, tag = 'output window, operand 1, single buffered']
    #allocation13 [shape = 's32[1]{0}', space=sflag, size = 0x4, scoped, tag = 'scoped memory for tpu_custom_call.1']
    %12 = vsyncpa [#allocation3], 0
    %13 = vsyncpa [#allocation6], 0
    %14 = vsyncpa [#allocation9], 0
    %15 = vsyncpa [#allocation4], 0
    %16 = vsyncpa [#allocation13], 0
    // Predicated region
    $region2: #{tpu_custom_call.1} parent=1 // pred_check
      _
    $region3: #{tpu_custom_call.1} parent=1 // pred_check_branch
      %18 = sbr.rel (0) target = $region5
    $region4: #{tpu_custom_call.1} parent=1 // pred_region
      %s20 = ssub.s32 6144, 6144
      %21 = vsyncadd [#allocation3], %s20
      %s22 = sshll.u32 [#allocation2], 4
      %s23 = int_to_ptr.vmem [resolvable:$true] %s22
      %28 = dma.hbm_to_vmem [thread:$0]  %s0, 6144, %s23, [#allocation3], 512, 512, 32
    $region5: #{tpu_custom_call.1} parent=1 // pred_fallthru
      _
    // Predicated region
    $region6: #{tpu_custom_call.1} parent=1 // pred_check
      _
    $region7: #{tpu_custom_call.1} parent=1 // pred_check_branch
      %30 = sbr.rel (0) target = $region9
    $region8: #{tpu_custom_call.1} parent=1 // pred_region
      %s32 = ssub.s32 6144, 6144
      %33 = vsyncadd [#allocation6], %s32
      %s34 = sshll.u32 [#allocation5], 4
      %s35 = int_to_ptr.vmem [resolvable:$true] %s34
      %40 = dma.hbm_to_vmem [thread:$0]  %s1, 6144, %s35, [#allocation6], 512, 512, 32
    $region9: #{tpu_custom_call.1} parent=1 // pred_fallthru
      _
    // Predicated region
    $region10: #{tpu_custom_call.1} parent=1 // pred_check
      _
    $region11: #{tpu_custom_call.1} parent=1 // pred_check_branch
      %42 = sbr.rel (0) target = $region13
    $region12: #{tpu_custom_call.1} parent=1 // pred_region
      %s44 = ssub.s32 40960, 40960
      %45 = vsyncadd [#allocation6], %s44
      %s46 = sshll.u32 [#allocation7], 4
      %s47 = int_to_ptr.vmem [resolvable:$true] %s46
      %52 = dma.hbm_to_vmem [thread:$0]  %s2, 40960, %s47, [#allocation6], 320, 320, 20
    $region13: #{tpu_custom_call.1} parent=1 // pred_fallthru
      _
    // Predicated region
    $region14: #{tpu_custom_call.1} parent=1 // pred_check
      _
    $region15: #{tpu_custom_call.1} parent=1 // pred_check_branch
      %54 = sbr.rel (0) target = $region17
    $region16: #{tpu_custom_call.1} parent=1 // pred_region
      %s56 = ssub.s32 40960, 40960
      %57 = vsyncadd [#allocation9], %s56
      %s58 = sshll.u32 [#allocation8], 4
      %s59 = int_to_ptr.vmem [resolvable:$true] %s58
      %64 = dma.hbm_to_vmem [thread:$0]  %s3, 40960, %s59, [#allocation9], 320, 320, 20
    $region17: #{tpu_custom_call.1} parent=1 // pred_fallthru
      _
    // Predicated region
    $region18: #{tpu_custom_call.1} parent=1 // pred_check
      _
    $region19: #{tpu_custom_call.1} parent=1 // pred_check_branch
      %66 = sbr.rel (0) target = $region21
    $region20: #{tpu_custom_call.1} parent=1 // pred_region
      %s68 = ssub.s32 10240, 10240
      %69 = vsyncadd [#allocation9], %s68
      %s70 = sshll.u32 [#allocation10], 4
      %s71 = int_to_ptr.vmem [resolvable:$true] %s70
      %76 = dma.hbm_to_vmem [thread:$0]  %s4, 10240, %s71, [#allocation9], 128, 128, 8
    $region21: #{tpu_custom_call.1} parent=1 // pred_fallthru
      _
    // Predicated region
    $region22: #{tpu_custom_call.1} parent=1 // pred_check
      _
    $region23: #{tpu_custom_call.1} parent=1 // pred_check_branch
      %78 = sbr.rel (0) target = $region25
    $region24: #{tpu_custom_call.1} parent=1 // pred_region
      %79 = dma.done [#allocation3], 6144
    $region25: #{tpu_custom_call.1} parent=1 // pred_fallthru
      _
    // Predicated region
    $region26: #{tpu_custom_call.1} parent=1 // pred_check
      _
    $region27: #{tpu_custom_call.1} parent=1 // pred_check_branch
      %81 = sbr.rel (0) target = $region29
    $region28: #{tpu_custom_call.1} parent=1 // pred_region
      %82 = dma.done [#allocation6], 6144
    $region29: #{tpu_custom_call.1} parent=1 // pred_fallthru
      _
    // Predicated region
    $region30: #{tpu_custom_call.1} parent=1 // pred_check
      _
    $region31: #{tpu_custom_call.1} parent=1 // pred_check_branch
      %84 = sbr.rel (0) target = $region33
    $region32: #{tpu_custom_call.1} parent=1 // pred_region
      %85 = dma.done [#allocation6], 40960
    $region33: #{tpu_custom_call.1} parent=1 // pred_fallthru
      _
    // Predicated region
    $region34: #{tpu_custom_call.1} parent=1 // pred_check
      _
    $region35: #{tpu_custom_call.1} parent=1 // pred_check_branch
      %87 = sbr.rel (0) target = $region37
    $region36: #{tpu_custom_call.1} parent=1 // pred_region
      %88 = dma.done [#allocation9], 40960
    $region37: #{tpu_custom_call.1} parent=1 // pred_fallthru
      _
    // Predicated region
    $region38: #{tpu_custom_call.1} parent=1 // pred_check
      _
    $region39: #{tpu_custom_call.1} parent=1 // pred_check_branch
      %90 = sbr.rel (0) target = $region41
    $region40: #{tpu_custom_call.1} parent=1 // pred_region
      %91 = dma.done [#allocation9], 10240
    $region41: #{tpu_custom_call.1} parent=1 // pred_fallthru
      _
    %v93 = vld [vmem:[#allocation7] sm:$0xff]
    %v94 = vld [vmem:[#allocation7 + $0x8] sm:$0xff]
    %v95 = vld [vmem:[#allocation7 + $0x10] sm:$0xf]
    %v96 = vld [vmem:[#allocation7 + $0x14] sm:$0xff]
    %v97 = vld [vmem:[#allocation7 + $0x1c] sm:$0xff]
    %v98 = vld [vmem:[#allocation7 + $0x24] sm:$0xf]
    %v99 = vld [vmem:[#allocation7 + $0x28] sm:$0xff]
    %v100 = vld [vmem:[#allocation7 + $0x30] sm:$0xff]
    %v101 = vld [vmem:[#allocation7 + $0x38] sm:$0xf]
    %v102 = vld [vmem:[#allocation7 + $0x3c] sm:$0xff]
    %v103 = vld [vmem:[#allocation7 + $0x44] sm:$0xff]
    %v104 = vld [vmem:[#allocation7 + $0x4c] sm:$0xf]
    %v105 = vld [vmem:[#allocation7 + $0x50] sm:$0xff]
    %v106 = vld [vmem:[#allocation7 + $0x58] sm:$0xff]
    %v107 = vld [vmem:[#allocation7 + $0x60] sm:$0xf]
    %v108 = vld [vmem:[#allocation7 + $0x64] sm:$0xff]
    %v109 = vld [vmem:[#allocation7 + $0x6c] sm:$0xff]
    %v110 = vld [vmem:[#allocation7 + $0x74] sm:$0xf]
    %v111 = vld [vmem:[#allocation7 + $0x78] sm:$0xff]
    %v112 = vld [vmem:[#allocation7 + $0x80] sm:$0xff]
    %v113 = vld [vmem:[#allocation7 + $0x88] sm:$0xf]
    %v114 = vld [vmem:[#allocation7 + $0x8c] sm:$0xff]
    %v115 = vld [vmem:[#allocation7 + $0x94] sm:$0xff]
    %v116 = vld [vmem:[#allocation7 + $0x9c] sm:$0xf]
    %v117 = vld [vmem:[#allocation7 + $0xa0] sm:$0xff]
    %v118 = vld [vmem:[#allocation7 + $0xa8] sm:$0xff]
    %v119 = vld [vmem:[#allocation7 + $0xb0] sm:$0xf]
    %v120 = vld [vmem:[#allocation7 + $0xb4] sm:$0xff]
    %v121 = vld [vmem:[#allocation7 + $0xbc] sm:$0xff]
    %v122 = vld [vmem:[#allocation7 + $0xc4] sm:$0xf]
    %v123 = vld [vmem:[#allocation7 + $0xc8] sm:$0xff]
    %v124 = vld [vmem:[#allocation7 + $0xd0] sm:$0xff]
    %v125 = vld [vmem:[#allocation7 + $0xd8] sm:$0xf]
    %v126 = vld [vmem:[#allocation7 + $0xdc] sm:$0xff]
    %v127 = vld [vmem:[#allocation7 + $0xe4] sm:$0xff]
    %v128 = vld [vmem:[#allocation7 + $0xec] sm:$0xf]
    %v129 = vld [vmem:[#allocation7 + $0xf0] sm:$0xff]
    %v130 = vld [vmem:[#allocation7 + $0xf8] sm:$0xff]
    %v131 = vld [vmem:[#allocation7 + $0x100] sm:$0xf]
    %v132 = vld [vmem:[#allocation7 + $0x104] sm:$0xff]
    %v133 = vld [vmem:[#allocation7 + $0x10c] sm:$0xff]
    %v134 = vld [vmem:[#allocation7 + $0x114] sm:$0xf]
    %v135 = vld [vmem:[#allocation7 + $0x118] sm:$0xff]
    %v136 = vld [vmem:[#allocation7 + $0x120] sm:$0xff]
    %v137 = vld [vmem:[#allocation7 + $0x128] sm:$0xf]
    %v138 = vld [vmem:[#allocation7 + $0x12c] sm:$0xff]
    %v139 = vld [vmem:[#allocation7 + $0x134] sm:$0xff]
    %v140 = vld [vmem:[#allocation7 + $0x13c] sm:$0xf]
    %v141 = vld [vmem:[#allocation7 + $0x140] sm:$0xff]
    %v142 = vld [vmem:[#allocation7 + $0x148] sm:$0xff]
    %v143 = vld [vmem:[#allocation7 + $0x150] sm:$0xf]
    %v144 = vld [vmem:[#allocation7 + $0x154] sm:$0xff]
    %v145 = vld [vmem:[#allocation7 + $0x15c] sm:$0xff]
    %v146 = vld [vmem:[#allocation7 + $0x164] sm:$0xf]
    %v147 = vld [vmem:[#allocation7 + $0x168] sm:$0xff]
    %v148 = vld [vmem:[#allocation7 + $0x170] sm:$0xff]
    %v149 = vld [vmem:[#allocation7 + $0x178] sm:$0xf]
    %v150 = vld [vmem:[#allocation7 + $0x17c] sm:$0xff]
    %v151 = vld [vmem:[#allocation7 + $0x184] sm:$0xff]
    %v152 = vld [vmem:[#allocation7 + $0x18c] sm:$0xf]
    %v153 = vld [vmem:[#allocation7 + $0x190] sm:$0xff]
    %v154 = vld [vmem:[#allocation7 + $0x198] sm:$0xff]
    %v155 = vld [vmem:[#allocation7 + $0x1a0] sm:$0xf]
    %v156 = vld [vmem:[#allocation7 + $0x1a4] sm:$0xff]
    %v157 = vld [vmem:[#allocation7 + $0x1ac] sm:$0xff]
    %v158 = vld [vmem:[#allocation7 + $0x1b4] sm:$0xf]
    %v159 = vld [vmem:[#allocation7 + $0x1b8] sm:$0xff]
    %v160 = vld [vmem:[#allocation7 + $0x1c0] sm:$0xff]
    %v161 = vld [vmem:[#allocation7 + $0x1c8] sm:$0xf]
    %v162 = vld [vmem:[#allocation7 + $0x1cc] sm:$0xff]
    %v163 = vld [vmem:[#allocation7 + $0x1d4] sm:$0xff]
    %v164 = vld [vmem:[#allocation7 + $0x1dc] sm:$0xf]
    %v165 = vld [vmem:[#allocation7 + $0x1e0] sm:$0xff]
    %v166 = vld [vmem:[#allocation7 + $0x1e8] sm:$0xff]
    %v167 = vld [vmem:[#allocation7 + $0x1f0] sm:$0xf]
    %v168 = vld [vmem:[#allocation7 + $0x1f4] sm:$0xff]
    %v169 = vld [vmem:[#allocation7 + $0x1fc] sm:$0xff]
    %v170 = vld [vmem:[#allocation7 + $0x204] sm:$0xf]
    %v171 = vld [vmem:[#allocation7 + $0x208] sm:$0xff]
    %v172 = vld [vmem:[#allocation7 + $0x210] sm:$0xff]
    %v173 = vld [vmem:[#allocation7 + $0x218] sm:$0xf]
    %v174 = vld [vmem:[#allocation7 + $0x21c] sm:$0xff]
    %v175 = vld [vmem:[#allocation7 + $0x224] sm:$0xff]
    %v176 = vld [vmem:[#allocation7 + $0x22c] sm:$0xf]
    %v177 = vld [vmem:[#allocation7 + $0x230] sm:$0xff]
    %v178 = vld [vmem:[#allocation7 + $0x238] sm:$0xff]
    %v179 = vld [vmem:[#allocation7 + $0x240] sm:$0xf]
    %v180 = vld [vmem:[#allocation7 + $0x244] sm:$0xff]
    %v181 = vld [vmem:[#allocation7 + $0x24c] sm:$0xff]
    %v182 = vld [vmem:[#allocation7 + $0x254] sm:$0xf]
    %v183 = vld [vmem:[#allocation7 + $0x258] sm:$0xff]
    %v184 = vld [vmem:[#allocation7 + $0x260] sm:$0xff]
    %v185 = vld [vmem:[#allocation7 + $0x268] sm:$0xf]
    %v186 = vld [vmem:[#allocation7 + $0x26c] sm:$0xff]
    %v187 = vld [vmem:[#allocation7 + $0x274] sm:$0xff]
    %v188 = vld [vmem:[#allocation7 + $0x27c] sm:$0xf]
    %v189 = vld [vmem:[#allocation7 + $0x280] sm:$0xff]
    %v190 = vld [vmem:[#allocation7 + $0x288] sm:$0xff]
    %v191 = vld [vmem:[#allocation7 + $0x290] sm:$0xf]
    %v192 = vld [vmem:[#allocation7 + $0x294] sm:$0xff]
    %v193 = vld [vmem:[#allocation7 + $0x29c] sm:$0xff]
    %v194 = vld [vmem:[#allocation7 + $0x2a4] sm:$0xf]
    %v195 = vld [vmem:[#allocation7 + $0x2a8] sm:$0xff]
    %v196 = vld [vmem:[#allocation7 + $0x2b0] sm:$0xff]
    %v197 = vld [vmem:[#allocation7 + $0x2b8] sm:$0xf]
    %v198 = vld [vmem:[#allocation7 + $0x2bc] sm:$0xff]
    %v199 = vld [vmem:[#allocation7 + $0x2c4] sm:$0xff]
    %v200 = vld [vmem:[#allocation7 + $0x2cc] sm:$0xf]
    %v201 = vld [vmem:[#allocation7 + $0x2d0] sm:$0xff]
    %v202 = vld [vmem:[#allocation7 + $0x2d8] sm:$0xff]
    %v203 = vld [vmem:[#allocation7 + $0x2e0] sm:$0xf]
    %v204 = vld [vmem:[#allocation7 + $0x2e4] sm:$0xff]
    %v205 = vld [vmem:[#allocation7 + $0x2ec] sm:$0xff]
    %v206 = vld [vmem:[#allocation7 + $0x2f4] sm:$0xf]
    %v207 = vld [vmem:[#allocation7 + $0x2f8] sm:$0xff]
    %v208 = vld [vmem:[#allocation7 + $0x300] sm:$0xff]
    %v209 = vld [vmem:[#allocation7 + $0x308] sm:$0xf]
    %v210 = vld [vmem:[#allocation7 + $0x30c] sm:$0xff]
    %v211 = vld [vmem:[#allocation7 + $0x314] sm:$0xff]
    %v212 = vld [vmem:[#allocation7 + $0x31c] sm:$0xf]
    %v213 = vld [vmem:[#allocation7 + $0x320] sm:$0xff]
    %v214 = vld [vmem:[#allocation7 + $0x328] sm:$0xff]
    %v215 = vld [vmem:[#allocation7 + $0x330] sm:$0xf]
    %v216 = vld [vmem:[#allocation7 + $0x334] sm:$0xff]
    %v217 = vld [vmem:[#allocation7 + $0x33c] sm:$0xff]
    %v218 = vld [vmem:[#allocation7 + $0x344] sm:$0xf]
    %v219 = vld [vmem:[#allocation7 + $0x348] sm:$0xff]
    %v220 = vld [vmem:[#allocation7 + $0x350] sm:$0xff]
    %v221 = vld [vmem:[#allocation7 + $0x358] sm:$0xf]
    %v222 = vld [vmem:[#allocation7 + $0x35c] sm:$0xff]
    %v223 = vld [vmem:[#allocation7 + $0x364] sm:$0xff]
    %v224 = vld [vmem:[#allocation7 + $0x36c] sm:$0xf]
    %v225 = vld [vmem:[#allocation7 + $0x370] sm:$0xff]
    %v226 = vld [vmem:[#allocation7 + $0x378] sm:$0xff]
    %v227 = vld [vmem:[#allocation7 + $0x380] sm:$0xf]
    %v228 = vld [vmem:[#allocation7 + $0x384] sm:$0xff]
    %v229 = vld [vmem:[#allocation7 + $0x38c] sm:$0xff]
    %v230 = vld [vmem:[#allocation7 + $0x394] sm:$0xf]
    %v231 = vld [vmem:[#allocation7 + $0x398] sm:$0xff]
    %v232 = vld [vmem:[#allocation7 + $0x3a0] sm:$0xff]
    %v233 = vld [vmem:[#allocation7 + $0x3a8] sm:$0xf]
    %v234 = vld [vmem:[#allocation7 + $0x3ac] sm:$0xff]
    %v235 = vld [vmem:[#allocation7 + $0x3b4] sm:$0xff]
    %v236 = vld [vmem:[#allocation7 + $0x3bc] sm:$0xf]
    %v237 = vld [vmem:[#allocation7 + $0x3c0] sm:$0xff]
    %v238 = vld [vmem:[#allocation7 + $0x3c8] sm:$0xff]
    %v239 = vld [vmem:[#allocation7 + $0x3d0] sm:$0xf]
    %v240 = vld [vmem:[#allocation7 + $0x3d4] sm:$0xff]
    %v241 = vld [vmem:[#allocation7 + $0x3dc] sm:$0xff]
    %v242 = vld [vmem:[#allocation7 + $0x3e4] sm:$0xf]
    %v243 = vld [vmem:[#allocation7 + $0x3e8] sm:$0xff]
    %v244 = vld [vmem:[#allocation7 + $0x3f0] sm:$0xff]
    %v245 = vld [vmem:[#allocation7 + $0x3f8] sm:$0xf]
    %v246 = vld [vmem:[#allocation7 + $0x3fc] sm:$0xff]
    %v247 = vld [vmem:[#allocation7 + $0x404] sm:$0xff]
    %v248 = vld [vmem:[#allocation7 + $0x40c] sm:$0xf]
    %v249 = vld [vmem:[#allocation7 + $0x410] sm:$0xff]
    %v250 = vld [vmem:[#allocation7 + $0x418] sm:$0xff]
    %v251 = vld [vmem:[#allocation7 + $0x420] sm:$0xf]
    %v252 = vld [vmem:[#allocation7 + $0x424] sm:$0xff]
    %v253 = vld [vmem:[#allocation7 + $0x42c] sm:$0xff]
    %v254 = vld [vmem:[#allocation7 + $0x434] sm:$0xf]
    %v255 = vld [vmem:[#allocation7 + $0x438] sm:$0xff]
    %v256 = vld [vmem:[#allocation7 + $0x440] sm:$0xff]
    %v257 = vld [vmem:[#allocation7 + $0x448] sm:$0xf]
    %v258 = vld [vmem:[#allocation7 + $0x44c] sm:$0xff]
    %v259 = vld [vmem:[#allocation7 + $0x454] sm:$0xff]
    %v260 = vld [vmem:[#allocation7 + $0x45c] sm:$0xf]
    %v261 = vld [vmem:[#allocation7 + $0x460] sm:$0xff]
    %v262 = vld [vmem:[#allocation7 + $0x468] sm:$0xff]
    %v263 = vld [vmem:[#allocation7 + $0x470] sm:$0xf]
    %v264 = vld [vmem:[#allocation7 + $0x474] sm:$0xff]
    %v265 = vld [vmem:[#allocation7 + $0x47c] sm:$0xff]
    %v266 = vld [vmem:[#allocation7 + $0x484] sm:$0xf]
    %v267 = vld [vmem:[#allocation7 + $0x488] sm:$0xff]
    %v268 = vld [vmem:[#allocation7 + $0x490] sm:$0xff]
    %v269 = vld [vmem:[#allocation7 + $0x498] sm:$0xf]
    %v270 = vld [vmem:[#allocation7 + $0x49c] sm:$0xff]
    %v271 = vld [vmem:[#allocation7 + $0x4a4] sm:$0xff]
    %v272 = vld [vmem:[#allocation7 + $0x4ac] sm:$0xf]
    %v273 = vld [vmem:[#allocation7 + $0x4b0] sm:$0xff]
    %v274 = vld [vmem:[#allocation7 + $0x4b8] sm:$0xff]
    %v275 = vld [vmem:[#allocation7 + $0x4c0] sm:$0xf]
    %v276 = vld [vmem:[#allocation7 + $0x4c4] sm:$0xff]
    %v277 = vld [vmem:[#allocation7 + $0x4cc] sm:$0xff]
    %v278 = vld [vmem:[#allocation7 + $0x4d4] sm:$0xf]
    %v279 = vld [vmem:[#allocation7 + $0x4d8] sm:$0xff]
    %v280 = vld [vmem:[#allocation7 + $0x4e0] sm:$0xff]
    %v281 = vld [vmem:[#allocation7 + $0x4e8] sm:$0xf]
    %v282 = vld [vmem:[#allocation7 + $0x4ec] sm:$0xff]
    %v283 = vld [vmem:[#allocation7 + $0x4f4] sm:$0xff]
    %v284 = vld [vmem:[#allocation7 + $0x4fc] sm:$0xf]
    %v285 = vld [vmem:[#allocation7 + $0x500] sm:$0xff]
    %v286 = vld [vmem:[#allocation7 + $0x508] sm:$0xff]
    %v287 = vld [vmem:[#allocation7 + $0x510] sm:$0xf]
    %v288 = vld [vmem:[#allocation7 + $0x514] sm:$0xff]
    %v289 = vld [vmem:[#allocation7 + $0x51c] sm:$0xff]
    %v290 = vld [vmem:[#allocation7 + $0x524] sm:$0xf]
    %v291 = vld [vmem:[#allocation7 + $0x528] sm:$0xff]
    %v292 = vld [vmem:[#allocation7 + $0x530] sm:$0xff]
    %v293 = vld [vmem:[#allocation7 + $0x538] sm:$0xf]
    %v294 = vld [vmem:[#allocation7 + $0x53c] sm:$0xff]
    %v295 = vld [vmem:[#allocation7 + $0x544] sm:$0xff]
    %v296 = vld [vmem:[#allocation7 + $0x54c] sm:$0xf]
    %v297 = vld [vmem:[#allocation7 + $0x550] sm:$0xff]
    %v298 = vld [vmem:[#allocation7 + $0x558] sm:$0xff]
    %v299 = vld [vmem:[#allocation7 + $0x560] sm:$0xf]
    %v300 = vld [vmem:[#allocation7 + $0x564] sm:$0xff]
    %v301 = vld [vmem:[#allocation7 + $0x56c] sm:$0xff]
    %v302 = vld [vmem:[#allocation7 + $0x574] sm:$0xf]
    %v303 = vld [vmem:[#allocation7 + $0x578] sm:$0xff]
    %v304 = vld [vmem:[#allocation7 + $0x580] sm:$0xff]
    %v305 = vld [vmem:[#allocation7 + $0x588] sm:$0xf]
    %v306 = vld [vmem:[#allocation7 + $0x58c] sm:$0xff]
    %v307 = vld [vmem:[#allocation7 + $0x594] sm:$0xff]
    %v308 = vld [vmem:[#allocation7 + $0x59c] sm:$0xf]
    %v309 = vld [vmem:[#allocation7 + $0x5a0] sm:$0xff]
    %v310 = vld [vmem:[#allocation7 + $0x5a8] sm:$0xff]
    %v311 = vld [vmem:[#allocation7 + $0x5b0] sm:$0xf]
    %v312 = vld [vmem:[#allocation7 + $0x5b4] sm:$0xff]
    %v313 = vld [vmem:[#allocation7 + $0x5bc] sm:$0xff]
    %v314 = vld [vmem:[#allocation7 + $0x5c4] sm:$0xf]
    %v315 = vld [vmem:[#allocation7 + $0x5c8] sm:$0xff]
    %v316 = vld [vmem:[#allocation7 + $0x5d0] sm:$0xff]
    %v317 = vld [vmem:[#allocation7 + $0x5d8] sm:$0xf]
    %v318 = vld [vmem:[#allocation7 + $0x5dc] sm:$0xff]
    %v319 = vld [vmem:[#allocation7 + $0x5e4] sm:$0xff]
    %v320 = vld [vmem:[#allocation7 + $0x5ec] sm:$0xf]
    %v321 = vld [vmem:[#allocation7 + $0x5f0] sm:$0xff]
    %v322 = vld [vmem:[#allocation7 + $0x5f8] sm:$0xff]
    %v323 = vld [vmem:[#allocation7 + $0x600] sm:$0xf]
    %v324 = vld [vmem:[#allocation7 + $0x604] sm:$0xff]
    %v325 = vld [vmem:[#allocation7 + $0x60c] sm:$0xff]
    %v326 = vld [vmem:[#allocation7 + $0x614] sm:$0xf]
    %v327 = vld [vmem:[#allocation7 + $0x618] sm:$0xff]
    %v328 = vld [vmem:[#allocation7 + $0x620] sm:$0xff]
    %v329 = vld [vmem:[#allocation7 + $0x628] sm:$0xf]
    %v330 = vld [vmem:[#allocation7 + $0x62c] sm:$0xff]
    %v331 = vld [vmem:[#allocation7 + $0x634] sm:$0xff]
    %v332 = vld [vmem:[#allocation7 + $0x63c] sm:$0xf]
    %v333 = vld [vmem:[#allocation7 + $0x640] sm:$0xff]
    %v334 = vld [vmem:[#allocation7 + $0x648] sm:$0xff]
    %v335 = vld [vmem:[#allocation7 + $0x650] sm:$0xf]
    %v336 = vld [vmem:[#allocation7 + $0x654] sm:$0xff]
    %v337 = vld [vmem:[#allocation7 + $0x65c] sm:$0xff]
    %v338 = vld [vmem:[#allocation7 + $0x664] sm:$0xf]
    %v339 = vld [vmem:[#allocation7 + $0x668] sm:$0xff]
    %v340 = vld [vmem:[#allocation7 + $0x670] sm:$0xff]
    %v341 = vld [vmem:[#allocation7 + $0x678] sm:$0xf]
    %v342 = vld [vmem:[#allocation7 + $0x67c] sm:$0xff]
    %v343 = vld [vmem:[#allocation7 + $0x684] sm:$0xff]
    %v344 = vld [vmem:[#allocation7 + $0x68c] sm:$0xf]
    %v345 = vld [vmem:[#allocation7 + $0x690] sm:$0xff]
    %v346 = vld [vmem:[#allocation7 + $0x698] sm:$0xff]
    %v347 = vld [vmem:[#allocation7 + $0x6a0] sm:$0xf]
    %v348 = vld [vmem:[#allocation7 + $0x6a4] sm:$0xff]
    %v349 = vld [vmem:[#allocation7 + $0x6ac] sm:$0xff]
    %v350 = vld [vmem:[#allocation7 + $0x6b4] sm:$0xf]
    %v351 = vld [vmem:[#allocation7 + $0x6b8] sm:$0xff]
    %v352 = vld [vmem:[#allocation7 + $0x6c0] sm:$0xff]
    %v353 = vld [vmem:[#allocation7 + $0x6c8] sm:$0xf]
    %v354 = vld [vmem:[#allocation7 + $0x6cc] sm:$0xff]
    %v355 = vld [vmem:[#allocation7 + $0x6d4] sm:$0xff]
    %v356 = vld [vmem:[#allocation7 + $0x6dc] sm:$0xf]
    %v357 = vld [vmem:[#allocation7 + $0x6e0] sm:$0xff]
    %v358 = vld [vmem:[#allocation7 + $0x6e8] sm:$0xff]
    %v359 = vld [vmem:[#allocation7 + $0x6f0] sm:$0xf]
    %v360 = vld [vmem:[#allocation7 + $0x6f4] sm:$0xff]
    %v361 = vld [vmem:[#allocation7 + $0x6fc] sm:$0xff]
    %v362 = vld [vmem:[#allocation7 + $0x704] sm:$0xf]
    %v363 = vld [vmem:[#allocation7 + $0x708] sm:$0xff]
    %v364 = vld [vmem:[#allocation7 + $0x710] sm:$0xff]
    %v365 = vld [vmem:[#allocation7 + $0x718] sm:$0xf]
    %v366 = vld [vmem:[#allocation7 + $0x71c] sm:$0xff]
    %v367 = vld [vmem:[#allocation7 + $0x724] sm:$0xff]
    %v368 = vld [vmem:[#allocation7 + $0x72c] sm:$0xf]
    %v369 = vld [vmem:[#allocation7 + $0x730] sm:$0xff]
    %v370 = vld [vmem:[#allocation7 + $0x738] sm:$0xff]
    %v371 = vld [vmem:[#allocation7 + $0x740] sm:$0xf]
    %v372 = vld [vmem:[#allocation7 + $0x744] sm:$0xff]
    %v373 = vld [vmem:[#allocation7 + $0x74c] sm:$0xff]
    %v374 = vld [vmem:[#allocation7 + $0x754] sm:$0xf]
    %v375 = vld [vmem:[#allocation7 + $0x758] sm:$0xff]
    %v376 = vld [vmem:[#allocation7 + $0x760] sm:$0xff]
    %v377 = vld [vmem:[#allocation7 + $0x768] sm:$0xf]
    %v378 = vld [vmem:[#allocation7 + $0x76c] sm:$0xff]
    %v379 = vld [vmem:[#allocation7 + $0x774] sm:$0xff]
    %v380 = vld [vmem:[#allocation7 + $0x77c] sm:$0xf]
    %v381 = vld [vmem:[#allocation7 + $0x780] sm:$0xff]
    %v382 = vld [vmem:[#allocation7 + $0x788] sm:$0xff]
    %v383 = vld [vmem:[#allocation7 + $0x790] sm:$0xf]
    %v384 = vld [vmem:[#allocation7 + $0x794] sm:$0xff]
    %v385 = vld [vmem:[#allocation7 + $0x79c] sm:$0xff]
    %v386 = vld [vmem:[#allocation7 + $0x7a4] sm:$0xf]
    %v387 = vld [vmem:[#allocation7 + $0x7a8] sm:$0xff]
    %v388 = vld [vmem:[#allocation7 + $0x7b0] sm:$0xff]
    %v389 = vld [vmem:[#allocation7 + $0x7b8] sm:$0xf]
    %v390 = vld [vmem:[#allocation7 + $0x7bc] sm:$0xff]
    %v391 = vld [vmem:[#allocation7 + $0x7c4] sm:$0xff]
    %v392 = vld [vmem:[#allocation7 + $0x7cc] sm:$0xf]
    %v393 = vld [vmem:[#allocation7 + $0x7d0] sm:$0xff]
    %v394 = vld [vmem:[#allocation7 + $0x7d8] sm:$0xff]
    %v395 = vld [vmem:[#allocation7 + $0x7e0] sm:$0xf]
    %v396 = vld [vmem:[#allocation7 + $0x7e4] sm:$0xff]
    %v397 = vld [vmem:[#allocation7 + $0x7ec] sm:$0xff]
    %v398 = vld [vmem:[#allocation7 + $0x7f4] sm:$0xf]
    %v399 = vld [vmem:[#allocation7 + $0x7f8] sm:$0xff]
    %v400 = vld [vmem:[#allocation7 + $0x800] sm:$0xff]
    %v401 = vld [vmem:[#allocation7 + $0x808] sm:$0xf]
    %v402 = vld [vmem:[#allocation7 + $0x80c] sm:$0xff]
    %v403 = vld [vmem:[#allocation7 + $0x814] sm:$0xff]
    %v404 = vld [vmem:[#allocation7 + $0x81c] sm:$0xf]
    %v405 = vld [vmem:[#allocation7 + $0x820] sm:$0xff]
    %v406 = vld [vmem:[#allocation7 + $0x828] sm:$0xff]
    %v407 = vld [vmem:[#allocation7 + $0x830] sm:$0xf]
    %v408 = vld [vmem:[#allocation7 + $0x834] sm:$0xff]
    %v409 = vld [vmem:[#allocation7 + $0x83c] sm:$0xff]
    %v410 = vld [vmem:[#allocation7 + $0x844] sm:$0xf]
    %v411 = vld [vmem:[#allocation7 + $0x848] sm:$0xff]
    %v412 = vld [vmem:[#allocation7 + $0x850] sm:$0xff]
    %v413 = vld [vmem:[#allocation7 + $0x858] sm:$0xf]
    %v414 = vld [vmem:[#allocation7 + $0x85c] sm:$0xff]
    %v415 = vld [vmem:[#allocation7 + $0x864] sm:$0xff]
    %v416 = vld [vmem:[#allocation7 + $0x86c] sm:$0xf]
    %v417 = vld [vmem:[#allocation7 + $0x870] sm:$0xff]
    %v418 = vld [vmem:[#allocation7 + $0x878] sm:$0xff]
    %v419 = vld [vmem:[#allocation7 + $0x880] sm:$0xf]
    %v420 = vld [vmem:[#allocation7 + $0x884] sm:$0xff]
    %v421 = vld [vmem:[#allocation7 + $0x88c] sm:$0xff]
    %v422 = vld [vmem:[#allocation7 + $0x894] sm:$0xf]
    %v423 = vld [vmem:[#allocation7 + $0x898] sm:$0xff]
    %v424 = vld [vmem:[#allocation7 + $0x8a0] sm:$0xff]
    %v425 = vld [vmem:[#allocation7 + $0x8a8] sm:$0xf]
    %v426 = vld [vmem:[#allocation7 + $0x8ac] sm:$0xff]
    %v427 = vld [vmem:[#allocation7 + $0x8b4] sm:$0xff]
    %v428 = vld [vmem:[#allocation7 + $0x8bc] sm:$0xf]
    %v429 = vld [vmem:[#allocation7 + $0x8c0] sm:$0xff]
    %v430 = vld [vmem:[#allocation7 + $0x8c8] sm:$0xff]
    %v431 = vld [vmem:[#allocation7 + $0x8d0] sm:$0xf]
    %v432 = vld [vmem:[#allocation7 + $0x8d4] sm:$0xff]
    %v433 = vld [vmem:[#allocation7 + $0x8dc] sm:$0xff]
    %v434 = vld [vmem:[#allocation7 + $0x8e4] sm:$0xf]
    %v435 = vld [vmem:[#allocation7 + $0x8e8] sm:$0xff]
    %v436 = vld [vmem:[#allocation7 + $0x8f0] sm:$0xff]
    %v437 = vld [vmem:[#allocation7 + $0x8f8] sm:$0xf]
    %v438 = vld [vmem:[#allocation7 + $0x8fc] sm:$0xff]
    %v439 = vld [vmem:[#allocation7 + $0x904] sm:$0xff]
    %v440 = vld [vmem:[#allocation7 + $0x90c] sm:$0xf]
    %v441 = vld [vmem:[#allocation7 + $0x910] sm:$0xff]
    %v442 = vld [vmem:[#allocation7 + $0x918] sm:$0xff]
    %v443 = vld [vmem:[#allocation7 + $0x920] sm:$0xf]
    %v444 = vld [vmem:[#allocation7 + $0x924] sm:$0xff]
    %v445 = vld [vmem:[#allocation7 + $0x92c] sm:$0xff]
    %v446 = vld [vmem:[#allocation7 + $0x934] sm:$0xf]
    %v447 = vld [vmem:[#allocation7 + $0x938] sm:$0xff]
    %v448 = vld [vmem:[#allocation7 + $0x940] sm:$0xff]
    %v449 = vld [vmem:[#allocation7 + $0x948] sm:$0xf]
    %v450 = vld [vmem:[#allocation7 + $0x94c] sm:$0xff]
    %v451 = vld [vmem:[#allocation7 + $0x954] sm:$0xff]
    %v452 = vld [vmem:[#allocation7 + $0x95c] sm:$0xf]
    %v453 = vld [vmem:[#allocation7 + $0x960] sm:$0xff]
    %v454 = vld [vmem:[#allocation7 + $0x968] sm:$0xff]
    %v455 = vld [vmem:[#allocation7 + $0x970] sm:$0xf]
    %v456 = vld [vmem:[#allocation7 + $0x974] sm:$0xff]
    %v457 = vld [vmem:[#allocation7 + $0x97c] sm:$0xff]
    %v458 = vld [vmem:[#allocation7 + $0x984] sm:$0xf]
    %v459 = vld [vmem:[#allocation7 + $0x988] sm:$0xff]
    %v460 = vld [vmem:[#allocation7 + $0x990] sm:$0xff]
    %v461 = vld [vmem:[#allocation7 + $0x998] sm:$0xf]
    %v462 = vld [vmem:[#allocation7 + $0x99c] sm:$0xff]
    %v463 = vld [vmem:[#allocation7 + $0x9a4] sm:$0xff]
    %v464 = vld [vmem:[#allocation7 + $0x9ac] sm:$0xf]
    %v465 = vld [vmem:[#allocation7 + $0x9b0] sm:$0xff]
    %v466 = vld [vmem:[#allocation7 + $0x9b8] sm:$0xff]
    %v467 = vld [vmem:[#allocation7 + $0x9c0] sm:$0xf]
    %v468 = vld [vmem:[#allocation7 + $0x9c4] sm:$0xff]
    %v469 = vld [vmem:[#allocation7 + $0x9cc] sm:$0xff]
    %v470 = vld [vmem:[#allocation7 + $0x9d4] sm:$0xf]
    %v471 = vld [vmem:[#allocation7 + $0x9d8] sm:$0xff]
    %v472 = vld [vmem:[#allocation7 + $0x9e0] sm:$0xff]
    %v473 = vld [vmem:[#allocation7 + $0x9e8] sm:$0xf]
    %v474 = vld [vmem:[#allocation7 + $0x9ec] sm:$0xff]
    %v475 = vld [vmem:[#allocation7 + $0x9f4] sm:$0xff]
    %v476 = vld [vmem:[#allocation7 + $0x9fc] sm:$0xf]
    %v477 = vld [vmem:[#allocation8] sm:$0xff]
    %v478 = vld [vmem:[#allocation8 + $0x8] sm:$0xff]
    %v479 = vld [vmem:[#allocation8 + $0x10] sm:$0xf]
    %v480 = vld [vmem:[#allocation8 + $0x14] sm:$0xff]
    %v481 = vld [vmem:[#allocation8 + $0x1c] sm:$0xff]
    %v482 = vld [vmem:[#allocation8 + $0x24] sm:$0xf]
    %v483 = vld [vmem:[#allocation8 + $0x28] sm:$0xff]
    %v484 = vld [vmem:[#allocation8 + $0x30] sm:$0xff]
    %v485 = vld [vmem:[#allocation8 + $0x38] sm:$0xf]
    %v486 = vld [vmem:[#allocation8 + $0x3c] sm:$0xff]
    %v487 = vld [vmem:[#allocation8 + $0x44] sm:$0xff]
    %v488 = vld [vmem:[#allocation8 + $0x4c] sm:$0xf]
    %v489 = vld [vmem:[#allocation8 + $0x50] sm:$0xff]
    %v490 = vld [vmem:[#allocation8 + $0x58] sm:$0xff]
    %v491 = vld [vmem:[#allocation8 + $0x60] sm:$0xf]
    %v492 = vld [vmem:[#allocation8 + $0x64] sm:$0xff]
    %v493 = vld [vmem:[#allocation8 + $0x6c] sm:$0xff]
    %v494 = vld [vmem:[#allocation8 + $0x74] sm:$0xf]
    %v495 = vld [vmem:[#allocation8 + $0x78] sm:$0xff]
    %v496 = vld [vmem:[#allocation8 + $0x80] sm:$0xff]
    %v497 = vld [vmem:[#allocation8 + $0x88] sm:$0xf]
    %v498 = vld [vmem:[#allocation8 + $0x8c] sm:$0xff]
    %v499 = vld [vmem:[#allocation8 + $0x94] sm:$0xff]
    %v500 = vld [vmem:[#allocation8 + $0x9c] sm:$0xf]
    %v501 = vld [vmem:[#allocation8 + $0xa0] sm:$0xff]
    %v502 = vld [vmem:[#allocation8 + $0xa8] sm:$0xff]
    %v503 = vld [vmem:[#allocation8 + $0xb0] sm:$0xf]
    %v504 = vld [vmem:[#allocation8 + $0xb4] sm:$0xff]
    %v505 = vld [vmem:[#allocation8 + $0xbc] sm:$0xff]
    %v506 = vld [vmem:[#allocation8 + $0xc4] sm:$0xf]
    %v507 = vld [vmem:[#allocation8 + $0xc8] sm:$0xff]
    %v508 = vld [vmem:[#allocation8 + $0xd0] sm:$0xff]
    %v509 = vld [vmem:[#allocation8 + $0xd8] sm:$0xf]
    %v510 = vld [vmem:[#allocation8 + $0xdc] sm:$0xff]
    %v511 = vld [vmem:[#allocation8 + $0xe4] sm:$0xff]
    %v512 = vld [vmem:[#allocation8 + $0xec] sm:$0xf]
    %v513 = vld [vmem:[#allocation8 + $0xf0] sm:$0xff]
    %v514 = vld [vmem:[#allocation8 + $0xf8] sm:$0xff]
    %v515 = vld [vmem:[#allocation8 + $0x100] sm:$0xf]
    %v516 = vld [vmem:[#allocation8 + $0x104] sm:$0xff]
    %v517 = vld [vmem:[#allocation8 + $0x10c] sm:$0xff]
    %v518 = vld [vmem:[#allocation8 + $0x114] sm:$0xf]
    %v519 = vld [vmem:[#allocation8 + $0x118] sm:$0xff]
    %v520 = vld [vmem:[#allocation8 + $0x120] sm:$0xff]
    %v521 = vld [vmem:[#allocation8 + $0x128] sm:$0xf]
    %v522 = vld [vmem:[#allocation8 + $0x12c] sm:$0xff]
    %v523 = vld [vmem:[#allocation8 + $0x134] sm:$0xff]
    %v524 = vld [vmem:[#allocation8 + $0x13c] sm:$0xf]
    %v525 = vld [vmem:[#allocation8 + $0x140] sm:$0xff]
    %v526 = vld [vmem:[#allocation8 + $0x148] sm:$0xff]
    %v527 = vld [vmem:[#allocation8 + $0x150] sm:$0xf]
    %v528 = vld [vmem:[#allocation8 + $0x154] sm:$0xff]
    %v529 = vld [vmem:[#allocation8 + $0x15c] sm:$0xff]
    %v530 = vld [vmem:[#allocation8 + $0x164] sm:$0xf]
    %v531 = vld [vmem:[#allocation8 + $0x168] sm:$0xff]
    %v532 = vld [vmem:[#allocation8 + $0x170] sm:$0xff]
    %v533 = vld [vmem:[#allocation8 + $0x178] sm:$0xf]
    %v534 = vld [vmem:[#allocation8 + $0x17c] sm:$0xff]
    %v535 = vld [vmem:[#allocation8 + $0x184] sm:$0xff]
    %v536 = vld [vmem:[#allocation8 + $0x18c] sm:$0xf]
    %v537 = vld [vmem:[#allocation8 + $0x190] sm:$0xff]
    %v538 = vld [vmem:[#allocation8 + $0x198] sm:$0xff]
    %v539 = vld [vmem:[#allocation8 + $0x1a0] sm:$0xf]
    %v540 = vld [vmem:[#allocation8 + $0x1a4] sm:$0xff]
    %v541 = vld [vmem:[#allocation8 + $0x1ac] sm:$0xff]
    %v542 = vld [vmem:[#allocation8 + $0x1b4] sm:$0xf]
    %v543 = vld [vmem:[#allocation8 + $0x1b8] sm:$0xff]
    %v544 = vld [vmem:[#allocation8 + $0x1c0] sm:$0xff]
    %v545 = vld [vmem:[#allocation8 + $0x1c8] sm:$0xf]
    %v546 = vld [vmem:[#allocation8 + $0x1cc] sm:$0xff]
    %v547 = vld [vmem:[#allocation8 + $0x1d4] sm:$0xff]
    %v548 = vld [vmem:[#allocation8 + $0x1dc] sm:$0xf]
    %v549 = vld [vmem:[#allocation8 + $0x1e0] sm:$0xff]
    %v550 = vld [vmem:[#allocation8 + $0x1e8] sm:$0xff]
    %v551 = vld [vmem:[#allocation8 + $0x1f0] sm:$0xf]
    %v552 = vld [vmem:[#allocation8 + $0x1f4] sm:$0xff]
    %v553 = vld [vmem:[#allocation8 + $0x1fc] sm:$0xff]
    %v554 = vld [vmem:[#allocation8 + $0x204] sm:$0xf]
    %v555 = vld [vmem:[#allocation8 + $0x208] sm:$0xff]
    %v556 = vld [vmem:[#allocation8 + $0x210] sm:$0xff]
    %v557 = vld [vmem:[#allocation8 + $0x218] sm:$0xf]
    %v558 = vld [vmem:[#allocation8 + $0x21c] sm:$0xff]
    %v559 = vld [vmem:[#allocation8 + $0x224] sm:$0xff]
    %v560 = vld [vmem:[#allocation8 + $0x22c] sm:$0xf]
    %v561 = vld [vmem:[#allocation8 + $0x230] sm:$0xff]
    %v562 = vld [vmem:[#allocation8 + $0x238] sm:$0xff]
    %v563 = vld [vmem:[#allocation8 + $0x240] sm:$0xf]
    %v564 = vld [vmem:[#allocation8 + $0x244] sm:$0xff]
    %v565 = vld [vmem:[#allocation8 + $0x24c] sm:$0xff]
    %v566 = vld [vmem:[#allocation8 + $0x254] sm:$0xf]
    %v567 = vld [vmem:[#allocation8 + $0x258] sm:$0xff]
    %v568 = vld [vmem:[#allocation8 + $0x260] sm:$0xff]
    %v569 = vld [vmem:[#allocation8 + $0x268] sm:$0xf]
    %v570 = vld [vmem:[#allocation8 + $0x26c] sm:$0xff]
    %v571 = vld [vmem:[#allocation8 + $0x274] sm:$0xff]
    %v572 = vld [vmem:[#allocation8 + $0x27c] sm:$0xf]
    %v573 = vld [vmem:[#allocation8 + $0x280] sm:$0xff]
    %v574 = vld [vmem:[#allocation8 + $0x288] sm:$0xff]
    %v575 = vld [vmem:[#allocation8 + $0x290] sm:$0xf]
    %v576 = vld [vmem:[#allocation8 + $0x294] sm:$0xff]
    %v577 = vld [vmem:[#allocation8 + $0x29c] sm:$0xff]
    %v578 = vld [vmem:[#allocation8 + $0x2a4] sm:$0xf]
    %v579 = vld [vmem:[#allocation8 + $0x2a8] sm:$0xff]
    %v580 = vld [vmem:[#allocation8 + $0x2b0] sm:$0xff]
    %v581 = vld [vmem:[#allocation8 + $0x2b8] sm:$0xf]
    %v582 = vld [vmem:[#allocation8 + $0x2bc] sm:$0xff]
    %v583 = vld [vmem:[#allocation8 + $0x2c4] sm:$0xff]
    %v584 = vld [vmem:[#allocation8 + $0x2cc] sm:$0xf]
    %v585 = vld [vmem:[#allocation8 + $0x2d0] sm:$0xff]
    %v586 = vld [vmem:[#allocation8 + $0x2d8] sm:$0xff]
    %v587 = vld [vmem:[#allocation8 + $0x2e0] sm:$0xf]
    %v588 = vld [vmem:[#allocation8 + $0x2e4] sm:$0xff]
    %v589 = vld [vmem:[#allocation8 + $0x2ec] sm:$0xff]
    %v590 = vld [vmem:[#allocation8 + $0x2f4] sm:$0xf]
    %v591 = vld [vmem:[#allocation8 + $0x2f8] sm:$0xff]
    %v592 = vld [vmem:[#allocation8 + $0x300] sm:$0xff]
    %v593 = vld [vmem:[#allocation8 + $0x308] sm:$0xf]
    %v594 = vld [vmem:[#allocation8 + $0x30c] sm:$0xff]
    %v595 = vld [vmem:[#allocation8 + $0x314] sm:$0xff]
    %v596 = vld [vmem:[#allocation8 + $0x31c] sm:$0xf]
    %v597 = vld [vmem:[#allocation8 + $0x320] sm:$0xff]
    %v598 = vld [vmem:[#allocation8 + $0x328] sm:$0xff]
    %v599 = vld [vmem:[#allocation8 + $0x330] sm:$0xf]
    %v600 = vld [vmem:[#allocation8 + $0x334] sm:$0xff]
    %v601 = vld [vmem:[#allocation8 + $0x33c] sm:$0xff]
    %v602 = vld [vmem:[#allocation8 + $0x344] sm:$0xf]
    %v603 = vld [vmem:[#allocation8 + $0x348] sm:$0xff]
    %v604 = vld [vmem:[#allocation8 + $0x350] sm:$0xff]
    %v605 = vld [vmem:[#allocation8 + $0x358] sm:$0xf]
    %v606 = vld [vmem:[#allocation8 + $0x35c] sm:$0xff]
    %v607 = vld [vmem:[#allocation8 + $0x364] sm:$0xff]
    %v608 = vld [vmem:[#allocation8 + $0x36c] sm:$0xf]
    %v609 = vld [vmem:[#allocation8 + $0x370] sm:$0xff]
    %v610 = vld [vmem:[#allocation8 + $0x378] sm:$0xff]
    %v611 = vld [vmem:[#allocation8 + $0x380] sm:$0xf]
    %v612 = vld [vmem:[#allocation8 + $0x384] sm:$0xff]
    %v613 = vld [vmem:[#allocation8 + $0x38c] sm:$0xff]
    %v614 = vld [vmem:[#allocation8 + $0x394] sm:$0xf]
    %v615 = vld [vmem:[#allocation8 + $0x398] sm:$0xff]
    %v616 = vld [vmem:[#allocation8 + $0x3a0] sm:$0xff]
    %v617 = vld [vmem:[#allocation8 + $0x3a8] sm:$0xf]
    %v618 = vld [vmem:[#allocation8 + $0x3ac] sm:$0xff]
    %v619 = vld [vmem:[#allocation8 + $0x3b4] sm:$0xff]
    %v620 = vld [vmem:[#allocation8 + $0x3bc] sm:$0xf]
    %v621 = vld [vmem:[#allocation8 + $0x3c0] sm:$0xff]
    %v622 = vld [vmem:[#allocation8 + $0x3c8] sm:$0xff]
    %v623 = vld [vmem:[#allocation8 + $0x3d0] sm:$0xf]
    %v624 = vld [vmem:[#allocation8 + $0x3d4] sm:$0xff]
    %v625 = vld [vmem:[#allocation8 + $0x3dc] sm:$0xff]
    %v626 = vld [vmem:[#allocation8 + $0x3e4] sm:$0xf]
    %v627 = vld [vmem:[#allocation8 + $0x3e8] sm:$0xff]
    %v628 = vld [vmem:[#allocation8 + $0x3f0] sm:$0xff]
    %v629 = vld [vmem:[#allocation8 + $0x3f8] sm:$0xf]
    %v630 = vld [vmem:[#allocation8 + $0x3fc] sm:$0xff]
    %v631 = vld [vmem:[#allocation8 + $0x404] sm:$0xff]
    %v632 = vld [vmem:[#allocation8 + $0x40c] sm:$0xf]
    %v633 = vld [vmem:[#allocation8 + $0x410] sm:$0xff]
    %v634 = vld [vmem:[#allocation8 + $0x418] sm:$0xff]
    %v635 = vld [vmem:[#allocation8 + $0x420] sm:$0xf]
    %v636 = vld [vmem:[#allocation8 + $0x424] sm:$0xff]
    %v637 = vld [vmem:[#allocation8 + $0x42c] sm:$0xff]
    %v638 = vld [vmem:[#allocation8 + $0x434] sm:$0xf]
    %v639 = vld [vmem:[#allocation8 + $0x438] sm:$0xff]
    %v640 = vld [vmem:[#allocation8 + $0x440] sm:$0xff]
    %v641 = vld [vmem:[#allocation8 + $0x448] sm:$0xf]
    %v642 = vld [vmem:[#allocation8 + $0x44c] sm:$0xff]
    %v643 = vld [vmem:[#allocation8 + $0x454] sm:$0xff]
    %v644 = vld [vmem:[#allocation8 + $0x45c] sm:$0xf]
    %v645 = vld [vmem:[#allocation8 + $0x460] sm:$0xff]
    %v646 = vld [vmem:[#allocation8 + $0x468] sm:$0xff]
    %v647 = vld [vmem:[#allocation8 + $0x470] sm:$0xf]
    %v648 = vld [vmem:[#allocation8 + $0x474] sm:$0xff]
    %v649 = vld [vmem:[#allocation8 + $0x47c] sm:$0xff]
    %v650 = vld [vmem:[#allocation8 + $0x484] sm:$0xf]
    %v651 = vld [vmem:[#allocation8 + $0x488] sm:$0xff]
    %v652 = vld [vmem:[#allocation8 + $0x490] sm:$0xff]
    %v653 = vld [vmem:[#allocation8 + $0x498] sm:$0xf]
    %v654 = vld [vmem:[#allocation8 + $0x49c] sm:$0xff]
    %v655 = vld [vmem:[#allocation8 + $0x4a4] sm:$0xff]
    %v656 = vld [vmem:[#allocation8 + $0x4ac] sm:$0xf]
    %v657 = vld [vmem:[#allocation8 + $0x4b0] sm:$0xff]
    %v658 = vld [vmem:[#allocation8 + $0x4b8] sm:$0xff]
    %v659 = vld [vmem:[#allocation8 + $0x4c0] sm:$0xf]
    %v660 = vld [vmem:[#allocation8 + $0x4c4] sm:$0xff]
    %v661 = vld [vmem:[#allocation8 + $0x4cc] sm:$0xff]
    %v662 = vld [vmem:[#allocation8 + $0x4d4] sm:$0xf]
    %v663 = vld [vmem:[#allocation8 + $0x4d8] sm:$0xff]
    %v664 = vld [vmem:[#allocation8 + $0x4e0] sm:$0xff]
    %v665 = vld [vmem:[#allocation8 + $0x4e8] sm:$0xf]
    %v666 = vld [vmem:[#allocation8 + $0x4ec] sm:$0xff]
    %v667 = vld [vmem:[#allocation8 + $0x4f4] sm:$0xff]
    %v668 = vld [vmem:[#allocation8 + $0x4fc] sm:$0xf]
    %v669 = vld [vmem:[#allocation8 + $0x500] sm:$0xff]
    %v670 = vld [vmem:[#allocation8 + $0x508] sm:$0xff]
    %v671 = vld [vmem:[#allocation8 + $0x510] sm:$0xf]
    %v672 = vld [vmem:[#allocation8 + $0x514] sm:$0xff]
    %v673 = vld [vmem:[#allocation8 + $0x51c] sm:$0xff]
    %v674 = vld [vmem:[#allocation8 + $0x524] sm:$0xf]
    %v675 = vld [vmem:[#allocation8 + $0x528] sm:$0xff]
    %v676 = vld [vmem:[#allocation8 + $0x530] sm:$0xff]
    %v677 = vld [vmem:[#allocation8 + $0x538] sm:$0xf]
    %v678 = vld [vmem:[#allocation8 + $0x53c] sm:$0xff]
    %v679 = vld [vmem:[#allocation8 + $0x544] sm:$0xff]
    %v680 = vld [vmem:[#allocation8 + $0x54c] sm:$0xf]
    %v681 = vld [vmem:[#allocation8 + $0x550] sm:$0xff]
    %v682 = vld [vmem:[#allocation8 + $0x558] sm:$0xff]
    %v683 = vld [vmem:[#allocation8 + $0x560] sm:$0xf]
    %v684 = vld [vmem:[#allocation8 + $0x564] sm:$0xff]
    %v685 = vld [vmem:[#allocation8 + $0x56c] sm:$0xff]
    %v686 = vld [vmem:[#allocation8 + $0x574] sm:$0xf]
    %v687 = vld [vmem:[#allocation8 + $0x578] sm:$0xff]
    %v688 = vld [vmem:[#allocation8 + $0x580] sm:$0xff]
    %v689 = vld [vmem:[#allocation8 + $0x588] sm:$0xf]
    %v690 = vld [vmem:[#allocation8 + $0x58c] sm:$0xff]
    %v691 = vld [vmem:[#allocation8 + $0x594] sm:$0xff]
    %v692 = vld [vmem:[#allocation8 + $0x59c] sm:$0xf]
    %v693 = vld [vmem:[#allocation8 + $0x5a0] sm:$0xff]
    %v694 = vld [vmem:[#allocation8 + $0x5a8] sm:$0xff]
    %v695 = vld [vmem:[#allocation8 + $0x5b0] sm:$0xf]
    %v696 = vld [vmem:[#allocation8 + $0x5b4] sm:$0xff]
    %v697 = vld [vmem:[#allocation8 + $0x5bc] sm:$0xff]
    %v698 = vld [vmem:[#allocation8 + $0x5c4] sm:$0xf]
    %v699 = vld [vmem:[#allocation8 + $0x5c8] sm:$0xff]
    %v700 = vld [vmem:[#allocation8 + $0x5d0] sm:$0xff]
    %v701 = vld [vmem:[#allocation8 + $0x5d8] sm:$0xf]
    %v702 = vld [vmem:[#allocation8 + $0x5dc] sm:$0xff]
    %v703 = vld [vmem:[#allocation8 + $0x5e4] sm:$0xff]
    %v704 = vld [vmem:[#allocation8 + $0x5ec] sm:$0xf]
    %v705 = vld [vmem:[#allocation8 + $0x5f0] sm:$0xff]
    %v706 = vld [vmem:[#allocation8 + $0x5f8] sm:$0xff]
    %v707 = vld [vmem:[#allocation8 + $0x600] sm:$0xf]
    %v708 = vld [vmem:[#allocation8 + $0x604] sm:$0xff]
    %v709 = vld [vmem:[#allocation8 + $0x60c] sm:$0xff]
    %v710 = vld [vmem:[#allocation8 + $0x614] sm:$0xf]
    %v711 = vld [vmem:[#allocation8 + $0x618] sm:$0xff]
    %v712 = vld [vmem:[#allocation8 + $0x620] sm:$0xff]
    %v713 = vld [vmem:[#allocation8 + $0x628] sm:$0xf]
    %v714 = vld [vmem:[#allocation8 + $0x62c] sm:$0xff]
    %v715 = vld [vmem:[#allocation8 + $0x634] sm:$0xff]
    %v716 = vld [vmem:[#allocation8 + $0x63c] sm:$0xf]
    %v717 = vld [vmem:[#allocation8 + $0x640] sm:$0xff]
    %v718 = vld [vmem:[#allocation8 + $0x648] sm:$0xff]
    %v719 = vld [vmem:[#allocation8 + $0x650] sm:$0xf]
    %v720 = vld [vmem:[#allocation8 + $0x654] sm:$0xff]
    %v721 = vld [vmem:[#allocation8 + $0x65c] sm:$0xff]
    %v722 = vld [vmem:[#allocation8 + $0x664] sm:$0xf]
    %v723 = vld [vmem:[#allocation8 + $0x668] sm:$0xff]
    %v724 = vld [vmem:[#allocation8 + $0x670] sm:$0xff]
    %v725 = vld [vmem:[#allocation8 + $0x678] sm:$0xf]
    %v726 = vld [vmem:[#allocation8 + $0x67c] sm:$0xff]
    %v727 = vld [vmem:[#allocation8 + $0x684] sm:$0xff]
    %v728 = vld [vmem:[#allocation8 + $0x68c] sm:$0xf]
    %v729 = vld [vmem:[#allocation8 + $0x690] sm:$0xff]
    %v730 = vld [vmem:[#allocation8 + $0x698] sm:$0xff]
    %v731 = vld [vmem:[#allocation8 + $0x6a0] sm:$0xf]
    %v732 = vld [vmem:[#allocation8 + $0x6a4] sm:$0xff]
    %v733 = vld [vmem:[#allocation8 + $0x6ac] sm:$0xff]
    %v734 = vld [vmem:[#allocation8 + $0x6b4] sm:$0xf]
    %v735 = vld [vmem:[#allocation8 + $0x6b8] sm:$0xff]
    %v736 = vld [vmem:[#allocation8 + $0x6c0] sm:$0xff]
    %v737 = vld [vmem:[#allocation8 + $0x6c8] sm:$0xf]
    %v738 = vld [vmem:[#allocation8 + $0x6cc] sm:$0xff]
    %v739 = vld [vmem:[#allocation8 + $0x6d4] sm:$0xff]
    %v740 = vld [vmem:[#allocation8 + $0x6dc] sm:$0xf]
    %v741 = vld [vmem:[#allocation8 + $0x6e0] sm:$0xff]
    %v742 = vld [vmem:[#allocation8 + $0x6e8] sm:$0xff]
    %v743 = vld [vmem:[#allocation8 + $0x6f0] sm:$0xf]
    %v744 = vld [vmem:[#allocation8 + $0x6f4] sm:$0xff]
    %v745 = vld [vmem:[#allocation8 + $0x6fc] sm:$0xff]
    %v746 = vld [vmem:[#allocation8 + $0x704] sm:$0xf]
    %v747 = vld [vmem:[#allocation8 + $0x708] sm:$0xff]
    %v748 = vld [vmem:[#allocation8 + $0x710] sm:$0xff]
    %v749 = vld [vmem:[#allocation8 + $0x718] sm:$0xf]
    %v750 = vld [vmem:[#allocation8 + $0x71c] sm:$0xff]
    %v751 = vld [vmem:[#allocation8 + $0x724] sm:$0xff]
    %v752 = vld [vmem:[#allocation8 + $0x72c] sm:$0xf]
    %v753 = vld [vmem:[#allocation8 + $0x730] sm:$0xff]
    %v754 = vld [vmem:[#allocation8 + $0x738] sm:$0xff]
    %v755 = vld [vmem:[#allocation8 + $0x740] sm:$0xf]
    %v756 = vld [vmem:[#allocation8 + $0x744] sm:$0xff]
    %v757 = vld [vmem:[#allocation8 + $0x74c] sm:$0xff]
    %v758 = vld [vmem:[#allocation8 + $0x754] sm:$0xf]
    %v759 = vld [vmem:[#allocation8 + $0x758] sm:$0xff]
    %v760 = vld [vmem:[#allocation8 + $0x760] sm:$0xff]
    %v761 = vld [vmem:[#allocation8 + $0x768] sm:$0xf]
    %v762 = vld [vmem:[#allocation8 + $0x76c] sm:$0xff]
    %v763 = vld [vmem:[#allocation8 + $0x774] sm:$0xff]
    %v764 = vld [vmem:[#allocation8 + $0x77c] sm:$0xf]
    %v765 = vld [vmem:[#allocation8 + $0x780] sm:$0xff]
    %v766 = vld [vmem:[#allocation8 + $0x788] sm:$0xff]
    %v767 = vld [vmem:[#allocation8 + $0x790] sm:$0xf]
    %v768 = vld [vmem:[#allocation8 + $0x794] sm:$0xff]
    %v769 = vld [vmem:[#allocation8 + $0x79c] sm:$0xff]
    %v770 = vld [vmem:[#allocation8 + $0x7a4] sm:$0xf]
    %v771 = vld [vmem:[#allocation8 + $0x7a8] sm:$0xff]
    %v772 = vld [vmem:[#allocation8 + $0x7b0] sm:$0xff]
    %v773 = vld [vmem:[#allocation8 + $0x7b8] sm:$0xf]
    %v774 = vld [vmem:[#allocation8 + $0x7bc] sm:$0xff]
    %v775 = vld [vmem:[#allocation8 + $0x7c4] sm:$0xff]
    %v776 = vld [vmem:[#allocation8 + $0x7cc] sm:$0xf]
    %v777 = vld [vmem:[#allocation8 + $0x7d0] sm:$0xff]
    %v778 = vld [vmem:[#allocation8 + $0x7d8] sm:$0xff]
    %v779 = vld [vmem:[#allocation8 + $0x7e0] sm:$0xf]
    %v780 = vld [vmem:[#allocation8 + $0x7e4] sm:$0xff]
    %v781 = vld [vmem:[#allocation8 + $0x7ec] sm:$0xff]
    %v782 = vld [vmem:[#allocation8 + $0x7f4] sm:$0xf]
    %v783 = vld [vmem:[#allocation8 + $0x7f8] sm:$0xff]
    %v784 = vld [vmem:[#allocation8 + $0x800] sm:$0xff]
    %v785 = vld [vmem:[#allocation8 + $0x808] sm:$0xf]
    %v786 = vld [vmem:[#allocation8 + $0x80c] sm:$0xff]
    %v787 = vld [vmem:[#allocation8 + $0x814] sm:$0xff]
    %v788 = vld [vmem:[#allocation8 + $0x81c] sm:$0xf]
    %v789 = vld [vmem:[#allocation8 + $0x820] sm:$0xff]
    %v790 = vld [vmem:[#allocation8 + $0x828] sm:$0xff]
    %v791 = vld [vmem:[#allocation8 + $0x830] sm:$0xf]
    %v792 = vld [vmem:[#allocation8 + $0x834] sm:$0xff]
    %v793 = vld [vmem:[#allocation8 + $0x83c] sm:$0xff]
    %v794 = vld [vmem:[#allocation8 + $0x844] sm:$0xf]
    %v795 = vld [vmem:[#allocation8 + $0x848] sm:$0xff]
    %v796 = vld [vmem:[#allocation8 + $0x850] sm:$0xff]
    %v797 = vld [vmem:[#allocation8 + $0x858] sm:$0xf]
    %v798 = vld [vmem:[#allocation8 + $0x85c] sm:$0xff]
    %v799 = vld [vmem:[#allocation8 + $0x864] sm:$0xff]
    %v800 = vld [vmem:[#allocation8 + $0x86c] sm:$0xf]
    %v801 = vld [vmem:[#allocation8 + $0x870] sm:$0xff]
    %v802 = vld [vmem:[#allocation8 + $0x878] sm:$0xff]
    %v803 = vld [vmem:[#allocation8 + $0x880] sm:$0xf]
    %v804 = vld [vmem:[#allocation8 + $0x884] sm:$0xff]
    %v805 = vld [vmem:[#allocation8 + $0x88c] sm:$0xff]
    %v806 = vld [vmem:[#allocation8 + $0x894] sm:$0xf]
    %v807 = vld [vmem:[#allocation8 + $0x898] sm:$0xff]
    %v808 = vld [vmem:[#allocation8 + $0x8a0] sm:$0xff]
    %v809 = vld [vmem:[#allocation8 + $0x8a8] sm:$0xf]
    %v810 = vld [vmem:[#allocation8 + $0x8ac] sm:$0xff]
    %v811 = vld [vmem:[#allocation8 + $0x8b4] sm:$0xff]
    %v812 = vld [vmem:[#allocation8 + $0x8bc] sm:$0xf]
    %v813 = vld [vmem:[#allocation8 + $0x8c0] sm:$0xff]
    %v814 = vld [vmem:[#allocation8 + $0x8c8] sm:$0xff]
    %v815 = vld [vmem:[#allocation8 + $0x8d0] sm:$0xf]
    %v816 = vld [vmem:[#allocation8 + $0x8d4] sm:$0xff]
    %v817 = vld [vmem:[#allocation8 + $0x8dc] sm:$0xff]
    %v818 = vld [vmem:[#allocation8 + $0x8e4] sm:$0xf]
    %v819 = vld [vmem:[#allocation8 + $0x8e8] sm:$0xff]
    %v820 = vld [vmem:[#allocation8 + $0x8f0] sm:$0xff]
    %v821 = vld [vmem:[#allocation8 + $0x8f8] sm:$0xf]
    %v822 = vld [vmem:[#allocation8 + $0x8fc] sm:$0xff]
    %v823 = vld [vmem:[#allocation8 + $0x904] sm:$0xff]
    %v824 = vld [vmem:[#allocation8 + $0x90c] sm:$0xf]
    %v825 = vld [vmem:[#allocation8 + $0x910] sm:$0xff]
    %v826 = vld [vmem:[#allocation8 + $0x918] sm:$0xff]
    %v827 = vld [vmem:[#allocation8 + $0x920] sm:$0xf]
    %v828 = vld [vmem:[#allocation8 + $0x924] sm:$0xff]
    %v829 = vld [vmem:[#allocation8 + $0x92c] sm:$0xff]
    %v830 = vld [vmem:[#allocation8 + $0x934] sm:$0xf]
    %v831 = vld [vmem:[#allocation8 + $0x938] sm:$0xff]
    %v832 = vld [vmem:[#allocation8 + $0x940] sm:$0xff]
    %v833 = vld [vmem:[#allocation8 + $0x948] sm:$0xf]
    %v834 = vld [vmem:[#allocation8 + $0x94c] sm:$0xff]
    %v835 = vld [vmem:[#allocation8 + $0x954] sm:$0xff]
    %v836 = vld [vmem:[#allocation8 + $0x95c] sm:$0xf]
    %v837 = vld [vmem:[#allocation8 + $0x960] sm:$0xff]
    %v838 = vld [vmem:[#allocation8 + $0x968] sm:$0xff]
    %v839 = vld [vmem:[#allocation8 + $0x970] sm:$0xf]
    %v840 = vld [vmem:[#allocation8 + $0x974] sm:$0xff]
    %v841 = vld [vmem:[#allocation8 + $0x97c] sm:$0xff]
    %v842 = vld [vmem:[#allocation8 + $0x984] sm:$0xf]
    %v843 = vld [vmem:[#allocation8 + $0x988] sm:$0xff]
    %v844 = vld [vmem:[#allocation8 + $0x990] sm:$0xff]
    %v845 = vld [vmem:[#allocation8 + $0x998] sm:$0xf]
    %v846 = vld [vmem:[#allocation8 + $0x99c] sm:$0xff]
    %v847 = vld [vmem:[#allocation8 + $0x9a4] sm:$0xff]
    %v848 = vld [vmem:[#allocation8 + $0x9ac] sm:$0xf]
    %v849 = vld [vmem:[#allocation8 + $0x9b0] sm:$0xff]
    %v850 = vld [vmem:[#allocation8 + $0x9b8] sm:$0xff]
    %v851 = vld [vmem:[#allocation8 + $0x9c0] sm:$0xf]
    %v852 = vld [vmem:[#allocation8 + $0x9c4] sm:$0xff]
    %v853 = vld [vmem:[#allocation8 + $0x9cc] sm:$0xff]
    %v854 = vld [vmem:[#allocation8 + $0x9d4] sm:$0xf]
    %v855 = vld [vmem:[#allocation8 + $0x9d8] sm:$0xff]
    %v856 = vld [vmem:[#allocation8 + $0x9e0] sm:$0xff]
    %v857 = vld [vmem:[#allocation8 + $0x9e8] sm:$0xf]
    %v858 = vld [vmem:[#allocation8 + $0x9ec] sm:$0xff]
    %v859 = vld [vmem:[#allocation8 + $0x9f4] sm:$0xff]
    %v860 = vld [vmem:[#allocation8 + $0x9fc] sm:$0xf]
    %v861 = vld [vmem:[#allocation10] sm:$0xff]
    %v862 = vld [vmem:[#allocation10 + $0x8] sm:$0xff]
    %v863 = vld [vmem:[#allocation10 + $0x10] sm:$0xff]
    %v864 = vld [vmem:[#allocation10 + $0x18] sm:$0xff]
    %v865 = vld [vmem:[#allocation10 + $0x20] sm:$0xff]
    %v866 = vld [vmem:[#allocation10 + $0x28] sm:$0xff]
    %v867 = vld [vmem:[#allocation10 + $0x30] sm:$0xff]
    %v868 = vld [vmem:[#allocation10 + $0x38] sm:$0xff]
    %v869 = vld [vmem:[#allocation10 + $0x40] sm:$0xff]
    %v870 = vld [vmem:[#allocation10 + $0x48] sm:$0xff]
    %v871 = vld [vmem:[#allocation10 + $0x50] sm:$0xff]
    %v872 = vld [vmem:[#allocation10 + $0x58] sm:$0xff]
    %v873 = vld [vmem:[#allocation10 + $0x60] sm:$0xff]
    %v874 = vld [vmem:[#allocation10 + $0x68] sm:$0xff]
    %v875 = vld [vmem:[#allocation10 + $0x70] sm:$0xff]
    %v876 = vld [vmem:[#allocation10 + $0x78] sm:$0xff]
    %v877 = vld [vmem:[#allocation10 + $0x80] sm:$0xff]
    %v878 = vld [vmem:[#allocation10 + $0x88] sm:$0xff]
    %v879 = vld [vmem:[#allocation10 + $0x90] sm:$0xff]
    %v880 = vld [vmem:[#allocation10 + $0x98] sm:$0xff]
    %v881 = vld [vmem:[#allocation10 + $0xa0] sm:$0xff]
    %v882 = vld [vmem:[#allocation10 + $0xa8] sm:$0xff]
    %v883 = vld [vmem:[#allocation10 + $0xb0] sm:$0xff]
    %v884 = vld [vmem:[#allocation10 + $0xb8] sm:$0xff]
    %v885 = vld [vmem:[#allocation10 + $0xc0] sm:$0xff]
    %v886 = vld [vmem:[#allocation10 + $0xc8] sm:$0xff]
    %v887 = vld [vmem:[#allocation10 + $0xd0] sm:$0xff]
    %v888 = vld [vmem:[#allocation10 + $0xd8] sm:$0xff]
    %v889 = vld [vmem:[#allocation10 + $0xe0] sm:$0xff]
    %v890 = vld [vmem:[#allocation10 + $0xe8] sm:$0xff]
    %v891 = vld [vmem:[#allocation10 + $0xf0] sm:$0xff]
    %v892 = vld [vmem:[#allocation10 + $0xf8] sm:$0xff]
    %v893 = vld [vmem:[#allocation10 + $0x100] sm:$0xff]
    %v894 = vld [vmem:[#allocation10 + $0x108] sm:$0xff]
    %v895 = vld [vmem:[#allocation10 + $0x110] sm:$0xff]
    %v896 = vld [vmem:[#allocation10 + $0x118] sm:$0xff]
    %v897 = vld [vmem:[#allocation10 + $0x120] sm:$0xff]
    %v898 = vld [vmem:[#allocation10 + $0x128] sm:$0xff]
    %v899 = vld [vmem:[#allocation10 + $0x130] sm:$0xff]
    %v900 = vld [vmem:[#allocation10 + $0x138] sm:$0xff]
    %v901 = vld [vmem:[#allocation10 + $0x140] sm:$0xff]
    %v902 = vld [vmem:[#allocation10 + $0x148] sm:$0xff]
    %v903 = vld [vmem:[#allocation10 + $0x150] sm:$0xff]
    %v904 = vld [vmem:[#allocation10 + $0x158] sm:$0xff]
    %v905 = vld [vmem:[#allocation10 + $0x160] sm:$0xff]
    %v906 = vld [vmem:[#allocation10 + $0x168] sm:$0xff]
    %v907 = vld [vmem:[#allocation10 + $0x170] sm:$0xff]
    %v908 = vld [vmem:[#allocation10 + $0x178] sm:$0xff]
    %v909 = vld [vmem:[#allocation10 + $0x180] sm:$0xff]
    %v910 = vld [vmem:[#allocation10 + $0x188] sm:$0xff]
    %v911 = vld [vmem:[#allocation10 + $0x190] sm:$0xff]
    %v912 = vld [vmem:[#allocation10 + $0x198] sm:$0xff]
    %v913 = vld [vmem:[#allocation10 + $0x1a0] sm:$0xff]
    %v914 = vld [vmem:[#allocation10 + $0x1a8] sm:$0xff]
    %v915 = vld [vmem:[#allocation10 + $0x1b0] sm:$0xff]
    %v916 = vld [vmem:[#allocation10 + $0x1b8] sm:$0xff]
    %v917 = vld [vmem:[#allocation10 + $0x1c0] sm:$0xff]
    %v918 = vld [vmem:[#allocation10 + $0x1c8] sm:$0xff]
    %v919 = vld [vmem:[#allocation10 + $0x1d0] sm:$0xff]
    %v920 = vld [vmem:[#allocation10 + $0x1d8] sm:$0xff]
    %v921 = vld [vmem:[#allocation10 + $0x1e0] sm:$0xff]
    %v922 = vld [vmem:[#allocation10 + $0x1e8] sm:$0xff]
    %v923 = vld [vmem:[#allocation10 + $0x1f0] sm:$0xff]
    %v924 = vld [vmem:[#allocation10 + $0x1f8] sm:$0xff]
    %v925 = vld [vmem:[#allocation10 + $0x200] sm:$0xff]
    %v926 = vld [vmem:[#allocation10 + $0x208] sm:$0xff]
    %v927 = vld [vmem:[#allocation10 + $0x210] sm:$0xff]
    %v928 = vld [vmem:[#allocation10 + $0x218] sm:$0xff]
    %v929 = vld [vmem:[#allocation10 + $0x220] sm:$0xff]
    %v930 = vld [vmem:[#allocation10 + $0x228] sm:$0xff]
    %v931 = vld [vmem:[#allocation10 + $0x230] sm:$0xff]
    %v932 = vld [vmem:[#allocation10 + $0x238] sm:$0xff]
    %v933 = vld [vmem:[#allocation10 + $0x240] sm:$0xff]
    %v934 = vld [vmem:[#allocation10 + $0x248] sm:$0xff]
    %v935 = vld [vmem:[#allocation10 + $0x250] sm:$0xff]
    %v936 = vld [vmem:[#allocation10 + $0x258] sm:$0xff]
    %v937 = vld [vmem:[#allocation10 + $0x260] sm:$0xff]
    %v938 = vld [vmem:[#allocation10 + $0x268] sm:$0xff]
    %v939 = vld [vmem:[#allocation10 + $0x270] sm:$0xff]
    %v940 = vld [vmem:[#allocation10 + $0x278] sm:$0xff]
    %v941 = vld [vmem:[#allocation2] sm:$0xff]
    %v942 = vld [vmem:[#allocation2 + $0x8] sm:$0xff]
    %v943 = vld [vmem:[#allocation2 + $0x10] sm:$0xff]
    %v944 = vld [vmem:[#allocation2 + $0x18] sm:$0xff]
    %v945 = vld [vmem:[#allocation2 + $0x20] sm:$0xff]
    %v946 = vld [vmem:[#allocation2 + $0x28] sm:$0xff]
    %v947 = vld [vmem:[#allocation2 + $0x30] sm:$0xff]
    %v948 = vld [vmem:[#allocation2 + $0x38] sm:$0xff]
    %v949 = vld [vmem:[#allocation2 + $0x40] sm:$0xff]
    %v950 = vld [vmem:[#allocation2 + $0x48] sm:$0xff]
    %v951 = vld [vmem:[#allocation2 + $0x50] sm:$0xff]
    %v952 = vld [vmem:[#allocation2 + $0x58] sm:$0xff]
    %v953 = vld [vmem:[#allocation2 + $0x60] sm:$0xff]
    %v954 = vld [vmem:[#allocation2 + $0x68] sm:$0xff]
    %v955 = vld [vmem:[#allocation2 + $0x70] sm:$0xff]
    %v956 = vld [vmem:[#allocation2 + $0x78] sm:$0xff]
    %v957 = vld [vmem:[#allocation2 + $0x80] sm:$0xff]
    %v958 = vld [vmem:[#allocation2 + $0x88] sm:$0xff]
    %v959 = vld [vmem:[#allocation2 + $0x90] sm:$0xff]
    %v960 = vld [vmem:[#allocation2 + $0x98] sm:$0xff]
    %v961 = vld [vmem:[#allocation2 + $0xa0] sm:$0xff]
    %v962 = vld [vmem:[#allocation2 + $0xa8] sm:$0xff]
    %v963 = vld [vmem:[#allocation2 + $0xb0] sm:$0xff]
    %v964 = vld [vmem:[#allocation2 + $0xb8] sm:$0xff]
    %v965 = vld [vmem:[#allocation2 + $0xc0] sm:$0xff]
    %v966 = vld [vmem:[#allocation2 + $0xc8] sm:$0xff]
    %v967 = vld [vmem:[#allocation2 + $0xd0] sm:$0xff]
    %v968 = vld [vmem:[#allocation2 + $0xd8] sm:$0xff]
    %v969 = vld [vmem:[#allocation2 + $0xe0] sm:$0xff]
    %v970 = vld [vmem:[#allocation2 + $0xe8] sm:$0xff]
    %v971 = vld [vmem:[#allocation2 + $0xf0] sm:$0xff]
    %v972 = vld [vmem:[#allocation2 + $0xf8] sm:$0xff]
    %v973 = vld [vmem:[#allocation2 + $0x100] sm:$0xff]
    %v974 = vld [vmem:[#allocation2 + $0x108] sm:$0xff]
    %v975 = vld [vmem:[#allocation2 + $0x110] sm:$0xff]
    %v976 = vld [vmem:[#allocation2 + $0x118] sm:$0xff]
    %v977 = vld [vmem:[#allocation2 + $0x120] sm:$0xff]
    %v978 = vld [vmem:[#allocation2 + $0x128] sm:$0xff]
    %v979 = vld [vmem:[#allocation2 + $0x130] sm:$0xff]
    %v980 = vld [vmem:[#allocation2 + $0x138] sm:$0xff]
    %v981 = vld [vmem:[#allocation2 + $0x140] sm:$0xff]
    %v982 = vld [vmem:[#allocation2 + $0x148] sm:$0xff]
    %v983 = vld [vmem:[#allocation2 + $0x150] sm:$0xff]
    %v984 = vld [vmem:[#allocation2 + $0x158] sm:$0xff]
    %v985 = vld [vmem:[#allocation2 + $0x160] sm:$0xff]
    %v986 = vld [vmem:[#allocation2 + $0x168] sm:$0xff]
    %v987 = vld [vmem:[#allocation2 + $0x170] sm:$0xff]
    %v988 = vld [vmem:[#allocation2 + $0x178] sm:$0xff]
    %v1037 = vunpack.c.l.b16 %v941
    %v1038 = vunpack.c.h.b16 %v941
    %v1039 = vunpack.c.l.b16 %v942
    %v1040 = vunpack.c.h.b16 %v942
    %v1041 = vunpack.c.l.b16 %v943
    %v1042 = vunpack.c.h.b16 %v943
    %v1043 = vunpack.c.l.b16 %v944
    %v1044 = vunpack.c.h.b16 %v944
    %v1045 = vunpack.c.l.b16 %v945
    %v1046 = vunpack.c.h.b16 %v945
    %v1047 = vunpack.c.l.b16 %v946
    %v1048 = vunpack.c.h.b16 %v946
    %v1049 = vunpack.c.l.b16 %v947
    %v1050 = vunpack.c.h.b16 %v947
    %v1051 = vunpack.c.l.b16 %v948
    %v1052 = vunpack.c.h.b16 %v948
    %v1053 = vunpack.c.l.b16 %v949
    %v1054 = vunpack.c.h.b16 %v949
    %v1055 = vunpack.c.l.b16 %v950
    %v1056 = vunpack.c.h.b16 %v950
    %v1057 = vunpack.c.l.b16 %v951
    %v1058 = vunpack.c.h.b16 %v951
    %v1059 = vunpack.c.l.b16 %v952
    %v1060 = vunpack.c.h.b16 %v952
    %v1061 = vunpack.c.l.b16 %v953
    %v1062 = vunpack.c.h.b16 %v953
    %v1063 = vunpack.c.l.b16 %v954
    %v1064 = vunpack.c.h.b16 %v954
    %v1065 = vunpack.c.l.b16 %v955
    %v1066 = vunpack.c.h.b16 %v955
    %v1067 = vunpack.c.l.b16 %v956
    %v1068 = vunpack.c.h.b16 %v956
    %v1069 = vunpack.c.l.b16 %v957
    %v1070 = vunpack.c.h.b16 %v957
    %v1071 = vunpack.c.l.b16 %v958
    %v1072 = vunpack.c.h.b16 %v958
    %v1073 = vunpack.c.l.b16 %v959
    %v1074 = vunpack.c.h.b16 %v959
    %v1075 = vunpack.c.l.b16 %v960
    %v1076 = vunpack.c.h.b16 %v960
    %v1077 = vunpack.c.l.b16 %v961
    %v1078 = vunpack.c.h.b16 %v961
    %v1079 = vunpack.c.l.b16 %v962
    %v1080 = vunpack.c.h.b16 %v962
    %v1081 = vunpack.c.l.b16 %v963
    %v1082 = vunpack.c.h.b16 %v963
    %v1083 = vunpack.c.l.b16 %v964
    %v1084 = vunpack.c.h.b16 %v964
    %v1085 = vunpack.c.l.b16 %v965
    %v1086 = vunpack.c.h.b16 %v965
    %v1087 = vunpack.c.l.b16 %v966
    %v1088 = vunpack.c.h.b16 %v966
    %v1089 = vunpack.c.l.b16 %v967
    %v1090 = vunpack.c.h.b16 %v967
    %v1091 = vunpack.c.l.b16 %v968
    %v1092 = vunpack.c.h.b16 %v968
    %v1093 = vunpack.c.l.b16 %v969
    %v1094 = vunpack.c.h.b16 %v969
    %v1095 = vunpack.c.l.b16 %v970
    %v1096 = vunpack.c.h.b16 %v970
    %v1097 = vunpack.c.l.b16 %v971
    %v1098 = vunpack.c.h.b16 %v971
    %v1099 = vunpack.c.l.b16 %v972
    %v1100 = vunpack.c.h.b16 %v972
    %v1101 = vunpack.c.l.b16 %v973
    %v1102 = vunpack.c.h.b16 %v973
    %v1103 = vunpack.c.l.b16 %v974
    %v1104 = vunpack.c.h.b16 %v974
    %v1105 = vunpack.c.l.b16 %v975
    %v1106 = vunpack.c.h.b16 %v975
    %v1107 = vunpack.c.l.b16 %v976
    %v1108 = vunpack.c.h.b16 %v976
    %v1109 = vunpack.c.l.b16 %v977
    %v1110 = vunpack.c.h.b16 %v977
    %v1111 = vunpack.c.l.b16 %v978
    %v1112 = vunpack.c.h.b16 %v978
    %v1113 = vunpack.c.l.b16 %v979
    %v1114 = vunpack.c.h.b16 %v979
    %v1115 = vunpack.c.l.b16 %v980
    %v1116 = vunpack.c.h.b16 %v980
    %v1117 = vunpack.c.l.b16 %v981
    %v1118 = vunpack.c.h.b16 %v981
    %v1119 = vunpack.c.l.b16 %v982
    %v1120 = vunpack.c.h.b16 %v982
    %v1121 = vunpack.c.l.b16 %v983
    %v1122 = vunpack.c.h.b16 %v983
    %v1123 = vunpack.c.l.b16 %v984
    %v1124 = vunpack.c.h.b16 %v984
    %v1125 = vunpack.c.l.b16 %v985
    %v1126 = vunpack.c.h.b16 %v985
    %v1127 = vunpack.c.l.b16 %v986
    %v1128 = vunpack.c.h.b16 %v986
    %v1129 = vunpack.c.l.b16 %v987
    %v1130 = vunpack.c.h.b16 %v987
    %v1131 = vunpack.c.l.b16 %v988
    %v1132 = vunpack.c.h.b16 %v988
    %v1133 = vpack.c.b16 %v1045, %v1037
    %v1134 = vpack.c.b16 %v1046, %v1038
    %v1135 = vpack.c.b16 %v1047, %v1039
    %v1136 = vpack.c.b16 %v1048, %v1040
    %v1137 = vpack.c.b16 %v1049, %v1041
    %v1138 = vpack.c.b16 %v1050, %v1042
    %v1139 = vpack.c.b16 %v1051, %v1043
    %v1140 = vpack.c.b16 %v1052, %v1044
    %v1141 = vpack.c.b16 %v1061, %v1053
    %v1142 = vpack.c.b16 %v1062, %v1054
    %v1143 = vpack.c.b16 %v1063, %v1055
    %v1144 = vpack.c.b16 %v1064, %v1056
    %v1145 = vpack.c.b16 %v1065, %v1057
    %v1146 = vpack.c.b16 %v1066, %v1058
    %v1147 = vpack.c.b16 %v1067, %v1059
    %v1148 = vpack.c.b16 %v1068, %v1060
    %v1149 = vpack.c.b16 %v1077, %v1069
    %v1150 = vpack.c.b16 %v1078, %v1070
    %v1151 = vpack.c.b16 %v1079, %v1071
    %v1152 = vpack.c.b16 %v1080, %v1072
    %v1153 = vpack.c.b16 %v1081, %v1073
    %v1154 = vpack.c.b16 %v1082, %v1074
    %v1155 = vpack.c.b16 %v1083, %v1075
    %v1156 = vpack.c.b16 %v1084, %v1076
    %v1157 = vpack.c.b16 %v1093, %v1085
    %v1158 = vpack.c.b16 %v1094, %v1086
    %v1159 = vpack.c.b16 %v1095, %v1087
    %v1160 = vpack.c.b16 %v1096, %v1088
    %v1161 = vpack.c.b16 %v1097, %v1089
    %v1162 = vpack.c.b16 %v1098, %v1090
    %v1163 = vpack.c.b16 %v1099, %v1091
    %v1164 = vpack.c.b16 %v1100, %v1092
    %v1165 = vpack.c.b16 %v1109, %v1101
    %v1166 = vpack.c.b16 %v1110, %v1102
    %v1167 = vpack.c.b16 %v1111, %v1103
    %v1168 = vpack.c.b16 %v1112, %v1104
    %v1169 = vpack.c.b16 %v1113, %v1105
    %v1170 = vpack.c.b16 %v1114, %v1106
    %v1171 = vpack.c.b16 %v1115, %v1107
    %v1172 = vpack.c.b16 %v1116, %v1108
    %v1173 = vpack.c.b16 %v1125, %v1117
    %v1174 = vpack.c.b16 %v1126, %v1118
    %v1175 = vpack.c.b16 %v1127, %v1119
    %v1176 = vpack.c.b16 %v1128, %v1120
    %v1177 = vpack.c.b16 %v1129, %v1121
    %v1178 = vpack.c.b16 %v1130, %v1122
    %v1179 = vpack.c.b16 %v1131, %v1123
    %v1180 = vpack.c.b16 %v1132, %v1124
    %v1613 = vunpack.c.l.b16 %v93
    %v1614 = vunpack.c.h.b16 %v93
    %v1615 = vunpack.c.l.b16 %v94
    %v1616 = vunpack.c.h.b16 %v94
    %v1617 = vunpack.c.l.b16 %v95
    %v1618 = vunpack.c.l.b16 %v96
    %v1619 = vunpack.c.h.b16 %v96
    %v1620 = vunpack.c.l.b16 %v97
    %v1621 = vunpack.c.h.b16 %v97
    %v1622 = vunpack.c.l.b16 %v98
    %v1623 = vunpack.c.l.b16 %v99
    %v1624 = vunpack.c.h.b16 %v99
    %v1625 = vunpack.c.l.b16 %v100
    %v1626 = vunpack.c.h.b16 %v100
    %v1627 = vunpack.c.l.b16 %v101
    %v1628 = vunpack.c.l.b16 %v102
    %v1629 = vunpack.c.h.b16 %v102
    %v1630 = vunpack.c.l.b16 %v103
    %v1631 = vunpack.c.h.b16 %v103
    %v1632 = vunpack.c.l.b16 %v104
    %v1633 = vunpack.c.l.b16 %v105
    %v1634 = vunpack.c.h.b16 %v105
    %v1635 = vunpack.c.l.b16 %v106
    %v1636 = vunpack.c.h.b16 %v106
    %v1637 = vunpack.c.l.b16 %v107
    %v1638 = vunpack.c.l.b16 %v108
    %v1639 = vunpack.c.h.b16 %v108
    %v1640 = vunpack.c.l.b16 %v109
    %v1641 = vunpack.c.h.b16 %v109
    %v1642 = vunpack.c.l.b16 %v110
    %v1643 = vunpack.c.l.b16 %v111
    %v1644 = vunpack.c.h.b16 %v111
    %v1645 = vunpack.c.l.b16 %v112
    %v1646 = vunpack.c.h.b16 %v112
    %v1647 = vunpack.c.l.b16 %v113
    %v1648 = vunpack.c.l.b16 %v114
    %v1649 = vunpack.c.h.b16 %v114
    %v1650 = vunpack.c.l.b16 %v115
    %v1651 = vunpack.c.h.b16 %v115
    %v1652 = vunpack.c.l.b16 %v116
    %v1653 = vunpack.c.l.b16 %v117
    %v1654 = vunpack.c.h.b16 %v117
    %v1655 = vunpack.c.l.b16 %v118
    %v1656 = vunpack.c.h.b16 %v118
    %v1657 = vunpack.c.l.b16 %v119
    %v1658 = vunpack.c.l.b16 %v120
    %v1659 = vunpack.c.h.b16 %v120
    %v1660 = vunpack.c.l.b16 %v121
    %v1661 = vunpack.c.h.b16 %v121
    %v1662 = vunpack.c.l.b16 %v122
    %v1663 = vunpack.c.l.b16 %v123
    %v1664 = vunpack.c.h.b16 %v123
    %v1665 = vunpack.c.l.b16 %v124
    %v1666 = vunpack.c.h.b16 %v124
    %v1667 = vunpack.c.l.b16 %v125
    %v1668 = vunpack.c.l.b16 %v126
    %v1669 = vunpack.c.h.b16 %v126
    %v1670 = vunpack.c.l.b16 %v127
    %v1671 = vunpack.c.h.b16 %v127
    %v1672 = vunpack.c.l.b16 %v128
    %v1673 = vunpack.c.l.b16 %v129
    %v1674 = vunpack.c.h.b16 %v129
    %v1675 = vunpack.c.l.b16 %v130
    %v1676 = vunpack.c.h.b16 %v130
    %v1677 = vunpack.c.l.b16 %v131
    %v1678 = vunpack.c.l.b16 %v132
    %v1679 = vunpack.c.h.b16 %v132
    %v1680 = vunpack.c.l.b16 %v133
    %v1681 = vunpack.c.h.b16 %v133
    %v1682 = vunpack.c.l.b16 %v134
    %v1683 = vunpack.c.l.b16 %v135
    %v1684 = vunpack.c.h.b16 %v135
    %v1685 = vunpack.c.l.b16 %v136
    %v1686 = vunpack.c.h.b16 %v136
    %v1687 = vunpack.c.l.b16 %v137
    %v1688 = vunpack.c.l.b16 %v138
    %v1689 = vunpack.c.h.b16 %v138
    %v1690 = vunpack.c.l.b16 %v139
    %v1691 = vunpack.c.h.b16 %v139
    %v1692 = vunpack.c.l.b16 %v140
    %v1693 = vunpack.c.l.b16 %v141
    %v1694 = vunpack.c.h.b16 %v141
    %v1695 = vunpack.c.l.b16 %v142
    %v1696 = vunpack.c.h.b16 %v142
    %v1697 = vunpack.c.l.b16 %v143
    %v1698 = vunpack.c.l.b16 %v144
    %v1699 = vunpack.c.h.b16 %v144
    %v1700 = vunpack.c.l.b16 %v145
    %v1701 = vunpack.c.h.b16 %v145
    %v1702 = vunpack.c.l.b16 %v146
    %v1703 = vunpack.c.l.b16 %v147
    %v1704 = vunpack.c.h.b16 %v147
    %v1705 = vunpack.c.l.b16 %v148
    %v1706 = vunpack.c.h.b16 %v148
    %v1707 = vunpack.c.l.b16 %v149
    %v1708 = vunpack.c.l.b16 %v150
    %v1709 = vunpack.c.h.b16 %v150
    %v1710 = vunpack.c.l.b16 %v151
    %v1711 = vunpack.c.h.b16 %v151
    %v1712 = vunpack.c.l.b16 %v152
    %v1713 = vunpack.c.l.b16 %v153
    %v1714 = vunpack.c.h.b16 %v153
    %v1715 = vunpack.c.l.b16 %v154
    %v1716 = vunpack.c.h.b16 %v154
    %v1717 = vunpack.c.l.b16 %v155
    %v1718 = vunpack.c.l.b16 %v156
    %v1719 = vunpack.c.h.b16 %v156
    %v1720 = vunpack.c.l.b16 %v157
    %v1721 = vunpack.c.h.b16 %v157
    %v1722 = vunpack.c.l.b16 %v158
    %v1723 = vunpack.c.l.b16 %v159
    %v1724 = vunpack.c.h.b16 %v159
    %v1725 = vunpack.c.l.b16 %v160
    %v1726 = vunpack.c.h.b16 %v160
    %v1727 = vunpack.c.l.b16 %v161
    %v1728 = vunpack.c.l.b16 %v162
    %v1729 = vunpack.c.h.b16 %v162
    %v1730 = vunpack.c.l.b16 %v163
    %v1731 = vunpack.c.h.b16 %v163
    %v1732 = vunpack.c.l.b16 %v164
    %v1733 = vunpack.c.l.b16 %v165
    %v1734 = vunpack.c.h.b16 %v165
    %v1735 = vunpack.c.l.b16 %v166
    %v1736 = vunpack.c.h.b16 %v166
    %v1737 = vunpack.c.l.b16 %v167
    %v1738 = vunpack.c.l.b16 %v168
    %v1739 = vunpack.c.h.b16 %v168
    %v1740 = vunpack.c.l.b16 %v169
    %v1741 = vunpack.c.h.b16 %v169
    %v1742 = vunpack.c.l.b16 %v170
    %v1743 = vunpack.c.l.b16 %v171
    %v1744 = vunpack.c.h.b16 %v171
    %v1745 = vunpack.c.l.b16 %v172
    %v1746 = vunpack.c.h.b16 %v172
    %v1747 = vunpack.c.l.b16 %v173
    %v1748 = vunpack.c.l.b16 %v174
    %v1749 = vunpack.c.h.b16 %v174
    %v1750 = vunpack.c.l.b16 %v175
    %v1751 = vunpack.c.h.b16 %v175
    %v1752 = vunpack.c.l.b16 %v176
    %v1753 = vunpack.c.l.b16 %v177
    %v1754 = vunpack.c.h.b16 %v177
    %v1755 = vunpack.c.l.b16 %v178
    %v1756 = vunpack.c.h.b16 %v178
    %v1757 = vunpack.c.l.b16 %v179
    %v1758 = vunpack.c.l.b16 %v180
    %v1759 = vunpack.c.h.b16 %v180
    %v1760 = vunpack.c.l.b16 %v181
    %v1761 = vunpack.c.h.b16 %v181
    %v1762 = vunpack.c.l.b16 %v182
    %v1763 = vunpack.c.l.b16 %v183
    %v1764 = vunpack.c.h.b16 %v183
    %v1765 = vunpack.c.l.b16 %v184
    %v1766 = vunpack.c.h.b16 %v184
    %v1767 = vunpack.c.l.b16 %v185
    %v1768 = vunpack.c.l.b16 %v186
    %v1769 = vunpack.c.h.b16 %v186
    %v1770 = vunpack.c.l.b16 %v187
    %v1771 = vunpack.c.h.b16 %v187
    %v1772 = vunpack.c.l.b16 %v188
    %v1773 = vunpack.c.l.b16 %v189
    %v1774 = vunpack.c.h.b16 %v189
    %v1775 = vunpack.c.l.b16 %v190
    %v1776 = vunpack.c.h.b16 %v190
    %v1777 = vunpack.c.l.b16 %v191
    %v1778 = vunpack.c.l.b16 %v192
    %v1779 = vunpack.c.h.b16 %v192
    %v1780 = vunpack.c.l.b16 %v193
    %v1781 = vunpack.c.h.b16 %v193
    %v1782 = vunpack.c.l.b16 %v194
    %v1783 = vunpack.c.l.b16 %v195
    %v1784 = vunpack.c.h.b16 %v195
    %v1785 = vunpack.c.l.b16 %v196
    %v1786 = vunpack.c.h.b16 %v196
    %v1787 = vunpack.c.l.b16 %v197
    %v1788 = vunpack.c.l.b16 %v198
    %v1789 = vunpack.c.h.b16 %v198
    %v1790 = vunpack.c.l.b16 %v199
    %v1791 = vunpack.c.h.b16 %v199
    %v1792 = vunpack.c.l.b16 %v200
    %v1793 = vunpack.c.l.b16 %v201
    %v1794 = vunpack.c.h.b16 %v201
    %v1795 = vunpack.c.l.b16 %v202
    %v1796 = vunpack.c.h.b16 %v202
    %v1797 = vunpack.c.l.b16 %v203
    %v1798 = vunpack.c.l.b16 %v204
    %v1799 = vunpack.c.h.b16 %v204
    %v1800 = vunpack.c.l.b16 %v205
    %v1801 = vunpack.c.h.b16 %v205
    %v1802 = vunpack.c.l.b16 %v206
    %v1803 = vunpack.c.l.b16 %v207
    %v1804 = vunpack.c.h.b16 %v207
    %v1805 = vunpack.c.l.b16 %v208
    %v1806 = vunpack.c.h.b16 %v208
    %v1807 = vunpack.c.l.b16 %v209
    %v1808 = vunpack.c.l.b16 %v210
    %v1809 = vunpack.c.h.b16 %v210
    %v1810 = vunpack.c.l.b16 %v211
    %v1811 = vunpack.c.h.b16 %v211
    %v1812 = vunpack.c.l.b16 %v212
    %v1813 = vunpack.c.l.b16 %v213
    %v1814 = vunpack.c.h.b16 %v213
    %v1815 = vunpack.c.l.b16 %v214
    %v1816 = vunpack.c.h.b16 %v214
    %v1817 = vunpack.c.l.b16 %v215
    %v1818 = vunpack.c.l.b16 %v216
    %v1819 = vunpack.c.h.b16 %v216
    %v1820 = vunpack.c.l.b16 %v217
    %v1821 = vunpack.c.h.b16 %v217
    %v1822 = vunpack.c.l.b16 %v218
    %v1823 = vunpack.c.l.b16 %v219
    %v1824 = vunpack.c.h.b16 %v219
    %v1825 = vunpack.c.l.b16 %v220
    %v1826 = vunpack.c.h.b16 %v220
    %v1827 = vunpack.c.l.b16 %v221
    %v1828 = vunpack.c.l.b16 %v222
    %v1829 = vunpack.c.h.b16 %v222
    %v1830 = vunpack.c.l.b16 %v223
    %v1831 = vunpack.c.h.b16 %v223
    %v1832 = vunpack.c.l.b16 %v224
    %v1833 = vunpack.c.l.b16 %v225
    %v1834 = vunpack.c.h.b16 %v225
    %v1835 = vunpack.c.l.b16 %v226
    %v1836 = vunpack.c.h.b16 %v226
    %v1837 = vunpack.c.l.b16 %v227
    %v1838 = vunpack.c.l.b16 %v228
    %v1839 = vunpack.c.h.b16 %v228
    %v1840 = vunpack.c.l.b16 %v229
    %v1841 = vunpack.c.h.b16 %v229
    %v1842 = vunpack.c.l.b16 %v230
    %v1843 = vunpack.c.l.b16 %v231
    %v1844 = vunpack.c.h.b16 %v231
    %v1845 = vunpack.c.l.b16 %v232
    %v1846 = vunpack.c.h.b16 %v232
    %v1847 = vunpack.c.l.b16 %v233
    %v1848 = vunpack.c.l.b16 %v234
    %v1849 = vunpack.c.h.b16 %v234
    %v1850 = vunpack.c.l.b16 %v235
    %v1851 = vunpack.c.h.b16 %v235
    %v1852 = vunpack.c.l.b16 %v236
    %v1853 = vunpack.c.l.b16 %v237
    %v1854 = vunpack.c.h.b16 %v237
    %v1855 = vunpack.c.l.b16 %v238
    %v1856 = vunpack.c.h.b16 %v238
    %v1857 = vunpack.c.l.b16 %v239
    %v1858 = vunpack.c.l.b16 %v240
    %v1859 = vunpack.c.h.b16 %v240
    %v1860 = vunpack.c.l.b16 %v241
    %v1861 = vunpack.c.h.b16 %v241
    %v1862 = vunpack.c.l.b16 %v242
    %v1863 = vunpack.c.l.b16 %v243
    %v1864 = vunpack.c.h.b16 %v243
    %v1865 = vunpack.c.l.b16 %v244
    %v1866 = vunpack.c.h.b16 %v244
    %v1867 = vunpack.c.l.b16 %v245
    %v1868 = vunpack.c.l.b16 %v246
    %v1869 = vunpack.c.h.b16 %v246
    %v1870 = vunpack.c.l.b16 %v247
    %v1871 = vunpack.c.h.b16 %v247
    %v1872 = vunpack.c.l.b16 %v248
    %v1873 = vunpack.c.l.b16 %v249
    %v1874 = vunpack.c.h.b16 %v249
    %v1875 = vunpack.c.l.b16 %v250
    %v1876 = vunpack.c.h.b16 %v250
    %v1877 = vunpack.c.l.b16 %v251
    %v1878 = vunpack.c.l.b16 %v252
    %v1879 = vunpack.c.h.b16 %v252
    %v1880 = vunpack.c.l.b16 %v253
    %v1881 = vunpack.c.h.b16 %v253
    %v1882 = vunpack.c.l.b16 %v254
    %v1883 = vunpack.c.l.b16 %v255
    %v1884 = vunpack.c.h.b16 %v255
    %v1885 = vunpack.c.l.b16 %v256
    %v1886 = vunpack.c.h.b16 %v256
    %v1887 = vunpack.c.l.b16 %v257
    %v1888 = vunpack.c.l.b16 %v258
    %v1889 = vunpack.c.h.b16 %v258
    %v1890 = vunpack.c.l.b16 %v259
    %v1891 = vunpack.c.h.b16 %v259
    %v1892 = vunpack.c.l.b16 %v260
    %v1893 = vunpack.c.l.b16 %v261
    %v1894 = vunpack.c.h.b16 %v261
    %v1895 = vunpack.c.l.b16 %v262
    %v1896 = vunpack.c.h.b16 %v262
    %v1897 = vunpack.c.l.b16 %v263
    %v1898 = vunpack.c.l.b16 %v264
    %v1899 = vunpack.c.h.b16 %v264
    %v1900 = vunpack.c.l.b16 %v265
    %v1901 = vunpack.c.h.b16 %v265
    %v1902 = vunpack.c.l.b16 %v266
    %v1903 = vunpack.c.l.b16 %v267
    %v1904 = vunpack.c.h.b16 %v267
    %v1905 = vunpack.c.l.b16 %v268
    %v1906 = vunpack.c.h.b16 %v268
    %v1907 = vunpack.c.l.b16 %v269
    %v1908 = vunpack.c.l.b16 %v270
    %v1909 = vunpack.c.h.b16 %v270
    %v1910 = vunpack.c.l.b16 %v271
    %v1911 = vunpack.c.h.b16 %v271
    %v1912 = vunpack.c.l.b16 %v272
    %v1913 = vunpack.c.l.b16 %v273
    %v1914 = vunpack.c.h.b16 %v273
    %v1915 = vunpack.c.l.b16 %v274
    %v1916 = vunpack.c.h.b16 %v274
    %v1917 = vunpack.c.l.b16 %v275
    %v1918 = vunpack.c.l.b16 %v276
    %v1919 = vunpack.c.h.b16 %v276
    %v1920 = vunpack.c.l.b16 %v277
    %v1921 = vunpack.c.h.b16 %v277
    %v1922 = vunpack.c.l.b16 %v278
    %v1923 = vunpack.c.l.b16 %v279
    %v1924 = vunpack.c.h.b16 %v279
    %v1925 = vunpack.c.l.b16 %v280
    %v1926 = vunpack.c.h.b16 %v280
    %v1927 = vunpack.c.l.b16 %v281
    %v1928 = vunpack.c.l.b16 %v282
    %v1929 = vunpack.c.h.b16 %v282
    %v1930 = vunpack.c.l.b16 %v283
    %v1931 = vunpack.c.h.b16 %v283
    %v1932 = vunpack.c.l.b16 %v284
    %v1933 = vunpack.c.l.b16 %v285
    %v1934 = vunpack.c.h.b16 %v285
    %v1935 = vunpack.c.l.b16 %v286
    %v1936 = vunpack.c.h.b16 %v286
    %v1937 = vunpack.c.l.b16 %v287
    %v1938 = vunpack.c.l.b16 %v288
    %v1939 = vunpack.c.h.b16 %v288
    %v1940 = vunpack.c.l.b16 %v289
    %v1941 = vunpack.c.h.b16 %v289
    %v1942 = vunpack.c.l.b16 %v290
    %v1943 = vunpack.c.l.b16 %v291
    %v1944 = vunpack.c.h.b16 %v291
    %v1945 = vunpack.c.l.b16 %v292
    %v1946 = vunpack.c.h.b16 %v292
    %v1947 = vunpack.c.l.b16 %v293
    %v1948 = vunpack.c.l.b16 %v294
    %v1949 = vunpack.c.h.b16 %v294
    %v1950 = vunpack.c.l.b16 %v295
    %v1951 = vunpack.c.h.b16 %v295
    %v1952 = vunpack.c.l.b16 %v296
    %v1953 = vunpack.c.l.b16 %v297
    %v1954 = vunpack.c.h.b16 %v297
    %v1955 = vunpack.c.l.b16 %v298
    %v1956 = vunpack.c.h.b16 %v298
    %v1957 = vunpack.c.l.b16 %v299
    %v1958 = vunpack.c.l.b16 %v300
    %v1959 = vunpack.c.h.b16 %v300
    %v1960 = vunpack.c.l.b16 %v301
    %v1961 = vunpack.c.h.b16 %v301
    %v1962 = vunpack.c.l.b16 %v302
    %v1963 = vunpack.c.l.b16 %v303
    %v1964 = vunpack.c.h.b16 %v303
    %v1965 = vunpack.c.l.b16 %v304
    %v1966 = vunpack.c.h.b16 %v304
    %v1967 = vunpack.c.l.b16 %v305
    %v1968 = vunpack.c.l.b16 %v306
    %v1969 = vunpack.c.h.b16 %v306
    %v1970 = vunpack.c.l.b16 %v307
    %v1971 = vunpack.c.h.b16 %v307
    %v1972 = vunpack.c.l.b16 %v308
    %v1973 = vunpack.c.l.b16 %v309
    %v1974 = vunpack.c.h.b16 %v309
    %v1975 = vunpack.c.l.b16 %v310
    %v1976 = vunpack.c.h.b16 %v310
    %v1977 = vunpack.c.l.b16 %v311
    %v1978 = vunpack.c.l.b16 %v312
    %v1979 = vunpack.c.h.b16 %v312
    %v1980 = vunpack.c.l.b16 %v313
    %v1981 = vunpack.c.h.b16 %v313
    %v1982 = vunpack.c.l.b16 %v314
    %v1983 = vunpack.c.l.b16 %v315
    %v1984 = vunpack.c.h.b16 %v315
    %v1985 = vunpack.c.l.b16 %v316
    %v1986 = vunpack.c.h.b16 %v316
    %v1987 = vunpack.c.l.b16 %v317
    %v1988 = vunpack.c.l.b16 %v318
    %v1989 = vunpack.c.h.b16 %v318
    %v1990 = vunpack.c.l.b16 %v319
    %v1991 = vunpack.c.h.b16 %v319
    %v1992 = vunpack.c.l.b16 %v320
    %v1993 = vunpack.c.l.b16 %v321
    %v1994 = vunpack.c.h.b16 %v321
    %v1995 = vunpack.c.l.b16 %v322
    %v1996 = vunpack.c.h.b16 %v322
    %v1997 = vunpack.c.l.b16 %v323
    %v1998 = vunpack.c.l.b16 %v324
    %v1999 = vunpack.c.h.b16 %v324
    %v2000 = vunpack.c.l.b16 %v325
    %v2001 = vunpack.c.h.b16 %v325
    %v2002 = vunpack.c.l.b16 %v326
    %v2003 = vunpack.c.l.b16 %v327
    %v2004 = vunpack.c.h.b16 %v327
    %v2005 = vunpack.c.l.b16 %v328
    %v2006 = vunpack.c.h.b16 %v328
    %v2007 = vunpack.c.l.b16 %v329
    %v2008 = vunpack.c.l.b16 %v330
    %v2009 = vunpack.c.h.b16 %v330
    %v2010 = vunpack.c.l.b16 %v331
    %v2011 = vunpack.c.h.b16 %v331
    %v2012 = vunpack.c.l.b16 %v332
    %v2013 = vunpack.c.l.b16 %v333
    %v2014 = vunpack.c.h.b16 %v333
    %v2015 = vunpack.c.l.b16 %v334
    %v2016 = vunpack.c.h.b16 %v334
    %v2017 = vunpack.c.l.b16 %v335
    %v2018 = vunpack.c.l.b16 %v336
    %v2019 = vunpack.c.h.b16 %v336
    %v2020 = vunpack.c.l.b16 %v337
    %v2021 = vunpack.c.h.b16 %v337
    %v2022 = vunpack.c.l.b16 %v338
    %v2023 = vunpack.c.l.b16 %v339
    %v2024 = vunpack.c.h.b16 %v339
    %v2025 = vunpack.c.l.b16 %v340
    %v2026 = vunpack.c.h.b16 %v340
    %v2027 = vunpack.c.l.b16 %v341
    %v2028 = vunpack.c.l.b16 %v342
    %v2029 = vunpack.c.h.b16 %v342
    %v2030 = vunpack.c.l.b16 %v343
    %v2031 = vunpack.c.h.b16 %v343
    %v2032 = vunpack.c.l.b16 %v344
    %v2033 = vunpack.c.l.b16 %v345
    %v2034 = vunpack.c.h.b16 %v345
    %v2035 = vunpack.c.l.b16 %v346
    %v2036 = vunpack.c.h.b16 %v346
    %v2037 = vunpack.c.l.b16 %v347
    %v2038 = vunpack.c.l.b16 %v348
    %v2039 = vunpack.c.h.b16 %v348
    %v2040 = vunpack.c.l.b16 %v349
    %v2041 = vunpack.c.h.b16 %v349
    %v2042 = vunpack.c.l.b16 %v350
    %v2043 = vunpack.c.l.b16 %v351
    %v2044 = vunpack.c.h.b16 %v351
    %v2045 = vunpack.c.l.b16 %v352
    %v2046 = vunpack.c.h.b16 %v352
    %v2047 = vunpack.c.l.b16 %v353
    %v2048 = vunpack.c.l.b16 %v354
    %v2049 = vunpack.c.h.b16 %v354
    %v2050 = vunpack.c.l.b16 %v355
    %v2051 = vunpack.c.h.b16 %v355
    %v2052 = vunpack.c.l.b16 %v356
    %v2053 = vunpack.c.l.b16 %v357
    %v2054 = vunpack.c.h.b16 %v357
    %v2055 = vunpack.c.l.b16 %v358
    %v2056 = vunpack.c.h.b16 %v358
    %v2057 = vunpack.c.l.b16 %v359
    %v2058 = vunpack.c.l.b16 %v360
    %v2059 = vunpack.c.h.b16 %v360
    %v2060 = vunpack.c.l.b16 %v361
    %v2061 = vunpack.c.h.b16 %v361
    %v2062 = vunpack.c.l.b16 %v362
    %v2063 = vunpack.c.l.b16 %v363
    %v2064 = vunpack.c.h.b16 %v363
    %v2065 = vunpack.c.l.b16 %v364
    %v2066 = vunpack.c.h.b16 %v364
    %v2067 = vunpack.c.l.b16 %v365
    %v2068 = vunpack.c.l.b16 %v366
    %v2069 = vunpack.c.h.b16 %v366
    %v2070 = vunpack.c.l.b16 %v367
    %v2071 = vunpack.c.h.b16 %v367
    %v2072 = vunpack.c.l.b16 %v368
    %v2073 = vunpack.c.l.b16 %v369
    %v2074 = vunpack.c.h.b16 %v369
    %v2075 = vunpack.c.l.b16 %v370
    %v2076 = vunpack.c.h.b16 %v370
    %v2077 = vunpack.c.l.b16 %v371
    %v2078 = vunpack.c.l.b16 %v372
    %v2079 = vunpack.c.h.b16 %v372
    %v2080 = vunpack.c.l.b16 %v373
    %v2081 = vunpack.c.h.b16 %v373
    %v2082 = vunpack.c.l.b16 %v374
    %v2083 = vunpack.c.l.b16 %v375
    %v2084 = vunpack.c.h.b16 %v375
    %v2085 = vunpack.c.l.b16 %v376
    %v2086 = vunpack.c.h.b16 %v376
    %v2087 = vunpack.c.l.b16 %v377
    %v2088 = vunpack.c.l.b16 %v378
    %v2089 = vunpack.c.h.b16 %v378
    %v2090 = vunpack.c.l.b16 %v379
    %v2091 = vunpack.c.h.b16 %v379
    %v2092 = vunpack.c.l.b16 %v380
    %v2093 = vunpack.c.l.b16 %v381
    %v2094 = vunpack.c.h.b16 %v381
    %v2095 = vunpack.c.l.b16 %v382
    %v2096 = vunpack.c.h.b16 %v382
    %v2097 = vunpack.c.l.b16 %v383
    %v2098 = vunpack.c.l.b16 %v384
    %v2099 = vunpack.c.h.b16 %v384
    %v2100 = vunpack.c.l.b16 %v385
    %v2101 = vunpack.c.h.b16 %v385
    %v2102 = vunpack.c.l.b16 %v386
    %v2103 = vunpack.c.l.b16 %v387
    %v2104 = vunpack.c.h.b16 %v387
    %v2105 = vunpack.c.l.b16 %v388
    %v2106 = vunpack.c.h.b16 %v388
    %v2107 = vunpack.c.l.b16 %v389
    %v2108 = vunpack.c.l.b16 %v390
    %v2109 = vunpack.c.h.b16 %v390
    %v2110 = vunpack.c.l.b16 %v391
    %v2111 = vunpack.c.h.b16 %v391
    %v2112 = vunpack.c.l.b16 %v392
    %v2113 = vunpack.c.l.b16 %v393
    %v2114 = vunpack.c.h.b16 %v393
    %v2115 = vunpack.c.l.b16 %v394
    %v2116 = vunpack.c.h.b16 %v394
    %v2117 = vunpack.c.l.b16 %v395
    %v2118 = vunpack.c.l.b16 %v396
    %v2119 = vunpack.c.h.b16 %v396
    %v2120 = vunpack.c.l.b16 %v397
    %v2121 = vunpack.c.h.b16 %v397
    %v2122 = vunpack.c.l.b16 %v398
    %v2123 = vunpack.c.l.b16 %v399
    %v2124 = vunpack.c.h.b16 %v399
    %v2125 = vunpack.c.l.b16 %v400
    %v2126 = vunpack.c.h.b16 %v400
    %v2127 = vunpack.c.l.b16 %v401
    %v2128 = vunpack.c.l.b16 %v402
    %v2129 = vunpack.c.h.b16 %v402
    %v2130 = vunpack.c.l.b16 %v403
    %v2131 = vunpack.c.h.b16 %v403
    %v2132 = vunpack.c.l.b16 %v404
    %v2133 = vunpack.c.l.b16 %v405
    %v2134 = vunpack.c.h.b16 %v405
    %v2135 = vunpack.c.l.b16 %v406
    %v2136 = vunpack.c.h.b16 %v406
    %v2137 = vunpack.c.l.b16 %v407
    %v2138 = vunpack.c.l.b16 %v408
    %v2139 = vunpack.c.h.b16 %v408
    %v2140 = vunpack.c.l.b16 %v409
    %v2141 = vunpack.c.h.b16 %v409
    %v2142 = vunpack.c.l.b16 %v410
    %v2143 = vunpack.c.l.b16 %v411
    %v2144 = vunpack.c.h.b16 %v411
    %v2145 = vunpack.c.l.b16 %v412
    %v2146 = vunpack.c.h.b16 %v412
    %v2147 = vunpack.c.l.b16 %v413
    %v2148 = vunpack.c.l.b16 %v414
    %v2149 = vunpack.c.h.b16 %v414
    %v2150 = vunpack.c.l.b16 %v415
    %v2151 = vunpack.c.h.b16 %v415
    %v2152 = vunpack.c.l.b16 %v416
    %v2153 = vunpack.c.l.b16 %v417
    %v2154 = vunpack.c.h.b16 %v417
    %v2155 = vunpack.c.l.b16 %v418
    %v2156 = vunpack.c.h.b16 %v418
    %v2157 = vunpack.c.l.b16 %v419
    %v2158 = vunpack.c.l.b16 %v420
    %v2159 = vunpack.c.h.b16 %v420
    %v2160 = vunpack.c.l.b16 %v421
    %v2161 = vunpack.c.h.b16 %v421
    %v2162 = vunpack.c.l.b16 %v422
    %v2163 = vunpack.c.l.b16 %v423
    %v2164 = vunpack.c.h.b16 %v423
    %v2165 = vunpack.c.l.b16 %v424
    %v2166 = vunpack.c.h.b16 %v424
    %v2167 = vunpack.c.l.b16 %v425
    %v2168 = vunpack.c.l.b16 %v426
    %v2169 = vunpack.c.h.b16 %v426
    %v2170 = vunpack.c.l.b16 %v427
    %v2171 = vunpack.c.h.b16 %v427
    %v2172 = vunpack.c.l.b16 %v428
    %v2173 = vunpack.c.l.b16 %v429
    %v2174 = vunpack.c.h.b16 %v429
    %v2175 = vunpack.c.l.b16 %v430
    %v2176 = vunpack.c.h.b16 %v430
    %v2177 = vunpack.c.l.b16 %v431
    %v2178 = vunpack.c.l.b16 %v432
    %v2179 = vunpack.c.h.b16 %v432
    %v2180 = vunpack.c.l.b16 %v433
    %v2181 = vunpack.c.h.b16 %v433
    %v2182 = vunpack.c.l.b16 %v434
    %v2183 = vunpack.c.l.b16 %v435
    %v2184 = vunpack.c.h.b16 %v435
    %v2185 = vunpack.c.l.b16 %v436
    %v2186 = vunpack.c.h.b16 %v436
    %v2187 = vunpack.c.l.b16 %v437
    %v2188 = vunpack.c.l.b16 %v438
    %v2189 = vunpack.c.h.b16 %v438
    %v2190 = vunpack.c.l.b16 %v439
    %v2191 = vunpack.c.h.b16 %v439
    %v2192 = vunpack.c.l.b16 %v440
    %v2193 = vunpack.c.l.b16 %v441
    %v2194 = vunpack.c.h.b16 %v441
    %v2195 = vunpack.c.l.b16 %v442
    %v2196 = vunpack.c.h.b16 %v442
    %v2197 = vunpack.c.l.b16 %v443
    %v2198 = vunpack.c.l.b16 %v444
    %v2199 = vunpack.c.h.b16 %v444
    %v2200 = vunpack.c.l.b16 %v445
    %v2201 = vunpack.c.h.b16 %v445
    %v2202 = vunpack.c.l.b16 %v446
    %v2203 = vunpack.c.l.b16 %v447
    %v2204 = vunpack.c.h.b16 %v447
    %v2205 = vunpack.c.l.b16 %v448
    %v2206 = vunpack.c.h.b16 %v448
    %v2207 = vunpack.c.l.b16 %v449
    %v2208 = vunpack.c.l.b16 %v450
    %v2209 = vunpack.c.h.b16 %v450
    %v2210 = vunpack.c.l.b16 %v451
    %v2211 = vunpack.c.h.b16 %v451
    %v2212 = vunpack.c.l.b16 %v452
    %v2213 = vunpack.c.l.b16 %v453
    %v2214 = vunpack.c.h.b16 %v453
    %v2215 = vunpack.c.l.b16 %v454
    %v2216 = vunpack.c.h.b16 %v454
    %v2217 = vunpack.c.l.b16 %v455
    %v2218 = vunpack.c.l.b16 %v456
    %v2219 = vunpack.c.h.b16 %v456
    %v2220 = vunpack.c.l.b16 %v457
    %v2221 = vunpack.c.h.b16 %v457
    %v2222 = vunpack.c.l.b16 %v458
    %v2223 = vunpack.c.l.b16 %v459
    %v2224 = vunpack.c.h.b16 %v459
    %v2225 = vunpack.c.l.b16 %v460
    %v2226 = vunpack.c.h.b16 %v460
    %v2227 = vunpack.c.l.b16 %v461
    %v2228 = vunpack.c.l.b16 %v462
    %v2229 = vunpack.c.h.b16 %v462
    %v2230 = vunpack.c.l.b16 %v463
    %v2231 = vunpack.c.h.b16 %v463
    %v2232 = vunpack.c.l.b16 %v464
    %v2233 = vunpack.c.l.b16 %v465
    %v2234 = vunpack.c.h.b16 %v465
    %v2235 = vunpack.c.l.b16 %v466
    %v2236 = vunpack.c.h.b16 %v466
    %v2237 = vunpack.c.l.b16 %v467
    %v2238 = vunpack.c.l.b16 %v468
    %v2239 = vunpack.c.h.b16 %v468
    %v2240 = vunpack.c.l.b16 %v469
    %v2241 = vunpack.c.h.b16 %v469
    %v2242 = vunpack.c.l.b16 %v470
    %v2243 = vunpack.c.l.b16 %v471
    %v2244 = vunpack.c.h.b16 %v471
    %v2245 = vunpack.c.l.b16 %v472
    %v2246 = vunpack.c.h.b16 %v472
    %v2247 = vunpack.c.l.b16 %v473
    %v2248 = vunpack.c.l.b16 %v474
    %v2249 = vunpack.c.h.b16 %v474
    %v2250 = vunpack.c.l.b16 %v475
    %v2251 = vunpack.c.h.b16 %v475
    %v2252 = vunpack.c.l.b16 %v476
    %v2253 = vpack.c.b16 %v1618, %v1613
    %v2254 = vpack.c.b16 %v1619, %v1614
    %v2255 = vpack.c.b16 %v1620, %v1615
    %v2256 = vpack.c.b16 %v1621, %v1616
    %v2257 = vpack.c.b16 %v1622, %v1617
    %v2258 = vpack.c.b16 %v1628, %v1623
    %v2259 = vpack.c.b16 %v1629, %v1624
    %v2260 = vpack.c.b16 %v1630, %v1625
    %v2261 = vpack.c.b16 %v1631, %v1626
    %v2262 = vpack.c.b16 %v1632, %v1627
    %v2263 = vpack.c.b16 %v1638, %v1633
    %v2264 = vpack.c.b16 %v1639, %v1634
    %v2265 = vpack.c.b16 %v1640, %v1635
    %v2266 = vpack.c.b16 %v1641, %v1636
    %v2267 = vpack.c.b16 %v1642, %v1637
    %v2268 = vpack.c.b16 %v1648, %v1643
    %v2269 = vpack.c.b16 %v1649, %v1644
    %v2270 = vpack.c.b16 %v1650, %v1645
    %v2271 = vpack.c.b16 %v1651, %v1646
    %v2272 = vpack.c.b16 %v1652, %v1647
    %v2273 = vpack.c.b16 %v1658, %v1653
    %v2274 = vpack.c.b16 %v1659, %v1654
    %v2275 = vpack.c.b16 %v1660, %v1655
    %v2276 = vpack.c.b16 %v1661, %v1656
    %v2277 = vpack.c.b16 %v1662, %v1657
    %v2278 = vpack.c.b16 %v1668, %v1663
    %v2279 = vpack.c.b16 %v1669, %v1664
    %v2280 = vpack.c.b16 %v1670, %v1665
    %v2281 = vpack.c.b16 %v1671, %v1666
    %v2282 = vpack.c.b16 %v1672, %v1667
    %v2283 = vpack.c.b16 %v1678, %v1673
    %v2284 = vpack.c.b16 %v1679, %v1674
    %v2285 = vpack.c.b16 %v1680, %v1675
    %v2286 = vpack.c.b16 %v1681, %v1676
    %v2287 = vpack.c.b16 %v1682, %v1677
    %v2288 = vpack.c.b16 %v1688, %v1683
    %v2289 = vpack.c.b16 %v1689, %v1684
    %v2290 = vpack.c.b16 %v1690, %v1685
    %v2291 = vpack.c.b16 %v1691, %v1686
    %v2292 = vpack.c.b16 %v1692, %v1687
    %v2293 = vpack.c.b16 %v1698, %v1693
    %v2294 = vpack.c.b16 %v1699, %v1694
    %v2295 = vpack.c.b16 %v1700, %v1695
    %v2296 = vpack.c.b16 %v1701, %v1696
    %v2297 = vpack.c.b16 %v1702, %v1697
    %v2298 = vpack.c.b16 %v1708, %v1703
    %v2299 = vpack.c.b16 %v1709, %v1704
    %v2300 = vpack.c.b16 %v1710, %v1705
    %v2301 = vpack.c.b16 %v1711, %v1706
    %v2302 = vpack.c.b16 %v1712, %v1707
    %v2303 = vpack.c.b16 %v1718, %v1713
    %v2304 = vpack.c.b16 %v1719, %v1714
    %v2305 = vpack.c.b16 %v1720, %v1715
    %v2306 = vpack.c.b16 %v1721, %v1716
    %v2307 = vpack.c.b16 %v1722, %v1717
    %v2308 = vpack.c.b16 %v1728, %v1723
    %v2309 = vpack.c.b16 %v1729, %v1724
    %v2310 = vpack.c.b16 %v1730, %v1725
    %v2311 = vpack.c.b16 %v1731, %v1726
    %v2312 = vpack.c.b16 %v1732, %v1727
    %v2313 = vpack.c.b16 %v1738, %v1733
    %v2314 = vpack.c.b16 %v1739, %v1734
    %v2315 = vpack.c.b16 %v1740, %v1735
    %v2316 = vpack.c.b16 %v1741, %v1736
    %v2317 = vpack.c.b16 %v1742, %v1737
    %v2318 = vpack.c.b16 %v1748, %v1743
    %v2319 = vpack.c.b16 %v1749, %v1744
    %v2320 = vpack.c.b16 %v1750, %v1745
    %v2321 = vpack.c.b16 %v1751, %v1746
    %v2322 = vpack.c.b16 %v1752, %v1747
    %v2323 = vpack.c.b16 %v1758, %v1753
    %v2324 = vpack.c.b16 %v1759, %v1754
    %v2325 = vpack.c.b16 %v1760, %v1755
    %v2326 = vpack.c.b16 %v1761, %v1756
    %v2327 = vpack.c.b16 %v1762, %v1757
    %v2328 = vpack.c.b16 %v1768, %v1763
    %v2329 = vpack.c.b16 %v1769, %v1764
    %v2330 = vpack.c.b16 %v1770, %v1765
    %v2331 = vpack.c.b16 %v1771, %v1766
    %v2332 = vpack.c.b16 %v1772, %v1767
    %v2333 = vpack.c.b16 %v1778, %v1773
    %v2334 = vpack.c.b16 %v1779, %v1774
    %v2335 = vpack.c.b16 %v1780, %v1775
    %v2336 = vpack.c.b16 %v1781, %v1776
    %v2337 = vpack.c.b16 %v1782, %v1777
    %v2338 = vpack.c.b16 %v1788, %v1783
    %v2339 = vpack.c.b16 %v1789, %v1784
    %v2340 = vpack.c.b16 %v1790, %v1785
    %v2341 = vpack.c.b16 %v1791, %v1786
    %v2342 = vpack.c.b16 %v1792, %v1787
    %v2343 = vpack.c.b16 %v1798, %v1793
    %v2344 = vpack.c.b16 %v1799, %v1794
    %v2345 = vpack.c.b16 %v1800, %v1795
    %v2346 = vpack.c.b16 %v1801, %v1796
    %v2347 = vpack.c.b16 %v1802, %v1797
    %v2348 = vpack.c.b16 %v1808, %v1803
    %v2349 = vpack.c.b16 %v1809, %v1804
    %v2350 = vpack.c.b16 %v1810, %v1805
    %v2351 = vpack.c.b16 %v1811, %v1806
    %v2352 = vpack.c.b16 %v1812, %v1807
    %v2353 = vpack.c.b16 %v1818, %v1813
    %v2354 = vpack.c.b16 %v1819, %v1814
    %v2355 = vpack.c.b16 %v1820, %v1815
    %v2356 = vpack.c.b16 %v1821, %v1816
    %v2357 = vpack.c.b16 %v1822, %v1817
    %v2358 = vpack.c.b16 %v1828, %v1823
    %v2359 = vpack.c.b16 %v1829, %v1824
    %v2360 = vpack.c.b16 %v1830, %v1825
    %v2361 = vpack.c.b16 %v1831, %v1826
    %v2362 = vpack.c.b16 %v1832, %v1827
    %v2363 = vpack.c.b16 %v1838, %v1833
    %v2364 = vpack.c.b16 %v1839, %v1834
    %v2365 = vpack.c.b16 %v1840, %v1835
    %v2366 = vpack.c.b16 %v1841, %v1836
    %v2367 = vpack.c.b16 %v1842, %v1837
    %v2368 = vpack.c.b16 %v1848, %v1843
    %v2369 = vpack.c.b16 %v1849, %v1844
    %v2370 = vpack.c.b16 %v1850, %v1845
    %v2371 = vpack.c.b16 %v1851, %v1846
    %v2372 = vpack.c.b16 %v1852, %v1847
    %v2373 = vpack.c.b16 %v1858, %v1853
    %v2374 = vpack.c.b16 %v1859, %v1854
    %v2375 = vpack.c.b16 %v1860, %v1855
    %v2376 = vpack.c.b16 %v1861, %v1856
    %v2377 = vpack.c.b16 %v1862, %v1857
    %v2378 = vpack.c.b16 %v1868, %v1863
    %v2379 = vpack.c.b16 %v1869, %v1864
    %v2380 = vpack.c.b16 %v1870, %v1865
    %v2381 = vpack.c.b16 %v1871, %v1866
    %v2382 = vpack.c.b16 %v1872, %v1867
    %v2383 = vpack.c.b16 %v1878, %v1873
    %v2384 = vpack.c.b16 %v1879, %v1874
    %v2385 = vpack.c.b16 %v1880, %v1875
    %v2386 = vpack.c.b16 %v1881, %v1876
    %v2387 = vpack.c.b16 %v1882, %v1877
    %v2388 = vpack.c.b16 %v1888, %v1883
    %v2389 = vpack.c.b16 %v1889, %v1884
    %v2390 = vpack.c.b16 %v1890, %v1885
    %v2391 = vpack.c.b16 %v1891, %v1886
    %v2392 = vpack.c.b16 %v1892, %v1887
    %v2393 = vpack.c.b16 %v1898, %v1893
    %v2394 = vpack.c.b16 %v1899, %v1894
    %v2395 = vpack.c.b16 %v1900, %v1895
    %v2396 = vpack.c.b16 %v1901, %v1896
    %v2397 = vpack.c.b16 %v1902, %v1897
    %v2398 = vpack.c.b16 %v1908, %v1903
    %v2399 = vpack.c.b16 %v1909, %v1904
    %v2400 = vpack.c.b16 %v1910, %v1905
    %v2401 = vpack.c.b16 %v1911, %v1906
    %v2402 = vpack.c.b16 %v1912, %v1907
    %v2403 = vpack.c.b16 %v1918, %v1913
    %v2404 = vpack.c.b16 %v1919, %v1914
    %v2405 = vpack.c.b16 %v1920, %v1915
    %v2406 = vpack.c.b16 %v1921, %v1916
    %v2407 = vpack.c.b16 %v1922, %v1917
    %v2408 = vpack.c.b16 %v1928, %v1923
    %v2409 = vpack.c.b16 %v1929, %v1924
    %v2410 = vpack.c.b16 %v1930, %v1925
    %v2411 = vpack.c.b16 %v1931, %v1926
    %v2412 = vpack.c.b16 %v1932, %v1927
    %v2413 = vpack.c.b16 %v1938, %v1933
    %v2414 = vpack.c.b16 %v1939, %v1934
    %v2415 = vpack.c.b16 %v1940, %v1935
    %v2416 = vpack.c.b16 %v1941, %v1936
    %v2417 = vpack.c.b16 %v1942, %v1937
    %v2418 = vpack.c.b16 %v1948, %v1943
    %v2419 = vpack.c.b16 %v1949, %v1944
    %v2420 = vpack.c.b16 %v1950, %v1945
    %v2421 = vpack.c.b16 %v1951, %v1946
    %v2422 = vpack.c.b16 %v1952, %v1947
    %v2423 = vpack.c.b16 %v1958, %v1953
    %v2424 = vpack.c.b16 %v1959, %v1954
    %v2425 = vpack.c.b16 %v1960, %v1955
    %v2426 = vpack.c.b16 %v1961, %v1956
    %v2427 = vpack.c.b16 %v1962, %v1957
    %v2428 = vpack.c.b16 %v1968, %v1963
    %v2429 = vpack.c.b16 %v1969, %v1964
    %v2430 = vpack.c.b16 %v1970, %v1965
    %v2431 = vpack.c.b16 %v1971, %v1966
    %v2432 = vpack.c.b16 %v1972, %v1967
    %v2433 = vpack.c.b16 %v1978, %v1973
    %v2434 = vpack.c.b16 %v1979, %v1974
    %v2435 = vpack.c.b16 %v1980, %v1975
    %v2436 = vpack.c.b16 %v1981, %v1976
    %v2437 = vpack.c.b16 %v1982, %v1977
    %v2438 = vpack.c.b16 %v1988, %v1983
    %v2439 = vpack.c.b16 %v1989, %v1984
    %v2440 = vpack.c.b16 %v1990, %v1985
    %v2441 = vpack.c.b16 %v1991, %v1986
    %v2442 = vpack.c.b16 %v1992, %v1987
    %v2443 = vpack.c.b16 %v1998, %v1993
    %v2444 = vpack.c.b16 %v1999, %v1994
    %v2445 = vpack.c.b16 %v2000, %v1995
    %v2446 = vpack.c.b16 %v2001, %v1996
    %v2447 = vpack.c.b16 %v2002, %v1997
    %v2448 = vpack.c.b16 %v2008, %v2003
    %v2449 = vpack.c.b16 %v2009, %v2004
    %v2450 = vpack.c.b16 %v2010, %v2005
    %v2451 = vpack.c.b16 %v2011, %v2006
    %v2452 = vpack.c.b16 %v2012, %v2007
    %v2453 = vpack.c.b16 %v2018, %v2013
    %v2454 = vpack.c.b16 %v2019, %v2014
    %v2455 = vpack.c.b16 %v2020, %v2015
    %v2456 = vpack.c.b16 %v2021, %v2016
    %v2457 = vpack.c.b16 %v2022, %v2017
    %v2458 = vpack.c.b16 %v2028, %v2023
    %v2459 = vpack.c.b16 %v2029, %v2024
    %v2460 = vpack.c.b16 %v2030, %v2025
    %v2461 = vpack.c.b16 %v2031, %v2026
    %v2462 = vpack.c.b16 %v2032, %v2027
    %v2463 = vpack.c.b16 %v2038, %v2033
    %v2464 = vpack.c.b16 %v2039, %v2034
    %v2465 = vpack.c.b16 %v2040, %v2035
    %v2466 = vpack.c.b16 %v2041, %v2036
    %v2467 = vpack.c.b16 %v2042, %v2037
    %v2468 = vpack.c.b16 %v2048, %v2043
    %v2469 = vpack.c.b16 %v2049, %v2044
    %v2470 = vpack.c.b16 %v2050, %v2045
    %v2471 = vpack.c.b16 %v2051, %v2046
    %v2472 = vpack.c.b16 %v2052, %v2047
    %v2473 = vpack.c.b16 %v2058, %v2053
    %v2474 = vpack.c.b16 %v2059, %v2054
    %v2475 = vpack.c.b16 %v2060, %v2055
    %v2476 = vpack.c.b16 %v2061, %v2056
    %v2477 = vpack.c.b16 %v2062, %v2057
    %v2478 = vpack.c.b16 %v2068, %v2063
    %v2479 = vpack.c.b16 %v2069, %v2064
    %v2480 = vpack.c.b16 %v2070, %v2065
    %v2481 = vpack.c.b16 %v2071, %v2066
    %v2482 = vpack.c.b16 %v2072, %v2067
    %v2483 = vpack.c.b16 %v2078, %v2073
    %v2484 = vpack.c.b16 %v2079, %v2074
    %v2485 = vpack.c.b16 %v2080, %v2075
    %v2486 = vpack.c.b16 %v2081, %v2076
    %v2487 = vpack.c.b16 %v2082, %v2077
    %v2488 = vpack.c.b16 %v2088, %v2083
    %v2489 = vpack.c.b16 %v2089, %v2084
    %v2490 = vpack.c.b16 %v2090, %v2085
    %v2491 = vpack.c.b16 %v2091, %v2086
    %v2492 = vpack.c.b16 %v2092, %v2087
    %v2493 = vpack.c.b16 %v2098, %v2093
    %v2494 = vpack.c.b16 %v2099, %v2094
    %v2495 = vpack.c.b16 %v2100, %v2095
    %v2496 = vpack.c.b16 %v2101, %v2096
    %v2497 = vpack.c.b16 %v2102, %v2097
    %v2498 = vpack.c.b16 %v2108, %v2103
    %v2499 = vpack.c.b16 %v2109, %v2104
    %v2500 = vpack.c.b16 %v2110, %v2105
    %v2501 = vpack.c.b16 %v2111, %v2106
    %v2502 = vpack.c.b16 %v2112, %v2107
    %v2503 = vpack.c.b16 %v2118, %v2113
    %v2504 = vpack.c.b16 %v2119, %v2114
    %v2505 = vpack.c.b16 %v2120, %v2115
    %v2506 = vpack.c.b16 %v2121, %v2116
    %v2507 = vpack.c.b16 %v2122, %v2117
    %v2508 = vpack.c.b16 %v2128, %v2123
    %v2509 = vpack.c.b16 %v2129, %v2124
    %v2510 = vpack.c.b16 %v2130, %v2125
    %v2511 = vpack.c.b16 %v2131, %v2126
    %v2512 = vpack.c.b16 %v2132, %v2127
    %v2513 = vpack.c.b16 %v2138, %v2133
    %v2514 = vpack.c.b16 %v2139, %v2134
    %v2515 = vpack.c.b16 %v2140, %v2135
    %v2516 = vpack.c.b16 %v2141, %v2136
    %v2517 = vpack.c.b16 %v2142, %v2137
    %v2518 = vpack.c.b16 %v2148, %v2143
    %v2519 = vpack.c.b16 %v2149, %v2144
    %v2520 = vpack.c.b16 %v2150, %v2145
    %v2521 = vpack.c.b16 %v2151, %v2146
    %v2522 = vpack.c.b16 %v2152, %v2147
    %v2523 = vpack.c.b16 %v2158, %v2153
    %v2524 = vpack.c.b16 %v2159, %v2154
    %v2525 = vpack.c.b16 %v2160, %v2155
    %v2526 = vpack.c.b16 %v2161, %v2156
    %v2527 = vpack.c.b16 %v2162, %v2157
    %v2528 = vpack.c.b16 %v2168, %v2163
    %v2529 = vpack.c.b16 %v2169, %v2164
    %v2530 = vpack.c.b16 %v2170, %v2165
    %v2531 = vpack.c.b16 %v2171, %v2166
    %v2532 = vpack.c.b16 %v2172, %v2167
    %v2533 = vpack.c.b16 %v2178, %v2173
    %v2534 = vpack.c.b16 %v2179, %v2174
    %v2535 = vpack.c.b16 %v2180, %v2175
    %v2536 = vpack.c.b16 %v2181, %v2176
    %v2537 = vpack.c.b16 %v2182, %v2177
    %v2538 = vpack.c.b16 %v2188, %v2183
    %v2539 = vpack.c.b16 %v2189, %v2184
    %v2540 = vpack.c.b16 %v2190, %v2185
    %v2541 = vpack.c.b16 %v2191, %v2186
    %v2542 = vpack.c.b16 %v2192, %v2187
    %v2543 = vpack.c.b16 %v2198, %v2193
    %v2544 = vpack.c.b16 %v2199, %v2194
    %v2545 = vpack.c.b16 %v2200, %v2195
    %v2546 = vpack.c.b16 %v2201, %v2196
    %v2547 = vpack.c.b16 %v2202, %v2197
    %v2548 = vpack.c.b16 %v2208, %v2203
    %v2549 = vpack.c.b16 %v2209, %v2204
    %v2550 = vpack.c.b16 %v2210, %v2205
    %v2551 = vpack.c.b16 %v2211, %v2206
    %v2552 = vpack.c.b16 %v2212, %v2207
    %v2553 = vpack.c.b16 %v2218, %v2213
    %v2554 = vpack.c.b16 %v2219, %v2214
    %v2555 = vpack.c.b16 %v2220, %v2215
    %v2556 = vpack.c.b16 %v2221, %v2216
    %v2557 = vpack.c.b16 %v2222, %v2217
    %v2558 = vpack.c.b16 %v2228, %v2223
    %v2559 = vpack.c.b16 %v2229, %v2224
    %v2560 = vpack.c.b16 %v2230, %v2225
    %v2561 = vpack.c.b16 %v2231, %v2226
    %v2562 = vpack.c.b16 %v2232, %v2227
    %v2563 = vpack.c.b16 %v2238, %v2233
    %v2564 = vpack.c.b16 %v2239, %v2234
    %v2565 = vpack.c.b16 %v2240, %v2235
    %v2566 = vpack.c.b16 %v2241, %v2236
    %v2567 = vpack.c.b16 %v2242, %v2237
    %v2568 = vpack.c.b16 %v2248, %v2243
    %v2569 = vpack.c.b16 %v2249, %v2244
    %v2570 = vpack.c.b16 %v2250, %v2245
    %v2571 = vpack.c.b16 %v2251, %v2246
    %v2572 = vpack.c.b16 %v2252, %v2247
    %2893 = vmatprep.subr.bf16.mxu0 %v2254
    %2894 = vmatpush1.bf16.msra.mxu0 %v2253
    %2895 = vmatprep.subr.bf16.mxu0 %v2259
    %2896 = vmatpush1.bf16.msra.mxu0 %v2258
    %2897 = vmatprep.subr.bf16.mxu0 %v2264
    %2898 = vmatpush1.bf16.msra.mxu0 %v2263
    %2899 = vmatprep.subr.bf16.mxu0 %v2269
    %2900 = vmatpush1.bf16.msra.mxu0 %v2268
    %2901 = vmatprep.subr.bf16.mxu0 %v2274
    %2902 = vmatpush1.bf16.msra.mxu0 %v2273
    %2903 = vmatprep.subr.bf16.mxu0 %v2279
    %2904 = vmatpush1.bf16.msra.mxu0 %v2278
    %2905 = vmatprep.subr.bf16.mxu0 %v2284
    %2906 = vmatpush1.bf16.msra.mxu0 %v2283
    %2907 = vmatprep.subr.bf16.mxu0 %v2289
    %2908 = vmatpush1.bf16.msra.mxu0 %v2288
    %2909 = vmatprep.subr.bf16.mxu0 %v2294
    %2910 = vmatpush1.bf16.msra.mxu0 %v2293
    %2911 = vmatprep.subr.bf16.mxu0 %v2299
    %2912 = vmatpush1.bf16.msra.mxu0 %v2298
    %2913 = vmatprep.subr.bf16.mxu0 %v2304
    %2914 = vmatpush1.bf16.msra.mxu0 %v2303
    %2915 = vmatprep.subr.bf16.mxu0 %v2309
    %2916 = vmatpush1.bf16.msra.mxu0 %v2308
    %2917 = vmatprep.subr.bf16.mxu0 %v2314
    %2918 = vmatpush1.bf16.msra.mxu0 %v2313
    %2919 = vmatprep.subr.bf16.mxu0 %v2319
    %2920 = vmatpush1.bf16.msra.mxu0 %v2318
    %2921 = vmatprep.subr.bf16.mxu0 %v2324
    %2922 = vmatpush1.bf16.msra.mxu0 %v2323
    %2923 = vmatprep.subr.bf16.mxu0 %v2329
    %2924 = vmatpush1.bf16.msra.mxu0 %v2328
    %2925 = vmatprep.mubr.bf16.mxu0 %v1134
    %2926 = vmatmul.mubr.bf16.gmra.mrb[0].mxu0 %v1133
    %v2927 = vpop.f32.mrb[0].mxu0
    %v2928 = vadd.f32 0.0, %v2927
    %v2929 = vpop.f32.mrb[0].mxu0
    %v2930 = vadd.f32 0.0, %v2929
    %v2931 = vpop.f32.mrb[0].mxu0
    %v2932 = vadd.f32 0.0, %v2931
    %v2933 = vpop.f32.mrb[0].mxu0
    %v2934 = vadd.f32 0.0, %v2933
    %2935 = vmatprep.mubr.bf16.mxu0 %v1142
    %2936 = vmatmul.mubr.bf16.gmra.mrb[0].mxu0 %v1141
    %v2937 = vpop.f32.mrb[0].mxu0
    %v2938 = vadd.f32 0.0, %v2937
    %v2939 = vpop.f32.mrb[0].mxu0
    %v2940 = vadd.f32 0.0, %v2939
    %v2941 = vpop.f32.mrb[0].mxu0
    %v2942 = vadd.f32 0.0, %v2941
    %v2943 = vpop.f32.mrb[0].mxu0
    %v2944 = vadd.f32 0.0, %v2943
    %2945 = vmatprep.mubr.bf16.mxu0 %v1150
    %2946 = vmatmul.mubr.bf16.gmra.mrb[0].mxu0 %v1149
    %v2947 = vpop.f32.mrb[0].mxu0
    %v2948 = vadd.f32 0.0, %v2947
    %v2949 = vpop.f32.mrb[0].mxu0
    %v2950 = vadd.f32 0.0, %v2949
    %v2951 = vpop.f32.mrb[0].mxu0
    %v2952 = vadd.f32 0.0, %v2951
    %v2953 = vpop.f32.mrb[0].mxu0
    %v2954 = vadd.f32 0.0, %v2953
    %2955 = vmatprep.mubr.bf16.mxu0 %v1158
    %2956 = vmatmul.mubr.bf16.gmra.mrb[0].mxu0 %v1157
    %v2957 = vpop.f32.mrb[0].mxu0
    %v2958 = vadd.f32 0.0, %v2957
    %v2959 = vpop.f32.mrb[0].mxu0
    %v2960 = vadd.f32 0.0, %v2959
    %v2961 = vpop.f32.mrb[0].mxu0
    %v2962 = vadd.f32 0.0, %v2961
    %v2963 = vpop.f32.mrb[0].mxu0
    %v2964 = vadd.f32 0.0, %v2963
    %2965 = vmatprep.mubr.bf16.mxu0 %v1166
    %2966 = vmatmul.mubr.bf16.gmra.mrb[0].mxu0 %v1165
    %v2967 = vpop.f32.mrb[0].mxu0
    %v2968 = vadd.f32 0.0, %v2967
    %v2969 = vpop.f32.mrb[0].mxu0
    %v2970 = vadd.f32 0.0, %v2969
    %v2971 = vpop.f32.mrb[0].mxu0
    %v2972 = vadd.f32 0.0, %v2971
    %v2973 = vpop.f32.mrb[0].mxu0
    %v2974 = vadd.f32 0.0, %v2973
    %2975 = vmatprep.mubr.bf16.mxu0 %v1174
    %2976 = vmatmul.mubr.bf16.gmra.mrb[0].mxu0 %v1173
    %v2977 = vpop.f32.mrb[0].mxu0
    %v2978 = vadd.f32 0.0, %v2977
    %v2979 = vpop.f32.mrb[0].mxu0
    %v2980 = vadd.f32 0.0, %v2979
    %v2981 = vpop.f32.mrb[0].mxu0
    %v2982 = vadd.f32 0.0, %v2981
    %v2983 = vpop.f32.mrb[0].mxu0
    %v2984 = vadd.f32 0.0, %v2983
    %2985 = vdwg.mxu0
    %2986 = vmatprep.subr.bf16.mxu0 %v2334
    %2987 = vmatpush1.bf16.msra.mxu0 %v2333
    %2988 = vmatprep.subr.bf16.mxu0 %v2339
    %2989 = vmatpush1.bf16.msra.mxu0 %v2338
    %2990 = vmatprep.subr.bf16.mxu0 %v2344
    %2991 = vmatpush1.bf16.msra.mxu0 %v2343
    %2992 = vmatprep.subr.bf16.mxu0 %v2349
    %2993 = vmatpush1.bf16.msra.mxu0 %v2348
    %2994 = vmatprep.subr.bf16.mxu0 %v2354
    %2995 = vmatpush1.bf16.msra.mxu0 %v2353
    %2996 = vmatprep.subr.bf16.mxu0 %v2359
    %2997 = vmatpush1.bf16.msra.mxu0 %v2358
    %2998 = vmatprep.subr.bf16.mxu0 %v2364
    %2999 = vmatpush1.bf16.msra.mxu0 %v2363
    %3000 = vmatprep.subr.bf16.mxu0 %v2369
    %3001 = vmatpush1.bf16.msra.mxu0 %v2368
    %3002 = vmatprep.subr.bf16.mxu0 %v2374
    %3003 = vmatpush1.bf16.msra.mxu0 %v2373
    %3004 = vmatprep.subr.bf16.mxu0 %v2379
    %3005 = vmatpush1.bf16.msra.mxu0 %v2378
    %3006 = vmatprep.subr.bf16.mxu0 %v2384
    %3007 = vmatpush1.bf16.msra.mxu0 %v2383
    %3008 = vmatprep.subr.bf16.mxu0 %v2389
    %3009 = vmatpush1.bf16.msra.mxu0 %v2388
    %3010 = vmatprep.subr.bf16.mxu0 %v2394
    %3011 = vmatpush1.bf16.msra.mxu0 %v2393
    %3012 = vmatprep.subr.bf16.mxu0 %v2399
    %3013 = vmatpush1.bf16.msra.mxu0 %v2398
    %3014 = vmatprep.subr.bf16.mxu0 %v2404
    %3015 = vmatpush1.bf16.msra.mxu0 %v2403
    %3016 = vmatprep.subr.bf16.mxu0 %v2409
    %3017 = vmatpush1.bf16.msra.mxu0 %v2408
    %3018 = vmatprep.mubr.bf16.mxu0 %v1136
    %3019 = vmatmul.mubr.bf16.gmra.mrb[0].mxu0 %v1135
    %v3020 = vpop.f32.mrb[0].mxu0
    %v3021 = vadd.f32 %v2928, %v3020
    %v3022 = vpop.f32.mrb[0].mxu0
    %v3023 = vadd.f32 %v2930, %v3022
    %v3024 = vpop.f32.mrb[0].mxu0
    %v3025 = vadd.f32 %v2932, %v3024
    %v3026 = vpop.f32.mrb[0].mxu0
    %v3027 = vadd.f32 %v2934, %v3026
    %3028 = vmatprep.mubr.bf16.mxu0 %v1144
    %3029 = vmatmul.mubr.bf16.gmra.mrb[0].mxu0 %v1143
    %v3030 = vpop.f32.mrb[0].mxu0
    %v3031 = vadd.f32 %v2938, %v3030
    %v3032 = vpop.f32.mrb[0].mxu0
    %v3033 = vadd.f32 %v2940, %v3032
    %v3034 = vpop.f32.mrb[0].mxu0
    %v3035 = vadd.f32 %v2942, %v3034
    %v3036 = vpop.f32.mrb[0].mxu0
    %v3037 = vadd.f32 %v2944, %v3036
    %3038 = vmatprep.mubr.bf16.mxu0 %v1152
    %3039 = vmatmul.mubr.bf16.gmra.mrb[0].mxu0 %v1151
    %v3040 = vpop.f32.mrb[0].mxu0
    %v3041 = vadd.f32 %v2948, %v3040
    %v3042 = vpop.f32.mrb[0].mxu0
    %v3043 = vadd.f32 %v2950, %v3042
    %v3044 = vpop.f32.mrb[0].mxu0
    %v3045 = vadd.f32 %v2952, %v3044
    %v3046 = vpop.f32.mrb[0].mxu0
    %v3047 = vadd.f32 %v2954, %v3046
    %3048 = vmatprep.mubr.bf16.mxu0 %v1160
    %3049 = vmatmul.mubr.bf16.gmra.mrb[0].mxu0 %v1159
    %v3050 = vpop.f32.mrb[0].mxu0
    %v3051 = vadd.f32 %v2958, %v3050
    %v3052 = vpop.f32.mrb[0].mxu0
    %v3053 = vadd.f32 %v2960, %v3052
    %v3054 = vpop.f32.mrb[0].mxu0
    %v3055 = vadd.f32 %v2962, %v3054
    %v3056 = vpop.f32.mrb[0].mxu0
    %v3057 = vadd.f32 %v2964, %v3056
    %3058 = vmatprep.mubr.bf16.mxu0 %v1168
    %3059 = vmatmul.mubr.bf16.gmra.mrb[0].mxu0 %v1167
    %v3060 = vpop.f32.mrb[0].mxu0
    %v3061 = vadd.f32 %v2968, %v3060
    %v3062 = vpop.f32.mrb[0].mxu0
    %v3063 = vadd.f32 %v2970, %v3062
    %v3064 = vpop.f32.mrb[0].mxu0
    %v3065 = vadd.f32 %v2972, %v3064
    %v3066 = vpop.f32.mrb[0].mxu0
    %v3067 = vadd.f32 %v2974, %v3066
    %3068 = vmatprep.mubr.bf16.mxu0 %v1176
    %3069 = vmatmul.mubr.bf16.gmra.mrb[0].mxu0 %v1175
    %v3070 = vpop.f32.mrb[0].mxu0
    %v3071 = vadd.f32 %v2978, %v3070
    %v3072 = vpop.f32.mrb[0].mxu0
    %v3073 = vadd.f32 %v2980, %v3072
    %v3074 = vpop.f32.mrb[0].mxu0
    %v3075 = vadd.f32 %v2982, %v3074
    %v3076 = vpop.f32.mrb[0].mxu0
    %v3077 = vadd.f32 %v2984, %v3076
    %3078 = vdwg.mxu0
    %3079 = vmatprep.subr.bf16.mxu0 %v2414
    %3080 = vmatpush1.bf16.msra.mxu0 %v2413
    %3081 = vmatprep.subr.bf16.mxu0 %v2419
    %3082 = vmatpush1.bf16.msra.mxu0 %v2418
    %3083 = vmatprep.subr.bf16.mxu0 %v2424
    %3084 = vmatpush1.bf16.msra.mxu0 %v2423
    %3085 = vmatprep.subr.bf16.mxu0 %v2429
    %3086 = vmatpush1.bf16.msra.mxu0 %v2428
    %3087 = vmatprep.subr.bf16.mxu0 %v2434
    %3088 = vmatpush1.bf16.msra.mxu0 %v2433
    %3089 = vmatprep.subr.bf16.mxu0 %v2439
    %3090 = vmatpush1.bf16.msra.mxu0 %v2438
    %3091 = vmatprep.subr.bf16.mxu0 %v2444
    %3092 = vmatpush1.bf16.msra.mxu0 %v2443
    %3093 = vmatprep.subr.bf16.mxu0 %v2449
    %3094 = vmatpush1.bf16.msra.mxu0 %v2448
    %3095 = vmatprep.subr.bf16.mxu0 %v2454
    %3096 = vmatpush1.bf16.msra.mxu0 %v2453
    %3097 = vmatprep.subr.bf16.mxu0 %v2459
    %3098 = vmatpush1.bf16.msra.mxu0 %v2458
    %3099 = vmatprep.subr.bf16.mxu0 %v2464
    %3100 = vmatpush1.bf16.msra.mxu0 %v2463
    %3101 = vmatprep.subr.bf16.mxu0 %v2469
    %3102 = vmatpush1.bf16.msra.mxu0 %v2468
    %3103 = vmatprep.subr.bf16.mxu0 %v2474
    %3104 = vmatpush1.bf16.msra.mxu0 %v2473
    %3105 = vmatprep.subr.bf16.mxu0 %v2479
    %3106 = vmatpush1.bf16.msra.mxu0 %v2478
    %3107 = vmatprep.subr.bf16.mxu0 %v2484
    %3108 = vmatpush1.bf16.msra.mxu0 %v2483
    %3109 = vmatprep.subr.bf16.mxu0 %v2489
    %3110 = vmatpush1.bf16.msra.mxu0 %v2488
    %3111 = vmatprep.mubr.bf16.mxu0 %v1138
    %3112 = vmatmul.mubr.bf16.gmra.mrb[0].mxu0 %v1137
    %v3113 = vpop.f32.mrb[0].mxu0
    %v3114 = vadd.f32 %v3021, %v3113
    %v3115 = vpop.f32.mrb[0].mxu0
    %v3116 = vadd.f32 %v3023, %v3115
    %v3117 = vpop.f32.mrb[0].mxu0
    %v3118 = vadd.f32 %v3025, %v3117
    %v3119 = vpop.f32.mrb[0].mxu0
    %v3120 = vadd.f32 %v3027, %v3119
    %3121 = vmatprep.mubr.bf16.mxu0 %v1146
    %3122 = vmatmul.mubr.bf16.gmra.mrb[0].mxu0 %v1145
    %v3123 = vpop.f32.mrb[0].mxu0
    %v3124 = vadd.f32 %v3031, %v3123
    %v3125 = vpop.f32.mrb[0].mxu0
    %v3126 = vadd.f32 %v3033, %v3125
    %v3127 = vpop.f32.mrb[0].mxu0
    %v3128 = vadd.f32 %v3035, %v3127
    %v3129 = vpop.f32.mrb[0].mxu0
    %v3130 = vadd.f32 %v3037, %v3129
    %3131 = vmatprep.mubr.bf16.mxu0 %v1154
    %3132 = vmatmul.mubr.bf16.gmra.mrb[0].mxu0 %v1153
    %v3133 = vpop.f32.mrb[0].mxu0
    %v3134 = vadd.f32 %v3041, %v3133
    %v3135 = vpop.f32.mrb[0].mxu0
    %v3136 = vadd.f32 %v3043, %v3135
    %v3137 = vpop.f32.mrb[0].mxu0
    %v3138 = vadd.f32 %v3045, %v3137
    %v3139 = vpop.f32.mrb[0].mxu0
    %v3140 = vadd.f32 %v3047, %v3139
    %3141 = vmatprep.mubr.bf16.mxu0 %v1162
    %3142 = vmatmul.mubr.bf16.gmra.mrb[0].mxu0 %v1161
    %v3143 = vpop.f32.mrb[0].mxu0
    %v3144 = vadd.f32 %v3051, %v3143
    %v3145 = vpop.f32.mrb[0].mxu0
    %v3146 = vadd.f32 %v3053, %v3145
    %v3147 = vpop.f32.mrb[0].mxu0
    %v3148 = vadd.f32 %v3055, %v3147
    %v3149 = vpop.f32.mrb[0].mxu0
    %v3150 = vadd.f32 %v3057, %v3149
    %3151 = vmatprep.mubr.bf16.mxu0 %v1170
    %3152 = vmatmul.mubr.bf16.gmra.mrb[0].mxu0 %v1169
    %v3153 = vpop.f32.mrb[0].mxu0
    %v3154 = vadd.f32 %v3061, %v3153
    %v3155 = vpop.f32.mrb[0].mxu0
    %v3156 = vadd.f32 %v3063, %v3155
    %v3157 = vpop.f32.mrb[0].mxu0
    %v3158 = vadd.f32 %v3065, %v3157
    %v3159 = vpop.f32.mrb[0].mxu0
    %v3160 = vadd.f32 %v3067, %v3159
    %3161 = vmatprep.mubr.bf16.mxu0 %v1178
    %3162 = vmatmul.mubr.bf16.gmra.mrb[0].mxu0 %v1177
    %v3163 = vpop.f32.mrb[0].mxu0
    %v3164 = vadd.f32 %v3071, %v3163
    %v3165 = vpop.f32.mrb[0].mxu0
    %v3166 = vadd.f32 %v3073, %v3165
    %v3167 = vpop.f32.mrb[0].mxu0
    %v3168 = vadd.f32 %v3075, %v3167
    %v3169 = vpop.f32.mrb[0].mxu0
    %v3170 = vadd.f32 %v3077, %v3169
    %3171 = vdwg.mxu0
    %3172 = vmatprep.subr.bf16.mxu0 %v2494
    %3173 = vmatpush1.bf16.msra.mxu0 %v2493
    %3174 = vmatprep.subr.bf16.mxu0 %v2499
    %3175 = vmatpush1.bf16.msra.mxu0 %v2498
    %3176 = vmatprep.subr.bf16.mxu0 %v2504
    %3177 = vmatpush1.bf16.msra.mxu0 %v2503
    %3178 = vmatprep.subr.bf16.mxu0 %v2509
    %3179 = vmatpush1.bf16.msra.mxu0 %v2508
    %3180 = vmatprep.subr.bf16.mxu0 %v2514
    %3181 = vmatpush1.bf16.msra.mxu0 %v2513
    %3182 = vmatprep.subr.bf16.mxu0 %v2519
    %3183 = vmatpush1.bf16.msra.mxu0 %v2518
    %3184 = vmatprep.subr.bf16.mxu0 %v2524
    %3185 = vmatpush1.bf16.msra.mxu0 %v2523
    %3186 = vmatprep.subr.bf16.mxu0 %v2529
    %3187 = vmatpush1.bf16.msra.mxu0 %v2528
    %3188 = vmatprep.subr.bf16.mxu0 %v2534
    %3189 = vmatpush1.bf16.msra.mxu0 %v2533
    %3190 = vmatprep.subr.bf16.mxu0 %v2539
    %3191 = vmatpush1.bf16.msra.mxu0 %v2538
    %3192 = vmatprep.subr.bf16.mxu0 %v2544
    %3193 = vmatpush1.bf16.msra.mxu0 %v2543
    %3194 = vmatprep.subr.bf16.mxu0 %v2549
    %3195 = vmatpush1.bf16.msra.mxu0 %v2548
    %3196 = vmatprep.subr.bf16.mxu0 %v2554
    %3197 = vmatpush1.bf16.msra.mxu0 %v2553
    %3198 = vmatprep.subr.bf16.mxu0 %v2559
    %3199 = vmatpush1.bf16.msra.mxu0 %v2558
    %3200 = vmatprep.subr.bf16.mxu0 %v2564
    %3201 = vmatpush1.bf16.msra.mxu0 %v2563
    %3202 = vmatprep.subr.bf16.mxu0 %v2569
    %3203 = vmatpush1.bf16.msra.mxu0 %v2568
    %3204 = vmatprep.mubr.bf16.mxu0 %v1140
    %3205 = vmatmul.mubr.bf16.gmra.mrb[0].mxu0 %v1139
    %v3206 = vpop.f32.mrb[0].mxu0
    %v3207 = vadd.f32 %v3114, %v3206
    %v3208 = vpop.f32.mrb[0].mxu0
    %v3209 = vadd.f32 %v3116, %v3208
    %v3210 = vpop.f32.mrb[0].mxu0
    %v3211 = vadd.f32 %v3118, %v3210
    %v3212 = vpop.f32.mrb[0].mxu0
    %v3213 = vadd.f32 %v3120, %v3212
    %3214 = vmatprep.mubr.bf16.mxu0 %v1148
    %3215 = vmatmul.mubr.bf16.gmra.mrb[0].mxu0 %v1147
    %v3216 = vpop.f32.mrb[0].mxu0
    %v3217 = vadd.f32 %v3124, %v3216
    %v3218 = vpop.f32.mrb[0].mxu0
    %v3219 = vadd.f32 %v3126, %v3218
    %v3220 = vpop.f32.mrb[0].mxu0
    %v3221 = vadd.f32 %v3128, %v3220
    %v3222 = vpop.f32.mrb[0].mxu0
    %v3223 = vadd.f32 %v3130, %v3222
    %3224 = vmatprep.mubr.bf16.mxu0 %v1156
    %3225 = vmatmul.mubr.bf16.gmra.mrb[0].mxu0 %v1155
    %v3226 = vpop.f32.mrb[0].mxu0
    %v3227 = vadd.f32 %v3134, %v3226
    %v3228 = vpop.f32.mrb[0].mxu0
    %v3229 = vadd.f32 %v3136, %v3228
    %v3230 = vpop.f32.mrb[0].mxu0
    %v3231 = vadd.f32 %v3138, %v3230
    %v3232 = vpop.f32.mrb[0].mxu0
    %v3233 = vadd.f32 %v3140, %v3232
    %3234 = vmatprep.mubr.bf16.mxu0 %v1164
    %3235 = vmatmul.mubr.bf16.gmra.mrb[0].mxu0 %v1163
    %v3236 = vpop.f32.mrb[0].mxu0
    %v3237 = vadd.f32 %v3144, %v3236
    %v3238 = vpop.f32.mrb[0].mxu0
    %v3239 = vadd.f32 %v3146, %v3238
    %v3240 = vpop.f32.mrb[0].mxu0
    %v3241 = vadd.f32 %v3148, %v3240
    %v3242 = vpop.f32.mrb[0].mxu0
    %v3243 = vadd.f32 %v3150, %v3242
    %3244 = vmatprep.mubr.bf16.mxu0 %v1172
    %3245 = vmatmul.mubr.bf16.gmra.mrb[0].mxu0 %v1171
    %v3246 = vpop.f32.mrb[0].mxu0
    %v3247 = vadd.f32 %v3154, %v3246
    %v3248 = vpop.f32.mrb[0].mxu0
    %v3249 = vadd.f32 %v3156, %v3248
    %v3250 = vpop.f32.mrb[0].mxu0
    %v3251 = vadd.f32 %v3158, %v3250
    %v3252 = vpop.f32.mrb[0].mxu0
    %v3253 = vadd.f32 %v3160, %v3252
    %3254 = vmatprep.mubr.bf16.mxu0 %v1180
    %3255 = vmatmul.mubr.bf16.gmra.mrb[0].mxu0 %v1179
    %v3256 = vpop.f32.mrb[0].mxu0
    %v3257 = vadd.f32 %v3164, %v3256
    %v3258 = vpop.f32.mrb[0].mxu0
    %v3259 = vadd.f32 %v3166, %v3258
    %v3260 = vpop.f32.mrb[0].mxu0
    %v3261 = vadd.f32 %v3168, %v3260
    %v3262 = vpop.f32.mrb[0].mxu0
    %v3263 = vadd.f32 %v3170, %v3262
    %3264 = vdwg.mxu0
    %3265 = vmatprep.subr.bf16.mxu0 %v2256
    %3266 = vmatpush1.bf16.msra.mxu0 %v2255
    %3267 = vmatprep.subr.bf16.mxu0 %v2261
    %3268 = vmatpush1.bf16.msra.mxu0 %v2260
    %3269 = vmatprep.subr.bf16.mxu0 %v2266
    %3270 = vmatpush1.bf16.msra.mxu0 %v2265
    %3271 = vmatprep.subr.bf16.mxu0 %v2271
    %3272 = vmatpush1.bf16.msra.mxu0 %v2270
    %3273 = vmatprep.subr.bf16.mxu0 %v2276
    %3274 = vmatpush1.bf16.msra.mxu0 %v2275
    %3275 = vmatprep.subr.bf16.mxu0 %v2281
    %3276 = vmatpush1.bf16.msra.mxu0 %v2280
    %3277 = vmatprep.subr.bf16.mxu0 %v2286
    %3278 = vmatpush1.bf16.msra.mxu0 %v2285
    %3279 = vmatprep.subr.bf16.mxu0 %v2291
    %3280 = vmatpush1.bf16.msra.mxu0 %v2290
    %3281 = vmatprep.subr.bf16.mxu0 %v2296
    %3282 = vmatpush1.bf16.msra.mxu0 %v2295
    %3283 = vmatprep.subr.bf16.mxu0 %v2301
    %3284 = vmatpush1.bf16.msra.mxu0 %v2300
    %3285 = vmatprep.subr.bf16.mxu0 %v2306
    %3286 = vmatpush1.bf16.msra.mxu0 %v2305
    %3287 = vmatprep.subr.bf16.mxu0 %v2311
    %3288 = vmatpush1.bf16.msra.mxu0 %v2310
    %3289 = vmatprep.subr.bf16.mxu0 %v2316
    %3290 = vmatpush1.bf16.msra.mxu0 %v2315
    %3291 = vmatprep.subr.bf16.mxu0 %v2321
    %3292 = vmatpush1.bf16.msra.mxu0 %v2320
    %3293 = vmatprep.subr.bf16.mxu0 %v2326
    %3294 = vmatpush1.bf16.msra.mxu0 %v2325
    %3295 = vmatprep.subr.bf16.mxu0 %v2331
    %3296 = vmatpush1.bf16.msra.mxu0 %v2330
    %3297 = vmatprep.mubr.bf16.mxu0 %v1134
    %3298 = vmatmul.mubr.bf16.gmra.mrb[0].mxu0 %v1133
    %v3299 = vpop.f32.mrb[0].mxu0
    %v3300 = vadd.f32 0.0, %v3299
    %v3301 = vpop.f32.mrb[0].mxu0
    %v3302 = vadd.f32 0.0, %v3301
    %v3303 = vpop.f32.mrb[0].mxu0
    %v3304 = vadd.f32 0.0, %v3303
    %v3305 = vpop.f32.mrb[0].mxu0
    %v3306 = vadd.f32 0.0, %v3305
    %3307 = vmatprep.mubr.bf16.mxu0 %v1142
    %3308 = vmatmul.mubr.bf16.gmra.mrb[0].mxu0 %v1141
    %v3309 = vpop.f32.mrb[0].mxu0
    %v3310 = vadd.f32 0.0, %v3309
    %v3311 = vpop.f32.mrb[0].mxu0
    %v3312 = vadd.f32 0.0, %v3311
    %v3313 = vpop.f32.mrb[0].mxu0
    %v3314 = vadd.f32 0.0, %v3313
    %v3315 = vpop.f32.mrb[0].mxu0
    %v3316 = vadd.f32 0.0, %v3315
    %3317 = vmatprep.mubr.bf16.mxu0 %v1150
    %3318 = vmatmul.mubr.bf16.gmra.mrb[0].mxu0 %v1149
    %v3319 = vpop.f32.mrb[0].mxu0
    %v3320 = vadd.f32 0.0, %v3319
    %v3321 = vpop.f32.mrb[0].mxu0
    %v3322 = vadd.f32 0.0, %v3321
    %v3323 = vpop.f32.mrb[0].mxu0
    %v3324 = vadd.f32 0.0, %v3323
    %v3325 = vpop.f32.mrb[0].mxu0
    %v3326 = vadd.f32 0.0, %v3325
    %3327 = vmatprep.mubr.bf16.mxu0 %v1158
    %3328 = vmatmul.mubr.bf16.gmra.mrb[0].mxu0 %v1157
    %v3329 = vpop.f32.mrb[0].mxu0
    %v3330 = vadd.f32 0.0, %v3329
    %v3331 = vpop.f32.mrb[0].mxu0
    %v3332 = vadd.f32 0.0, %v3331
    %v3333 = vpop.f32.mrb[0].mxu0
    %v3334 = vadd.f32 0.0, %v3333
    %v3335 = vpop.f32.mrb[0].mxu0
    %v3336 = vadd.f32 0.0, %v3335
    %3337 = vmatprep.mubr.bf16.mxu0 %v1166
    %3338 = vmatmul.mubr.bf16.gmra.mrb[0].mxu0 %v1165
    %v3339 = vpop.f32.mrb[0].mxu0
    %v3340 = vadd.f32 0.0, %v3339
    %v3341 = vpop.f32.mrb[0].mxu0
    %v3342 = vadd.f32 0.0, %v3341
    %v3343 = vpop.f32.mrb[0].mxu0
    %v3344 = vadd.f32 0.0, %v3343
    %v3345 = vpop.f32.mrb[0].mxu0
    %v3346 = vadd.f32 0.0, %v3345
    %3347 = vmatprep.mubr.bf16.mxu0 %v1174
    %3348 = vmatmul.mubr.bf16.gmra.mrb[0].mxu0 %v1173
    %v3349 = vpop.f32.mrb[0].mxu0
    %v3350 = vadd.f32 0.0, %v3349
    %v3351 = vpop.f32.mrb[0].mxu0
    %v3352 = vadd.f32 0.0, %v3351
    %v3353 = vpop.f32.mrb[0].mxu0
    %v3354 = vadd.f32 0.0, %v3353
    %v3355 = vpop.f32.mrb[0].mxu0
    %v3356 = vadd.f32 0.0, %v3355
    %3357 = vdwg.mxu0
    %3358 = vmatprep.subr.bf16.mxu0 %v2336
    %3359 = vmatpush1.bf16.msra.mxu0 %v2335
    %3360 = vmatprep.subr.bf16.mxu0 %v2341
    %3361 = vmatpush1.bf16.msra.mxu0 %v2340
    %3362 = vmatprep.subr.bf16.mxu0 %v2346
    %3363 = vmatpush1.bf16.msra.mxu0 %v2345
    %3364 = vmatprep.subr.bf16.mxu0 %v2351
    %3365 = vmatpush1.bf16.msra.mxu0 %v2350
    %3366 = vmatprep.subr.bf16.mxu0 %v2356
    %3367 = vmatpush1.bf16.msra.mxu0 %v2355
    %3368 = vmatprep.subr.bf16.mxu0 %v2361
    %3369 = vmatpush1.bf16.msra.mxu0 %v2360
    %3370 = vmatprep.subr.bf16.mxu0 %v2366
    %3371 = vmatpush1.bf16.msra.mxu0 %v2365
    %3372 = vmatprep.subr.bf16.mxu0 %v2371
    %3373 = vmatpush1.bf16.msra.mxu0 %v2370
    %3374 = vmatprep.subr.bf16.mxu0 %v2376
    %3375 = vmatpush1.bf16.msra.mxu0 %v2375
    %3376 = vmatprep.subr.bf16.mxu0 %v2381
    %3377 = vmatpush1.bf16.msra.mxu0 %v2380
    %3378 = vmatprep.subr.bf16.mxu0 %v2386
    %3379 = vmatpush1.bf16.msra.mxu0 %v2385
    %3380 = vmatprep.subr.bf16.mxu0 %v2391
    %3381 = vmatpush1.bf16.msra.mxu0 %v2390
    %3382 = vmatprep.subr.bf16.mxu0 %v2396
    %3383 = vmatpush1.bf16.msra.mxu0 %v2395
    %3384 = vmatprep.subr.bf16.mxu0 %v2401
    %3385 = vmatpush1.bf16.msra.mxu0 %v2400
    %3386 = vmatprep.subr.bf16.mxu0 %v2406
    %3387 = vmatpush1.bf16.msra.mxu0 %v2405
    %3388 = vmatprep.subr.bf16.mxu0 %v2411
    %3389 = vmatpush1.bf16.msra.mxu0 %v2410
    %3390 = vmatprep.mubr.bf16.mxu0 %v1136
    %3391 = vmatmul.mubr.bf16.gmra.mrb[0].mxu0 %v1135
    %v3392 = vpop.f32.mrb[0].mxu0
    %v3393 = vadd.f32 %v3300, %v3392
    %v3394 = vpop.f32.mrb[0].mxu0
    %v3395 = vadd.f32 %v3302, %v3394
    %v3396 = vpop.f32.mrb[0].mxu0
    %v3397 = vadd.f32 %v3304, %v3396
    %v3398 = vpop.f32.mrb[0].mxu0
    %v3399 = vadd.f32 %v3306, %v3398
    %3400 = vmatprep.mubr.bf16.mxu0 %v1144
    %3401 = vmatmul.mubr.bf16.gmra.mrb[0].mxu0 %v1143
    %v3402 = vpop.f32.mrb[0].mxu0
    %v3403 = vadd.f32 %v3310, %v3402
    %v3404 = vpop.f32.mrb[0].mxu0
    %v3405 = vadd.f32 %v3312, %v3404
    %v3406 = vpop.f32.mrb[0].mxu0
    %v3407 = vadd.f32 %v3314, %v3406
    %v3408 = vpop.f32.mrb[0].mxu0
    %v3409 = vadd.f32 %v3316, %v3408
    %3410 = vmatprep.mubr.bf16.mxu0 %v1152
    %3411 = vmatmul.mubr.bf16.gmra.mrb[0].mxu0 %v1151
    %v3412 = vpop.f32.mrb[0].mxu0
    %v3413 = vadd.f32 %v3320, %v3412
    %v3414 = vpop.f32.mrb[0].mxu0
    %v3415 = vadd.f32 %v3322, %v3414
    %v3416 = vpop.f32.mrb[0].mxu0
    %v3417 = vadd.f32 %v3324, %v3416
    %v3418 = vpop.f32.mrb[0].mxu0
    %v3419 = vadd.f32 %v3326, %v3418
    %3420 = vmatprep.mubr.bf16.mxu0 %v1160
    %3421 = vmatmul.mubr.bf16.gmra.mrb[0].mxu0 %v1159
    %v3422 = vpop.f32.mrb[0].mxu0
    %v3423 = vadd.f32 %v3330, %v3422
    %v3424 = vpop.f32.mrb[0].mxu0
    %v3425 = vadd.f32 %v3332, %v3424
    %v3426 = vpop.f32.mrb[0].mxu0
    %v3427 = vadd.f32 %v3334, %v3426
    %v3428 = vpop.f32.mrb[0].mxu0
    %v3429 = vadd.f32 %v3336, %v3428
    %3430 = vmatprep.mubr.bf16.mxu0 %v1168
    %3431 = vmatmul.mubr.bf16.gmra.mrb[0].mxu0 %v1167
    %v3432 = vpop.f32.mrb[0].mxu0
    %v3433 = vadd.f32 %v3340, %v3432
    %v3434 = vpop.f32.mrb[0].mxu0
    %v3435 = vadd.f32 %v3342, %v3434
    %v3436 = vpop.f32.mrb[0].mxu0
    %v3437 = vadd.f32 %v3344, %v3436
    %v3438 = vpop.f32.mrb[0].mxu0
    %v3439 = vadd.f32 %v3346, %v3438
    %3440 = vmatprep.mubr.bf16.mxu0 %v1176
    %3441 = vmatmul.mubr.bf16.gmra.mrb[0].mxu0 %v1175
    %v3442 = vpop.f32.mrb[0].mxu0
    %v3443 = vadd.f32 %v3350, %v3442
    %v3444 = vpop.f32.mrb[0].mxu0
    %v3445 = vadd.f32 %v3352, %v3444
    %v3446 = vpop.f32.mrb[0].mxu0
    %v3447 = vadd.f32 %v3354, %v3446
    %v3448 = vpop.f32.mrb[0].mxu0
    %v3449 = vadd.f32 %v3356, %v3448
    %3450 = vdwg.mxu0
    %3451 = vmatprep.subr.bf16.mxu0 %v2416
    %3452 = vmatpush1.bf16.msra.mxu0 %v2415
    %3453 = vmatprep.subr.bf16.mxu0 %v2421
    %3454 = vmatpush1.bf16.msra.mxu0 %v2420
    %3455 = vmatprep.subr.bf16.mxu0 %v2426
    %3456 = vmatpush1.bf16.msra.mxu0 %v2425
    %3457 = vmatprep.subr.bf16.mxu0 %v2431
    %3458 = vmatpush1.bf16.msra.mxu0 %v2430
    %3459 = vmatprep.subr.bf16.mxu0 %v2436
    %3460 = vmatpush1.bf16.msra.mxu0 %v2435
    %3461 = vmatprep.subr.bf16.mxu0 %v2441
    %3462 = vmatpush1.bf16.msra.mxu0 %v2440
    %3463 = vmatprep.subr.bf16.mxu0 %v2446
    %3464 = vmatpush1.bf16.msra.mxu0 %v2445
    %3465 = vmatprep.subr.bf16.mxu0 %v2451
    %3466 = vmatpush1.bf16.msra.mxu0 %v2450
    %3467 = vmatprep.subr.bf16.mxu0 %v2456
    %3468 = vmatpush1.bf16.msra.mxu0 %v2455
    %3469 = vmatprep.subr.bf16.mxu0 %v2461
    %3470 = vmatpush1.bf16.msra.mxu0 %v2460
    %3471 = vmatprep.subr.bf16.mxu0 %v2466
    %3472 = vmatpush1.bf16.msra.mxu0 %v2465
    %3473 = vmatprep.subr.bf16.mxu0 %v2471
    %3474 = vmatpush1.bf16.msra.mxu0 %v2470
    %3475 = vmatprep.subr.bf16.mxu0 %v2476
    %3476 = vmatpush1.bf16.msra.mxu0 %v2475
    %3477 = vmatprep.subr.bf16.mxu0 %v2481
    %3478 = vmatpush1.bf16.msra.mxu0 %v2480
    %3479 = vmatprep.subr.bf16.mxu0 %v2486
    %3480 = vmatpush1.bf16.msra.mxu0 %v2485
    %3481 = vmatprep.subr.bf16.mxu0 %v2491
    %3482 = vmatpush1.bf16.msra.mxu0 %v2490
    %3483 = vmatprep.mubr.bf16.mxu0 %v1138
    %3484 = vmatmul.mubr.bf16.gmra.mrb[0].mxu0 %v1137
    %v3485 = vpop.f32.mrb[0].mxu0
    %v3486 = vadd.f32 %v3393, %v3485
    %v3487 = vpop.f32.mrb[0].mxu0
    %v3488 = vadd.f32 %v3395, %v3487
    %v3489 = vpop.f32.mrb[0].mxu0
    %v3490 = vadd.f32 %v3397, %v3489
    %v3491 = vpop.f32.mrb[0].mxu0
    %v3492 = vadd.f32 %v3399, %v3491
    %3493 = vmatprep.mubr.bf16.mxu0 %v1146
    %3494 = vmatmul.mubr.bf16.gmra.mrb[0].mxu0 %v1145
    %v3495 = vpop.f32.mrb[0].mxu0
    %v3496 = vadd.f32 %v3403, %v3495
    %v3497 = vpop.f32.mrb[0].mxu0
    %v3498 = vadd.f32 %v3405, %v3497
    %v3499 = vpop.f32.mrb[0].mxu0
    %v3500 = vadd.f32 %v3407, %v3499
    %v3501 = vpop.f32.mrb[0].mxu0
    %v3502 = vadd.f32 %v3409, %v3501
    %3503 = vmatprep.mubr.bf16.mxu0 %v1154
    %3504 = vmatmul.mubr.bf16.gmra.mrb[0].mxu0 %v1153
    %v3505 = vpop.f32.mrb[0].mxu0
    %v3506 = vadd.f32 %v3413, %v3505
    %v3507 = vpop.f32.mrb[0].mxu0
    %v3508 = vadd.f32 %v3415, %v3507
    %v3509 = vpop.f32.mrb[0].mxu0
    %v3510 = vadd.f32 %v3417, %v3509
    %v3511 = vpop.f32.mrb[0].mxu0
    %v3512 = vadd.f32 %v3419, %v3511
    %3513 = vmatprep.mubr.bf16.mxu0 %v1162
    %3514 = vmatmul.mubr.bf16.gmra.mrb[0].mxu0 %v1161
    %v3515 = vpop.f32.mrb[0].mxu0
    %v3516 = vadd.f32 %v3423, %v3515
    %v3517 = vpop.f32.mrb[0].mxu0
    %v3518 = vadd.f32 %v3425, %v3517
    %v3519 = vpop.f32.mrb[0].mxu0
    %v3520 = vadd.f32 %v3427, %v3519
    %v3521 = vpop.f32.mrb[0].mxu0
    %v3522 = vadd.f32 %v3429, %v3521
    %3523 = vmatprep.mubr.bf16.mxu0 %v1170
    %3524 = vmatmul.mubr.bf16.gmra.mrb[0].mxu0 %v1169
    %v3525 = vpop.f32.mrb[0].mxu0
    %v3526 = vadd.f32 %v3433, %v3525
    %v3527 = vpop.f32.mrb[0].mxu0
    %v3528 = vadd.f32 %v3435, %v3527
    %v3529 = vpop.f32.mrb[0].mxu0
    %v3530 = vadd.f32 %v3437, %v3529
    %v3531 = vpop.f32.mrb[0].mxu0
    %v3532 = vadd.f32 %v3439, %v3531
    %3533 = vmatprep.mubr.bf16.mxu0 %v1178
    %3534 = vmatmul.mubr.bf16.gmra.mrb[0].mxu0 %v1177
    %v3535 = vpop.f32.mrb[0].mxu0
    %v3536 = vadd.f32 %v3443, %v3535
    %v3537 = vpop.f32.mrb[0].mxu0
    %v3538 = vadd.f32 %v3445, %v3537
    %v3539 = vpop.f32.mrb[0].mxu0
    %v3540 = vadd.f32 %v3447, %v3539
    %v3541 = vpop.f32.mrb[0].mxu0
    %v3542 = vadd.f32 %v3449, %v3541
    %3543 = vdwg.mxu0
    %3544 = vmatprep.subr.bf16.mxu0 %v2496
    %3545 = vmatpush1.bf16.msra.mxu0 %v2495
    %3546 = vmatprep.subr.bf16.mxu0 %v2501
    %3547 = vmatpush1.bf16.msra.mxu0 %v2500
    %3548 = vmatprep.subr.bf16.mxu0 %v2506
    %3549 = vmatpush1.bf16.msra.mxu0 %v2505
    %3550 = vmatprep.subr.bf16.mxu0 %v2511
    %3551 = vmatpush1.bf16.msra.mxu0 %v2510
    %3552 = vmatprep.subr.bf16.mxu0 %v2516
    %3553 = vmatpush1.bf16.msra.mxu0 %v2515
    %3554 = vmatprep.subr.bf16.mxu0 %v2521
    %3555 = vmatpush1.bf16.msra.mxu0 %v2520
    %3556 = vmatprep.subr.bf16.mxu0 %v2526
    %3557 = vmatpush1.bf16.msra.mxu0 %v2525
    %3558 = vmatprep.subr.bf16.mxu0 %v2531
    %3559 = vmatpush1.bf16.msra.mxu0 %v2530
    %3560 = vmatprep.subr.bf16.mxu0 %v2536
    %3561 = vmatpush1.bf16.msra.mxu0 %v2535
    %3562 = vmatprep.subr.bf16.mxu0 %v2541
    %3563 = vmatpush1.bf16.msra.mxu0 %v2540
    %3564 = vmatprep.subr.bf16.mxu0 %v2546
    %3565 = vmatpush1.bf16.msra.mxu0 %v2545
    %3566 = vmatprep.subr.bf16.mxu0 %v2551
    %3567 = vmatpush1.bf16.msra.mxu0 %v2550
    %3568 = vmatprep.subr.bf16.mxu0 %v2556
    %3569 = vmatpush1.bf16.msra.mxu0 %v2555
    %3570 = vmatprep.subr.bf16.mxu0 %v2561
    %3571 = vmatpush1.bf16.msra.mxu0 %v2560
    %3572 = vmatprep.subr.bf16.mxu0 %v2566
    %3573 = vmatpush1.bf16.msra.mxu0 %v2565
    %3574 = vmatprep.subr.bf16.mxu0 %v2571
    %3575 = vmatpush1.bf16.msra.mxu0 %v2570
    %3576 = vmatprep.mubr.bf16.mxu0 %v1140
    %3577 = vmatmul.mubr.bf16.gmra.mrb[0].mxu0 %v1139
    %v3578 = vpop.f32.mrb[0].mxu0
    %v3579 = vadd.f32 %v3486, %v3578
    %v3580 = vpop.f32.mrb[0].mxu0
    %v3581 = vadd.f32 %v3488, %v3580
    %v3582 = vpop.f32.mrb[0].mxu0
    %v3583 = vadd.f32 %v3490, %v3582
    %v3584 = vpop.f32.mrb[0].mxu0
    %v3585 = vadd.f32 %v3492, %v3584
    %3586 = vmatprep.mubr.bf16.mxu0 %v1148
    %3587 = vmatmul.mubr.bf16.gmra.mrb[0].mxu0 %v1147
    %v3588 = vpop.f32.mrb[0].mxu0
    %v3589 = vadd.f32 %v3496, %v3588
    %v3590 = vpop.f32.mrb[0].mxu0
    %v3591 = vadd.f32 %v3498, %v3590
    %v3592 = vpop.f32.mrb[0].mxu0
    %v3593 = vadd.f32 %v3500, %v3592
    %v3594 = vpop.f32.mrb[0].mxu0
    %v3595 = vadd.f32 %v3502, %v3594
    %3596 = vmatprep.mubr.bf16.mxu0 %v1156
    %3597 = vmatmul.mubr.bf16.gmra.mrb[0].mxu0 %v1155
    %v3598 = vpop.f32.mrb[0].mxu0
    %v3599 = vadd.f32 %v3506, %v3598
    %v3600 = vpop.f32.mrb[0].mxu0
    %v3601 = vadd.f32 %v3508, %v3600
    %v3602 = vpop.f32.mrb[0].mxu0
    %v3603 = vadd.f32 %v3510, %v3602
    %v3604 = vpop.f32.mrb[0].mxu0
    %v3605 = vadd.f32 %v3512, %v3604
    %3606 = vmatprep.mubr.bf16.mxu0 %v1164
    %3607 = vmatmul.mubr.bf16.gmra.mrb[0].mxu0 %v1163
    %v3608 = vpop.f32.mrb[0].mxu0
    %v3609 = vadd.f32 %v3516, %v3608
    %v3610 = vpop.f32.mrb[0].mxu0
    %v3611 = vadd.f32 %v3518, %v3610
    %v3612 = vpop.f32.mrb[0].mxu0
    %v3613 = vadd.f32 %v3520, %v3612
    %v3614 = vpop.f32.mrb[0].mxu0
    %v3615 = vadd.f32 %v3522, %v3614
    %3616 = vmatprep.mubr.bf16.mxu0 %v1172
    %3617 = vmatmul.mubr.bf16.gmra.mrb[0].mxu0 %v1171
    %v3618 = vpop.f32.mrb[0].mxu0
    %v3619 = vadd.f32 %v3526, %v3618
    %v3620 = vpop.f32.mrb[0].mxu0
    %v3621 = vadd.f32 %v3528, %v3620
    %v3622 = vpop.f32.mrb[0].mxu0
    %v3623 = vadd.f32 %v3530, %v3622
    %v3624 = vpop.f32.mrb[0].mxu0
    %v3625 = vadd.f32 %v3532, %v3624
    %3626 = vmatprep.mubr.bf16.mxu0 %v1180
    %3627 = vmatmul.mubr.bf16.gmra.mrb[0].mxu0 %v1179
    %v3628 = vpop.f32.mrb[0].mxu0
    %v3629 = vadd.f32 %v3536, %v3628
    %v3630 = vpop.f32.mrb[0].mxu0
    %v3631 = vadd.f32 %v3538, %v3630
    %v3632 = vpop.f32.mrb[0].mxu0
    %v3633 = vadd.f32 %v3540, %v3632
    %v3634 = vpop.f32.mrb[0].mxu0
    %v3635 = vadd.f32 %v3542, %v3634
    %3636 = vdwg.mxu0
    %3637 = vmatprep.subr.bf16.mxu0 0
    %3638 = vmatpush1.bf16.msra.mxu0 %v2257
    %3639 = vmatprep.subr.bf16.mxu0 0
    %3640 = vmatpush1.bf16.msra.mxu0 %v2262
    %3641 = vmatprep.subr.bf16.mxu0 0
    %3642 = vmatpush1.bf16.msra.mxu0 %v2267
    %3643 = vmatprep.subr.bf16.mxu0 0
    %3644 = vmatpush1.bf16.msra.mxu0 %v2272
    %3645 = vmatprep.subr.bf16.mxu0 0
    %3646 = vmatpush1.bf16.msra.mxu0 %v2277
    %3647 = vmatprep.subr.bf16.mxu0 0
    %3648 = vmatpush1.bf16.msra.mxu0 %v2282
    %3649 = vmatprep.subr.bf16.mxu0 0
    %3650 = vmatpush1.bf16.msra.mxu0 %v2287
    %3651 = vmatprep.subr.bf16.mxu0 0
    %3652 = vmatpush1.bf16.msra.mxu0 %v2292
    %3653 = vmatprep.subr.bf16.mxu0 0
    %3654 = vmatpush1.bf16.msra.mxu0 %v2297
    %3655 = vmatprep.subr.bf16.mxu0 0
    %3656 = vmatpush1.bf16.msra.mxu0 %v2302
    %3657 = vmatprep.subr.bf16.mxu0 0
    %3658 = vmatpush1.bf16.msra.mxu0 %v2307
    %3659 = vmatprep.subr.bf16.mxu0 0
    %3660 = vmatpush1.bf16.msra.mxu0 %v2312
    %3661 = vmatprep.subr.bf16.mxu0 0
    %3662 = vmatpush1.bf16.msra.mxu0 %v2317
    %3663 = vmatprep.subr.bf16.mxu0 0
    %3664 = vmatpush1.bf16.msra.mxu0 %v2322
    %3665 = vmatprep.subr.bf16.mxu0 0
    %3666 = vmatpush1.bf16.msra.mxu0 %v2327
    %3667 = vmatprep.subr.bf16.mxu0 0
    %3668 = vmatpush1.bf16.msra.mxu0 %v2332
    %3669 = vmatprep.mubr.bf16.mxu0 %v1134
    %3670 = vmatmul.mubr.bf16.gmra.mrb[0].mxu0 %v1133
    %v3671 = vpop.f32.mrb[0].mxu0
    %v3672 = vadd.f32 0.0, %v3671
    %v3673 = vpop.f32.mrb[0].mxu0
    %v3674 = vpop.f32.mrb[0].mxu0
    %v3675 = vadd.f32 0.0, %v3674
    %v3676 = vpop.f32.mrb[0].mxu0
    %3677 = vmatprep.mubr.bf16.mxu0 %v1142
    %3678 = vmatmul.mubr.bf16.gmra.mrb[0].mxu0 %v1141
    %v3679 = vpop.f32.mrb[0].mxu0
    %v3680 = vadd.f32 0.0, %v3679
    %v3681 = vpop.f32.mrb[0].mxu0
    %v3682 = vpop.f32.mrb[0].mxu0
    %v3683 = vadd.f32 0.0, %v3682
    %v3684 = vpop.f32.mrb[0].mxu0
    %3685 = vmatprep.mubr.bf16.mxu0 %v1150
    %3686 = vmatmul.mubr.bf16.gmra.mrb[0].mxu0 %v1149
    %v3687 = vpop.f32.mrb[0].mxu0
    %v3688 = vadd.f32 0.0, %v3687
    %v3689 = vpop.f32.mrb[0].mxu0
    %v3690 = vpop.f32.mrb[0].mxu0
    %v3691 = vadd.f32 0.0, %v3690
    %v3692 = vpop.f32.mrb[0].mxu0
    %3693 = vmatprep.mubr.bf16.mxu0 %v1158
    %3694 = vmatmul.mubr.bf16.gmra.mrb[0].mxu0 %v1157
    %v3695 = vpop.f32.mrb[0].mxu0
    %v3696 = vadd.f32 0.0, %v3695
    %v3697 = vpop.f32.mrb[0].mxu0
    %v3698 = vpop.f32.mrb[0].mxu0
    %v3699 = vadd.f32 0.0, %v3698
    %v3700 = vpop.f32.mrb[0].mxu0
    %3701 = vmatprep.mubr.bf16.mxu0 %v1166
    %3702 = vmatmul.mubr.bf16.gmra.mrb[0].mxu0 %v1165
    %v3703 = vpop.f32.mrb[0].mxu0
    %v3704 = vadd.f32 0.0, %v3703
    %v3705 = vpop.f32.mrb[0].mxu0
    %v3706 = vpop.f32.mrb[0].mxu0
    %v3707 = vadd.f32 0.0, %v3706
    %v3708 = vpop.f32.mrb[0].mxu0
    %3709 = vmatprep.mubr.bf16.mxu0 %v1174
    %3710 = vmatmul.mubr.bf16.gmra.mrb[0].mxu0 %v1173
    %v3711 = vpop.f32.mrb[0].mxu0
    %v3712 = vadd.f32 0.0, %v3711
    %v3713 = vpop.f32.mrb[0].mxu0
    %v3714 = vpop.f32.mrb[0].mxu0
    %v3715 = vadd.f32 0.0, %v3714
    %v3716 = vpop.f32.mrb[0].mxu0
    %3717 = vdwg.mxu0
    %3718 = vmatprep.subr.bf16.mxu0 0
    %3719 = vmatpush1.bf16.msra.mxu0 %v2337
    %3720 = vmatprep.subr.bf16.mxu0 0
    %3721 = vmatpush1.bf16.msra.mxu0 %v2342
    %3722 = vmatprep.subr.bf16.mxu0 0
    %3723 = vmatpush1.bf16.msra.mxu0 %v2347
    %3724 = vmatprep.subr.bf16.mxu0 0
    %3725 = vmatpush1.bf16.msra.mxu0 %v2352
    %3726 = vmatprep.subr.bf16.mxu0 0
    %3727 = vmatpush1.bf16.msra.mxu0 %v2357
    %3728 = vmatprep.subr.bf16.mxu0 0
    %3729 = vmatpush1.bf16.msra.mxu0 %v2362
    %3730 = vmatprep.subr.bf16.mxu0 0
    %3731 = vmatpush1.bf16.msra.mxu0 %v2367
    %3732 = vmatprep.subr.bf16.mxu0 0
    %3733 = vmatpush1.bf16.msra.mxu0 %v2372
    %3734 = vmatprep.subr.bf16.mxu0 0
    %3735 = vmatpush1.bf16.msra.mxu0 %v2377
    %3736 = vmatprep.subr.bf16.mxu0 0
    %3737 = vmatpush1.bf16.msra.mxu0 %v2382
    %3738 = vmatprep.subr.bf16.mxu0 0
    %3739 = vmatpush1.bf16.msra.mxu0 %v2387
    %3740 = vmatprep.subr.bf16.mxu0 0
    %3741 = vmatpush1.bf16.msra.mxu0 %v2392
    %3742 = vmatprep.subr.bf16.mxu0 0
    %3743 = vmatpush1.bf16.msra.mxu0 %v2397
    %3744 = vmatprep.subr.bf16.mxu0 0
    %3745 = vmatpush1.bf16.msra.mxu0 %v2402
    %3746 = vmatprep.subr.bf16.mxu0 0
    %3747 = vmatpush1.bf16.msra.mxu0 %v2407
    %3748 = vmatprep.subr.bf16.mxu0 0
    %3749 = vmatpush1.bf16.msra.mxu0 %v2412
    %3750 = vmatprep.mubr.bf16.mxu0 %v1136
    %3751 = vmatmul.mubr.bf16.gmra.mrb[0].mxu0 %v1135
    %v3752 = vpop.f32.mrb[0].mxu0
    %v3753 = vadd.f32 %v3672, %v3752
    %v3754 = vpop.f32.mrb[0].mxu0
    %v3755 = vpop.f32.mrb[0].mxu0
    %v3756 = vadd.f32 %v3675, %v3755
    %v3757 = vpop.f32.mrb[0].mxu0
    %3758 = vmatprep.mubr.bf16.mxu0 %v1144
    %3759 = vmatmul.mubr.bf16.gmra.mrb[0].mxu0 %v1143
    %v3760 = vpop.f32.mrb[0].mxu0
    %v3761 = vadd.f32 %v3680, %v3760
    %v3762 = vpop.f32.mrb[0].mxu0
    %v3763 = vpop.f32.mrb[0].mxu0
    %v3764 = vadd.f32 %v3683, %v3763
    %v3765 = vpop.f32.mrb[0].mxu0
    %3766 = vmatprep.mubr.bf16.mxu0 %v1152
    %3767 = vmatmul.mubr.bf16.gmra.mrb[0].mxu0 %v1151
    %v3768 = vpop.f32.mrb[0].mxu0
    %v3769 = vadd.f32 %v3688, %v3768
    %v3770 = vpop.f32.mrb[0].mxu0
    %v3771 = vpop.f32.mrb[0].mxu0
    %v3772 = vadd.f32 %v3691, %v3771
    %v3773 = vpop.f32.mrb[0].mxu0
    %3774 = vmatprep.mubr.bf16.mxu0 %v1160
    %3775 = vmatmul.mubr.bf16.gmra.mrb[0].mxu0 %v1159
    %v3776 = vpop.f32.mrb[0].mxu0
    %v3777 = vadd.f32 %v3696, %v3776
    %v3778 = vpop.f32.mrb[0].mxu0
    %v3779 = vpop.f32.mrb[0].mxu0
    %v3780 = vadd.f32 %v3699, %v3779
    %v3781 = vpop.f32.mrb[0].mxu0
    %3782 = vmatprep.mubr.bf16.mxu0 %v1168
    %3783 = vmatmul.mubr.bf16.gmra.mrb[0].mxu0 %v1167
    %v3784 = vpop.f32.mrb[0].mxu0
    %v3785 = vadd.f32 %v3704, %v3784
    %v3786 = vpop.f32.mrb[0].mxu0
    %v3787 = vpop.f32.mrb[0].mxu0
    %v3788 = vadd.f32 %v3707, %v3787
    %v3789 = vpop.f32.mrb[0].mxu0
    %3790 = vmatprep.mubr.bf16.mxu0 %v1176
    %3791 = vmatmul.mubr.bf16.gmra.mrb[0].mxu0 %v1175
    %v3792 = vpop.f32.mrb[0].mxu0
    %v3793 = vadd.f32 %v3712, %v3792
    %v3794 = vpop.f32.mrb[0].mxu0
    %v3795 = vpop.f32.mrb[0].mxu0
    %v3796 = vadd.f32 %v3715, %v3795
    %v3797 = vpop.f32.mrb[0].mxu0
    %3798 = vdwg.mxu0
    %3799 = vmatprep.subr.bf16.mxu0 0
    %3800 = vmatpush1.bf16.msra.mxu0 %v2417
    %3801 = vmatprep.subr.bf16.mxu0 0
    %3802 = vmatpush1.bf16.msra.mxu0 %v2422
    %3803 = vmatprep.subr.bf16.mxu0 0
    %3804 = vmatpush1.bf16.msra.mxu0 %v2427
    %3805 = vmatprep.subr.bf16.mxu0 0
    %3806 = vmatpush1.bf16.msra.mxu0 %v2432
    %3807 = vmatprep.subr.bf16.mxu0 0
    %3808 = vmatpush1.bf16.msra.mxu0 %v2437
    %3809 = vmatprep.subr.bf16.mxu0 0
    %3810 = vmatpush1.bf16.msra.mxu0 %v2442
    %3811 = vmatprep.subr.bf16.mxu0 0
    %3812 = vmatpush1.bf16.msra.mxu0 %v2447
    %3813 = vmatprep.subr.bf16.mxu0 0
    %3814 = vmatpush1.bf16.msra.mxu0 %v2452
    %3815 = vmatprep.subr.bf16.mxu0 0
    %3816 = vmatpush1.bf16.msra.mxu0 %v2457
    %3817 = vmatprep.subr.bf16.mxu0 0
    %3818 = vmatpush1.bf16.msra.mxu0 %v2462
    %3819 = vmatprep.subr.bf16.mxu0 0
    %3820 = vmatpush1.bf16.msra.mxu0 %v2467
    %3821 = vmatprep.subr.bf16.mxu0 0
    %3822 = vmatpush1.bf16.msra.mxu0 %v2472
    %3823 = vmatprep.subr.bf16.mxu0 0
    %3824 = vmatpush1.bf16.msra.mxu0 %v2477
    %3825 = vmatprep.subr.bf16.mxu0 0
    %3826 = vmatpush1.bf16.msra.mxu0 %v2482
    %3827 = vmatprep.subr.bf16.mxu0 0
    %3828 = vmatpush1.bf16.msra.mxu0 %v2487
    %3829 = vmatprep.subr.bf16.mxu0 0
    %3830 = vmatpush1.bf16.msra.mxu0 %v2492
    %3831 = vmatprep.mubr.bf16.mxu0 %v1138
    %3832 = vmatmul.mubr.bf16.gmra.mrb[0].mxu0 %v1137
    %v3833 = vpop.f32.mrb[0].mxu0
    %v3834 = vadd.f32 %v3753, %v3833
    %v3835 = vpop.f32.mrb[0].mxu0
    %v3836 = vpop.f32.mrb[0].mxu0
    %v3837 = vadd.f32 %v3756, %v3836
    %v3838 = vpop.f32.mrb[0].mxu0
    %3839 = vmatprep.mubr.bf16.mxu0 %v1146
    %3840 = vmatmul.mubr.bf16.gmra.mrb[0].mxu0 %v1145
    %v3841 = vpop.f32.mrb[0].mxu0
    %v3842 = vadd.f32 %v3761, %v3841
    %v3843 = vpop.f32.mrb[0].mxu0
    %v3844 = vpop.f32.mrb[0].mxu0
    %v3845 = vadd.f32 %v3764, %v3844
    %v3846 = vpop.f32.mrb[0].mxu0
    %3847 = vmatprep.mubr.bf16.mxu0 %v1154
    %3848 = vmatmul.mubr.bf16.gmra.mrb[0].mxu0 %v1153
    %v3849 = vpop.f32.mrb[0].mxu0
    %v3850 = vadd.f32 %v3769, %v3849
    %v3851 = vpop.f32.mrb[0].mxu0
    %v3852 = vpop.f32.mrb[0].mxu0
    %v3853 = vadd.f32 %v3772, %v3852
    %v3854 = vpop.f32.mrb[0].mxu0
    %3855 = vmatprep.mubr.bf16.mxu0 %v1162
    %3856 = vmatmul.mubr.bf16.gmra.mrb[0].mxu0 %v1161
    %v3857 = vpop.f32.mrb[0].mxu0
    %v3858 = vadd.f32 %v3777, %v3857
    %v3859 = vpop.f32.mrb[0].mxu0
    %v3860 = vpop.f32.mrb[0].mxu0
    %v3861 = vadd.f32 %v3780, %v3860
    %v3862 = vpop.f32.mrb[0].mxu0
    %3863 = vmatprep.mubr.bf16.mxu0 %v1170
    %3864 = vmatmul.mubr.bf16.gmra.mrb[0].mxu0 %v1169
    %v3865 = vpop.f32.mrb[0].mxu0
    %v3866 = vadd.f32 %v3785, %v3865
    %v3867 = vpop.f32.mrb[0].mxu0
    %v3868 = vpop.f32.mrb[0].mxu0
    %v3869 = vadd.f32 %v3788, %v3868
    %v3870 = vpop.f32.mrb[0].mxu0
    %3871 = vmatprep.mubr.bf16.mxu0 %v1178
    %3872 = vmatmul.mubr.bf16.gmra.mrb[0].mxu0 %v1177
    %v3873 = vpop.f32.mrb[0].mxu0
    %v3874 = vadd.f32 %v3793, %v3873
    %v3875 = vpop.f32.mrb[0].mxu0
    %v3876 = vpop.f32.mrb[0].mxu0
    %v3877 = vadd.f32 %v3796, %v3876
    %v3878 = vpop.f32.mrb[0].mxu0
    %3879 = vdwg.mxu0
    %3880 = vmatprep.subr.bf16.mxu0 0
    %3881 = vmatpush1.bf16.msra.mxu0 %v2497
    %3882 = vmatprep.subr.bf16.mxu0 0
    %3883 = vmatpush1.bf16.msra.mxu0 %v2502
    %3884 = vmatprep.subr.bf16.mxu0 0
    %3885 = vmatpush1.bf16.msra.mxu0 %v2507
    %3886 = vmatprep.subr.bf16.mxu0 0
    %3887 = vmatpush1.bf16.msra.mxu0 %v2512
    %3888 = vmatprep.subr.bf16.mxu0 0
    %3889 = vmatpush1.bf16.msra.mxu0 %v2517
    %3890 = vmatprep.subr.bf16.mxu0 0
    %3891 = vmatpush1.bf16.msra.mxu0 %v2522
    %3892 = vmatprep.subr.bf16.mxu0 0
    %3893 = vmatpush1.bf16.msra.mxu0 %v2527
    %3894 = vmatprep.subr.bf16.mxu0 0
    %3895 = vmatpush1.bf16.msra.mxu0 %v2532
    %3896 = vmatprep.subr.bf16.mxu0 0
    %3897 = vmatpush1.bf16.msra.mxu0 %v2537
    %3898 = vmatprep.subr.bf16.mxu0 0
    %3899 = vmatpush1.bf16.msra.mxu0 %v2542
    %3900 = vmatprep.subr.bf16.mxu0 0
    %3901 = vmatpush1.bf16.msra.mxu0 %v2547
    %3902 = vmatprep.subr.bf16.mxu0 0
    %3903 = vmatpush1.bf16.msra.mxu0 %v2552
    %3904 = vmatprep.subr.bf16.mxu0 0
    %3905 = vmatpush1.bf16.msra.mxu0 %v2557
    %3906 = vmatprep.subr.bf16.mxu0 0
    %3907 = vmatpush1.bf16.msra.mxu0 %v2562
    %3908 = vmatprep.subr.bf16.mxu0 0
    %3909 = vmatpush1.bf16.msra.mxu0 %v2567
    %3910 = vmatprep.subr.bf16.mxu0 0
    %3911 = vmatpush1.bf16.msra.mxu0 %v2572
    %3912 = vmatprep.mubr.bf16.mxu0 %v1140
    %3913 = vmatmul.mubr.bf16.gmra.mrb[0].mxu0 %v1139
    %v3914 = vpop.f32.mrb[0].mxu0
    %v3915 = vadd.f32 %v3834, %v3914
    %v3916 = vpop.f32.mrb[0].mxu0
    %v3917 = vpop.f32.mrb[0].mxu0
    %v3918 = vadd.f32 %v3837, %v3917
    %v3919 = vpop.f32.mrb[0].mxu0
    %3920 = vmatprep.mubr.bf16.mxu0 %v1148
    %3921 = vmatmul.mubr.bf16.gmra.mrb[0].mxu0 %v1147
    %v3922 = vpop.f32.mrb[0].mxu0
    %v3923 = vadd.f32 %v3842, %v3922
    %v3924 = vpop.f32.mrb[0].mxu0
    %v3925 = vpop.f32.mrb[0].mxu0
    %v3926 = vadd.f32 %v3845, %v3925
    %v3927 = vpop.f32.mrb[0].mxu0
    %3928 = vmatprep.mubr.bf16.mxu0 %v1156
    %3929 = vmatmul.mubr.bf16.gmra.mrb[0].mxu0 %v1155
    %v3930 = vpop.f32.mrb[0].mxu0
    %v3931 = vadd.f32 %v3850, %v3930
    %v3932 = vpop.f32.mrb[0].mxu0
    %v3933 = vpop.f32.mrb[0].mxu0
    %v3934 = vadd.f32 %v3853, %v3933
    %v3935 = vpop.f32.mrb[0].mxu0
    %3936 = vmatprep.mubr.bf16.mxu0 %v1164
    %3937 = vmatmul.mubr.bf16.gmra.mrb[0].mxu0 %v1163
    %v3938 = vpop.f32.mrb[0].mxu0
    %v3939 = vadd.f32 %v3858, %v3938
    %v3940 = vpop.f32.mrb[0].mxu0
    %v3941 = vpop.f32.mrb[0].mxu0
    %v3942 = vadd.f32 %v3861, %v3941
    %v3943 = vpop.f32.mrb[0].mxu0
    %3944 = vmatprep.mubr.bf16.mxu0 %v1172
    %3945 = vmatmul.mubr.bf16.gmra.mrb[0].mxu0 %v1171
    %v3946 = vpop.f32.mrb[0].mxu0
    %v3947 = vadd.f32 %v3866, %v3946
    %v3948 = vpop.f32.mrb[0].mxu0
    %v3949 = vpop.f32.mrb[0].mxu0
    %v3950 = vadd.f32 %v3869, %v3949
    %v3951 = vpop.f32.mrb[0].mxu0
    %3952 = vmatprep.mubr.bf16.mxu0 %v1180
    %3953 = vmatmul.mubr.bf16.gmra.mrb[0].mxu0 %v1179
    %v3954 = vpop.f32.mrb[0].mxu0
    %v3955 = vadd.f32 %v3874, %v3954
    %v3956 = vpop.f32.mrb[0].mxu0
    %v3957 = vpop.f32.mrb[0].mxu0
    %v3958 = vadd.f32 %v3877, %v3957
    %v3959 = vpop.f32.mrb[0].mxu0
    %3960 = vdwg.mxu0
    %v4345 = vunpack.c.l.b16 %v477
    %v4346 = vunpack.c.h.b16 %v477
    %v4347 = vunpack.c.l.b16 %v478
    %v4348 = vunpack.c.h.b16 %v478
    %v4349 = vunpack.c.l.b16 %v479
    %v4350 = vunpack.c.l.b16 %v480
    %v4351 = vunpack.c.h.b16 %v480
    %v4352 = vunpack.c.l.b16 %v481
    %v4353 = vunpack.c.h.b16 %v481
    %v4354 = vunpack.c.l.b16 %v482
    %v4355 = vunpack.c.l.b16 %v483
    %v4356 = vunpack.c.h.b16 %v483
    %v4357 = vunpack.c.l.b16 %v484
    %v4358 = vunpack.c.h.b16 %v484
    %v4359 = vunpack.c.l.b16 %v485
    %v4360 = vunpack.c.l.b16 %v486
    %v4361 = vunpack.c.h.b16 %v486
    %v4362 = vunpack.c.l.b16 %v487
    %v4363 = vunpack.c.h.b16 %v487
    %v4364 = vunpack.c.l.b16 %v488
    %v4365 = vunpack.c.l.b16 %v489
    %v4366 = vunpack.c.h.b16 %v489
    %v4367 = vunpack.c.l.b16 %v490
    %v4368 = vunpack.c.h.b16 %v490
    %v4369 = vunpack.c.l.b16 %v491
    %v4370 = vunpack.c.l.b16 %v492
    %v4371 = vunpack.c.h.b16 %v492
    %v4372 = vunpack.c.l.b16 %v493
    %v4373 = vunpack.c.h.b16 %v493
    %v4374 = vunpack.c.l.b16 %v494
    %v4375 = vunpack.c.l.b16 %v495
    %v4376 = vunpack.c.h.b16 %v495
    %v4377 = vunpack.c.l.b16 %v496
    %v4378 = vunpack.c.h.b16 %v496
    %v4379 = vunpack.c.l.b16 %v497
    %v4380 = vunpack.c.l.b16 %v498
    %v4381 = vunpack.c.h.b16 %v498
    %v4382 = vunpack.c.l.b16 %v499
    %v4383 = vunpack.c.h.b16 %v499
    %v4384 = vunpack.c.l.b16 %v500
    %v4385 = vunpack.c.l.b16 %v501
    %v4386 = vunpack.c.h.b16 %v501
    %v4387 = vunpack.c.l.b16 %v502
    %v4388 = vunpack.c.h.b16 %v502
    %v4389 = vunpack.c.l.b16 %v503
    %v4390 = vunpack.c.l.b16 %v504
    %v4391 = vunpack.c.h.b16 %v504
    %v4392 = vunpack.c.l.b16 %v505
    %v4393 = vunpack.c.h.b16 %v505
    %v4394 = vunpack.c.l.b16 %v506
    %v4395 = vunpack.c.l.b16 %v507
    %v4396 = vunpack.c.h.b16 %v507
    %v4397 = vunpack.c.l.b16 %v508
    %v4398 = vunpack.c.h.b16 %v508
    %v4399 = vunpack.c.l.b16 %v509
    %v4400 = vunpack.c.l.b16 %v510
    %v4401 = vunpack.c.h.b16 %v510
    %v4402 = vunpack.c.l.b16 %v511
    %v4403 = vunpack.c.h.b16 %v511
    %v4404 = vunpack.c.l.b16 %v512
    %v4405 = vunpack.c.l.b16 %v513
    %v4406 = vunpack.c.h.b16 %v513
    %v4407 = vunpack.c.l.b16 %v514
    %v4408 = vunpack.c.h.b16 %v514
    %v4409 = vunpack.c.l.b16 %v515
    %v4410 = vunpack.c.l.b16 %v516
    %v4411 = vunpack.c.h.b16 %v516
    %v4412 = vunpack.c.l.b16 %v517
    %v4413 = vunpack.c.h.b16 %v517
    %v4414 = vunpack.c.l.b16 %v518
    %v4415 = vunpack.c.l.b16 %v519
    %v4416 = vunpack.c.h.b16 %v519
    %v4417 = vunpack.c.l.b16 %v520
    %v4418 = vunpack.c.h.b16 %v520
    %v4419 = vunpack.c.l.b16 %v521
    %v4420 = vunpack.c.l.b16 %v522
    %v4421 = vunpack.c.h.b16 %v522
    %v4422 = vunpack.c.l.b16 %v523
    %v4423 = vunpack.c.h.b16 %v523
    %v4424 = vunpack.c.l.b16 %v524
    %v4425 = vunpack.c.l.b16 %v525
    %v4426 = vunpack.c.h.b16 %v525
    %v4427 = vunpack.c.l.b16 %v526
    %v4428 = vunpack.c.h.b16 %v526
    %v4429 = vunpack.c.l.b16 %v527
    %v4430 = vunpack.c.l.b16 %v528
    %v4431 = vunpack.c.h.b16 %v528
    %v4432 = vunpack.c.l.b16 %v529
    %v4433 = vunpack.c.h.b16 %v529
    %v4434 = vunpack.c.l.b16 %v530
    %v4435 = vunpack.c.l.b16 %v531
    %v4436 = vunpack.c.h.b16 %v531
    %v4437 = vunpack.c.l.b16 %v532
    %v4438 = vunpack.c.h.b16 %v532
    %v4439 = vunpack.c.l.b16 %v533
    %v4440 = vunpack.c.l.b16 %v534
    %v4441 = vunpack.c.h.b16 %v534
    %v4442 = vunpack.c.l.b16 %v535
    %v4443 = vunpack.c.h.b16 %v535
    %v4444 = vunpack.c.l.b16 %v536
    %v4445 = vunpack.c.l.b16 %v537
    %v4446 = vunpack.c.h.b16 %v537
    %v4447 = vunpack.c.l.b16 %v538
    %v4448 = vunpack.c.h.b16 %v538
    %v4449 = vunpack.c.l.b16 %v539
    %v4450 = vunpack.c.l.b16 %v540
    %v4451 = vunpack.c.h.b16 %v540
    %v4452 = vunpack.c.l.b16 %v541
    %v4453 = vunpack.c.h.b16 %v541
    %v4454 = vunpack.c.l.b16 %v542
    %v4455 = vunpack.c.l.b16 %v543
    %v4456 = vunpack.c.h.b16 %v543
    %v4457 = vunpack.c.l.b16 %v544
    %v4458 = vunpack.c.h.b16 %v544
    %v4459 = vunpack.c.l.b16 %v545
    %v4460 = vunpack.c.l.b16 %v546
    %v4461 = vunpack.c.h.b16 %v546
    %v4462 = vunpack.c.l.b16 %v547
    %v4463 = vunpack.c.h.b16 %v547
    %v4464 = vunpack.c.l.b16 %v548
    %v4465 = vunpack.c.l.b16 %v549
    %v4466 = vunpack.c.h.b16 %v549
    %v4467 = vunpack.c.l.b16 %v550
    %v4468 = vunpack.c.h.b16 %v550
    %v4469 = vunpack.c.l.b16 %v551
    %v4470 = vunpack.c.l.b16 %v552
    %v4471 = vunpack.c.h.b16 %v552
    %v4472 = vunpack.c.l.b16 %v553
    %v4473 = vunpack.c.h.b16 %v553
    %v4474 = vunpack.c.l.b16 %v554
    %v4475 = vunpack.c.l.b16 %v555
    %v4476 = vunpack.c.h.b16 %v555
    %v4477 = vunpack.c.l.b16 %v556
    %v4478 = vunpack.c.h.b16 %v556
    %v4479 = vunpack.c.l.b16 %v557
    %v4480 = vunpack.c.l.b16 %v558
    %v4481 = vunpack.c.h.b16 %v558
    %v4482 = vunpack.c.l.b16 %v559
    %v4483 = vunpack.c.h.b16 %v559
    %v4484 = vunpack.c.l.b16 %v560
    %v4485 = vunpack.c.l.b16 %v561
    %v4486 = vunpack.c.h.b16 %v561
    %v4487 = vunpack.c.l.b16 %v562
    %v4488 = vunpack.c.h.b16 %v562
    %v4489 = vunpack.c.l.b16 %v563
    %v4490 = vunpack.c.l.b16 %v564
    %v4491 = vunpack.c.h.b16 %v564
    %v4492 = vunpack.c.l.b16 %v565
    %v4493 = vunpack.c.h.b16 %v565
    %v4494 = vunpack.c.l.b16 %v566
    %v4495 = vunpack.c.l.b16 %v567
    %v4496 = vunpack.c.h.b16 %v567
    %v4497 = vunpack.c.l.b16 %v568
    %v4498 = vunpack.c.h.b16 %v568
    %v4499 = vunpack.c.l.b16 %v569
    %v4500 = vunpack.c.l.b16 %v570
    %v4501 = vunpack.c.h.b16 %v570
    %v4502 = vunpack.c.l.b16 %v571
    %v4503 = vunpack.c.h.b16 %v571
    %v4504 = vunpack.c.l.b16 %v572
    %v4505 = vunpack.c.l.b16 %v573
    %v4506 = vunpack.c.h.b16 %v573
    %v4507 = vunpack.c.l.b16 %v574
    %v4508 = vunpack.c.h.b16 %v574
    %v4509 = vunpack.c.l.b16 %v575
    %v4510 = vunpack.c.l.b16 %v576
    %v4511 = vunpack.c.h.b16 %v576
    %v4512 = vunpack.c.l.b16 %v577
    %v4513 = vunpack.c.h.b16 %v577
    %v4514 = vunpack.c.l.b16 %v578
    %v4515 = vunpack.c.l.b16 %v579
    %v4516 = vunpack.c.h.b16 %v579
    %v4517 = vunpack.c.l.b16 %v580
    %v4518 = vunpack.c.h.b16 %v580
    %v4519 = vunpack.c.l.b16 %v581
    %v4520 = vunpack.c.l.b16 %v582
    %v4521 = vunpack.c.h.b16 %v582
    %v4522 = vunpack.c.l.b16 %v583
    %v4523 = vunpack.c.h.b16 %v583
    %v4524 = vunpack.c.l.b16 %v584
    %v4525 = vunpack.c.l.b16 %v585
    %v4526 = vunpack.c.h.b16 %v585
    %v4527 = vunpack.c.l.b16 %v586
    %v4528 = vunpack.c.h.b16 %v586
    %v4529 = vunpack.c.l.b16 %v587
    %v4530 = vunpack.c.l.b16 %v588
    %v4531 = vunpack.c.h.b16 %v588
    %v4532 = vunpack.c.l.b16 %v589
    %v4533 = vunpack.c.h.b16 %v589
    %v4534 = vunpack.c.l.b16 %v590
    %v4535 = vunpack.c.l.b16 %v591
    %v4536 = vunpack.c.h.b16 %v591
    %v4537 = vunpack.c.l.b16 %v592
    %v4538 = vunpack.c.h.b16 %v592
    %v4539 = vunpack.c.l.b16 %v593
    %v4540 = vunpack.c.l.b16 %v594
    %v4541 = vunpack.c.h.b16 %v594
    %v4542 = vunpack.c.l.b16 %v595
    %v4543 = vunpack.c.h.b16 %v595
    %v4544 = vunpack.c.l.b16 %v596
    %v4545 = vunpack.c.l.b16 %v597
    %v4546 = vunpack.c.h.b16 %v597
    %v4547 = vunpack.c.l.b16 %v598
    %v4548 = vunpack.c.h.b16 %v598
    %v4549 = vunpack.c.l.b16 %v599
    %v4550 = vunpack.c.l.b16 %v600
    %v4551 = vunpack.c.h.b16 %v600
    %v4552 = vunpack.c.l.b16 %v601
    %v4553 = vunpack.c.h.b16 %v601
    %v4554 = vunpack.c.l.b16 %v602
    %v4555 = vunpack.c.l.b16 %v603
    %v4556 = vunpack.c.h.b16 %v603
    %v4557 = vunpack.c.l.b16 %v604
    %v4558 = vunpack.c.h.b16 %v604
    %v4559 = vunpack.c.l.b16 %v605
    %v4560 = vunpack.c.l.b16 %v606
    %v4561 = vunpack.c.h.b16 %v606
    %v4562 = vunpack.c.l.b16 %v607
    %v4563 = vunpack.c.h.b16 %v607
    %v4564 = vunpack.c.l.b16 %v608
    %v4565 = vunpack.c.l.b16 %v609
    %v4566 = vunpack.c.h.b16 %v609
    %v4567 = vunpack.c.l.b16 %v610
    %v4568 = vunpack.c.h.b16 %v610
    %v4569 = vunpack.c.l.b16 %v611
    %v4570 = vunpack.c.l.b16 %v612
    %v4571 = vunpack.c.h.b16 %v612
    %v4572 = vunpack.c.l.b16 %v613
    %v4573 = vunpack.c.h.b16 %v613
    %v4574 = vunpack.c.l.b16 %v614
    %v4575 = vunpack.c.l.b16 %v615
    %v4576 = vunpack.c.h.b16 %v615
    %v4577 = vunpack.c.l.b16 %v616
    %v4578 = vunpack.c.h.b16 %v616
    %v4579 = vunpack.c.l.b16 %v617
    %v4580 = vunpack.c.l.b16 %v618
    %v4581 = vunpack.c.h.b16 %v618
    %v4582 = vunpack.c.l.b16 %v619
    %v4583 = vunpack.c.h.b16 %v619
    %v4584 = vunpack.c.l.b16 %v620
    %v4585 = vunpack.c.l.b16 %v621
    %v4586 = vunpack.c.h.b16 %v621
    %v4587 = vunpack.c.l.b16 %v622
    %v4588 = vunpack.c.h.b16 %v622
    %v4589 = vunpack.c.l.b16 %v623
    %v4590 = vunpack.c.l.b16 %v624
    %v4591 = vunpack.c.h.b16 %v624
    %v4592 = vunpack.c.l.b16 %v625
    %v4593 = vunpack.c.h.b16 %v625
    %v4594 = vunpack.c.l.b16 %v626
    %v4595 = vunpack.c.l.b16 %v627
    %v4596 = vunpack.c.h.b16 %v627
    %v4597 = vunpack.c.l.b16 %v628
    %v4598 = vunpack.c.h.b16 %v628
    %v4599 = vunpack.c.l.b16 %v629
    %v4600 = vunpack.c.l.b16 %v630
    %v4601 = vunpack.c.h.b16 %v630
    %v4602 = vunpack.c.l.b16 %v631
    %v4603 = vunpack.c.h.b16 %v631
    %v4604 = vunpack.c.l.b16 %v632
    %v4605 = vunpack.c.l.b16 %v633
    %v4606 = vunpack.c.h.b16 %v633
    %v4607 = vunpack.c.l.b16 %v634
    %v4608 = vunpack.c.h.b16 %v634
    %v4609 = vunpack.c.l.b16 %v635
    %v4610 = vunpack.c.l.b16 %v636
    %v4611 = vunpack.c.h.b16 %v636
    %v4612 = vunpack.c.l.b16 %v637
    %v4613 = vunpack.c.h.b16 %v637
    %v4614 = vunpack.c.l.b16 %v638
    %v4615 = vunpack.c.l.b16 %v639
    %v4616 = vunpack.c.h.b16 %v639
    %v4617 = vunpack.c.l.b16 %v640
    %v4618 = vunpack.c.h.b16 %v640
    %v4619 = vunpack.c.l.b16 %v641
    %v4620 = vunpack.c.l.b16 %v642
    %v4621 = vunpack.c.h.b16 %v642
    %v4622 = vunpack.c.l.b16 %v643
    %v4623 = vunpack.c.h.b16 %v643
    %v4624 = vunpack.c.l.b16 %v644
    %v4625 = vunpack.c.l.b16 %v645
    %v4626 = vunpack.c.h.b16 %v645
    %v4627 = vunpack.c.l.b16 %v646
    %v4628 = vunpack.c.h.b16 %v646
    %v4629 = vunpack.c.l.b16 %v647
    %v4630 = vunpack.c.l.b16 %v648
    %v4631 = vunpack.c.h.b16 %v648
    %v4632 = vunpack.c.l.b16 %v649
    %v4633 = vunpack.c.h.b16 %v649
    %v4634 = vunpack.c.l.b16 %v650
    %v4635 = vunpack.c.l.b16 %v651
    %v4636 = vunpack.c.h.b16 %v651
    %v4637 = vunpack.c.l.b16 %v652
    %v4638 = vunpack.c.h.b16 %v652
    %v4639 = vunpack.c.l.b16 %v653
    %v4640 = vunpack.c.l.b16 %v654
    %v4641 = vunpack.c.h.b16 %v654
    %v4642 = vunpack.c.l.b16 %v655
    %v4643 = vunpack.c.h.b16 %v655
    %v4644 = vunpack.c.l.b16 %v656
    %v4645 = vunpack.c.l.b16 %v657
    %v4646 = vunpack.c.h.b16 %v657
    %v4647 = vunpack.c.l.b16 %v658
    %v4648 = vunpack.c.h.b16 %v658
    %v4649 = vunpack.c.l.b16 %v659
    %v4650 = vunpack.c.l.b16 %v660
    %v4651 = vunpack.c.h.b16 %v660
    %v4652 = vunpack.c.l.b16 %v661
    %v4653 = vunpack.c.h.b16 %v661
    %v4654 = vunpack.c.l.b16 %v662
    %v4655 = vunpack.c.l.b16 %v663
    %v4656 = vunpack.c.h.b16 %v663
    %v4657 = vunpack.c.l.b16 %v664
    %v4658 = vunpack.c.h.b16 %v664
    %v4659 = vunpack.c.l.b16 %v665
    %v4660 = vunpack.c.l.b16 %v666
    %v4661 = vunpack.c.h.b16 %v666
    %v4662 = vunpack.c.l.b16 %v667
    %v4663 = vunpack.c.h.b16 %v667
    %v4664 = vunpack.c.l.b16 %v668
    %v4665 = vunpack.c.l.b16 %v669
    %v4666 = vunpack.c.h.b16 %v669
    %v4667 = vunpack.c.l.b16 %v670
    %v4668 = vunpack.c.h.b16 %v670
    %v4669 = vunpack.c.l.b16 %v671
    %v4670 = vunpack.c.l.b16 %v672
    %v4671 = vunpack.c.h.b16 %v672
    %v4672 = vunpack.c.l.b16 %v673
    %v4673 = vunpack.c.h.b16 %v673
    %v4674 = vunpack.c.l.b16 %v674
    %v4675 = vunpack.c.l.b16 %v675
    %v4676 = vunpack.c.h.b16 %v675
    %v4677 = vunpack.c.l.b16 %v676
    %v4678 = vunpack.c.h.b16 %v676
    %v4679 = vunpack.c.l.b16 %v677
    %v4680 = vunpack.c.l.b16 %v678
    %v4681 = vunpack.c.h.b16 %v678
    %v4682 = vunpack.c.l.b16 %v679
    %v4683 = vunpack.c.h.b16 %v679
    %v4684 = vunpack.c.l.b16 %v680
    %v4685 = vunpack.c.l.b16 %v681
    %v4686 = vunpack.c.h.b16 %v681
    %v4687 = vunpack.c.l.b16 %v682
    %v4688 = vunpack.c.h.b16 %v682
    %v4689 = vunpack.c.l.b16 %v683
    %v4690 = vunpack.c.l.b16 %v684
    %v4691 = vunpack.c.h.b16 %v684
    %v4692 = vunpack.c.l.b16 %v685
    %v4693 = vunpack.c.h.b16 %v685
    %v4694 = vunpack.c.l.b16 %v686
    %v4695 = vunpack.c.l.b16 %v687
    %v4696 = vunpack.c.h.b16 %v687
    %v4697 = vunpack.c.l.b16 %v688
    %v4698 = vunpack.c.h.b16 %v688
    %v4699 = vunpack.c.l.b16 %v689
    %v4700 = vunpack.c.l.b16 %v690
    %v4701 = vunpack.c.h.b16 %v690
    %v4702 = vunpack.c.l.b16 %v691
    %v4703 = vunpack.c.h.b16 %v691
    %v4704 = vunpack.c.l.b16 %v692
    %v4705 = vunpack.c.l.b16 %v693
    %v4706 = vunpack.c.h.b16 %v693
    %v4707 = vunpack.c.l.b16 %v694
    %v4708 = vunpack.c.h.b16 %v694
    %v4709 = vunpack.c.l.b16 %v695
    %v4710 = vunpack.c.l.b16 %v696
    %v4711 = vunpack.c.h.b16 %v696
    %v4712 = vunpack.c.l.b16 %v697
    %v4713 = vunpack.c.h.b16 %v697
    %v4714 = vunpack.c.l.b16 %v698
    %v4715 = vunpack.c.l.b16 %v699
    %v4716 = vunpack.c.h.b16 %v699
    %v4717 = vunpack.c.l.b16 %v700
    %v4718 = vunpack.c.h.b16 %v700
    %v4719 = vunpack.c.l.b16 %v701
    %v4720 = vunpack.c.l.b16 %v702
    %v4721 = vunpack.c.h.b16 %v702
    %v4722 = vunpack.c.l.b16 %v703
    %v4723 = vunpack.c.h.b16 %v703
    %v4724 = vunpack.c.l.b16 %v704
    %v4725 = vunpack.c.l.b16 %v705
    %v4726 = vunpack.c.h.b16 %v705
    %v4727 = vunpack.c.l.b16 %v706
    %v4728 = vunpack.c.h.b16 %v706
    %v4729 = vunpack.c.l.b16 %v707
    %v4730 = vunpack.c.l.b16 %v708
    %v4731 = vunpack.c.h.b16 %v708
    %v4732 = vunpack.c.l.b16 %v709
    %v4733 = vunpack.c.h.b16 %v709
    %v4734 = vunpack.c.l.b16 %v710
    %v4735 = vunpack.c.l.b16 %v711
    %v4736 = vunpack.c.h.b16 %v711
    %v4737 = vunpack.c.l.b16 %v712
    %v4738 = vunpack.c.h.b16 %v712
    %v4739 = vunpack.c.l.b16 %v713
    %v4740 = vunpack.c.l.b16 %v714
    %v4741 = vunpack.c.h.b16 %v714
    %v4742 = vunpack.c.l.b16 %v715
    %v4743 = vunpack.c.h.b16 %v715
    %v4744 = vunpack.c.l.b16 %v716
    %v4745 = vunpack.c.l.b16 %v717
    %v4746 = vunpack.c.h.b16 %v717
    %v4747 = vunpack.c.l.b16 %v718
    %v4748 = vunpack.c.h.b16 %v718
    %v4749 = vunpack.c.l.b16 %v719
    %v4750 = vunpack.c.l.b16 %v720
    %v4751 = vunpack.c.h.b16 %v720
    %v4752 = vunpack.c.l.b16 %v721
    %v4753 = vunpack.c.h.b16 %v721
    %v4754 = vunpack.c.l.b16 %v722
    %v4755 = vunpack.c.l.b16 %v723
    %v4756 = vunpack.c.h.b16 %v723
    %v4757 = vunpack.c.l.b16 %v724
    %v4758 = vunpack.c.h.b16 %v724
    %v4759 = vunpack.c.l.b16 %v725
    %v4760 = vunpack.c.l.b16 %v726
    %v4761 = vunpack.c.h.b16 %v726
    %v4762 = vunpack.c.l.b16 %v727
    %v4763 = vunpack.c.h.b16 %v727
    %v4764 = vunpack.c.l.b16 %v728
    %v4765 = vunpack.c.l.b16 %v729
    %v4766 = vunpack.c.h.b16 %v729
    %v4767 = vunpack.c.l.b16 %v730
    %v4768 = vunpack.c.h.b16 %v730
    %v4769 = vunpack.c.l.b16 %v731
    %v4770 = vunpack.c.l.b16 %v732
    %v4771 = vunpack.c.h.b16 %v732
    %v4772 = vunpack.c.l.b16 %v733
    %v4773 = vunpack.c.h.b16 %v733
    %v4774 = vunpack.c.l.b16 %v734
    %v4775 = vunpack.c.l.b16 %v735
    %v4776 = vunpack.c.h.b16 %v735
    %v4777 = vunpack.c.l.b16 %v736
    %v4778 = vunpack.c.h.b16 %v736
    %v4779 = vunpack.c.l.b16 %v737
    %v4780 = vunpack.c.l.b16 %v738
    %v4781 = vunpack.c.h.b16 %v738
    %v4782 = vunpack.c.l.b16 %v739
    %v4783 = vunpack.c.h.b16 %v739
    %v4784 = vunpack.c.l.b16 %v740
    %v4785 = vunpack.c.l.b16 %v741
    %v4786 = vunpack.c.h.b16 %v741
    %v4787 = vunpack.c.l.b16 %v742
    %v4788 = vunpack.c.h.b16 %v742
    %v4789 = vunpack.c.l.b16 %v743
    %v4790 = vunpack.c.l.b16 %v744
    %v4791 = vunpack.c.h.b16 %v744
    %v4792 = vunpack.c.l.b16 %v745
    %v4793 = vunpack.c.h.b16 %v745
    %v4794 = vunpack.c.l.b16 %v746
    %v4795 = vunpack.c.l.b16 %v747
    %v4796 = vunpack.c.h.b16 %v747
    %v4797 = vunpack.c.l.b16 %v748
    %v4798 = vunpack.c.h.b16 %v748
    %v4799 = vunpack.c.l.b16 %v749
    %v4800 = vunpack.c.l.b16 %v750
    %v4801 = vunpack.c.h.b16 %v750
    %v4802 = vunpack.c.l.b16 %v751
    %v4803 = vunpack.c.h.b16 %v751
    %v4804 = vunpack.c.l.b16 %v752
    %v4805 = vunpack.c.l.b16 %v753
    %v4806 = vunpack.c.h.b16 %v753
    %v4807 = vunpack.c.l.b16 %v754
    %v4808 = vunpack.c.h.b16 %v754
    %v4809 = vunpack.c.l.b16 %v755
    %v4810 = vunpack.c.l.b16 %v756
    %v4811 = vunpack.c.h.b16 %v756
    %v4812 = vunpack.c.l.b16 %v757
    %v4813 = vunpack.c.h.b16 %v757
    %v4814 = vunpack.c.l.b16 %v758
    %v4815 = vunpack.c.l.b16 %v759
    %v4816 = vunpack.c.h.b16 %v759
    %v4817 = vunpack.c.l.b16 %v760
    %v4818 = vunpack.c.h.b16 %v760
    %v4819 = vunpack.c.l.b16 %v761
    %v4820 = vunpack.c.l.b16 %v762
    %v4821 = vunpack.c.h.b16 %v762
    %v4822 = vunpack.c.l.b16 %v763
    %v4823 = vunpack.c.h.b16 %v763
    %v4824 = vunpack.c.l.b16 %v764
    %v4825 = vunpack.c.l.b16 %v765
    %v4826 = vunpack.c.h.b16 %v765
    %v4827 = vunpack.c.l.b16 %v766
    %v4828 = vunpack.c.h.b16 %v766
    %v4829 = vunpack.c.l.b16 %v767
    %v4830 = vunpack.c.l.b16 %v768
    %v4831 = vunpack.c.h.b16 %v768
    %v4832 = vunpack.c.l.b16 %v769
    %v4833 = vunpack.c.h.b16 %v769
    %v4834 = vunpack.c.l.b16 %v770
    %v4835 = vunpack.c.l.b16 %v771
    %v4836 = vunpack.c.h.b16 %v771
    %v4837 = vunpack.c.l.b16 %v772
    %v4838 = vunpack.c.h.b16 %v772
    %v4839 = vunpack.c.l.b16 %v773
    %v4840 = vunpack.c.l.b16 %v774
    %v4841 = vunpack.c.h.b16 %v774
    %v4842 = vunpack.c.l.b16 %v775
    %v4843 = vunpack.c.h.b16 %v775
    %v4844 = vunpack.c.l.b16 %v776
    %v4845 = vunpack.c.l.b16 %v777
    %v4846 = vunpack.c.h.b16 %v777
    %v4847 = vunpack.c.l.b16 %v778
    %v4848 = vunpack.c.h.b16 %v778
    %v4849 = vunpack.c.l.b16 %v779
    %v4850 = vunpack.c.l.b16 %v780
    %v4851 = vunpack.c.h.b16 %v780
    %v4852 = vunpack.c.l.b16 %v781
    %v4853 = vunpack.c.h.b16 %v781
    %v4854 = vunpack.c.l.b16 %v782
    %v4855 = vunpack.c.l.b16 %v783
    %v4856 = vunpack.c.h.b16 %v783
    %v4857 = vunpack.c.l.b16 %v784
    %v4858 = vunpack.c.h.b16 %v784
    %v4859 = vunpack.c.l.b16 %v785
    %v4860 = vunpack.c.l.b16 %v786
    %v4861 = vunpack.c.h.b16 %v786
    %v4862 = vunpack.c.l.b16 %v787
    %v4863 = vunpack.c.h.b16 %v787
    %v4864 = vunpack.c.l.b16 %v788
    %v4865 = vunpack.c.l.b16 %v789
    %v4866 = vunpack.c.h.b16 %v789
    %v4867 = vunpack.c.l.b16 %v790
    %v4868 = vunpack.c.h.b16 %v790
    %v4869 = vunpack.c.l.b16 %v791
    %v4870 = vunpack.c.l.b16 %v792
    %v4871 = vunpack.c.h.b16 %v792
    %v4872 = vunpack.c.l.b16 %v793
    %v4873 = vunpack.c.h.b16 %v793
    %v4874 = vunpack.c.l.b16 %v794
    %v4875 = vunpack.c.l.b16 %v795
    %v4876 = vunpack.c.h.b16 %v795
    %v4877 = vunpack.c.l.b16 %v796
    %v4878 = vunpack.c.h.b16 %v796
    %v4879 = vunpack.c.l.b16 %v797
    %v4880 = vunpack.c.l.b16 %v798
    %v4881 = vunpack.c.h.b16 %v798
    %v4882 = vunpack.c.l.b16 %v799
    %v4883 = vunpack.c.h.b16 %v799
    %v4884 = vunpack.c.l.b16 %v800
    %v4885 = vunpack.c.l.b16 %v801
    %v4886 = vunpack.c.h.b16 %v801
    %v4887 = vunpack.c.l.b16 %v802
    %v4888 = vunpack.c.h.b16 %v802
    %v4889 = vunpack.c.l.b16 %v803
    %v4890 = vunpack.c.l.b16 %v804
    %v4891 = vunpack.c.h.b16 %v804
    %v4892 = vunpack.c.l.b16 %v805
    %v4893 = vunpack.c.h.b16 %v805
    %v4894 = vunpack.c.l.b16 %v806
    %v4895 = vunpack.c.l.b16 %v807
    %v4896 = vunpack.c.h.b16 %v807
    %v4897 = vunpack.c.l.b16 %v808
    %v4898 = vunpack.c.h.b16 %v808
    %v4899 = vunpack.c.l.b16 %v809
    %v4900 = vunpack.c.l.b16 %v810
    %v4901 = vunpack.c.h.b16 %v810
    %v4902 = vunpack.c.l.b16 %v811
    %v4903 = vunpack.c.h.b16 %v811
    %v4904 = vunpack.c.l.b16 %v812
    %v4905 = vunpack.c.l.b16 %v813
    %v4906 = vunpack.c.h.b16 %v813
    %v4907 = vunpack.c.l.b16 %v814
    %v4908 = vunpack.c.h.b16 %v814
    %v4909 = vunpack.c.l.b16 %v815
    %v4910 = vunpack.c.l.b16 %v816
    %v4911 = vunpack.c.h.b16 %v816
    %v4912 = vunpack.c.l.b16 %v817
    %v4913 = vunpack.c.h.b16 %v817
    %v4914 = vunpack.c.l.b16 %v818
    %v4915 = vunpack.c.l.b16 %v819
    %v4916 = vunpack.c.h.b16 %v819
    %v4917 = vunpack.c.l.b16 %v820
    %v4918 = vunpack.c.h.b16 %v820
    %v4919 = vunpack.c.l.b16 %v821
    %v4920 = vunpack.c.l.b16 %v822
    %v4921 = vunpack.c.h.b16 %v822
    %v4922 = vunpack.c.l.b16 %v823
    %v4923 = vunpack.c.h.b16 %v823
    %v4924 = vunpack.c.l.b16 %v824
    %v4925 = vunpack.c.l.b16 %v825
    %v4926 = vunpack.c.h.b16 %v825
    %v4927 = vunpack.c.l.b16 %v826
    %v4928 = vunpack.c.h.b16 %v826
    %v4929 = vunpack.c.l.b16 %v827
    %v4930 = vunpack.c.l.b16 %v828
    %v4931 = vunpack.c.h.b16 %v828
    %v4932 = vunpack.c.l.b16 %v829
    %v4933 = vunpack.c.h.b16 %v829
    %v4934 = vunpack.c.l.b16 %v830
    %v4935 = vunpack.c.l.b16 %v831
    %v4936 = vunpack.c.h.b16 %v831
    %v4937 = vunpack.c.l.b16 %v832
    %v4938 = vunpack.c.h.b16 %v832
    %v4939 = vunpack.c.l.b16 %v833
    %v4940 = vunpack.c.l.b16 %v834
    %v4941 = vunpack.c.h.b16 %v834
    %v4942 = vunpack.c.l.b16 %v835
    %v4943 = vunpack.c.h.b16 %v835
    %v4944 = vunpack.c.l.b16 %v836
    %v4945 = vunpack.c.l.b16 %v837
    %v4946 = vunpack.c.h.b16 %v837
    %v4947 = vunpack.c.l.b16 %v838
    %v4948 = vunpack.c.h.b16 %v838
    %v4949 = vunpack.c.l.b16 %v839
    %v4950 = vunpack.c.l.b16 %v840
    %v4951 = vunpack.c.h.b16 %v840
    %v4952 = vunpack.c.l.b16 %v841
    %v4953 = vunpack.c.h.b16 %v841
    %v4954 = vunpack.c.l.b16 %v842
    %v4955 = vunpack.c.l.b16 %v843
    %v4956 = vunpack.c.h.b16 %v843
    %v4957 = vunpack.c.l.b16 %v844
    %v4958 = vunpack.c.h.b16 %v844
    %v4959 = vunpack.c.l.b16 %v845
    %v4960 = vunpack.c.l.b16 %v846
    %v4961 = vunpack.c.h.b16 %v846
    %v4962 = vunpack.c.l.b16 %v847
    %v4963 = vunpack.c.h.b16 %v847
    %v4964 = vunpack.c.l.b16 %v848
    %v4965 = vunpack.c.l.b16 %v849
    %v4966 = vunpack.c.h.b16 %v849
    %v4967 = vunpack.c.l.b16 %v850
    %v4968 = vunpack.c.h.b16 %v850
    %v4969 = vunpack.c.l.b16 %v851
    %v4970 = vunpack.c.l.b16 %v852
    %v4971 = vunpack.c.h.b16 %v852
    %v4972 = vunpack.c.l.b16 %v853
    %v4973 = vunpack.c.h.b16 %v853
    %v4974 = vunpack.c.l.b16 %v854
    %v4975 = vunpack.c.l.b16 %v855
    %v4976 = vunpack.c.h.b16 %v855
    %v4977 = vunpack.c.l.b16 %v856
    %v4978 = vunpack.c.h.b16 %v856
    %v4979 = vunpack.c.l.b16 %v857
    %v4980 = vunpack.c.l.b16 %v858
    %v4981 = vunpack.c.h.b16 %v858
    %v4982 = vunpack.c.l.b16 %v859
    %v4983 = vunpack.c.h.b16 %v859
    %v4984 = vunpack.c.l.b16 %v860
    %v4985 = vpack.c.b16 %v4350, %v4345
    %v4986 = vpack.c.b16 %v4351, %v4346
    %v4987 = vpack.c.b16 %v4352, %v4347
    %v4988 = vpack.c.b16 %v4353, %v4348
    %v4989 = vpack.c.b16 %v4354, %v4349
    %v4990 = vpack.c.b16 %v4360, %v4355
    %v4991 = vpack.c.b16 %v4361, %v4356
    %v4992 = vpack.c.b16 %v4362, %v4357
    %v4993 = vpack.c.b16 %v4363, %v4358
    %v4994 = vpack.c.b16 %v4364, %v4359
    %v4995 = vpack.c.b16 %v4370, %v4365
    %v4996 = vpack.c.b16 %v4371, %v4366
    %v4997 = vpack.c.b16 %v4372, %v4367
    %v4998 = vpack.c.b16 %v4373, %v4368
    %v4999 = vpack.c.b16 %v4374, %v4369
    %v5000 = vpack.c.b16 %v4380, %v4375
    %v5001 = vpack.c.b16 %v4381, %v4376
    %v5002 = vpack.c.b16 %v4382, %v4377
    %v5003 = vpack.c.b16 %v4383, %v4378
    %v5004 = vpack.c.b16 %v4384, %v4379
    %v5005 = vpack.c.b16 %v4390, %v4385
    %v5006 = vpack.c.b16 %v4391, %v4386
    %v5007 = vpack.c.b16 %v4392, %v4387
    %v5008 = vpack.c.b16 %v4393, %v4388
    %v5009 = vpack.c.b16 %v4394, %v4389
    %v5010 = vpack.c.b16 %v4400, %v4395
    %v5011 = vpack.c.b16 %v4401, %v4396
    %v5012 = vpack.c.b16 %v4402, %v4397
    %v5013 = vpack.c.b16 %v4403, %v4398
    %v5014 = vpack.c.b16 %v4404, %v4399
    %v5015 = vpack.c.b16 %v4410, %v4405
    %v5016 = vpack.c.b16 %v4411, %v4406
    %v5017 = vpack.c.b16 %v4412, %v4407
    %v5018 = vpack.c.b16 %v4413, %v4408
    %v5019 = vpack.c.b16 %v4414, %v4409
    %v5020 = vpack.c.b16 %v4420, %v4415
    %v5021 = vpack.c.b16 %v4421, %v4416
    %v5022 = vpack.c.b16 %v4422, %v4417
    %v5023 = vpack.c.b16 %v4423, %v4418
    %v5024 = vpack.c.b16 %v4424, %v4419
    %v5025 = vpack.c.b16 %v4430, %v4425
    %v5026 = vpack.c.b16 %v4431, %v4426
    %v5027 = vpack.c.b16 %v4432, %v4427
    %v5028 = vpack.c.b16 %v4433, %v4428
    %v5029 = vpack.c.b16 %v4434, %v4429
    %v5030 = vpack.c.b16 %v4440, %v4435
    %v5031 = vpack.c.b16 %v4441, %v4436
    %v5032 = vpack.c.b16 %v4442, %v4437
    %v5033 = vpack.c.b16 %v4443, %v4438
    %v5034 = vpack.c.b16 %v4444, %v4439
    %v5035 = vpack.c.b16 %v4450, %v4445
    %v5036 = vpack.c.b16 %v4451, %v4446
    %v5037 = vpack.c.b16 %v4452, %v4447
    %v5038 = vpack.c.b16 %v4453, %v4448
    %v5039 = vpack.c.b16 %v4454, %v4449
    %v5040 = vpack.c.b16 %v4460, %v4455
    %v5041 = vpack.c.b16 %v4461, %v4456
    %v5042 = vpack.c.b16 %v4462, %v4457
    %v5043 = vpack.c.b16 %v4463, %v4458
    %v5044 = vpack.c.b16 %v4464, %v4459
    %v5045 = vpack.c.b16 %v4470, %v4465
    %v5046 = vpack.c.b16 %v4471, %v4466
    %v5047 = vpack.c.b16 %v4472, %v4467
    %v5048 = vpack.c.b16 %v4473, %v4468
    %v5049 = vpack.c.b16 %v4474, %v4469
    %v5050 = vpack.c.b16 %v4480, %v4475
    %v5051 = vpack.c.b16 %v4481, %v4476
    %v5052 = vpack.c.b16 %v4482, %v4477
    %v5053 = vpack.c.b16 %v4483, %v4478
    %v5054 = vpack.c.b16 %v4484, %v4479
    %v5055 = vpack.c.b16 %v4490, %v4485
    %v5056 = vpack.c.b16 %v4491, %v4486
    %v5057 = vpack.c.b16 %v4492, %v4487
    %v5058 = vpack.c.b16 %v4493, %v4488
    %v5059 = vpack.c.b16 %v4494, %v4489
    %v5060 = vpack.c.b16 %v4500, %v4495
    %v5061 = vpack.c.b16 %v4501, %v4496
    %v5062 = vpack.c.b16 %v4502, %v4497
    %v5063 = vpack.c.b16 %v4503, %v4498
    %v5064 = vpack.c.b16 %v4504, %v4499
    %v5065 = vpack.c.b16 %v4510, %v4505
    %v5066 = vpack.c.b16 %v4511, %v4506
    %v5067 = vpack.c.b16 %v4512, %v4507
    %v5068 = vpack.c.b16 %v4513, %v4508
    %v5069 = vpack.c.b16 %v4514, %v4509
    %v5070 = vpack.c.b16 %v4520, %v4515
    %v5071 = vpack.c.b16 %v4521, %v4516
    %v5072 = vpack.c.b16 %v4522, %v4517
    %v5073 = vpack.c.b16 %v4523, %v4518
    %v5074 = vpack.c.b16 %v4524, %v4519
    %v5075 = vpack.c.b16 %v4530, %v4525
    %v5076 = vpack.c.b16 %v4531, %v4526
    %v5077 = vpack.c.b16 %v4532, %v4527
    %v5078 = vpack.c.b16 %v4533, %v4528
    %v5079 = vpack.c.b16 %v4534, %v4529
    %v5080 = vpack.c.b16 %v4540, %v4535
    %v5081 = vpack.c.b16 %v4541, %v4536
    %v5082 = vpack.c.b16 %v4542, %v4537
    %v5083 = vpack.c.b16 %v4543, %v4538
    %v5084 = vpack.c.b16 %v4544, %v4539
    %v5085 = vpack.c.b16 %v4550, %v4545
    %v5086 = vpack.c.b16 %v4551, %v4546
    %v5087 = vpack.c.b16 %v4552, %v4547
    %v5088 = vpack.c.b16 %v4553, %v4548
    %v5089 = vpack.c.b16 %v4554, %v4549
    %v5090 = vpack.c.b16 %v4560, %v4555
    %v5091 = vpack.c.b16 %v4561, %v4556
    %v5092 = vpack.c.b16 %v4562, %v4557
    %v5093 = vpack.c.b16 %v4563, %v4558
    %v5094 = vpack.c.b16 %v4564, %v4559
    %v5095 = vpack.c.b16 %v4570, %v4565
    %v5096 = vpack.c.b16 %v4571, %v4566
    %v5097 = vpack.c.b16 %v4572, %v4567
    %v5098 = vpack.c.b16 %v4573, %v4568
    %v5099 = vpack.c.b16 %v4574, %v4569
    %v5100 = vpack.c.b16 %v4580, %v4575
    %v5101 = vpack.c.b16 %v4581, %v4576
    %v5102 = vpack.c.b16 %v4582, %v4577
    %v5103 = vpack.c.b16 %v4583, %v4578
    %v5104 = vpack.c.b16 %v4584, %v4579
    %v5105 = vpack.c.b16 %v4590, %v4585
    %v5106 = vpack.c.b16 %v4591, %v4586
    %v5107 = vpack.c.b16 %v4592, %v4587
    %v5108 = vpack.c.b16 %v4593, %v4588
    %v5109 = vpack.c.b16 %v4594, %v4589
    %v5110 = vpack.c.b16 %v4600, %v4595
    %v5111 = vpack.c.b16 %v4601, %v4596
    %v5112 = vpack.c.b16 %v4602, %v4597
    %v5113 = vpack.c.b16 %v4603, %v4598
    %v5114 = vpack.c.b16 %v4604, %v4599
    %v5115 = vpack.c.b16 %v4610, %v4605
    %v5116 = vpack.c.b16 %v4611, %v4606
    %v5117 = vpack.c.b16 %v4612, %v4607
    %v5118 = vpack.c.b16 %v4613, %v4608
    %v5119 = vpack.c.b16 %v4614, %v4609
    %v5120 = vpack.c.b16 %v4620, %v4615
    %v5121 = vpack.c.b16 %v4621, %v4616
    %v5122 = vpack.c.b16 %v4622, %v4617
    %v5123 = vpack.c.b16 %v4623, %v4618
    %v5124 = vpack.c.b16 %v4624, %v4619
    %v5125 = vpack.c.b16 %v4630, %v4625
    %v5126 = vpack.c.b16 %v4631, %v4626
    %v5127 = vpack.c.b16 %v4632, %v4627
    %v5128 = vpack.c.b16 %v4633, %v4628
    %v5129 = vpack.c.b16 %v4634, %v4629
    %v5130 = vpack.c.b16 %v4640, %v4635
    %v5131 = vpack.c.b16 %v4641, %v4636
    %v5132 = vpack.c.b16 %v4642, %v4637
    %v5133 = vpack.c.b16 %v4643, %v4638
    %v5134 = vpack.c.b16 %v4644, %v4639
    %v5135 = vpack.c.b16 %v4650, %v4645
    %v5136 = vpack.c.b16 %v4651, %v4646
    %v5137 = vpack.c.b16 %v4652, %v4647
    %v5138 = vpack.c.b16 %v4653, %v4648
    %v5139 = vpack.c.b16 %v4654, %v4649
    %v5140 = vpack.c.b16 %v4660, %v4655
    %v5141 = vpack.c.b16 %v4661, %v4656
    %v5142 = vpack.c.b16 %v4662, %v4657
    %v5143 = vpack.c.b16 %v4663, %v4658
    %v5144 = vpack.c.b16 %v4664, %v4659
    %v5145 = vpack.c.b16 %v4670, %v4665
    %v5146 = vpack.c.b16 %v4671, %v4666
    %v5147 = vpack.c.b16 %v4672, %v4667
    %v5148 = vpack.c.b16 %v4673, %v4668
    %v5149 = vpack.c.b16 %v4674, %v4669
    %v5150 = vpack.c.b16 %v4680, %v4675
    %v5151 = vpack.c.b16 %v4681, %v4676
    %v5152 = vpack.c.b16 %v4682, %v4677
    %v5153 = vpack.c.b16 %v4683, %v4678
    %v5154 = vpack.c.b16 %v4684, %v4679
    %v5155 = vpack.c.b16 %v4690, %v4685
    %v5156 = vpack.c.b16 %v4691, %v4686
    %v5157 = vpack.c.b16 %v4692, %v4687
    %v5158 = vpack.c.b16 %v4693, %v4688
    %v5159 = vpack.c.b16 %v4694, %v4689
    %v5160 = vpack.c.b16 %v4700, %v4695
    %v5161 = vpack.c.b16 %v4701, %v4696
    %v5162 = vpack.c.b16 %v4702, %v4697
    %v5163 = vpack.c.b16 %v4703, %v4698
    %v5164 = vpack.c.b16 %v4704, %v4699
    %v5165 = vpack.c.b16 %v4710, %v4705
    %v5166 = vpack.c.b16 %v4711, %v4706
    %v5167 = vpack.c.b16 %v4712, %v4707
    %v5168 = vpack.c.b16 %v4713, %v4708
    %v5169 = vpack.c.b16 %v4714, %v4709
    %v5170 = vpack.c.b16 %v4720, %v4715
    %v5171 = vpack.c.b16 %v4721, %v4716
    %v5172 = vpack.c.b16 %v4722, %v4717
    %v5173 = vpack.c.b16 %v4723, %v4718
    %v5174 = vpack.c.b16 %v4724, %v4719
    %v5175 = vpack.c.b16 %v4730, %v4725
    %v5176 = vpack.c.b16 %v4731, %v4726
    %v5177 = vpack.c.b16 %v4732, %v4727
    %v5178 = vpack.c.b16 %v4733, %v4728
    %v5179 = vpack.c.b16 %v4734, %v4729
    %v5180 = vpack.c.b16 %v4740, %v4735
    %v5181 = vpack.c.b16 %v4741, %v4736
    %v5182 = vpack.c.b16 %v4742, %v4737
    %v5183 = vpack.c.b16 %v4743, %v4738
    %v5184 = vpack.c.b16 %v4744, %v4739
    %v5185 = vpack.c.b16 %v4750, %v4745
    %v5186 = vpack.c.b16 %v4751, %v4746
    %v5187 = vpack.c.b16 %v4752, %v4747
    %v5188 = vpack.c.b16 %v4753, %v4748
    %v5189 = vpack.c.b16 %v4754, %v4749
    %v5190 = vpack.c.b16 %v4760, %v4755
    %v5191 = vpack.c.b16 %v4761, %v4756
    %v5192 = vpack.c.b16 %v4762, %v4757
    %v5193 = vpack.c.b16 %v4763, %v4758
    %v5194 = vpack.c.b16 %v4764, %v4759
    %v5195 = vpack.c.b16 %v4770, %v4765
    %v5196 = vpack.c.b16 %v4771, %v4766
    %v5197 = vpack.c.b16 %v4772, %v4767
    %v5198 = vpack.c.b16 %v4773, %v4768
    %v5199 = vpack.c.b16 %v4774, %v4769
    %v5200 = vpack.c.b16 %v4780, %v4775
    %v5201 = vpack.c.b16 %v4781, %v4776
    %v5202 = vpack.c.b16 %v4782, %v4777
    %v5203 = vpack.c.b16 %v4783, %v4778
    %v5204 = vpack.c.b16 %v4784, %v4779
    %v5205 = vpack.c.b16 %v4790, %v4785
    %v5206 = vpack.c.b16 %v4791, %v4786
    %v5207 = vpack.c.b16 %v4792, %v4787
    %v5208 = vpack.c.b16 %v4793, %v4788
    %v5209 = vpack.c.b16 %v4794, %v4789
    %v5210 = vpack.c.b16 %v4800, %v4795
    %v5211 = vpack.c.b16 %v4801, %v4796
    %v5212 = vpack.c.b16 %v4802, %v4797
    %v5213 = vpack.c.b16 %v4803, %v4798
    %v5214 = vpack.c.b16 %v4804, %v4799
    %v5215 = vpack.c.b16 %v4810, %v4805
    %v5216 = vpack.c.b16 %v4811, %v4806
    %v5217 = vpack.c.b16 %v4812, %v4807
    %v5218 = vpack.c.b16 %v4813, %v4808
    %v5219 = vpack.c.b16 %v4814, %v4809
    %v5220 = vpack.c.b16 %v4820, %v4815
    %v5221 = vpack.c.b16 %v4821, %v4816
    %v5222 = vpack.c.b16 %v4822, %v4817
    %v5223 = vpack.c.b16 %v4823, %v4818
    %v5224 = vpack.c.b16 %v4824, %v4819
    %v5225 = vpack.c.b16 %v4830, %v4825
    %v5226 = vpack.c.b16 %v4831, %v4826
    %v5227 = vpack.c.b16 %v4832, %v4827
    %v5228 = vpack.c.b16 %v4833, %v4828
    %v5229 = vpack.c.b16 %v4834, %v4829
    %v5230 = vpack.c.b16 %v4840, %v4835
    %v5231 = vpack.c.b16 %v4841, %v4836
    %v5232 = vpack.c.b16 %v4842, %v4837
    %v5233 = vpack.c.b16 %v4843, %v4838
    %v5234 = vpack.c.b16 %v4844, %v4839
    %v5235 = vpack.c.b16 %v4850, %v4845
    %v5236 = vpack.c.b16 %v4851, %v4846
    %v5237 = vpack.c.b16 %v4852, %v4847
    %v5238 = vpack.c.b16 %v4853, %v4848
    %v5239 = vpack.c.b16 %v4854, %v4849
    %v5240 = vpack.c.b16 %v4860, %v4855
    %v5241 = vpack.c.b16 %v4861, %v4856
    %v5242 = vpack.c.b16 %v4862, %v4857
    %v5243 = vpack.c.b16 %v4863, %v4858
    %v5244 = vpack.c.b16 %v4864, %v4859
    %v5245 = vpack.c.b16 %v4870, %v4865
    %v5246 = vpack.c.b16 %v4871, %v4866
    %v5247 = vpack.c.b16 %v4872, %v4867
    %v5248 = vpack.c.b16 %v4873, %v4868
    %v5249 = vpack.c.b16 %v4874, %v4869
    %v5250 = vpack.c.b16 %v4880, %v4875
    %v5251 = vpack.c.b16 %v4881, %v4876
    %v5252 = vpack.c.b16 %v4882, %v4877
    %v5253 = vpack.c.b16 %v4883, %v4878
    %v5254 = vpack.c.b16 %v4884, %v4879
    %v5255 = vpack.c.b16 %v4890, %v4885
    %v5256 = vpack.c.b16 %v4891, %v4886
    %v5257 = vpack.c.b16 %v4892, %v4887
    %v5258 = vpack.c.b16 %v4893, %v4888
    %v5259 = vpack.c.b16 %v4894, %v4889
    %v5260 = vpack.c.b16 %v4900, %v4895
    %v5261 = vpack.c.b16 %v4901, %v4896
    %v5262 = vpack.c.b16 %v4902, %v4897
    %v5263 = vpack.c.b16 %v4903, %v4898
    %v5264 = vpack.c.b16 %v4904, %v4899
    %v5265 = vpack.c.b16 %v4910, %v4905
    %v5266 = vpack.c.b16 %v4911, %v4906
    %v5267 = vpack.c.b16 %v4912, %v4907
    %v5268 = vpack.c.b16 %v4913, %v4908
    %v5269 = vpack.c.b16 %v4914, %v4909
    %v5270 = vpack.c.b16 %v4920, %v4915
    %v5271 = vpack.c.b16 %v4921, %v4916
    %v5272 = vpack.c.b16 %v4922, %v4917
    %v5273 = vpack.c.b16 %v4923, %v4918
    %v5274 = vpack.c.b16 %v4924, %v4919
    %v5275 = vpack.c.b16 %v4930, %v4925
    %v5276 = vpack.c.b16 %v4931, %v4926
    %v5277 = vpack.c.b16 %v4932, %v4927
    %v5278 = vpack.c.b16 %v4933, %v4928
    %v5279 = vpack.c.b16 %v4934, %v4929
    %v5280 = vpack.c.b16 %v4940, %v4935
    %v5281 = vpack.c.b16 %v4941, %v4936
    %v5282 = vpack.c.b16 %v4942, %v4937
    %v5283 = vpack.c.b16 %v4943, %v4938
    %v5284 = vpack.c.b16 %v4944, %v4939
    %v5285 = vpack.c.b16 %v4950, %v4945
    %v5286 = vpack.c.b16 %v4951, %v4946
    %v5287 = vpack.c.b16 %v4952, %v4947
    %v5288 = vpack.c.b16 %v4953, %v4948
    %v5289 = vpack.c.b16 %v4954, %v4949
    %v5290 = vpack.c.b16 %v4960, %v4955
    %v5291 = vpack.c.b16 %v4961, %v4956
    %v5292 = vpack.c.b16 %v4962, %v4957
    %v5293 = vpack.c.b16 %v4963, %v4958
    %v5294 = vpack.c.b16 %v4964, %v4959
    %v5295 = vpack.c.b16 %v4970, %v4965
    %v5296 = vpack.c.b16 %v4971, %v4966
    %v5297 = vpack.c.b16 %v4972, %v4967
    %v5298 = vpack.c.b16 %v4973, %v4968
    %v5299 = vpack.c.b16 %v4974, %v4969
    %v5300 = vpack.c.b16 %v4980, %v4975
    %v5301 = vpack.c.b16 %v4981, %v4976
    %v5302 = vpack.c.b16 %v4982, %v4977
    %v5303 = vpack.c.b16 %v4983, %v4978
    %v5304 = vpack.c.b16 %v4984, %v4979
    %5625 = vmatprep.subr.bf16.mxu0 %v4986
    %5626 = vmatpush1.bf16.msra.mxu0 %v4985
    %5627 = vmatprep.subr.bf16.mxu0 %v4991
    %5628 = vmatpush1.bf16.msra.mxu0 %v4990
    %5629 = vmatprep.subr.bf16.mxu0 %v4996
    %5630 = vmatpush1.bf16.msra.mxu0 %v4995
    %5631 = vmatprep.subr.bf16.mxu0 %v5001
    %5632 = vmatpush1.bf16.msra.mxu0 %v5000
    %5633 = vmatprep.subr.bf16.mxu0 %v5006
    %5634 = vmatpush1.bf16.msra.mxu0 %v5005
    %5635 = vmatprep.subr.bf16.mxu0 %v5011
    %5636 = vmatpush1.bf16.msra.mxu0 %v5010
    %5637 = vmatprep.subr.bf16.mxu0 %v5016
    %5638 = vmatpush1.bf16.msra.mxu0 %v5015
    %5639 = vmatprep.subr.bf16.mxu0 %v5021
    %5640 = vmatpush1.bf16.msra.mxu0 %v5020
    %5641 = vmatprep.subr.bf16.mxu0 %v5026
    %5642 = vmatpush1.bf16.msra.mxu0 %v5025
    %5643 = vmatprep.subr.bf16.mxu0 %v5031
    %5644 = vmatpush1.bf16.msra.mxu0 %v5030
    %5645 = vmatprep.subr.bf16.mxu0 %v5036
    %5646 = vmatpush1.bf16.msra.mxu0 %v5035
    %5647 = vmatprep.subr.bf16.mxu0 %v5041
    %5648 = vmatpush1.bf16.msra.mxu0 %v5040
    %5649 = vmatprep.subr.bf16.mxu0 %v5046
    %5650 = vmatpush1.bf16.msra.mxu0 %v5045
    %5651 = vmatprep.subr.bf16.mxu0 %v5051
    %5652 = vmatpush1.bf16.msra.mxu0 %v5050
    %5653 = vmatprep.subr.bf16.mxu0 %v5056
    %5654 = vmatpush1.bf16.msra.mxu0 %v5055
    %5655 = vmatprep.subr.bf16.mxu0 %v5061
    %5656 = vmatpush1.bf16.msra.mxu0 %v5060
    %5657 = vmatprep.mubr.bf16.mxu0 %v1134
    %5658 = vmatmul.mubr.bf16.gmra.mrb[0].mxu0 %v1133
    %v5659 = vpop.f32.mrb[0].mxu0
    %v5660 = vadd.f32 0.0, %v5659
    %v5661 = vpop.f32.mrb[0].mxu0
    %v5662 = vadd.f32 0.0, %v5661
    %v5663 = vpop.f32.mrb[0].mxu0
    %v5664 = vadd.f32 0.0, %v5663
    %v5665 = vpop.f32.mrb[0].mxu0
    %v5666 = vadd.f32 0.0, %v5665
    %5667 = vmatprep.mubr.bf16.mxu0 %v1142
    %5668 = vmatmul.mubr.bf16.gmra.mrb[0].mxu0 %v1141
    %v5669 = vpop.f32.mrb[0].mxu0
    %v5670 = vadd.f32 0.0, %v5669
    %v5671 = vpop.f32.mrb[0].mxu0
    %v5672 = vadd.f32 0.0, %v5671
    %v5673 = vpop.f32.mrb[0].mxu0
    %v5674 = vadd.f32 0.0, %v5673
    %v5675 = vpop.f32.mrb[0].mxu0
    %v5676 = vadd.f32 0.0, %v5675
    %5677 = vmatprep.mubr.bf16.mxu0 %v1150
    %5678 = vmatmul.mubr.bf16.gmra.mrb[0].mxu0 %v1149
    %v5679 = vpop.f32.mrb[0].mxu0
    %v5680 = vadd.f32 0.0, %v5679
    %v5681 = vpop.f32.mrb[0].mxu0
    %v5682 = vadd.f32 0.0, %v5681
    %v5683 = vpop.f32.mrb[0].mxu0
    %v5684 = vadd.f32 0.0, %v5683
    %v5685 = vpop.f32.mrb[0].mxu0
    %v5686 = vadd.f32 0.0, %v5685
    %5687 = vmatprep.mubr.bf16.mxu0 %v1158
    %5688 = vmatmul.mubr.bf16.gmra.mrb[0].mxu0 %v1157
    %v5689 = vpop.f32.mrb[0].mxu0
    %v5690 = vadd.f32 0.0, %v5689
    %v5691 = vpop.f32.mrb[0].mxu0
    %v5692 = vadd.f32 0.0, %v5691
    %v5693 = vpop.f32.mrb[0].mxu0
    %v5694 = vadd.f32 0.0, %v5693
    %v5695 = vpop.f32.mrb[0].mxu0
    %v5696 = vadd.f32 0.0, %v5695
    %5697 = vmatprep.mubr.bf16.mxu0 %v1166
    %5698 = vmatmul.mubr.bf16.gmra.mrb[0].mxu0 %v1165
    %v5699 = vpop.f32.mrb[0].mxu0
    %v5700 = vadd.f32 0.0, %v5699
    %v5701 = vpop.f32.mrb[0].mxu0
    %v5702 = vadd.f32 0.0, %v5701
    %v5703 = vpop.f32.mrb[0].mxu0
    %v5704 = vadd.f32 0.0, %v5703
    %v5705 = vpop.f32.mrb[0].mxu0
    %v5706 = vadd.f32 0.0, %v5705
    %5707 = vmatprep.mubr.bf16.mxu0 %v1174
    %5708 = vmatmul.mubr.bf16.gmra.mrb[0].mxu0 %v1173
    %v5709 = vpop.f32.mrb[0].mxu0
    %v5710 = vadd.f32 0.0, %v5709
    %v5711 = vpop.f32.mrb[0].mxu0
    %v5712 = vadd.f32 0.0, %v5711
    %v5713 = vpop.f32.mrb[0].mxu0
    %v5714 = vadd.f32 0.0, %v5713
    %v5715 = vpop.f32.mrb[0].mxu0
    %v5716 = vadd.f32 0.0, %v5715
    %5717 = vdwg.mxu0
    %5718 = vmatprep.subr.bf16.mxu0 %v5066
    %5719 = vmatpush1.bf16.msra.mxu0 %v5065
    %5720 = vmatprep.subr.bf16.mxu0 %v5071
    %5721 = vmatpush1.bf16.msra.mxu0 %v5070
    %5722 = vmatprep.subr.bf16.mxu0 %v5076
    %5723 = vmatpush1.bf16.msra.mxu0 %v5075
    %5724 = vmatprep.subr.bf16.mxu0 %v5081
    %5725 = vmatpush1.bf16.msra.mxu0 %v5080
    %5726 = vmatprep.subr.bf16.mxu0 %v5086
    %5727 = vmatpush1.bf16.msra.mxu0 %v5085
    %5728 = vmatprep.subr.bf16.mxu0 %v5091
    %5729 = vmatpush1.bf16.msra.mxu0 %v5090
    %5730 = vmatprep.subr.bf16.mxu0 %v5096
    %5731 = vmatpush1.bf16.msra.mxu0 %v5095
    %5732 = vmatprep.subr.bf16.mxu0 %v5101
    %5733 = vmatpush1.bf16.msra.mxu0 %v5100
    %5734 = vmatprep.subr.bf16.mxu0 %v5106
    %5735 = vmatpush1.bf16.msra.mxu0 %v5105
    %5736 = vmatprep.subr.bf16.mxu0 %v5111
    %5737 = vmatpush1.bf16.msra.mxu0 %v5110
    %5738 = vmatprep.subr.bf16.mxu0 %v5116
    %5739 = vmatpush1.bf16.msra.mxu0 %v5115
    %5740 = vmatprep.subr.bf16.mxu0 %v5121
    %5741 = vmatpush1.bf16.msra.mxu0 %v5120
    %5742 = vmatprep.subr.bf16.mxu0 %v5126
    %5743 = vmatpush1.bf16.msra.mxu0 %v5125
    %5744 = vmatprep.subr.bf16.mxu0 %v5131
    %5745 = vmatpush1.bf16.msra.mxu0 %v5130
    %5746 = vmatprep.subr.bf16.mxu0 %v5136
    %5747 = vmatpush1.bf16.msra.mxu0 %v5135
    %5748 = vmatprep.subr.bf16.mxu0 %v5141
    %5749 = vmatpush1.bf16.msra.mxu0 %v5140
    %5750 = vmatprep.mubr.bf16.mxu0 %v1136
    %5751 = vmatmul.mubr.bf16.gmra.mrb[0].mxu0 %v1135
    %v5752 = vpop.f32.mrb[0].mxu0
    %v5753 = vadd.f32 %v5660, %v5752
    %v5754 = vpop.f32.mrb[0].mxu0
    %v5755 = vadd.f32 %v5662, %v5754
    %v5756 = vpop.f32.mrb[0].mxu0
    %v5757 = vadd.f32 %v5664, %v5756
    %v5758 = vpop.f32.mrb[0].mxu0
    %v5759 = vadd.f32 %v5666, %v5758
    %5760 = vmatprep.mubr.bf16.mxu0 %v1144
    %5761 = vmatmul.mubr.bf16.gmra.mrb[0].mxu0 %v1143
    %v5762 = vpop.f32.mrb[0].mxu0
    %v5763 = vadd.f32 %v5670, %v5762
    %v5764 = vpop.f32.mrb[0].mxu0
    %v5765 = vadd.f32 %v5672, %v5764
    %v5766 = vpop.f32.mrb[0].mxu0
    %v5767 = vadd.f32 %v5674, %v5766
    %v5768 = vpop.f32.mrb[0].mxu0
    %v5769 = vadd.f32 %v5676, %v5768
    %5770 = vmatprep.mubr.bf16.mxu0 %v1152
    %5771 = vmatmul.mubr.bf16.gmra.mrb[0].mxu0 %v1151
    %v5772 = vpop.f32.mrb[0].mxu0
    %v5773 = vadd.f32 %v5680, %v5772
    %v5774 = vpop.f32.mrb[0].mxu0
    %v5775 = vadd.f32 %v5682, %v5774
    %v5776 = vpop.f32.mrb[0].mxu0
    %v5777 = vadd.f32 %v5684, %v5776
    %v5778 = vpop.f32.mrb[0].mxu0
    %v5779 = vadd.f32 %v5686, %v5778
    %5780 = vmatprep.mubr.bf16.mxu0 %v1160
    %5781 = vmatmul.mubr.bf16.gmra.mrb[0].mxu0 %v1159
    %v5782 = vpop.f32.mrb[0].mxu0
    %v5783 = vadd.f32 %v5690, %v5782
    %v5784 = vpop.f32.mrb[0].mxu0
    %v5785 = vadd.f32 %v5692, %v5784
    %v5786 = vpop.f32.mrb[0].mxu0
    %v5787 = vadd.f32 %v5694, %v5786
    %v5788 = vpop.f32.mrb[0].mxu0
    %v5789 = vadd.f32 %v5696, %v5788
    %5790 = vmatprep.mubr.bf16.mxu0 %v1168
    %5791 = vmatmul.mubr.bf16.gmra.mrb[0].mxu0 %v1167
    %v5792 = vpop.f32.mrb[0].mxu0
    %v5793 = vadd.f32 %v5700, %v5792
    %v5794 = vpop.f32.mrb[0].mxu0
    %v5795 = vadd.f32 %v5702, %v5794
    %v5796 = vpop.f32.mrb[0].mxu0
    %v5797 = vadd.f32 %v5704, %v5796
    %v5798 = vpop.f32.mrb[0].mxu0
    %v5799 = vadd.f32 %v5706, %v5798
    %5800 = vmatprep.mubr.bf16.mxu0 %v1176
    %5801 = vmatmul.mubr.bf16.gmra.mrb[0].mxu0 %v1175
    %v5802 = vpop.f32.mrb[0].mxu0
    %v5803 = vadd.f32 %v5710, %v5802
    %v5804 = vpop.f32.mrb[0].mxu0
    %v5805 = vadd.f32 %v5712, %v5804
    %v5806 = vpop.f32.mrb[0].mxu0
    %v5807 = vadd.f32 %v5714, %v5806
    %v5808 = vpop.f32.mrb[0].mxu0
    %v5809 = vadd.f32 %v5716, %v5808
    %5810 = vdwg.mxu0
    %5811 = vmatprep.subr.bf16.mxu0 %v5146
    %5812 = vmatpush1.bf16.msra.mxu0 %v5145
    %5813 = vmatprep.subr.bf16.mxu0 %v5151
    %5814 = vmatpush1.bf16.msra.mxu0 %v5150
    %5815 = vmatprep.subr.bf16.mxu0 %v5156
    %5816 = vmatpush1.bf16.msra.mxu0 %v5155
    %5817 = vmatprep.subr.bf16.mxu0 %v5161
    %5818 = vmatpush1.bf16.msra.mxu0 %v5160
    %5819 = vmatprep.subr.bf16.mxu0 %v5166
    %5820 = vmatpush1.bf16.msra.mxu0 %v5165
    %5821 = vmatprep.subr.bf16.mxu0 %v5171
    %5822 = vmatpush1.bf16.msra.mxu0 %v5170
    %5823 = vmatprep.subr.bf16.mxu0 %v5176
    %5824 = vmatpush1.bf16.msra.mxu0 %v5175
    %5825 = vmatprep.subr.bf16.mxu0 %v5181
    %5826 = vmatpush1.bf16.msra.mxu0 %v5180
    %5827 = vmatprep.subr.bf16.mxu0 %v5186
    %5828 = vmatpush1.bf16.msra.mxu0 %v5185
    %5829 = vmatprep.subr.bf16.mxu0 %v5191
    %5830 = vmatpush1.bf16.msra.mxu0 %v5190
    %5831 = vmatprep.subr.bf16.mxu0 %v5196
    %5832 = vmatpush1.bf16.msra.mxu0 %v5195
    %5833 = vmatprep.subr.bf16.mxu0 %v5201
    %5834 = vmatpush1.bf16.msra.mxu0 %v5200
    %5835 = vmatprep.subr.bf16.mxu0 %v5206
    %5836 = vmatpush1.bf16.msra.mxu0 %v5205
    %5837 = vmatprep.subr.bf16.mxu0 %v5211
    %5838 = vmatpush1.bf16.msra.mxu0 %v5210
    %5839 = vmatprep.subr.bf16.mxu0 %v5216
    %5840 = vmatpush1.bf16.msra.mxu0 %v5215
    %5841 = vmatprep.subr.bf16.mxu0 %v5221
    %5842 = vmatpush1.bf16.msra.mxu0 %v5220
    %5843 = vmatprep.mubr.bf16.mxu0 %v1138
    %5844 = vmatmul.mubr.bf16.gmra.mrb[0].mxu0 %v1137
    %v5845 = vpop.f32.mrb[0].mxu0
    %v5846 = vadd.f32 %v5753, %v5845
    %v5847 = vpop.f32.mrb[0].mxu0
    %v5848 = vadd.f32 %v5755, %v5847
    %v5849 = vpop.f32.mrb[0].mxu0
    %v5850 = vadd.f32 %v5757, %v5849
    %v5851 = vpop.f32.mrb[0].mxu0
    %v5852 = vadd.f32 %v5759, %v5851
    %5853 = vmatprep.mubr.bf16.mxu0 %v1146
    %5854 = vmatmul.mubr.bf16.gmra.mrb[0].mxu0 %v1145
    %v5855 = vpop.f32.mrb[0].mxu0
    %v5856 = vadd.f32 %v5763, %v5855
    %v5857 = vpop.f32.mrb[0].mxu0
    %v5858 = vadd.f32 %v5765, %v5857
    %v5859 = vpop.f32.mrb[0].mxu0
    %v5860 = vadd.f32 %v5767, %v5859
    %v5861 = vpop.f32.mrb[0].mxu0
    %v5862 = vadd.f32 %v5769, %v5861
    %5863 = vmatprep.mubr.bf16.mxu0 %v1154
    %5864 = vmatmul.mubr.bf16.gmra.mrb[0].mxu0 %v1153
    %v5865 = vpop.f32.mrb[0].mxu0
    %v5866 = vadd.f32 %v5773, %v5865
    %v5867 = vpop.f32.mrb[0].mxu0
    %v5868 = vadd.f32 %v5775, %v5867
    %v5869 = vpop.f32.mrb[0].mxu0
    %v5870 = vadd.f32 %v5777, %v5869
    %v5871 = vpop.f32.mrb[0].mxu0
    %v5872 = vadd.f32 %v5779, %v5871
    %5873 = vmatprep.mubr.bf16.mxu0 %v1162
    %5874 = vmatmul.mubr.bf16.gmra.mrb[0].mxu0 %v1161
    %v5875 = vpop.f32.mrb[0].mxu0
    %v5876 = vadd.f32 %v5783, %v5875
    %v5877 = vpop.f32.mrb[0].mxu0
    %v5878 = vadd.f32 %v5785, %v5877
    %v5879 = vpop.f32.mrb[0].mxu0
    %v5880 = vadd.f32 %v5787, %v5879
    %v5881 = vpop.f32.mrb[0].mxu0
    %v5882 = vadd.f32 %v5789, %v5881
    %5883 = vmatprep.mubr.bf16.mxu0 %v1170
    %5884 = vmatmul.mubr.bf16.gmra.mrb[0].mxu0 %v1169
    %v5885 = vpop.f32.mrb[0].mxu0
    %v5886 = vadd.f32 %v5793, %v5885
    %v5887 = vpop.f32.mrb[0].mxu0
    %v5888 = vadd.f32 %v5795, %v5887
    %v5889 = vpop.f32.mrb[0].mxu0
    %v5890 = vadd.f32 %v5797, %v5889
    %v5891 = vpop.f32.mrb[0].mxu0
    %v5892 = vadd.f32 %v5799, %v5891
    %5893 = vmatprep.mubr.bf16.mxu0 %v1178
    %5894 = vmatmul.mubr.bf16.gmra.mrb[0].mxu0 %v1177
    %v5895 = vpop.f32.mrb[0].mxu0
    %v5896 = vadd.f32 %v5803, %v5895
    %v5897 = vpop.f32.mrb[0].mxu0
    %v5898 = vadd.f32 %v5805, %v5897
    %v5899 = vpop.f32.mrb[0].mxu0
    %v5900 = vadd.f32 %v5807, %v5899
    %v5901 = vpop.f32.mrb[0].mxu0
    %v5902 = vadd.f32 %v5809, %v5901
    %5903 = vdwg.mxu0
    %5904 = vmatprep.subr.bf16.mxu0 %v5226
    %5905 = vmatpush1.bf16.msra.mxu0 %v5225
    %5906 = vmatprep.subr.bf16.mxu0 %v5231
    %5907 = vmatpush1.bf16.msra.mxu0 %v5230
    %5908 = vmatprep.subr.bf16.mxu0 %v5236
    %5909 = vmatpush1.bf16.msra.mxu0 %v5235
    %5910 = vmatprep.subr.bf16.mxu0 %v5241
    %5911 = vmatpush1.bf16.msra.mxu0 %v5240
    %5912 = vmatprep.subr.bf16.mxu0 %v5246
    %5913 = vmatpush1.bf16.msra.mxu0 %v5245
    %5914 = vmatprep.subr.bf16.mxu0 %v5251
    %5915 = vmatpush1.bf16.msra.mxu0 %v5250
    %5916 = vmatprep.subr.bf16.mxu0 %v5256
    %5917 = vmatpush1.bf16.msra.mxu0 %v5255
    %5918 = vmatprep.subr.bf16.mxu0 %v5261
    %5919 = vmatpush1.bf16.msra.mxu0 %v5260
    %5920 = vmatprep.subr.bf16.mxu0 %v5266
    %5921 = vmatpush1.bf16.msra.mxu0 %v5265
    %5922 = vmatprep.subr.bf16.mxu0 %v5271
    %5923 = vmatpush1.bf16.msra.mxu0 %v5270
    %5924 = vmatprep.subr.bf16.mxu0 %v5276
    %5925 = vmatpush1.bf16.msra.mxu0 %v5275
    %5926 = vmatprep.subr.bf16.mxu0 %v5281
    %5927 = vmatpush1.bf16.msra.mxu0 %v5280
    %5928 = vmatprep.subr.bf16.mxu0 %v5286
    %5929 = vmatpush1.bf16.msra.mxu0 %v5285
    %5930 = vmatprep.subr.bf16.mxu0 %v5291
    %5931 = vmatpush1.bf16.msra.mxu0 %v5290
    %5932 = vmatprep.subr.bf16.mxu0 %v5296
    %5933 = vmatpush1.bf16.msra.mxu0 %v5295
    %5934 = vmatprep.subr.bf16.mxu0 %v5301
    %5935 = vmatpush1.bf16.msra.mxu0 %v5300
    %5936 = vmatprep.mubr.bf16.mxu0 %v1140
    %5937 = vmatmul.mubr.bf16.gmra.mrb[0].mxu0 %v1139
    %v5938 = vpop.f32.mrb[0].mxu0
    %v5939 = vadd.f32 %v5846, %v5938
    %v5940 = vpop.f32.mrb[0].mxu0
    %v5941 = vadd.f32 %v5848, %v5940
    %v5942 = vpop.f32.mrb[0].mxu0
    %v5943 = vadd.f32 %v5850, %v5942
    %v5944 = vpop.f32.mrb[0].mxu0
    %v5945 = vadd.f32 %v5852, %v5944
    %5946 = vmatprep.mubr.bf16.mxu0 %v1148
    %5947 = vmatmul.mubr.bf16.gmra.mrb[0].mxu0 %v1147
    %v5948 = vpop.f32.mrb[0].mxu0
    %v5949 = vadd.f32 %v5856, %v5948
    %v5950 = vpop.f32.mrb[0].mxu0
    %v5951 = vadd.f32 %v5858, %v5950
    %v5952 = vpop.f32.mrb[0].mxu0
    %v5953 = vadd.f32 %v5860, %v5952
    %v5954 = vpop.f32.mrb[0].mxu0
    %v5955 = vadd.f32 %v5862, %v5954
    %5956 = vmatprep.mubr.bf16.mxu0 %v1156
    %5957 = vmatmul.mubr.bf16.gmra.mrb[0].mxu0 %v1155
    %v5958 = vpop.f32.mrb[0].mxu0
    %v5959 = vadd.f32 %v5866, %v5958
    %v5960 = vpop.f32.mrb[0].mxu0
    %v5961 = vadd.f32 %v5868, %v5960
    %v5962 = vpop.f32.mrb[0].mxu0
    %v5963 = vadd.f32 %v5870, %v5962
    %v5964 = vpop.f32.mrb[0].mxu0
    %v5965 = vadd.f32 %v5872, %v5964
    %5966 = vmatprep.mubr.bf16.mxu0 %v1164
    %5967 = vmatmul.mubr.bf16.gmra.mrb[0].mxu0 %v1163
    %v5968 = vpop.f32.mrb[0].mxu0
    %v5969 = vadd.f32 %v5876, %v5968
    %v5970 = vpop.f32.mrb[0].mxu0
    %v5971 = vadd.f32 %v5878, %v5970
    %v5972 = vpop.f32.mrb[0].mxu0
    %v5973 = vadd.f32 %v5880, %v5972
    %v5974 = vpop.f32.mrb[0].mxu0
    %v5975 = vadd.f32 %v5882, %v5974
    %5976 = vmatprep.mubr.bf16.mxu0 %v1172
    %5977 = vmatmul.mubr.bf16.gmra.mrb[0].mxu0 %v1171
    %v5978 = vpop.f32.mrb[0].mxu0
    %v5979 = vadd.f32 %v5886, %v5978
    %v5980 = vpop.f32.mrb[0].mxu0
    %v5981 = vadd.f32 %v5888, %v5980
    %v5982 = vpop.f32.mrb[0].mxu0
    %v5983 = vadd.f32 %v5890, %v5982
    %v5984 = vpop.f32.mrb[0].mxu0
    %v5985 = vadd.f32 %v5892, %v5984
    %5986 = vmatprep.mubr.bf16.mxu0 %v1180
    %5987 = vmatmul.mubr.bf16.gmra.mrb[0].mxu0 %v1179
    %v5988 = vpop.f32.mrb[0].mxu0
    %v5989 = vadd.f32 %v5896, %v5988
    %v5990 = vpop.f32.mrb[0].mxu0
    %v5991 = vadd.f32 %v5898, %v5990
    %v5992 = vpop.f32.mrb[0].mxu0
    %v5993 = vadd.f32 %v5900, %v5992
    %v5994 = vpop.f32.mrb[0].mxu0
    %v5995 = vadd.f32 %v5902, %v5994
    %5996 = vdwg.mxu0
    %5997 = vmatprep.subr.bf16.mxu0 %v4988
    %5998 = vmatpush1.bf16.msra.mxu0 %v4987
    %5999 = vmatprep.subr.bf16.mxu0 %v4993
    %6000 = vmatpush1.bf16.msra.mxu0 %v4992
    %6001 = vmatprep.subr.bf16.mxu0 %v4998
    %6002 = vmatpush1.bf16.msra.mxu0 %v4997
    %6003 = vmatprep.subr.bf16.mxu0 %v5003
    %6004 = vmatpush1.bf16.msra.mxu0 %v5002
    %6005 = vmatprep.subr.bf16.mxu0 %v5008
    %6006 = vmatpush1.bf16.msra.mxu0 %v5007
    %6007 = vmatprep.subr.bf16.mxu0 %v5013
    %6008 = vmatpush1.bf16.msra.mxu0 %v5012
    %6009 = vmatprep.subr.bf16.mxu0 %v5018
    %6010 = vmatpush1.bf16.msra.mxu0 %v5017
    %6011 = vmatprep.subr.bf16.mxu0 %v5023
    %6012 = vmatpush1.bf16.msra.mxu0 %v5022
    %6013 = vmatprep.subr.bf16.mxu0 %v5028
    %6014 = vmatpush1.bf16.msra.mxu0 %v5027
    %6015 = vmatprep.subr.bf16.mxu0 %v5033
    %6016 = vmatpush1.bf16.msra.mxu0 %v5032
    %6017 = vmatprep.subr.bf16.mxu0 %v5038
    %6018 = vmatpush1.bf16.msra.mxu0 %v5037
    %6019 = vmatprep.subr.bf16.mxu0 %v5043
    %6020 = vmatpush1.bf16.msra.mxu0 %v5042
    %6021 = vmatprep.subr.bf16.mxu0 %v5048
    %6022 = vmatpush1.bf16.msra.mxu0 %v5047
    %6023 = vmatprep.subr.bf16.mxu0 %v5053
    %6024 = vmatpush1.bf16.msra.mxu0 %v5052
    %6025 = vmatprep.subr.bf16.mxu0 %v5058
    %6026 = vmatpush1.bf16.msra.mxu0 %v5057
    %6027 = vmatprep.subr.bf16.mxu0 %v5063
    %6028 = vmatpush1.bf16.msra.mxu0 %v5062
    %6029 = vmatprep.mubr.bf16.mxu0 %v1134
    %6030 = vmatmul.mubr.bf16.gmra.mrb[0].mxu0 %v1133
    %v6031 = vpop.f32.mrb[0].mxu0
    %v6032 = vadd.f32 0.0, %v6031
    %v6033 = vpop.f32.mrb[0].mxu0
    %v6034 = vadd.f32 0.0, %v6033
    %v6035 = vpop.f32.mrb[0].mxu0
    %v6036 = vadd.f32 0.0, %v6035
    %v6037 = vpop.f32.mrb[0].mxu0
    %v6038 = vadd.f32 0.0, %v6037
    %6039 = vmatprep.mubr.bf16.mxu0 %v1142
    %6040 = vmatmul.mubr.bf16.gmra.mrb[0].mxu0 %v1141
    %v6041 = vpop.f32.mrb[0].mxu0
    %v6042 = vadd.f32 0.0, %v6041
    %v6043 = vpop.f32.mrb[0].mxu0
    %v6044 = vadd.f32 0.0, %v6043
    %v6045 = vpop.f32.mrb[0].mxu0
    %v6046 = vadd.f32 0.0, %v6045
    %v6047 = vpop.f32.mrb[0].mxu0
    %v6048 = vadd.f32 0.0, %v6047
    %6049 = vmatprep.mubr.bf16.mxu0 %v1150
    %6050 = vmatmul.mubr.bf16.gmra.mrb[0].mxu0 %v1149
    %v6051 = vpop.f32.mrb[0].mxu0
    %v6052 = vadd.f32 0.0, %v6051
    %v6053 = vpop.f32.mrb[0].mxu0
    %v6054 = vadd.f32 0.0, %v6053
    %v6055 = vpop.f32.mrb[0].mxu0
    %v6056 = vadd.f32 0.0, %v6055
    %v6057 = vpop.f32.mrb[0].mxu0
    %v6058 = vadd.f32 0.0, %v6057
    %6059 = vmatprep.mubr.bf16.mxu0 %v1158
    %6060 = vmatmul.mubr.bf16.gmra.mrb[0].mxu0 %v1157
    %v6061 = vpop.f32.mrb[0].mxu0
    %v6062 = vadd.f32 0.0, %v6061
    %v6063 = vpop.f32.mrb[0].mxu0
    %v6064 = vadd.f32 0.0, %v6063
    %v6065 = vpop.f32.mrb[0].mxu0
    %v6066 = vadd.f32 0.0, %v6065
    %v6067 = vpop.f32.mrb[0].mxu0
    %v6068 = vadd.f32 0.0, %v6067
    %6069 = vmatprep.mubr.bf16.mxu0 %v1166
    %6070 = vmatmul.mubr.bf16.gmra.mrb[0].mxu0 %v1165
    %v6071 = vpop.f32.mrb[0].mxu0
    %v6072 = vadd.f32 0.0, %v6071
    %v6073 = vpop.f32.mrb[0].mxu0
    %v6074 = vadd.f32 0.0, %v6073
    %v6075 = vpop.f32.mrb[0].mxu0
    %v6076 = vadd.f32 0.0, %v6075
    %v6077 = vpop.f32.mrb[0].mxu0
    %v6078 = vadd.f32 0.0, %v6077
    %6079 = vmatprep.mubr.bf16.mxu0 %v1174
    %6080 = vmatmul.mubr.bf16.gmra.mrb[0].mxu0 %v1173
    %v6081 = vpop.f32.mrb[0].mxu0
    %v6082 = vadd.f32 0.0, %v6081
    %v6083 = vpop.f32.mrb[0].mxu0
    %v6084 = vadd.f32 0.0, %v6083
    %v6085 = vpop.f32.mrb[0].mxu0
    %v6086 = vadd.f32 0.0, %v6085
    %v6087 = vpop.f32.mrb[0].mxu0
    %v6088 = vadd.f32 0.0, %v6087
    %6089 = vdwg.mxu0
    %6090 = vmatprep.subr.bf16.mxu0 %v5068
    %6091 = vmatpush1.bf16.msra.mxu0 %v5067
    %6092 = vmatprep.subr.bf16.mxu0 %v5073
    %6093 = vmatpush1.bf16.msra.mxu0 %v5072
    %6094 = vmatprep.subr.bf16.mxu0 %v5078
    %6095 = vmatpush1.bf16.msra.mxu0 %v5077
    %6096 = vmatprep.subr.bf16.mxu0 %v5083
    %6097 = vmatpush1.bf16.msra.mxu0 %v5082
    %6098 = vmatprep.subr.bf16.mxu0 %v5088
    %6099 = vmatpush1.bf16.msra.mxu0 %v5087
    %6100 = vmatprep.subr.bf16.mxu0 %v5093
    %6101 = vmatpush1.bf16.msra.mxu0 %v5092
    %6102 = vmatprep.subr.bf16.mxu0 %v5098
    %6103 = vmatpush1.bf16.msra.mxu0 %v5097
    %6104 = vmatprep.subr.bf16.mxu0 %v5103
    %6105 = vmatpush1.bf16.msra.mxu0 %v5102
    %6106 = vmatprep.subr.bf16.mxu0 %v5108
    %6107 = vmatpush1.bf16.msra.mxu0 %v5107
    %6108 = vmatprep.subr.bf16.mxu0 %v5113
    %6109 = vmatpush1.bf16.msra.mxu0 %v5112
    %6110 = vmatprep.subr.bf16.mxu0 %v5118
    %6111 = vmatpush1.bf16.msra.mxu0 %v5117
    %6112 = vmatprep.subr.bf16.mxu0 %v5123
    %6113 = vmatpush1.bf16.msra.mxu0 %v5122
    %6114 = vmatprep.subr.bf16.mxu0 %v5128
    %6115 = vmatpush1.bf16.msra.mxu0 %v5127
    %6116 = vmatprep.subr.bf16.mxu0 %v5133
    %6117 = vmatpush1.bf16.msra.mxu0 %v5132
    %6118 = vmatprep.subr.bf16.mxu0 %v5138
    %6119 = vmatpush1.bf16.msra.mxu0 %v5137
    %6120 = vmatprep.subr.bf16.mxu0 %v5143
    %6121 = vmatpush1.bf16.msra.mxu0 %v5142
    %6122 = vmatprep.mubr.bf16.mxu0 %v1136
    %6123 = vmatmul.mubr.bf16.gmra.mrb[0].mxu0 %v1135
    %v6124 = vpop.f32.mrb[0].mxu0
    %v6125 = vadd.f32 %v6032, %v6124
    %v6126 = vpop.f32.mrb[0].mxu0
    %v6127 = vadd.f32 %v6034, %v6126
    %v6128 = vpop.f32.mrb[0].mxu0
    %v6129 = vadd.f32 %v6036, %v6128
    %v6130 = vpop.f32.mrb[0].mxu0
    %v6131 = vadd.f32 %v6038, %v6130
    %6132 = vmatprep.mubr.bf16.mxu0 %v1144
    %6133 = vmatmul.mubr.bf16.gmra.mrb[0].mxu0 %v1143
    %v6134 = vpop.f32.mrb[0].mxu0
    %v6135 = vadd.f32 %v6042, %v6134
    %v6136 = vpop.f32.mrb[0].mxu0
    %v6137 = vadd.f32 %v6044, %v6136
    %v6138 = vpop.f32.mrb[0].mxu0
    %v6139 = vadd.f32 %v6046, %v6138
    %v6140 = vpop.f32.mrb[0].mxu0
    %v6141 = vadd.f32 %v6048, %v6140
    %6142 = vmatprep.mubr.bf16.mxu0 %v1152
    %6143 = vmatmul.mubr.bf16.gmra.mrb[0].mxu0 %v1151
    %v6144 = vpop.f32.mrb[0].mxu0
    %v6145 = vadd.f32 %v6052, %v6144
    %v6146 = vpop.f32.mrb[0].mxu0
    %v6147 = vadd.f32 %v6054, %v6146
    %v6148 = vpop.f32.mrb[0].mxu0
    %v6149 = vadd.f32 %v6056, %v6148
    %v6150 = vpop.f32.mrb[0].mxu0
    %v6151 = vadd.f32 %v6058, %v6150
    %6152 = vmatprep.mubr.bf16.mxu0 %v1160
    %6153 = vmatmul.mubr.bf16.gmra.mrb[0].mxu0 %v1159
    %v6154 = vpop.f32.mrb[0].mxu0
    %v6155 = vadd.f32 %v6062, %v6154
    %v6156 = vpop.f32.mrb[0].mxu0
    %v6157 = vadd.f32 %v6064, %v6156
    %v6158 = vpop.f32.mrb[0].mxu0
    %v6159 = vadd.f32 %v6066, %v6158
    %v6160 = vpop.f32.mrb[0].mxu0
    %v6161 = vadd.f32 %v6068, %v6160
    %6162 = vmatprep.mubr.bf16.mxu0 %v1168
    %6163 = vmatmul.mubr.bf16.gmra.mrb[0].mxu0 %v1167
    %v6164 = vpop.f32.mrb[0].mxu0
    %v6165 = vadd.f32 %v6072, %v6164
    %v6166 = vpop.f32.mrb[0].mxu0
    %v6167 = vadd.f32 %v6074, %v6166
    %v6168 = vpop.f32.mrb[0].mxu0
    %v6169 = vadd.f32 %v6076, %v6168
    %v6170 = vpop.f32.mrb[0].mxu0
    %v6171 = vadd.f32 %v6078, %v6170
    %6172 = vmatprep.mubr.bf16.mxu0 %v1176
    %6173 = vmatmul.mubr.bf16.gmra.mrb[0].mxu0 %v1175
    %v6174 = vpop.f32.mrb[0].mxu0
    %v6175 = vadd.f32 %v6082, %v6174
    %v6176 = vpop.f32.mrb[0].mxu0
    %v6177 = vadd.f32 %v6084, %v6176
    %v6178 = vpop.f32.mrb[0].mxu0
    %v6179 = vadd.f32 %v6086, %v6178
    %v6180 = vpop.f32.mrb[0].mxu0
    %v6181 = vadd.f32 %v6088, %v6180
    %6182 = vdwg.mxu0
    %6183 = vmatprep.subr.bf16.mxu0 %v5148
    %6184 = vmatpush1.bf16.msra.mxu0 %v5147
    %6185 = vmatprep.subr.bf16.mxu0 %v5153
    %6186 = vmatpush1.bf16.msra.mxu0 %v5152
    %6187 = vmatprep.subr.bf16.mxu0 %v5158
    %6188 = vmatpush1.bf16.msra.mxu0 %v5157
    %6189 = vmatprep.subr.bf16.mxu0 %v5163
    %6190 = vmatpush1.bf16.msra.mxu0 %v5162
    %6191 = vmatprep.subr.bf16.mxu0 %v5168
    %6192 = vmatpush1.bf16.msra.mxu0 %v5167
    %6193 = vmatprep.subr.bf16.mxu0 %v5173
    %6194 = vmatpush1.bf16.msra.mxu0 %v5172
    %6195 = vmatprep.subr.bf16.mxu0 %v5178
    %6196 = vmatpush1.bf16.msra.mxu0 %v5177
    %6197 = vmatprep.subr.bf16.mxu0 %v5183
    %6198 = vmatpush1.bf16.msra.mxu0 %v5182
    %6199 = vmatprep.subr.bf16.mxu0 %v5188
    %6200 = vmatpush1.bf16.msra.mxu0 %v5187
    %6201 = vmatprep.subr.bf16.mxu0 %v5193
    %6202 = vmatpush1.bf16.msra.mxu0 %v5192
    %6203 = vmatprep.subr.bf16.mxu0 %v5198
    %6204 = vmatpush1.bf16.msra.mxu0 %v5197
    %6205 = vmatprep.subr.bf16.mxu0 %v5203
    %6206 = vmatpush1.bf16.msra.mxu0 %v5202
    %6207 = vmatprep.subr.bf16.mxu0 %v5208
    %6208 = vmatpush1.bf16.msra.mxu0 %v5207
    %6209 = vmatprep.subr.bf16.mxu0 %v5213
    %6210 = vmatpush1.bf16.msra.mxu0 %v5212
    %6211 = vmatprep.subr.bf16.mxu0 %v5218
    %6212 = vmatpush1.bf16.msra.mxu0 %v5217
    %6213 = vmatprep.subr.bf16.mxu0 %v5223
    %6214 = vmatpush1.bf16.msra.mxu0 %v5222
    %6215 = vmatprep.mubr.bf16.mxu0 %v1138
    %6216 = vmatmul.mubr.bf16.gmra.mrb[0].mxu0 %v1137
    %v6217 = vpop.f32.mrb[0].mxu0
    %v6218 = vadd.f32 %v6125, %v6217
    %v6219 = vpop.f32.mrb[0].mxu0
    %v6220 = vadd.f32 %v6127, %v6219
    %v6221 = vpop.f32.mrb[0].mxu0
    %v6222 = vadd.f32 %v6129, %v6221
    %v6223 = vpop.f32.mrb[0].mxu0
    %v6224 = vadd.f32 %v6131, %v6223
    %6225 = vmatprep.mubr.bf16.mxu0 %v1146
    %6226 = vmatmul.mubr.bf16.gmra.mrb[0].mxu0 %v1145
    %v6227 = vpop.f32.mrb[0].mxu0
    %v6228 = vadd.f32 %v6135, %v6227
    %v6229 = vpop.f32.mrb[0].mxu0
    %v6230 = vadd.f32 %v6137, %v6229
    %v6231 = vpop.f32.mrb[0].mxu0
    %v6232 = vadd.f32 %v6139, %v6231
    %v6233 = vpop.f32.mrb[0].mxu0
    %v6234 = vadd.f32 %v6141, %v6233
    %6235 = vmatprep.mubr.bf16.mxu0 %v1154
    %6236 = vmatmul.mubr.bf16.gmra.mrb[0].mxu0 %v1153
    %v6237 = vpop.f32.mrb[0].mxu0
    %v6238 = vadd.f32 %v6145, %v6237
    %v6239 = vpop.f32.mrb[0].mxu0
    %v6240 = vadd.f32 %v6147, %v6239
    %v6241 = vpop.f32.mrb[0].mxu0
    %v6242 = vadd.f32 %v6149, %v6241
    %v6243 = vpop.f32.mrb[0].mxu0
    %v6244 = vadd.f32 %v6151, %v6243
    %6245 = vmatprep.mubr.bf16.mxu0 %v1162
    %6246 = vmatmul.mubr.bf16.gmra.mrb[0].mxu0 %v1161
    %v6247 = vpop.f32.mrb[0].mxu0
    %v6248 = vadd.f32 %v6155, %v6247
    %v6249 = vpop.f32.mrb[0].mxu0
    %v6250 = vadd.f32 %v6157, %v6249
    %v6251 = vpop.f32.mrb[0].mxu0
    %v6252 = vadd.f32 %v6159, %v6251
    %v6253 = vpop.f32.mrb[0].mxu0
    %v6254 = vadd.f32 %v6161, %v6253
    %6255 = vmatprep.mubr.bf16.mxu0 %v1170
    %6256 = vmatmul.mubr.bf16.gmra.mrb[0].mxu0 %v1169
    %v6257 = vpop.f32.mrb[0].mxu0
    %v6258 = vadd.f32 %v6165, %v6257
    %v6259 = vpop.f32.mrb[0].mxu0
    %v6260 = vadd.f32 %v6167, %v6259
    %v6261 = vpop.f32.mrb[0].mxu0
    %v6262 = vadd.f32 %v6169, %v6261
    %v6263 = vpop.f32.mrb[0].mxu0
    %v6264 = vadd.f32 %v6171, %v6263
    %6265 = vmatprep.mubr.bf16.mxu0 %v1178
    %6266 = vmatmul.mubr.bf16.gmra.mrb[0].mxu0 %v1177
    %v6267 = vpop.f32.mrb[0].mxu0
    %v6268 = vadd.f32 %v6175, %v6267
    %v6269 = vpop.f32.mrb[0].mxu0
    %v6270 = vadd.f32 %v6177, %v6269
    %v6271 = vpop.f32.mrb[0].mxu0
    %v6272 = vadd.f32 %v6179, %v6271
    %v6273 = vpop.f32.mrb[0].mxu0
    %v6274 = vadd.f32 %v6181, %v6273
    %6275 = vdwg.mxu0
    %6276 = vmatprep.subr.bf16.mxu0 %v5228
    %6277 = vmatpush1.bf16.msra.mxu0 %v5227
    %6278 = vmatprep.subr.bf16.mxu0 %v5233
    %6279 = vmatpush1.bf16.msra.mxu0 %v5232
    %6280 = vmatprep.subr.bf16.mxu0 %v5238
    %6281 = vmatpush1.bf16.msra.mxu0 %v5237
    %6282 = vmatprep.subr.bf16.mxu0 %v5243
    %6283 = vmatpush1.bf16.msra.mxu0 %v5242
    %6284 = vmatprep.subr.bf16.mxu0 %v5248
    %6285 = vmatpush1.bf16.msra.mxu0 %v5247
    %6286 = vmatprep.subr.bf16.mxu0 %v5253
    %6287 = vmatpush1.bf16.msra.mxu0 %v5252
    %6288 = vmatprep.subr.bf16.mxu0 %v5258
    %6289 = vmatpush1.bf16.msra.mxu0 %v5257
    %6290 = vmatprep.subr.bf16.mxu0 %v5263
    %6291 = vmatpush1.bf16.msra.mxu0 %v5262
    %6292 = vmatprep.subr.bf16.mxu0 %v5268
    %6293 = vmatpush1.bf16.msra.mxu0 %v5267
    %6294 = vmatprep.subr.bf16.mxu0 %v5273
    %6295 = vmatpush1.bf16.msra.mxu0 %v5272
    %6296 = vmatprep.subr.bf16.mxu0 %v5278
    %6297 = vmatpush1.bf16.msra.mxu0 %v5277
    %6298 = vmatprep.subr.bf16.mxu0 %v5283
    %6299 = vmatpush1.bf16.msra.mxu0 %v5282
    %6300 = vmatprep.subr.bf16.mxu0 %v5288
    %6301 = vmatpush1.bf16.msra.mxu0 %v5287
    %6302 = vmatprep.subr.bf16.mxu0 %v5293
    %6303 = vmatpush1.bf16.msra.mxu0 %v5292
    %6304 = vmatprep.subr.bf16.mxu0 %v5298
    %6305 = vmatpush1.bf16.msra.mxu0 %v5297
    %6306 = vmatprep.subr.bf16.mxu0 %v5303
    %6307 = vmatpush1.bf16.msra.mxu0 %v5302
    %6308 = vmatprep.mubr.bf16.mxu0 %v1140
    %6309 = vmatmul.mubr.bf16.gmra.mrb[0].mxu0 %v1139
    %v6310 = vpop.f32.mrb[0].mxu0
    %v6311 = vadd.f32 %v6218, %v6310
    %v6312 = vpop.f32.mrb[0].mxu0
    %v6313 = vadd.f32 %v6220, %v6312
    %v6314 = vpop.f32.mrb[0].mxu0
    %v6315 = vadd.f32 %v6222, %v6314
    %v6316 = vpop.f32.mrb[0].mxu0
    %v6317 = vadd.f32 %v6224, %v6316
    %6318 = vmatprep.mubr.bf16.mxu0 %v1148
    %6319 = vmatmul.mubr.bf16.gmra.mrb[0].mxu0 %v1147
    %v6320 = vpop.f32.mrb[0].mxu0
    %v6321 = vadd.f32 %v6228, %v6320
    %v6322 = vpop.f32.mrb[0].mxu0
    %v6323 = vadd.f32 %v6230, %v6322
    %v6324 = vpop.f32.mrb[0].mxu0
    %v6325 = vadd.f32 %v6232, %v6324
    %v6326 = vpop.f32.mrb[0].mxu0
    %v6327 = vadd.f32 %v6234, %v6326
    %6328 = vmatprep.mubr.bf16.mxu0 %v1156
    %6329 = vmatmul.mubr.bf16.gmra.mrb[0].mxu0 %v1155
    %v6330 = vpop.f32.mrb[0].mxu0
    %v6331 = vadd.f32 %v6238, %v6330
    %v6332 = vpop.f32.mrb[0].mxu0
    %v6333 = vadd.f32 %v6240, %v6332
    %v6334 = vpop.f32.mrb[0].mxu0
    %v6335 = vadd.f32 %v6242, %v6334
    %v6336 = vpop.f32.mrb[0].mxu0
    %v6337 = vadd.f32 %v6244, %v6336
    %6338 = vmatprep.mubr.bf16.mxu0 %v1164
    %6339 = vmatmul.mubr.bf16.gmra.mrb[0].mxu0 %v1163
    %v6340 = vpop.f32.mrb[0].mxu0
    %v6341 = vadd.f32 %v6248, %v6340
    %v6342 = vpop.f32.mrb[0].mxu0
    %v6343 = vadd.f32 %v6250, %v6342
    %v6344 = vpop.f32.mrb[0].mxu0
    %v6345 = vadd.f32 %v6252, %v6344
    %v6346 = vpop.f32.mrb[0].mxu0
    %v6347 = vadd.f32 %v6254, %v6346
    %6348 = vmatprep.mubr.bf16.mxu0 %v1172
    %6349 = vmatmul.mubr.bf16.gmra.mrb[0].mxu0 %v1171
    %v6350 = vpop.f32.mrb[0].mxu0
    %v6351 = vadd.f32 %v6258, %v6350
    %v6352 = vpop.f32.mrb[0].mxu0
    %v6353 = vadd.f32 %v6260, %v6352
    %v6354 = vpop.f32.mrb[0].mxu0
    %v6355 = vadd.f32 %v6262, %v6354
    %v6356 = vpop.f32.mrb[0].mxu0
    %v6357 = vadd.f32 %v6264, %v6356
    %6358 = vmatprep.mubr.bf16.mxu0 %v1180
    %6359 = vmatmul.mubr.bf16.gmra.mrb[0].mxu0 %v1179
    %v6360 = vpop.f32.mrb[0].mxu0
    %v6361 = vadd.f32 %v6268, %v6360
    %v6362 = vpop.f32.mrb[0].mxu0
    %v6363 = vadd.f32 %v6270, %v6362
    %v6364 = vpop.f32.mrb[0].mxu0
    %v6365 = vadd.f32 %v6272, %v6364
    %v6366 = vpop.f32.mrb[0].mxu0
    %v6367 = vadd.f32 %v6274, %v6366
    %6368 = vdwg.mxu0
    %6369 = vmatprep.subr.bf16.mxu0 0
    %6370 = vmatpush1.bf16.msra.mxu0 %v4989
    %6371 = vmatprep.subr.bf16.mxu0 0
    %6372 = vmatpush1.bf16.msra.mxu0 %v4994
    %6373 = vmatprep.subr.bf16.mxu0 0
    %6374 = vmatpush1.bf16.msra.mxu0 %v4999
    %6375 = vmatprep.subr.bf16.mxu0 0
    %6376 = vmatpush1.bf16.msra.mxu0 %v5004
    %6377 = vmatprep.subr.bf16.mxu0 0
    %6378 = vmatpush1.bf16.msra.mxu0 %v5009
    %6379 = vmatprep.subr.bf16.mxu0 0
    %6380 = vmatpush1.bf16.msra.mxu0 %v5014
    %6381 = vmatprep.subr.bf16.mxu0 0
    %6382 = vmatpush1.bf16.msra.mxu0 %v5019
    %6383 = vmatprep.subr.bf16.mxu0 0
    %6384 = vmatpush1.bf16.msra.mxu0 %v5024
    %6385 = vmatprep.subr.bf16.mxu0 0
    %6386 = vmatpush1.bf16.msra.mxu0 %v5029
    %6387 = vmatprep.subr.bf16.mxu0 0
    %6388 = vmatpush1.bf16.msra.mxu0 %v5034
    %6389 = vmatprep.subr.bf16.mxu0 0
    %6390 = vmatpush1.bf16.msra.mxu0 %v5039
    %6391 = vmatprep.subr.bf16.mxu0 0
    %6392 = vmatpush1.bf16.msra.mxu0 %v5044
    %6393 = vmatprep.subr.bf16.mxu0 0
    %6394 = vmatpush1.bf16.msra.mxu0 %v5049
    %6395 = vmatprep.subr.bf16.mxu0 0
    %6396 = vmatpush1.bf16.msra.mxu0 %v5054
    %6397 = vmatprep.subr.bf16.mxu0 0
    %6398 = vmatpush1.bf16.msra.mxu0 %v5059
    %6399 = vmatprep.subr.bf16.mxu0 0
    %6400 = vmatpush1.bf16.msra.mxu0 %v5064
    %6401 = vmatprep.mubr.bf16.mxu0 %v1134
    %6402 = vmatmul.mubr.bf16.gmra.mrb[0].mxu0 %v1133
    %v6403 = vpop.f32.mrb[0].mxu0
    %v6404 = vadd.f32 0.0, %v6403
    %v6405 = vpop.f32.mrb[0].mxu0
    %v6406 = vpop.f32.mrb[0].mxu0
    %v6407 = vadd.f32 0.0, %v6406
    %v6408 = vpop.f32.mrb[0].mxu0
    %6409 = vmatprep.mubr.bf16.mxu0 %v1142
    %6410 = vmatmul.mubr.bf16.gmra.mrb[0].mxu0 %v1141
    %v6411 = vpop.f32.mrb[0].mxu0
    %v6412 = vadd.f32 0.0, %v6411
    %v6413 = vpop.f32.mrb[0].mxu0
    %v6414 = vpop.f32.mrb[0].mxu0
    %v6415 = vadd.f32 0.0, %v6414
    %v6416 = vpop.f32.mrb[0].mxu0
    %6417 = vmatprep.mubr.bf16.mxu0 %v1150
    %6418 = vmatmul.mubr.bf16.gmra.mrb[0].mxu0 %v1149
    %v6419 = vpop.f32.mrb[0].mxu0
    %v6420 = vadd.f32 0.0, %v6419
    %v6421 = vpop.f32.mrb[0].mxu0
    %v6422 = vpop.f32.mrb[0].mxu0
    %v6423 = vadd.f32 0.0, %v6422
    %v6424 = vpop.f32.mrb[0].mxu0
    %6425 = vmatprep.mubr.bf16.mxu0 %v1158
    %6426 = vmatmul.mubr.bf16.gmra.mrb[0].mxu0 %v1157
    %v6427 = vpop.f32.mrb[0].mxu0
    %v6428 = vadd.f32 0.0, %v6427
    %v6429 = vpop.f32.mrb[0].mxu0
    %v6430 = vpop.f32.mrb[0].mxu0
    %v6431 = vadd.f32 0.0, %v6430
    %v6432 = vpop.f32.mrb[0].mxu0
    %6433 = vmatprep.mubr.bf16.mxu0 %v1166
    %6434 = vmatmul.mubr.bf16.gmra.mrb[0].mxu0 %v1165
    %v6435 = vpop.f32.mrb[0].mxu0
    %v6436 = vadd.f32 0.0, %v6435
    %v6437 = vpop.f32.mrb[0].mxu0
    %v6438 = vpop.f32.mrb[0].mxu0
    %v6439 = vadd.f32 0.0, %v6438
    %v6440 = vpop.f32.mrb[0].mxu0
    %6441 = vmatprep.mubr.bf16.mxu0 %v1174
    %6442 = vmatmul.mubr.bf16.gmra.mrb[0].mxu0 %v1173
    %v6443 = vpop.f32.mrb[0].mxu0
    %v6444 = vadd.f32 0.0, %v6443
    %v6445 = vpop.f32.mrb[0].mxu0
    %v6446 = vpop.f32.mrb[0].mxu0
    %v6447 = vadd.f32 0.0, %v6446
    %v6448 = vpop.f32.mrb[0].mxu0
    %6449 = vdwg.mxu0
    %6450 = vmatprep.subr.bf16.mxu0 0
    %6451 = vmatpush1.bf16.msra.mxu0 %v5069
    %6452 = vmatprep.subr.bf16.mxu0 0
    %6453 = vmatpush1.bf16.msra.mxu0 %v5074
    %6454 = vmatprep.subr.bf16.mxu0 0
    %6455 = vmatpush1.bf16.msra.mxu0 %v5079
    %6456 = vmatprep.subr.bf16.mxu0 0
    %6457 = vmatpush1.bf16.msra.mxu0 %v5084
    %6458 = vmatprep.subr.bf16.mxu0 0
    %6459 = vmatpush1.bf16.msra.mxu0 %v5089
    %6460 = vmatprep.subr.bf16.mxu0 0
    %6461 = vmatpush1.bf16.msra.mxu0 %v5094
    %6462 = vmatprep.subr.bf16.mxu0 0
    %6463 = vmatpush1.bf16.msra.mxu0 %v5099
    %6464 = vmatprep.subr.bf16.mxu0 0
    %6465 = vmatpush1.bf16.msra.mxu0 %v5104
    %6466 = vmatprep.subr.bf16.mxu0 0
    %6467 = vmatpush1.bf16.msra.mxu0 %v5109
    %6468 = vmatprep.subr.bf16.mxu0 0
    %6469 = vmatpush1.bf16.msra.mxu0 %v5114
    %6470 = vmatprep.subr.bf16.mxu0 0
    %6471 = vmatpush1.bf16.msra.mxu0 %v5119
    %6472 = vmatprep.subr.bf16.mxu0 0
    %6473 = vmatpush1.bf16.msra.mxu0 %v5124
    %6474 = vmatprep.subr.bf16.mxu0 0
    %6475 = vmatpush1.bf16.msra.mxu0 %v5129
    %6476 = vmatprep.subr.bf16.mxu0 0
    %6477 = vmatpush1.bf16.msra.mxu0 %v5134
    %6478 = vmatprep.subr.bf16.mxu0 0
    %6479 = vmatpush1.bf16.msra.mxu0 %v5139
    %6480 = vmatprep.subr.bf16.mxu0 0
    %6481 = vmatpush1.bf16.msra.mxu0 %v5144
    %6482 = vmatprep.mubr.bf16.mxu0 %v1136
    %6483 = vmatmul.mubr.bf16.gmra.mrb[0].mxu0 %v1135
    %v6484 = vpop.f32.mrb[0].mxu0
    %v6485 = vadd.f32 %v6404, %v6484
    %v6486 = vpop.f32.mrb[0].mxu0
    %v6487 = vpop.f32.mrb[0].mxu0
    %v6488 = vadd.f32 %v6407, %v6487
    %v6489 = vpop.f32.mrb[0].mxu0
    %6490 = vmatprep.mubr.bf16.mxu0 %v1144
    %6491 = vmatmul.mubr.bf16.gmra.mrb[0].mxu0 %v1143
    %v6492 = vpop.f32.mrb[0].mxu0
    %v6493 = vadd.f32 %v6412, %v6492
    %v6494 = vpop.f32.mrb[0].mxu0
    %v6495 = vpop.f32.mrb[0].mxu0
    %v6496 = vadd.f32 %v6415, %v6495
    %v6497 = vpop.f32.mrb[0].mxu0
    %6498 = vmatprep.mubr.bf16.mxu0 %v1152
    %6499 = vmatmul.mubr.bf16.gmra.mrb[0].mxu0 %v1151
    %v6500 = vpop.f32.mrb[0].mxu0
    %v6501 = vadd.f32 %v6420, %v6500
    %v6502 = vpop.f32.mrb[0].mxu0
    %v6503 = vpop.f32.mrb[0].mxu0
    %v6504 = vadd.f32 %v6423, %v6503
    %v6505 = vpop.f32.mrb[0].mxu0
    %6506 = vmatprep.mubr.bf16.mxu0 %v1160
    %6507 = vmatmul.mubr.bf16.gmra.mrb[0].mxu0 %v1159
    %v6508 = vpop.f32.mrb[0].mxu0
    %v6509 = vadd.f32 %v6428, %v6508
    %v6510 = vpop.f32.mrb[0].mxu0
    %v6511 = vpop.f32.mrb[0].mxu0
    %v6512 = vadd.f32 %v6431, %v6511
    %v6513 = vpop.f32.mrb[0].mxu0
    %6514 = vmatprep.mubr.bf16.mxu0 %v1168
    %6515 = vmatmul.mubr.bf16.gmra.mrb[0].mxu0 %v1167
    %v6516 = vpop.f32.mrb[0].mxu0
    %v6517 = vadd.f32 %v6436, %v6516
    %v6518 = vpop.f32.mrb[0].mxu0
    %v6519 = vpop.f32.mrb[0].mxu0
    %v6520 = vadd.f32 %v6439, %v6519
    %v6521 = vpop.f32.mrb[0].mxu0
    %6522 = vmatprep.mubr.bf16.mxu0 %v1176
    %6523 = vmatmul.mubr.bf16.gmra.mrb[0].mxu0 %v1175
    %v6524 = vpop.f32.mrb[0].mxu0
    %v6525 = vadd.f32 %v6444, %v6524
    %v6526 = vpop.f32.mrb[0].mxu0
    %v6527 = vpop.f32.mrb[0].mxu0
    %v6528 = vadd.f32 %v6447, %v6527
    %v6529 = vpop.f32.mrb[0].mxu0
    %6530 = vdwg.mxu0
    %6531 = vmatprep.subr.bf16.mxu0 0
    %6532 = vmatpush1.bf16.msra.mxu0 %v5149
    %6533 = vmatprep.subr.bf16.mxu0 0
    %6534 = vmatpush1.bf16.msra.mxu0 %v5154
    %6535 = vmatprep.subr.bf16.mxu0 0
    %6536 = vmatpush1.bf16.msra.mxu0 %v5159
    %6537 = vmatprep.subr.bf16.mxu0 0
    %6538 = vmatpush1.bf16.msra.mxu0 %v5164
    %6539 = vmatprep.subr.bf16.mxu0 0
    %6540 = vmatpush1.bf16.msra.mxu0 %v5169
    %6541 = vmatprep.subr.bf16.mxu0 0
    %6542 = vmatpush1.bf16.msra.mxu0 %v5174
    %6543 = vmatprep.subr.bf16.mxu0 0
    %6544 = vmatpush1.bf16.msra.mxu0 %v5179
    %6545 = vmatprep.subr.bf16.mxu0 0
    %6546 = vmatpush1.bf16.msra.mxu0 %v5184
    %6547 = vmatprep.subr.bf16.mxu0 0
    %6548 = vmatpush1.bf16.msra.mxu0 %v5189
    %6549 = vmatprep.subr.bf16.mxu0 0
    %6550 = vmatpush1.bf16.msra.mxu0 %v5194
    %6551 = vmatprep.subr.bf16.mxu0 0
    %6552 = vmatpush1.bf16.msra.mxu0 %v5199
    %6553 = vmatprep.subr.bf16.mxu0 0
    %6554 = vmatpush1.bf16.msra.mxu0 %v5204
    %6555 = vmatprep.subr.bf16.mxu0 0
    %6556 = vmatpush1.bf16.msra.mxu0 %v5209
    %6557 = vmatprep.subr.bf16.mxu0 0
    %6558 = vmatpush1.bf16.msra.mxu0 %v5214
    %6559 = vmatprep.subr.bf16.mxu0 0
    %6560 = vmatpush1.bf16.msra.mxu0 %v5219
    %6561 = vmatprep.subr.bf16.mxu0 0
    %6562 = vmatpush1.bf16.msra.mxu0 %v5224
    %6563 = vmatprep.mubr.bf16.mxu0 %v1138
    %6564 = vmatmul.mubr.bf16.gmra.mrb[0].mxu0 %v1137
    %v6565 = vpop.f32.mrb[0].mxu0
    %v6566 = vadd.f32 %v6485, %v6565
    %v6567 = vpop.f32.mrb[0].mxu0
    %v6568 = vpop.f32.mrb[0].mxu0
    %v6569 = vadd.f32 %v6488, %v6568
    %v6570 = vpop.f32.mrb[0].mxu0
    %6571 = vmatprep.mubr.bf16.mxu0 %v1146
    %6572 = vmatmul.mubr.bf16.gmra.mrb[0].mxu0 %v1145
    %v6573 = vpop.f32.mrb[0].mxu0
    %v6574 = vadd.f32 %v6493, %v6573
    %v6575 = vpop.f32.mrb[0].mxu0
    %v6576 = vpop.f32.mrb[0].mxu0
    %v6577 = vadd.f32 %v6496, %v6576
    %v6578 = vpop.f32.mrb[0].mxu0
    %6579 = vmatprep.mubr.bf16.mxu0 %v1154
    %6580 = vmatmul.mubr.bf16.gmra.mrb[0].mxu0 %v1153
    %v6581 = vpop.f32.mrb[0].mxu0
    %v6582 = vadd.f32 %v6501, %v6581
    %v6583 = vpop.f32.mrb[0].mxu0
    %v6584 = vpop.f32.mrb[0].mxu0
    %v6585 = vadd.f32 %v6504, %v6584
    %v6586 = vpop.f32.mrb[0].mxu0
    %6587 = vmatprep.mubr.bf16.mxu0 %v1162
    %6588 = vmatmul.mubr.bf16.gmra.mrb[0].mxu0 %v1161
    %v6589 = vpop.f32.mrb[0].mxu0
    %v6590 = vadd.f32 %v6509, %v6589
    %v6591 = vpop.f32.mrb[0].mxu0
    %v6592 = vpop.f32.mrb[0].mxu0
    %v6593 = vadd.f32 %v6512, %v6592
    %v6594 = vpop.f32.mrb[0].mxu0
    %6595 = vmatprep.mubr.bf16.mxu0 %v1170
    %6596 = vmatmul.mubr.bf16.gmra.mrb[0].mxu0 %v1169
    %v6597 = vpop.f32.mrb[0].mxu0
    %v6598 = vadd.f32 %v6517, %v6597
    %v6599 = vpop.f32.mrb[0].mxu0
    %v6600 = vpop.f32.mrb[0].mxu0
    %v6601 = vadd.f32 %v6520, %v6600
    %v6602 = vpop.f32.mrb[0].mxu0
    %6603 = vmatprep.mubr.bf16.mxu0 %v1178
    %6604 = vmatmul.mubr.bf16.gmra.mrb[0].mxu0 %v1177
    %v6605 = vpop.f32.mrb[0].mxu0
    %v6606 = vadd.f32 %v6525, %v6605
    %v6607 = vpop.f32.mrb[0].mxu0
    %v6608 = vpop.f32.mrb[0].mxu0
    %v6609 = vadd.f32 %v6528, %v6608
    %v6610 = vpop.f32.mrb[0].mxu0
    %6611 = vdwg.mxu0
    %6612 = vmatprep.subr.bf16.mxu0 0
    %6613 = vmatpush1.bf16.msra.mxu0 %v5229
    %6614 = vmatprep.subr.bf16.mxu0 0
    %6615 = vmatpush1.bf16.msra.mxu0 %v5234
    %6616 = vmatprep.subr.bf16.mxu0 0
    %6617 = vmatpush1.bf16.msra.mxu0 %v5239
    %6618 = vmatprep.subr.bf16.mxu0 0
    %6619 = vmatpush1.bf16.msra.mxu0 %v5244
    %6620 = vmatprep.subr.bf16.mxu0 0
    %6621 = vmatpush1.bf16.msra.mxu0 %v5249
    %6622 = vmatprep.subr.bf16.mxu0 0
    %6623 = vmatpush1.bf16.msra.mxu0 %v5254
    %6624 = vmatprep.subr.bf16.mxu0 0
    %6625 = vmatpush1.bf16.msra.mxu0 %v5259
    %6626 = vmatprep.subr.bf16.mxu0 0
    %6627 = vmatpush1.bf16.msra.mxu0 %v5264
    %6628 = vmatprep.subr.bf16.mxu0 0
    %6629 = vmatpush1.bf16.msra.mxu0 %v5269
    %6630 = vmatprep.subr.bf16.mxu0 0
    %6631 = vmatpush1.bf16.msra.mxu0 %v5274
    %6632 = vmatprep.subr.bf16.mxu0 0
    %6633 = vmatpush1.bf16.msra.mxu0 %v5279
    %6634 = vmatprep.subr.bf16.mxu0 0
    %6635 = vmatpush1.bf16.msra.mxu0 %v5284
    %6636 = vmatprep.subr.bf16.mxu0 0
    %6637 = vmatpush1.bf16.msra.mxu0 %v5289
    %6638 = vmatprep.subr.bf16.mxu0 0
    %6639 = vmatpush1.bf16.msra.mxu0 %v5294
    %6640 = vmatprep.subr.bf16.mxu0 0
    %6641 = vmatpush1.bf16.msra.mxu0 %v5299
    %6642 = vmatprep.subr.bf16.mxu0 0
    %6643 = vmatpush1.bf16.msra.mxu0 %v5304
    %6644 = vmatprep.mubr.bf16.mxu0 %v1140
    %6645 = vmatmul.mubr.bf16.gmra.mrb[0].mxu0 %v1139
    %v6646 = vpop.f32.mrb[0].mxu0
    %v6647 = vadd.f32 %v6566, %v6646
    %v6648 = vpop.f32.mrb[0].mxu0
    %v6649 = vpop.f32.mrb[0].mxu0
    %v6650 = vadd.f32 %v6569, %v6649
    %v6651 = vpop.f32.mrb[0].mxu0
    %6652 = vmatprep.mubr.bf16.mxu0 %v1148
    %6653 = vmatmul.mubr.bf16.gmra.mrb[0].mxu0 %v1147
    %v6654 = vpop.f32.mrb[0].mxu0
    %v6655 = vadd.f32 %v6574, %v6654
    %v6656 = vpop.f32.mrb[0].mxu0
    %v6657 = vpop.f32.mrb[0].mxu0
    %v6658 = vadd.f32 %v6577, %v6657
    %v6659 = vpop.f32.mrb[0].mxu0
    %6660 = vmatprep.mubr.bf16.mxu0 %v1156
    %6661 = vmatmul.mubr.bf16.gmra.mrb[0].mxu0 %v1155
    %v6662 = vpop.f32.mrb[0].mxu0
    %v6663 = vadd.f32 %v6582, %v6662
    %v6664 = vpop.f32.mrb[0].mxu0
    %v6665 = vpop.f32.mrb[0].mxu0
    %v6666 = vadd.f32 %v6585, %v6665
    %v6667 = vpop.f32.mrb[0].mxu0
    %6668 = vmatprep.mubr.bf16.mxu0 %v1164
    %6669 = vmatmul.mubr.bf16.gmra.mrb[0].mxu0 %v1163
    %v6670 = vpop.f32.mrb[0].mxu0
    %v6671 = vadd.f32 %v6590, %v6670
    %v6672 = vpop.f32.mrb[0].mxu0
    %v6673 = vpop.f32.mrb[0].mxu0
    %v6674 = vadd.f32 %v6593, %v6673
    %v6675 = vpop.f32.mrb[0].mxu0
    %6676 = vmatprep.mubr.bf16.mxu0 %v1172
    %6677 = vmatmul.mubr.bf16.gmra.mrb[0].mxu0 %v1171
    %v6678 = vpop.f32.mrb[0].mxu0
    %v6679 = vadd.f32 %v6598, %v6678
    %v6680 = vpop.f32.mrb[0].mxu0
    %v6681 = vpop.f32.mrb[0].mxu0
    %v6682 = vadd.f32 %v6601, %v6681
    %v6683 = vpop.f32.mrb[0].mxu0
    %6684 = vmatprep.mubr.bf16.mxu0 %v1180
    %6685 = vmatmul.mubr.bf16.gmra.mrb[0].mxu0 %v1179
    %v6686 = vpop.f32.mrb[0].mxu0
    %v6687 = vadd.f32 %v6606, %v6686
    %v6688 = vpop.f32.mrb[0].mxu0
    %v6689 = vpop.f32.mrb[0].mxu0
    %v6690 = vadd.f32 %v6609, %v6689
    %v6691 = vpop.f32.mrb[0].mxu0
    %6692 = vdwg.mxu0
    %v6693 = vmul.f32 %v3207, %v3207
    %v6694 = vmul.f32 %v3209, %v3209
    %v6695 = vmul.f32 %v3579, %v3579
    %v6696 = vmul.f32 %v3581, %v3581
    %v6697 = vmul.f32 %v3915, %v3915
    %v6698 = vmul.f32 %v3211, %v3211
    %v6699 = vmul.f32 %v3213, %v3213
    %v6700 = vmul.f32 %v3583, %v3583
    %v6701 = vmul.f32 %v3585, %v3585
    %v6702 = vmul.f32 %v3918, %v3918
    %v6703 = vmul.f32 %v3217, %v3217
    %v6704 = vmul.f32 %v3219, %v3219
    %v6705 = vmul.f32 %v3589, %v3589
    %v6706 = vmul.f32 %v3591, %v3591
    %v6707 = vmul.f32 %v3923, %v3923
    %v6708 = vmul.f32 %v3221, %v3221
    %v6709 = vmul.f32 %v3223, %v3223
    %v6710 = vmul.f32 %v3593, %v3593
    %v6711 = vmul.f32 %v3595, %v3595
    %v6712 = vmul.f32 %v3926, %v3926
    %v6713 = vmul.f32 %v3227, %v3227
    %v6714 = vmul.f32 %v3229, %v3229
    %v6715 = vmul.f32 %v3599, %v3599
    %v6716 = vmul.f32 %v3601, %v3601
    %v6717 = vmul.f32 %v3931, %v3931
    %v6718 = vmul.f32 %v3231, %v3231
    %v6719 = vmul.f32 %v3233, %v3233
    %v6720 = vmul.f32 %v3603, %v3603
    %v6721 = vmul.f32 %v3605, %v3605
    %v6722 = vmul.f32 %v3934, %v3934
    %v6723 = vmul.f32 %v3237, %v3237
    %v6724 = vmul.f32 %v3239, %v3239
    %v6725 = vmul.f32 %v3609, %v3609
    %v6726 = vmul.f32 %v3611, %v3611
    %v6727 = vmul.f32 %v3939, %v3939
    %v6728 = vmul.f32 %v3241, %v3241
    %v6729 = vmul.f32 %v3243, %v3243
    %v6730 = vmul.f32 %v3613, %v3613
    %v6731 = vmul.f32 %v3615, %v3615
    %v6732 = vmul.f32 %v3942, %v3942
    %v6733 = vmul.f32 %v3247, %v3247
    %v6734 = vmul.f32 %v3249, %v3249
    %v6735 = vmul.f32 %v3619, %v3619
    %v6736 = vmul.f32 %v3621, %v3621
    %v6737 = vmul.f32 %v3947, %v3947
    %v6738 = vmul.f32 %v3251, %v3251
    %v6739 = vmul.f32 %v3253, %v3253
    %v6740 = vmul.f32 %v3623, %v3623
    %v6741 = vmul.f32 %v3625, %v3625
    %v6742 = vmul.f32 %v3950, %v3950
    %v6743 = vmul.f32 %v3257, %v3257
    %v6744 = vmul.f32 %v3259, %v3259
    %v6745 = vmul.f32 %v3629, %v3629
    %v6746 = vmul.f32 %v3631, %v3631
    %v6747 = vmul.f32 %v3955, %v3955
    %v6748 = vmul.f32 %v3261, %v3261
    %v6749 = vmul.f32 %v3263, %v3263
    %v6750 = vmul.f32 %v3633, %v3633
    %v6751 = vmul.f32 %v3635, %v3635
    %v6752 = vmul.f32 %v3958, %v3958
    %v6753 = vmul.f32 %v5939, %v5939
    %v6754 = vmul.f32 %v5941, %v5941
    %v6755 = vmul.f32 %v6311, %v6311
    %v6756 = vmul.f32 %v6313, %v6313
    %v6757 = vmul.f32 %v6647, %v6647
    %v6758 = vmul.f32 %v5943, %v5943
    %v6759 = vmul.f32 %v5945, %v5945
    %v6760 = vmul.f32 %v6315, %v6315
    %v6761 = vmul.f32 %v6317, %v6317
    %v6762 = vmul.f32 %v6650, %v6650
    %v6763 = vmul.f32 %v5949, %v5949
    %v6764 = vmul.f32 %v5951, %v5951
    %v6765 = vmul.f32 %v6321, %v6321
    %v6766 = vmul.f32 %v6323, %v6323
    %v6767 = vmul.f32 %v6655, %v6655
    %v6768 = vmul.f32 %v5953, %v5953
    %v6769 = vmul.f32 %v5955, %v5955
    %v6770 = vmul.f32 %v6325, %v6325
    %v6771 = vmul.f32 %v6327, %v6327
    %v6772 = vmul.f32 %v6658, %v6658
    %v6773 = vmul.f32 %v5959, %v5959
    %v6774 = vmul.f32 %v5961, %v5961
    %v6775 = vmul.f32 %v6331, %v6331
    %v6776 = vmul.f32 %v6333, %v6333
    %v6777 = vmul.f32 %v6663, %v6663
    %v6778 = vmul.f32 %v5963, %v5963
    %v6779 = vmul.f32 %v5965, %v5965
    %v6780 = vmul.f32 %v6335, %v6335
    %v6781 = vmul.f32 %v6337, %v6337
    %v6782 = vmul.f32 %v6666, %v6666
    %v6783 = vmul.f32 %v5969, %v5969
    %v6784 = vmul.f32 %v5971, %v5971
    %v6785 = vmul.f32 %v6341, %v6341
    %v6786 = vmul.f32 %v6343, %v6343
    %v6787 = vmul.f32 %v6671, %v6671
    %v6788 = vmul.f32 %v5973, %v5973
    %v6789 = vmul.f32 %v5975, %v5975
    %v6790 = vmul.f32 %v6345, %v6345
    %v6791 = vmul.f32 %v6347, %v6347
    %v6792 = vmul.f32 %v6674, %v6674
    %v6793 = vmul.f32 %v5979, %v5979
    %v6794 = vmul.f32 %v5981, %v5981
    %v6795 = vmul.f32 %v6351, %v6351
    %v6796 = vmul.f32 %v6353, %v6353
    %v6797 = vmul.f32 %v6679, %v6679
    %v6798 = vmul.f32 %v5983, %v5983
    %v6799 = vmul.f32 %v5985, %v5985
    %v6800 = vmul.f32 %v6355, %v6355
    %v6801 = vmul.f32 %v6357, %v6357
    %v6802 = vmul.f32 %v6682, %v6682
    %v6803 = vmul.f32 %v5989, %v5989
    %v6804 = vmul.f32 %v5991, %v5991
    %v6805 = vmul.f32 %v6361, %v6361
    %v6806 = vmul.f32 %v6363, %v6363
    %v6807 = vmul.f32 %v6687, %v6687
    %v6808 = vmul.f32 %v5993, %v5993
    %v6809 = vmul.f32 %v5995, %v5995
    %v6810 = vmul.f32 %v6365, %v6365
    %v6811 = vmul.f32 %v6367, %v6367
    %v6812 = vmul.f32 %v6690, %v6690
    %v6813 = vadd.f32 %v6693, %v6753
    %v6814 = vadd.f32 %v6694, %v6754
    %v6815 = vadd.f32 %v6695, %v6755
    %v6816 = vadd.f32 %v6696, %v6756
    %v6817 = vadd.f32 %v6697, %v6757
    %v6818 = vadd.f32 %v6698, %v6758
    %v6819 = vadd.f32 %v6699, %v6759
    %v6820 = vadd.f32 %v6700, %v6760
    %v6821 = vadd.f32 %v6701, %v6761
    %v6822 = vadd.f32 %v6702, %v6762
    %v6823 = vadd.f32 %v6703, %v6763
    %v6824 = vadd.f32 %v6704, %v6764
    %v6825 = vadd.f32 %v6705, %v6765
    %v6826 = vadd.f32 %v6706, %v6766
    %v6827 = vadd.f32 %v6707, %v6767
    %v6828 = vadd.f32 %v6708, %v6768
    %v6829 = vadd.f32 %v6709, %v6769
    %v6830 = vadd.f32 %v6710, %v6770
    %v6831 = vadd.f32 %v6711, %v6771
    %v6832 = vadd.f32 %v6712, %v6772
    %v6833 = vadd.f32 %v6713, %v6773
    %v6834 = vadd.f32 %v6714, %v6774
    %v6835 = vadd.f32 %v6715, %v6775
    %v6836 = vadd.f32 %v6716, %v6776
    %v6837 = vadd.f32 %v6717, %v6777
    %v6838 = vadd.f32 %v6718, %v6778
    %v6839 = vadd.f32 %v6719, %v6779
    %v6840 = vadd.f32 %v6720, %v6780
    %v6841 = vadd.f32 %v6721, %v6781
    %v6842 = vadd.f32 %v6722, %v6782
    %v6843 = vadd.f32 %v6723, %v6783
    %v6844 = vadd.f32 %v6724, %v6784
    %v6845 = vadd.f32 %v6725, %v6785
    %v6846 = vadd.f32 %v6726, %v6786
    %v6847 = vadd.f32 %v6727, %v6787
    %v6848 = vadd.f32 %v6728, %v6788
    %v6849 = vadd.f32 %v6729, %v6789
    %v6850 = vadd.f32 %v6730, %v6790
    %v6851 = vadd.f32 %v6731, %v6791
    %v6852 = vadd.f32 %v6732, %v6792
    %v6853 = vadd.f32 %v6733, %v6793
    %v6854 = vadd.f32 %v6734, %v6794
    %v6855 = vadd.f32 %v6735, %v6795
    %v6856 = vadd.f32 %v6736, %v6796
    %v6857 = vadd.f32 %v6737, %v6797
    %v6858 = vadd.f32 %v6738, %v6798
    %v6859 = vadd.f32 %v6739, %v6799
    %v6860 = vadd.f32 %v6740, %v6800
    %v6861 = vadd.f32 %v6741, %v6801
    %v6862 = vadd.f32 %v6742, %v6802
    %v6863 = vadd.f32 %v6743, %v6803
    %v6864 = vadd.f32 %v6744, %v6804
    %v6865 = vadd.f32 %v6745, %v6805
    %v6866 = vadd.f32 %v6746, %v6806
    %v6867 = vadd.f32 %v6747, %v6807
    %v6868 = vadd.f32 %v6748, %v6808
    %v6869 = vadd.f32 %v6749, %v6809
    %v6870 = vadd.f32 %v6750, %v6810
    %v6871 = vadd.f32 %v6751, %v6811
    %v6872 = vadd.f32 %v6752, %v6812
    %6873 = vmatprep.subr.mxu0 0.0
    %6874 = vmatpush1.msra.mxu0 %v861
    %6875 = vmatprep.subr.mxu0 0.0
    %6876 = vmatpush1.msra.mxu0 %v862
    %6877 = vmatprep.subr.mxu0 0.0
    %6878 = vmatpush1.msra.mxu0 %v863
    %6879 = vmatprep.subr.mxu0 0.0
    %6880 = vmatpush1.msra.mxu0 %v864
    %6881 = vmatprep.subr.mxu0 0.0
    %6882 = vmatpush1.msra.mxu0 %v865
    %6883 = vmatprep.subr.mxu0 0.0
    %6884 = vmatpush1.msra.mxu0 %v866
    %6885 = vmatprep.subr.mxu0 0.0
    %6886 = vmatpush1.msra.mxu0 %v867
    %6887 = vmatprep.subr.mxu0 0.0
    %6888 = vmatpush1.msra.mxu0 %v868
    %6889 = vmatprep.subr.mxu0 0.0
    %6890 = vmatpush1.msra.mxu0 %v869
    %6891 = vmatprep.subr.mxu0 0.0
    %6892 = vmatpush1.msra.mxu0 %v870
    %6893 = vmatprep.subr.mxu0 0.0
    %6894 = vmatpush1.msra.mxu0 %v871
    %6895 = vmatprep.subr.mxu0 0.0
    %6896 = vmatpush1.msra.mxu0 %v872
    %6897 = vmatprep.subr.mxu0 0.0
    %6898 = vmatpush1.msra.mxu0 %v873
    %6899 = vmatprep.subr.mxu0 0.0
    %6900 = vmatpush1.msra.mxu0 %v874
    %6901 = vmatprep.subr.mxu0 0.0
    %6902 = vmatpush1.msra.mxu0 %v875
    %6903 = vmatprep.subr.mxu0 0.0
    %6904 = vmatpush1.msra.mxu0 %v876
    %6905 = vmatprep.subr.mxu0 0.0
    %6906 = vmatpush1.msra.mxu0 %v877
    %6907 = vmatprep.subr.mxu0 0.0
    %6908 = vmatpush1.msra.mxu0 %v878
    %6909 = vmatprep.subr.mxu0 0.0
    %6910 = vmatpush1.msra.mxu0 %v879
    %6911 = vmatprep.subr.mxu0 0.0
    %6912 = vmatpush1.msra.mxu0 %v880
    %6913 = vmatprep.subr.mxu0 0.0
    %6914 = vmatpush1.msra.mxu0 %v881
    %6915 = vmatprep.subr.mxu0 0.0
    %6916 = vmatpush1.msra.mxu0 %v882
    %6917 = vmatprep.subr.mxu0 0.0
    %6918 = vmatpush1.msra.mxu0 %v883
    %6919 = vmatprep.subr.mxu0 0.0
    %6920 = vmatpush1.msra.mxu0 %v884
    %6921 = vmatprep.subr.mxu0 0.0
    %6922 = vmatpush1.msra.mxu0 %v885
    %6923 = vmatprep.subr.mxu0 0.0
    %6924 = vmatpush1.msra.mxu0 %v886
    %6925 = vmatprep.subr.mxu0 0.0
    %6926 = vmatpush1.msra.mxu0 %v887
    %6927 = vmatprep.subr.mxu0 0.0
    %6928 = vmatpush1.msra.mxu0 %v888
    %6929 = vmatprep.subr.mxu0 0.0
    %6930 = vmatpush1.msra.mxu0 %v889
    %6931 = vmatprep.subr.mxu0 0.0
    %6932 = vmatpush1.msra.mxu0 %v890
    %6933 = vmatprep.subr.mxu0 0.0
    %6934 = vmatpush1.msra.mxu0 %v891
    %6935 = vmatprep.subr.mxu0 0.0
    %6936 = vmatpush1.msra.mxu0 %v892
    %6937 = vmatprep.mubr.f32.mxu0 %v6814
    %6938 = vmatmul.mubr.f32.gmra.mrb[0].mxu0 %v6813
    %v6939 = vpop.f32.mrb[0].mxu0
    %v6940 = vadd.f32 1e-05, %v6939
    %v6941 = vpop.f32.mrb[0].mxu0
    %6942 = vmatprep.mubr.f32.mxu0 %v6819
    %6943 = vmatmul.mubr.f32.gmra.mrb[0].mxu0 %v6818
    %v6944 = vpop.f32.mrb[0].mxu0
    %v6945 = vadd.f32 1e-05, %v6944
    %v6946 = vpop.f32.mrb[0].mxu0
    %6947 = vmatprep.mubr.f32.mxu0 %v6824
    %6948 = vmatmul.mubr.f32.gmra.mrb[0].mxu0 %v6823
    %v6949 = vpop.f32.mrb[0].mxu0
    %v6950 = vadd.f32 1e-05, %v6949
    %v6951 = vpop.f32.mrb[0].mxu0
    %6952 = vmatprep.mubr.f32.mxu0 %v6829
    %6953 = vmatmul.mubr.f32.gmra.mrb[0].mxu0 %v6828
    %v6954 = vpop.f32.mrb[0].mxu0
    %v6955 = vadd.f32 1e-05, %v6954
    %v6956 = vpop.f32.mrb[0].mxu0
    %6957 = vmatprep.mubr.f32.mxu0 %v6834
    %6958 = vmatmul.mubr.f32.gmra.mrb[0].mxu0 %v6833
    %v6959 = vpop.f32.mrb[0].mxu0
    %v6960 = vadd.f32 1e-05, %v6959
    %v6961 = vpop.f32.mrb[0].mxu0
    %6962 = vmatprep.mubr.f32.mxu0 %v6839
    %6963 = vmatmul.mubr.f32.gmra.mrb[0].mxu0 %v6838
    %v6964 = vpop.f32.mrb[0].mxu0
    %v6965 = vadd.f32 1e-05, %v6964
    %v6966 = vpop.f32.mrb[0].mxu0
    %6967 = vmatprep.mubr.f32.mxu0 %v6844
    %6968 = vmatmul.mubr.f32.gmra.mrb[0].mxu0 %v6843
    %v6969 = vpop.f32.mrb[0].mxu0
    %v6970 = vadd.f32 1e-05, %v6969
    %v6971 = vpop.f32.mrb[0].mxu0
    %6972 = vmatprep.mubr.f32.mxu0 %v6849
    %6973 = vmatmul.mubr.f32.gmra.mrb[0].mxu0 %v6848
    %v6974 = vpop.f32.mrb[0].mxu0
    %v6975 = vadd.f32 1e-05, %v6974
    %v6976 = vpop.f32.mrb[0].mxu0
    %6977 = vmatprep.mubr.f32.mxu0 %v6854
    %6978 = vmatmul.mubr.f32.gmra.mrb[0].mxu0 %v6853
    %v6979 = vpop.f32.mrb[0].mxu0
    %v6980 = vadd.f32 1e-05, %v6979
    %v6981 = vpop.f32.mrb[0].mxu0
    %6982 = vmatprep.mubr.f32.mxu0 %v6859
    %6983 = vmatmul.mubr.f32.gmra.mrb[0].mxu0 %v6858
    %v6984 = vpop.f32.mrb[0].mxu0
    %v6985 = vadd.f32 1e-05, %v6984
    %v6986 = vpop.f32.mrb[0].mxu0
    %6987 = vmatprep.mubr.f32.mxu0 %v6864
    %6988 = vmatmul.mubr.f32.gmra.mrb[0].mxu0 %v6863
    %v6989 = vpop.f32.mrb[0].mxu0
    %v6990 = vadd.f32 1e-05, %v6989
    %v6991 = vpop.f32.mrb[0].mxu0
    %6992 = vmatprep.mubr.f32.mxu0 %v6869
    %6993 = vmatmul.mubr.f32.gmra.mrb[0].mxu0 %v6868
    %v6994 = vpop.f32.mrb[0].mxu0
    %v6995 = vadd.f32 1e-05, %v6994
    %v6996 = vpop.f32.mrb[0].mxu0
    %6997 = vdwg.mxu0
    %6998 = vmatprep.subr.mxu0 0.0
    %6999 = vmatpush1.msra.mxu0 %v893
    %7000 = vmatprep.subr.mxu0 0.0
    %7001 = vmatpush1.msra.mxu0 %v894
    %7002 = vmatprep.subr.mxu0 0.0
    %7003 = vmatpush1.msra.mxu0 %v895
    %7004 = vmatprep.subr.mxu0 0.0
    %7005 = vmatpush1.msra.mxu0 %v896
    %7006 = vmatprep.subr.mxu0 0.0
    %7007 = vmatpush1.msra.mxu0 %v897
    %7008 = vmatprep.subr.mxu0 0.0
    %7009 = vmatpush1.msra.mxu0 %v898
    %7010 = vmatprep.subr.mxu0 0.0
    %7011 = vmatpush1.msra.mxu0 %v899
    %7012 = vmatprep.subr.mxu0 0.0
    %7013 = vmatpush1.msra.mxu0 %v900
    %7014 = vmatprep.subr.mxu0 0.0
    %7015 = vmatpush1.msra.mxu0 %v901
    %7016 = vmatprep.subr.mxu0 0.0
    %7017 = vmatpush1.msra.mxu0 %v902
    %7018 = vmatprep.subr.mxu0 0.0
    %7019 = vmatpush1.msra.mxu0 %v903
    %7020 = vmatprep.subr.mxu0 0.0
    %7021 = vmatpush1.msra.mxu0 %v904
    %7022 = vmatprep.subr.mxu0 0.0
    %7023 = vmatpush1.msra.mxu0 %v905
    %7024 = vmatprep.subr.mxu0 0.0
    %7025 = vmatpush1.msra.mxu0 %v906
    %7026 = vmatprep.subr.mxu0 0.0
    %7027 = vmatpush1.msra.mxu0 %v907
    %7028 = vmatprep.subr.mxu0 0.0
    %7029 = vmatpush1.msra.mxu0 %v908
    %7030 = vmatprep.subr.mxu0 0.0
    %7031 = vmatpush1.msra.mxu0 %v909
    %7032 = vmatprep.subr.mxu0 0.0
    %7033 = vmatpush1.msra.mxu0 %v910
    %7034 = vmatprep.subr.mxu0 0.0
    %7035 = vmatpush1.msra.mxu0 %v911
    %7036 = vmatprep.subr.mxu0 0.0
    %7037 = vmatpush1.msra.mxu0 %v912
    %7038 = vmatprep.subr.mxu0 0.0
    %7039 = vmatpush1.msra.mxu0 %v913
    %7040 = vmatprep.subr.mxu0 0.0
    %7041 = vmatpush1.msra.mxu0 %v914
    %7042 = vmatprep.subr.mxu0 0.0
    %7043 = vmatpush1.msra.mxu0 %v915
    %7044 = vmatprep.subr.mxu0 0.0
    %7045 = vmatpush1.msra.mxu0 %v916
    %7046 = vmatprep.subr.mxu0 0.0
    %7047 = vmatpush1.msra.mxu0 %v917
    %7048 = vmatprep.subr.mxu0 0.0
    %7049 = vmatpush1.msra.mxu0 %v918
    %7050 = vmatprep.subr.mxu0 0.0
    %7051 = vmatpush1.msra.mxu0 %v919
    %7052 = vmatprep.subr.mxu0 0.0
    %7053 = vmatpush1.msra.mxu0 %v920
    %7054 = vmatprep.subr.mxu0 0.0
    %7055 = vmatpush1.msra.mxu0 %v921
    %7056 = vmatprep.subr.mxu0 0.0
    %7057 = vmatpush1.msra.mxu0 %v922
    %7058 = vmatprep.subr.mxu0 0.0
    %7059 = vmatpush1.msra.mxu0 %v923
    %7060 = vmatprep.subr.mxu0 0.0
    %7061 = vmatpush1.msra.mxu0 %v924
    %7062 = vmatprep.mubr.f32.mxu0 %v6816
    %7063 = vmatmul.mubr.f32.gmra.mrb[0].mxu0 %v6815
    %v7064 = vpop.f32.mrb[0].mxu0
    %v7065 = vadd.f32 %v6940, %v7064
    %v7066 = vpop.f32.mrb[0].mxu0
    %7067 = vmatprep.mubr.f32.mxu0 %v6821
    %7068 = vmatmul.mubr.f32.gmra.mrb[0].mxu0 %v6820
    %v7069 = vpop.f32.mrb[0].mxu0
    %v7070 = vadd.f32 %v6945, %v7069
    %v7071 = vpop.f32.mrb[0].mxu0
    %7072 = vmatprep.mubr.f32.mxu0 %v6826
    %7073 = vmatmul.mubr.f32.gmra.mrb[0].mxu0 %v6825
    %v7074 = vpop.f32.mrb[0].mxu0
    %v7075 = vadd.f32 %v6950, %v7074
    %v7076 = vpop.f32.mrb[0].mxu0
    %7077 = vmatprep.mubr.f32.mxu0 %v6831
    %7078 = vmatmul.mubr.f32.gmra.mrb[0].mxu0 %v6830
    %v7079 = vpop.f32.mrb[0].mxu0
    %v7080 = vadd.f32 %v6955, %v7079
    %v7081 = vpop.f32.mrb[0].mxu0
    %7082 = vmatprep.mubr.f32.mxu0 %v6836
    %7083 = vmatmul.mubr.f32.gmra.mrb[0].mxu0 %v6835
    %v7084 = vpop.f32.mrb[0].mxu0
    %v7085 = vadd.f32 %v6960, %v7084
    %v7086 = vpop.f32.mrb[0].mxu0
    %7087 = vmatprep.mubr.f32.mxu0 %v6841
    %7088 = vmatmul.mubr.f32.gmra.mrb[0].mxu0 %v6840
    %v7089 = vpop.f32.mrb[0].mxu0
    %v7090 = vadd.f32 %v6965, %v7089
    %v7091 = vpop.f32.mrb[0].mxu0
    %7092 = vmatprep.mubr.f32.mxu0 %v6846
    %7093 = vmatmul.mubr.f32.gmra.mrb[0].mxu0 %v6845
    %v7094 = vpop.f32.mrb[0].mxu0
    %v7095 = vadd.f32 %v6970, %v7094
    %v7096 = vpop.f32.mrb[0].mxu0
    %7097 = vmatprep.mubr.f32.mxu0 %v6851
    %7098 = vmatmul.mubr.f32.gmra.mrb[0].mxu0 %v6850
    %v7099 = vpop.f32.mrb[0].mxu0
    %v7100 = vadd.f32 %v6975, %v7099
    %v7101 = vpop.f32.mrb[0].mxu0
    %7102 = vmatprep.mubr.f32.mxu0 %v6856
    %7103 = vmatmul.mubr.f32.gmra.mrb[0].mxu0 %v6855
    %v7104 = vpop.f32.mrb[0].mxu0
    %v7105 = vadd.f32 %v6980, %v7104
    %v7106 = vpop.f32.mrb[0].mxu0
    %7107 = vmatprep.mubr.f32.mxu0 %v6861
    %7108 = vmatmul.mubr.f32.gmra.mrb[0].mxu0 %v6860
    %v7109 = vpop.f32.mrb[0].mxu0
    %v7110 = vadd.f32 %v6985, %v7109
    %v7111 = vpop.f32.mrb[0].mxu0
    %7112 = vmatprep.mubr.f32.mxu0 %v6866
    %7113 = vmatmul.mubr.f32.gmra.mrb[0].mxu0 %v6865
    %v7114 = vpop.f32.mrb[0].mxu0
    %v7115 = vadd.f32 %v6990, %v7114
    %v7116 = vpop.f32.mrb[0].mxu0
    %7117 = vmatprep.mubr.f32.mxu0 %v6871
    %7118 = vmatmul.mubr.f32.gmra.mrb[0].mxu0 %v6870
    %v7119 = vpop.f32.mrb[0].mxu0
    %v7120 = vadd.f32 %v6995, %v7119
    %v7121 = vpop.f32.mrb[0].mxu0
    %7122 = vdwg.mxu0
    %7123 = vmatprep.subr.mxu0 0.0
    %7124 = vmatpush1.msra.mxu0 %v925
    %7125 = vmatprep.subr.mxu0 0.0
    %7126 = vmatpush1.msra.mxu0 %v926
    %7127 = vmatprep.subr.mxu0 0.0
    %7128 = vmatpush1.msra.mxu0 %v927
    %7129 = vmatprep.subr.mxu0 0.0
    %7130 = vmatpush1.msra.mxu0 %v928
    %7131 = vmatprep.subr.mxu0 0.0
    %7132 = vmatpush1.msra.mxu0 %v929
    %7133 = vmatprep.subr.mxu0 0.0
    %7134 = vmatpush1.msra.mxu0 %v930
    %7135 = vmatprep.subr.mxu0 0.0
    %7136 = vmatpush1.msra.mxu0 %v931
    %7137 = vmatprep.subr.mxu0 0.0
    %7138 = vmatpush1.msra.mxu0 %v932
    %7139 = vmatprep.subr.mxu0 0.0
    %7140 = vmatpush1.msra.mxu0 %v933
    %7141 = vmatprep.subr.mxu0 0.0
    %7142 = vmatpush1.msra.mxu0 %v934
    %7143 = vmatprep.subr.mxu0 0.0
    %7144 = vmatpush1.msra.mxu0 %v935
    %7145 = vmatprep.subr.mxu0 0.0
    %7146 = vmatpush1.msra.mxu0 %v936
    %7147 = vmatprep.subr.mxu0 0.0
    %7148 = vmatpush1.msra.mxu0 %v937
    %7149 = vmatprep.subr.mxu0 0.0
    %7150 = vmatpush1.msra.mxu0 %v938
    %7151 = vmatprep.subr.mxu0 0.0
    %7152 = vmatpush1.msra.mxu0 %v939
    %7153 = vmatprep.subr.mxu0 0.0
    %7154 = vmatpush1.msra.mxu0 %v940
    %7155 = vmatprep.subr.mxu0 0.0
    %7156 = vmatpush1.msra.mxu0 0.0
    %7157 = vmatprep.subr.mxu0 0.0
    %7158 = vmatpush1.msra.mxu0 0.0
    %7159 = vmatprep.subr.mxu0 0.0
    %7160 = vmatpush1.msra.mxu0 0.0
    %7161 = vmatprep.subr.mxu0 0.0
    %7162 = vmatpush1.msra.mxu0 0.0
    %7163 = vmatprep.subr.mxu0 0.0
    %7164 = vmatpush1.msra.mxu0 0.0
    %7165 = vmatprep.subr.mxu0 0.0
    %7166 = vmatpush1.msra.mxu0 0.0
    %7167 = vmatprep.subr.mxu0 0.0
    %7168 = vmatpush1.msra.mxu0 0.0
    %7169 = vmatprep.subr.mxu0 0.0
    %7170 = vmatpush1.msra.mxu0 0.0
    %7171 = vmatprep.subr.mxu0 0.0
    %7172 = vmatpush1.msra.mxu0 0.0
    %7173 = vmatprep.subr.mxu0 0.0
    %7174 = vmatpush1.msra.mxu0 0.0
    %7175 = vmatprep.subr.mxu0 0.0
    %7176 = vmatpush1.msra.mxu0 0.0
    %7177 = vmatprep.subr.mxu0 0.0
    %7178 = vmatpush1.msra.mxu0 0.0
    %7179 = vmatprep.subr.mxu0 0.0
    %7180 = vmatpush1.msra.mxu0 0.0
    %7181 = vmatprep.subr.mxu0 0.0
    %7182 = vmatpush1.msra.mxu0 0.0
    %7183 = vmatprep.subr.mxu0 0.0
    %7184 = vmatpush1.msra.mxu0 0.0
    %7185 = vmatprep.subr.mxu0 0.0
    %7186 = vmatpush1.msra.mxu0 0.0
    %7187 = vmatprep.mubr.f32.mxu0 0.0
    %7188 = vmatmul.mubr.f32.gmra.mrb[0].mxu0 %v6817
    %v7189 = vpop.f32.mrb[0].mxu0
    %v7190 = vadd.f32 %v7065, %v7189
    %v7191 = vpop.f32.mrb[0].mxu0
    %7192 = vmatprep.mubr.f32.mxu0 0.0
    %7193 = vmatmul.mubr.f32.gmra.mrb[0].mxu0 %v6822
    %v7194 = vpop.f32.mrb[0].mxu0
    %v7195 = vadd.f32 %v7070, %v7194
    %v7196 = vpop.f32.mrb[0].mxu0
    %7197 = vmatprep.mubr.f32.mxu0 0.0
    %7198 = vmatmul.mubr.f32.gmra.mrb[0].mxu0 %v6827
    %v7199 = vpop.f32.mrb[0].mxu0
    %v7200 = vadd.f32 %v7075, %v7199
    %v7201 = vpop.f32.mrb[0].mxu0
    %7202 = vmatprep.mubr.f32.mxu0 0.0
    %7203 = vmatmul.mubr.f32.gmra.mrb[0].mxu0 %v6832
    %v7204 = vpop.f32.mrb[0].mxu0
    %v7205 = vadd.f32 %v7080, %v7204
    %v7206 = vpop.f32.mrb[0].mxu0
    %7207 = vmatprep.mubr.f32.mxu0 0.0
    %7208 = vmatmul.mubr.f32.gmra.mrb[0].mxu0 %v6837
    %v7209 = vpop.f32.mrb[0].mxu0
    %v7210 = vadd.f32 %v7085, %v7209
    %v7211 = vpop.f32.mrb[0].mxu0
    %7212 = vmatprep.mubr.f32.mxu0 0.0
    %7213 = vmatmul.mubr.f32.gmra.mrb[0].mxu0 %v6842
    %v7214 = vpop.f32.mrb[0].mxu0
    %v7215 = vadd.f32 %v7090, %v7214
    %v7216 = vpop.f32.mrb[0].mxu0
    %7217 = vmatprep.mubr.f32.mxu0 0.0
    %7218 = vmatmul.mubr.f32.gmra.mrb[0].mxu0 %v6847
    %v7219 = vpop.f32.mrb[0].mxu0
    %v7220 = vadd.f32 %v7095, %v7219
    %v7221 = vpop.f32.mrb[0].mxu0
    %7222 = vmatprep.mubr.f32.mxu0 0.0
    %7223 = vmatmul.mubr.f32.gmra.mrb[0].mxu0 %v6852
    %v7224 = vpop.f32.mrb[0].mxu0
    %v7225 = vadd.f32 %v7100, %v7224
    %v7226 = vpop.f32.mrb[0].mxu0
    %7227 = vmatprep.mubr.f32.mxu0 0.0
    %7228 = vmatmul.mubr.f32.gmra.mrb[0].mxu0 %v6857
    %v7229 = vpop.f32.mrb[0].mxu0
    %v7230 = vadd.f32 %v7105, %v7229
    %v7231 = vpop.f32.mrb[0].mxu0
    %7232 = vmatprep.mubr.f32.mxu0 0.0
    %7233 = vmatmul.mubr.f32.gmra.mrb[0].mxu0 %v6862
    %v7234 = vpop.f32.mrb[0].mxu0
    %v7235 = vadd.f32 %v7110, %v7234
    %v7236 = vpop.f32.mrb[0].mxu0
    %7237 = vmatprep.mubr.f32.mxu0 0.0
    %7238 = vmatmul.mubr.f32.gmra.mrb[0].mxu0 %v6867
    %v7239 = vpop.f32.mrb[0].mxu0
    %v7240 = vadd.f32 %v7115, %v7239
    %v7241 = vpop.f32.mrb[0].mxu0
    %7242 = vmatprep.mubr.f32.mxu0 0.0
    %7243 = vmatmul.mubr.f32.gmra.mrb[0].mxu0 %v6872
    %v7244 = vpop.f32.mrb[0].mxu0
    %v7245 = vadd.f32 %v7120, %v7244
    %v7246 = vpop.f32.mrb[0].mxu0
    %7247 = vdwg.mxu0
    %v7248 = vlog2.pop %v7190
    %v7249 = vmul.f32 %v7248, 0.6931472
    %v7250 = vlog2.pop %v7195
    %v7251 = vmul.f32 %v7250, 0.6931472
    %v7252 = vlog2.pop %v7200
    %v7253 = vmul.f32 %v7252, 0.6931472
    %v7254 = vlog2.pop %v7205
    %v7255 = vmul.f32 %v7254, 0.6931472
    %v7256 = vlog2.pop %v7210
    %v7257 = vmul.f32 %v7256, 0.6931472
    %v7258 = vlog2.pop %v7215
    %v7259 = vmul.f32 %v7258, 0.6931472
    %v7260 = vlog2.pop %v7220
    %v7261 = vmul.f32 %v7260, 0.6931472
    %v7262 = vlog2.pop %v7225
    %v7263 = vmul.f32 %v7262, 0.6931472
    %v7264 = vlog2.pop %v7230
    %v7265 = vmul.f32 %v7264, 0.6931472
    %v7266 = vlog2.pop %v7235
    %v7267 = vmul.f32 %v7266, 0.6931472
    %v7268 = vlog2.pop %v7240
    %v7269 = vmul.f32 %v7268, 0.6931472
    %v7270 = vlog2.pop %v7245
    %v7271 = vmul.f32 %v7270, 0.6931472
    %v7272 = vsub.f32 %v7249, -4.0
    %v7273 = vsub.f32 %v7251, -4.0
    %v7274 = vsub.f32 %v7253, -4.0
    %v7275 = vsub.f32 %v7255, -4.0
    %v7276 = vsub.f32 %v7257, -4.0
    %v7277 = vsub.f32 %v7259, -4.0
    %v7278 = vsub.f32 %v7261, -4.0
    %v7279 = vsub.f32 %v7263, -4.0
    %v7280 = vsub.f32 %v7265, -4.0
    %v7281 = vsub.f32 %v7267, -4.0
    %v7282 = vsub.f32 %v7269, -4.0
    %v7283 = vsub.f32 %v7271, -4.0
    %v7284 = vmul.f32 %v7272, 0.25
    %v7285 = vmul.f32 %v7273, 0.25
    %v7286 = vmul.f32 %v7274, 0.25
    %v7287 = vmul.f32 %v7275, 0.25
    %v7288 = vmul.f32 %v7276, 0.25
    %v7289 = vmul.f32 %v7277, 0.25
    %v7290 = vmul.f32 %v7278, 0.25
    %v7291 = vmul.f32 %v7279, 0.25
    %v7292 = vmul.f32 %v7280, 0.25
    %v7293 = vmul.f32 %v7281, 0.25
    %v7294 = vmul.f32 %v7282, 0.25
    %v7295 = vmul.f32 %v7283, 0.25
    %v7296 = vld [vmem:[#allocation5] sm:$0xff]
    %v7297 = vld [vmem:[#allocation5 + $0x8] sm:$0xff]
    %v7298 = vld [vmem:[#allocation5 + $0x10] sm:$0xff]
    %v7299 = vld [vmem:[#allocation5 + $0x18] sm:$0xff]
    %v7300 = vld [vmem:[#allocation5 + $0x20] sm:$0xff]
    %v7301 = vld [vmem:[#allocation5 + $0x28] sm:$0xff]
    %v7302 = vld [vmem:[#allocation5 + $0x30] sm:$0xff]
    %v7303 = vld [vmem:[#allocation5 + $0x38] sm:$0xff]
    %v7304 = vld [vmem:[#allocation5 + $0x40] sm:$0xff]
    %v7305 = vld [vmem:[#allocation5 + $0x48] sm:$0xff]
    %v7306 = vld [vmem:[#allocation5 + $0x50] sm:$0xff]
    %v7307 = vld [vmem:[#allocation5 + $0x58] sm:$0xff]
    %v7308 = vld [vmem:[#allocation5 + $0x60] sm:$0xff]
    %v7309 = vld [vmem:[#allocation5 + $0x68] sm:$0xff]
    %v7310 = vld [vmem:[#allocation5 + $0x70] sm:$0xff]
    %v7311 = vld [vmem:[#allocation5 + $0x78] sm:$0xff]
    %v7312 = vld [vmem:[#allocation5 + $0x80] sm:$0xff]
    %v7313 = vld [vmem:[#allocation5 + $0x88] sm:$0xff]
    %v7314 = vld [vmem:[#allocation5 + $0x90] sm:$0xff]
    %v7315 = vld [vmem:[#allocation5 + $0x98] sm:$0xff]
    %v7316 = vld [vmem:[#allocation5 + $0xa0] sm:$0xff]
    %v7317 = vld [vmem:[#allocation5 + $0xa8] sm:$0xff]
    %v7318 = vld [vmem:[#allocation5 + $0xb0] sm:$0xff]
    %v7319 = vld [vmem:[#allocation5 + $0xb8] sm:$0xff]
    %v7320 = vld [vmem:[#allocation5 + $0xc0] sm:$0xff]
    %v7321 = vld [vmem:[#allocation5 + $0xc8] sm:$0xff]
    %v7322 = vld [vmem:[#allocation5 + $0xd0] sm:$0xff]
    %v7323 = vld [vmem:[#allocation5 + $0xd8] sm:$0xff]
    %v7324 = vld [vmem:[#allocation5 + $0xe0] sm:$0xff]
    %v7325 = vld [vmem:[#allocation5 + $0xe8] sm:$0xff]
    %v7326 = vld [vmem:[#allocation5 + $0xf0] sm:$0xff]
    %v7327 = vld [vmem:[#allocation5 + $0xf8] sm:$0xff]
    %v7328 = vld [vmem:[#allocation5 + $0x100] sm:$0xff]
    %v7329 = vld [vmem:[#allocation5 + $0x108] sm:$0xff]
    %v7330 = vld [vmem:[#allocation5 + $0x110] sm:$0xff]
    %v7331 = vld [vmem:[#allocation5 + $0x118] sm:$0xff]
    %v7332 = vld [vmem:[#allocation5 + $0x120] sm:$0xff]
    %v7333 = vld [vmem:[#allocation5 + $0x128] sm:$0xff]
    %v7334 = vld [vmem:[#allocation5 + $0x130] sm:$0xff]
    %v7335 = vld [vmem:[#allocation5 + $0x138] sm:$0xff]
    %v7336 = vld [vmem:[#allocation5 + $0x140] sm:$0xff]
    %v7337 = vld [vmem:[#allocation5 + $0x148] sm:$0xff]
    %v7338 = vld [vmem:[#allocation5 + $0x150] sm:$0xff]
    %v7339 = vld [vmem:[#allocation5 + $0x158] sm:$0xff]
    %v7340 = vld [vmem:[#allocation5 + $0x160] sm:$0xff]
    %v7341 = vld [vmem:[#allocation5 + $0x168] sm:$0xff]
    %v7342 = vld [vmem:[#allocation5 + $0x170] sm:$0xff]
    %v7343 = vld [vmem:[#allocation5 + $0x178] sm:$0xff]
    %v7392 = vunpack.c.l.b16 %v7296
    %v7393 = vunpack.c.h.b16 %v7296
    %v7394 = vunpack.c.l.b16 %v7297
    %v7395 = vunpack.c.h.b16 %v7297
    %v7396 = vunpack.c.l.b16 %v7298
    %v7397 = vunpack.c.h.b16 %v7298
    %v7398 = vunpack.c.l.b16 %v7299
    %v7399 = vunpack.c.h.b16 %v7299
    %v7400 = vunpack.c.l.b16 %v7300
    %v7401 = vunpack.c.h.b16 %v7300
    %v7402 = vunpack.c.l.b16 %v7301
    %v7403 = vunpack.c.h.b16 %v7301
    %v7404 = vunpack.c.l.b16 %v7302
    %v7405 = vunpack.c.h.b16 %v7302
    %v7406 = vunpack.c.l.b16 %v7303
    %v7407 = vunpack.c.h.b16 %v7303
    %v7408 = vunpack.c.l.b16 %v7304
    %v7409 = vunpack.c.h.b16 %v7304
    %v7410 = vunpack.c.l.b16 %v7305
    %v7411 = vunpack.c.h.b16 %v7305
    %v7412 = vunpack.c.l.b16 %v7306
    %v7413 = vunpack.c.h.b16 %v7306
    %v7414 = vunpack.c.l.b16 %v7307
    %v7415 = vunpack.c.h.b16 %v7307
    %v7416 = vunpack.c.l.b16 %v7308
    %v7417 = vunpack.c.h.b16 %v7308
    %v7418 = vunpack.c.l.b16 %v7309
    %v7419 = vunpack.c.h.b16 %v7309
    %v7420 = vunpack.c.l.b16 %v7310
    %v7421 = vunpack.c.h.b16 %v7310
    %v7422 = vunpack.c.l.b16 %v7311
    %v7423 = vunpack.c.h.b16 %v7311
    %v7424 = vunpack.c.l.b16 %v7312
    %v7425 = vunpack.c.h.b16 %v7312
    %v7426 = vunpack.c.l.b16 %v7313
    %v7427 = vunpack.c.h.b16 %v7313
    %v7428 = vunpack.c.l.b16 %v7314
    %v7429 = vunpack.c.h.b16 %v7314
    %v7430 = vunpack.c.l.b16 %v7315
    %v7431 = vunpack.c.h.b16 %v7315
    %v7432 = vunpack.c.l.b16 %v7316
    %v7433 = vunpack.c.h.b16 %v7316
    %v7434 = vunpack.c.l.b16 %v7317
    %v7435 = vunpack.c.h.b16 %v7317
    %v7436 = vunpack.c.l.b16 %v7318
    %v7437 = vunpack.c.h.b16 %v7318
    %v7438 = vunpack.c.l.b16 %v7319
    %v7439 = vunpack.c.h.b16 %v7319
    %v7440 = vunpack.c.l.b16 %v7320
    %v7441 = vunpack.c.h.b16 %v7320
    %v7442 = vunpack.c.l.b16 %v7321
    %v7443 = vunpack.c.h.b16 %v7321
    %v7444 = vunpack.c.l.b16 %v7322
    %v7445 = vunpack.c.h.b16 %v7322
    %v7446 = vunpack.c.l.b16 %v7323
    %v7447 = vunpack.c.h.b16 %v7323
    %v7448 = vunpack.c.l.b16 %v7324
    %v7449 = vunpack.c.h.b16 %v7324
    %v7450 = vunpack.c.l.b16 %v7325
    %v7451 = vunpack.c.h.b16 %v7325
    %v7452 = vunpack.c.l.b16 %v7326
    %v7453 = vunpack.c.h.b16 %v7326
    %v7454 = vunpack.c.l.b16 %v7327
    %v7455 = vunpack.c.h.b16 %v7327
    %v7456 = vunpack.c.l.b16 %v7328
    %v7457 = vunpack.c.h.b16 %v7328
    %v7458 = vunpack.c.l.b16 %v7329
    %v7459 = vunpack.c.h.b16 %v7329
    %v7460 = vunpack.c.l.b16 %v7330
    %v7461 = vunpack.c.h.b16 %v7330
    %v7462 = vunpack.c.l.b16 %v7331
    %v7463 = vunpack.c.h.b16 %v7331
    %v7464 = vunpack.c.l.b16 %v7332
    %v7465 = vunpack.c.h.b16 %v7332
    %v7466 = vunpack.c.l.b16 %v7333
    %v7467 = vunpack.c.h.b16 %v7333
    %v7468 = vunpack.c.l.b16 %v7334
    %v7469 = vunpack.c.h.b16 %v7334
    %v7470 = vunpack.c.l.b16 %v7335
    %v7471 = vunpack.c.h.b16 %v7335
    %v7472 = vunpack.c.l.b16 %v7336
    %v7473 = vunpack.c.h.b16 %v7336
    %v7474 = vunpack.c.l.b16 %v7337
    %v7475 = vunpack.c.h.b16 %v7337
    %v7476 = vunpack.c.l.b16 %v7338
    %v7477 = vunpack.c.h.b16 %v7338
    %v7478 = vunpack.c.l.b16 %v7339
    %v7479 = vunpack.c.h.b16 %v7339
    %v7480 = vunpack.c.l.b16 %v7340
    %v7481 = vunpack.c.h.b16 %v7340
    %v7482 = vunpack.c.l.b16 %v7341
    %v7483 = vunpack.c.h.b16 %v7341
    %v7484 = vunpack.c.l.b16 %v7342
    %v7485 = vunpack.c.h.b16 %v7342
    %v7486 = vunpack.c.l.b16 %v7343
    %v7487 = vunpack.c.h.b16 %v7343
    %v7488 = vpack.c.b16 %v7400, %v7392
    %v7489 = vpack.c.b16 %v7401, %v7393
    %v7490 = vpack.c.b16 %v7402, %v7394
    %v7491 = vpack.c.b16 %v7403, %v7395
    %v7492 = vpack.c.b16 %v7404, %v7396
    %v7493 = vpack.c.b16 %v7405, %v7397
    %v7494 = vpack.c.b16 %v7406, %v7398
    %v7495 = vpack.c.b16 %v7407, %v7399
    %v7496 = vpack.c.b16 %v7416, %v7408
    %v7497 = vpack.c.b16 %v7417, %v7409
    %v7498 = vpack.c.b16 %v7418, %v7410
    %v7499 = vpack.c.b16 %v7419, %v7411
    %v7500 = vpack.c.b16 %v7420, %v7412
    %v7501 = vpack.c.b16 %v7421, %v7413
    %v7502 = vpack.c.b16 %v7422, %v7414
    %v7503 = vpack.c.b16 %v7423, %v7415
    %v7504 = vpack.c.b16 %v7432, %v7424
    %v7505 = vpack.c.b16 %v7433, %v7425
    %v7506 = vpack.c.b16 %v7434, %v7426
    %v7507 = vpack.c.b16 %v7435, %v7427
    %v7508 = vpack.c.b16 %v7436, %v7428
    %v7509 = vpack.c.b16 %v7437, %v7429
    %v7510 = vpack.c.b16 %v7438, %v7430
    %v7511 = vpack.c.b16 %v7439, %v7431
    %v7512 = vpack.c.b16 %v7448, %v7440
    %v7513 = vpack.c.b16 %v7449, %v7441
    %v7514 = vpack.c.b16 %v7450, %v7442
    %v7515 = vpack.c.b16 %v7451, %v7443
    %v7516 = vpack.c.b16 %v7452, %v7444
    %v7517 = vpack.c.b16 %v7453, %v7445
    %v7518 = vpack.c.b16 %v7454, %v7446
    %v7519 = vpack.c.b16 %v7455, %v7447
    %v7520 = vpack.c.b16 %v7464, %v7456
    %v7521 = vpack.c.b16 %v7465, %v7457
    %v7522 = vpack.c.b16 %v7466, %v7458
    %v7523 = vpack.c.b16 %v7467, %v7459
    %v7524 = vpack.c.b16 %v7468, %v7460
    %v7525 = vpack.c.b16 %v7469, %v7461
    %v7526 = vpack.c.b16 %v7470, %v7462
    %v7527 = vpack.c.b16 %v7471, %v7463
    %v7528 = vpack.c.b16 %v7480, %v7472
    %v7529 = vpack.c.b16 %v7481, %v7473
    %v7530 = vpack.c.b16 %v7482, %v7474
    %v7531 = vpack.c.b16 %v7483, %v7475
    %v7532 = vpack.c.b16 %v7484, %v7476
    %v7533 = vpack.c.b16 %v7485, %v7477
    %v7534 = vpack.c.b16 %v7486, %v7478
    %v7535 = vpack.c.b16 %v7487, %v7479
    %7584 = vmatprep.subr.bf16.mxu0 %v2254
    %7585 = vmatpush1.bf16.msra.mxu0 %v2253
    %7586 = vmatprep.subr.bf16.mxu0 %v2259
    %7587 = vmatpush1.bf16.msra.mxu0 %v2258
    %7588 = vmatprep.subr.bf16.mxu0 %v2264
    %7589 = vmatpush1.bf16.msra.mxu0 %v2263
    %7590 = vmatprep.subr.bf16.mxu0 %v2269
    %7591 = vmatpush1.bf16.msra.mxu0 %v2268
    %7592 = vmatprep.subr.bf16.mxu0 %v2274
    %7593 = vmatpush1.bf16.msra.mxu0 %v2273
    %7594 = vmatprep.subr.bf16.mxu0 %v2279
    %7595 = vmatpush1.bf16.msra.mxu0 %v2278
    %7596 = vmatprep.subr.bf16.mxu0 %v2284
    %7597 = vmatpush1.bf16.msra.mxu0 %v2283
    %7598 = vmatprep.subr.bf16.mxu0 %v2289
    %7599 = vmatpush1.bf16.msra.mxu0 %v2288
    %7600 = vmatprep.subr.bf16.mxu0 %v2294
    %7601 = vmatpush1.bf16.msra.mxu0 %v2293
    %7602 = vmatprep.subr.bf16.mxu0 %v2299
    %7603 = vmatpush1.bf16.msra.mxu0 %v2298
    %7604 = vmatprep.subr.bf16.mxu0 %v2304
    %7605 = vmatpush1.bf16.msra.mxu0 %v2303
    %7606 = vmatprep.subr.bf16.mxu0 %v2309
    %7607 = vmatpush1.bf16.msra.mxu0 %v2308
    %7608 = vmatprep.subr.bf16.mxu0 %v2314
    %7609 = vmatpush1.bf16.msra.mxu0 %v2313
    %7610 = vmatprep.subr.bf16.mxu0 %v2319
    %7611 = vmatpush1.bf16.msra.mxu0 %v2318
    %7612 = vmatprep.subr.bf16.mxu0 %v2324
    %7613 = vmatpush1.bf16.msra.mxu0 %v2323
    %7614 = vmatprep.subr.bf16.mxu0 %v2329
    %7615 = vmatpush1.bf16.msra.mxu0 %v2328
    %7616 = vmatprep.mubr.bf16.mxu0 %v7489
    %7617 = vmatmul.mubr.bf16.gmra.mrb[0].mxu0 %v7488
    %v7618 = vpop.f32.mrb[0].mxu0
    %v7619 = vadd.f32 0.0, %v7618
    %v7620 = vpop.f32.mrb[0].mxu0
    %v7621 = vadd.f32 0.0, %v7620
    %v7622 = vpop.f32.mrb[0].mxu0
    %v7623 = vadd.f32 0.0, %v7622
    %v7624 = vpop.f32.mrb[0].mxu0
    %v7625 = vadd.f32 0.0, %v7624
    %7626 = vmatprep.mubr.bf16.mxu0 %v7497
    %7627 = vmatmul.mubr.bf16.gmra.mrb[0].mxu0 %v7496
    %v7628 = vpop.f32.mrb[0].mxu0
    %v7629 = vadd.f32 0.0, %v7628
    %v7630 = vpop.f32.mrb[0].mxu0
    %v7631 = vadd.f32 0.0, %v7630
    %v7632 = vpop.f32.mrb[0].mxu0
    %v7633 = vadd.f32 0.0, %v7632
    %v7634 = vpop.f32.mrb[0].mxu0
    %v7635 = vadd.f32 0.0, %v7634
    %7636 = vmatprep.mubr.bf16.mxu0 %v7505
    %7637 = vmatmul.mubr.bf16.gmra.mrb[0].mxu0 %v7504
    %v7638 = vpop.f32.mrb[0].mxu0
    %v7639 = vadd.f32 0.0, %v7638
    %v7640 = vpop.f32.mrb[0].mxu0
    %v7641 = vadd.f32 0.0, %v7640
    %v7642 = vpop.f32.mrb[0].mxu0
    %v7643 = vadd.f32 0.0, %v7642
    %v7644 = vpop.f32.mrb[0].mxu0
    %v7645 = vadd.f32 0.0, %v7644
    %7646 = vmatprep.mubr.bf16.mxu0 %v7513
    %7647 = vmatmul.mubr.bf16.gmra.mrb[0].mxu0 %v7512
    %v7648 = vpop.f32.mrb[0].mxu0
    %v7649 = vadd.f32 0.0, %v7648
    %v7650 = vpop.f32.mrb[0].mxu0
    %v7651 = vadd.f32 0.0, %v7650
    %v7652 = vpop.f32.mrb[0].mxu0
    %v7653 = vadd.f32 0.0, %v7652
    %v7654 = vpop.f32.mrb[0].mxu0
    %v7655 = vadd.f32 0.0, %v7654
    %7656 = vmatprep.mubr.bf16.mxu0 %v7521
    %7657 = vmatmul.mubr.bf16.gmra.mrb[0].mxu0 %v7520
    %v7658 = vpop.f32.mrb[0].mxu0
    %v7659 = vadd.f32 0.0, %v7658
    %v7660 = vpop.f32.mrb[0].mxu0
    %v7661 = vadd.f32 0.0, %v7660
    %v7662 = vpop.f32.mrb[0].mxu0
    %v7663 = vadd.f32 0.0, %v7662
    %v7664 = vpop.f32.mrb[0].mxu0
    %v7665 = vadd.f32 0.0, %v7664
    %7666 = vmatprep.mubr.bf16.mxu0 %v7529
    %7667 = vmatmul.mubr.bf16.gmra.mrb[0].mxu0 %v7528
    %v7668 = vpop.f32.mrb[0].mxu0
    %v7669 = vadd.f32 0.0, %v7668
    %v7670 = vpop.f32.mrb[0].mxu0
    %v7671 = vadd.f32 0.0, %v7670
    %v7672 = vpop.f32.mrb[0].mxu0
    %v7673 = vadd.f32 0.0, %v7672
    %v7674 = vpop.f32.mrb[0].mxu0
    %v7675 = vadd.f32 0.0, %v7674
    %7676 = vdwg.mxu0
    %7677 = vmatprep.subr.bf16.mxu0 %v2334
    %7678 = vmatpush1.bf16.msra.mxu0 %v2333
    %7679 = vmatprep.subr.bf16.mxu0 %v2339
    %7680 = vmatpush1.bf16.msra.mxu0 %v2338
    %7681 = vmatprep.subr.bf16.mxu0 %v2344
    %7682 = vmatpush1.bf16.msra.mxu0 %v2343
    %7683 = vmatprep.subr.bf16.mxu0 %v2349
    %7684 = vmatpush1.bf16.msra.mxu0 %v2348
    %7685 = vmatprep.subr.bf16.mxu0 %v2354
    %7686 = vmatpush1.bf16.msra.mxu0 %v2353
    %7687 = vmatprep.subr.bf16.mxu0 %v2359
    %7688 = vmatpush1.bf16.msra.mxu0 %v2358
    %7689 = vmatprep.subr.bf16.mxu0 %v2364
    %7690 = vmatpush1.bf16.msra.mxu0 %v2363
    %7691 = vmatprep.subr.bf16.mxu0 %v2369
    %7692 = vmatpush1.bf16.msra.mxu0 %v2368
    %7693 = vmatprep.subr.bf16.mxu0 %v2374
    %7694 = vmatpush1.bf16.msra.mxu0 %v2373
    %7695 = vmatprep.subr.bf16.mxu0 %v2379
    %7696 = vmatpush1.bf16.msra.mxu0 %v2378
    %7697 = vmatprep.subr.bf16.mxu0 %v2384
    %7698 = vmatpush1.bf16.msra.mxu0 %v2383
    %7699 = vmatprep.subr.bf16.mxu0 %v2389
    %7700 = vmatpush1.bf16.msra.mxu0 %v2388
    %7701 = vmatprep.subr.bf16.mxu0 %v2394
    %7702 = vmatpush1.bf16.msra.mxu0 %v2393
    %7703 = vmatprep.subr.bf16.mxu0 %v2399
    %7704 = vmatpush1.bf16.msra.mxu0 %v2398
    %7705 = vmatprep.subr.bf16.mxu0 %v2404
    %7706 = vmatpush1.bf16.msra.mxu0 %v2403
    %7707 = vmatprep.subr.bf16.mxu0 %v2409
    %7708 = vmatpush1.bf16.msra.mxu0 %v2408
    %7709 = vmatprep.mubr.bf16.mxu0 %v7491
    %7710 = vmatmul.mubr.bf16.gmra.mrb[0].mxu0 %v7490
    %v7711 = vpop.f32.mrb[0].mxu0
    %v7712 = vadd.f32 %v7619, %v7711
    %v7713 = vpop.f32.mrb[0].mxu0
    %v7714 = vadd.f32 %v7621, %v7713
    %v7715 = vpop.f32.mrb[0].mxu0
    %v7716 = vadd.f32 %v7623, %v7715
    %v7717 = vpop.f32.mrb[0].mxu0
    %v7718 = vadd.f32 %v7625, %v7717
    %7719 = vmatprep.mubr.bf16.mxu0 %v7499
    %7720 = vmatmul.mubr.bf16.gmra.mrb[0].mxu0 %v7498
    %v7721 = vpop.f32.mrb[0].mxu0
    %v7722 = vadd.f32 %v7629, %v7721
    %v7723 = vpop.f32.mrb[0].mxu0
    %v7724 = vadd.f32 %v7631, %v7723
    %v7725 = vpop.f32.mrb[0].mxu0
    %v7726 = vadd.f32 %v7633, %v7725
    %v7727 = vpop.f32.mrb[0].mxu0
    %v7728 = vadd.f32 %v7635, %v7727
    %7729 = vmatprep.mubr.bf16.mxu0 %v7507
    %7730 = vmatmul.mubr.bf16.gmra.mrb[0].mxu0 %v7506
    %v7731 = vpop.f32.mrb[0].mxu0
    %v7732 = vadd.f32 %v7639, %v7731
    %v7733 = vpop.f32.mrb[0].mxu0
    %v7734 = vadd.f32 %v7641, %v7733
    %v7735 = vpop.f32.mrb[0].mxu0
    %v7736 = vadd.f32 %v7643, %v7735
    %v7737 = vpop.f32.mrb[0].mxu0
    %v7738 = vadd.f32 %v7645, %v7737
    %7739 = vmatprep.mubr.bf16.mxu0 %v7515
    %7740 = vmatmul.mubr.bf16.gmra.mrb[0].mxu0 %v7514
    %v7741 = vpop.f32.mrb[0].mxu0
    %v7742 = vadd.f32 %v7649, %v7741
    %v7743 = vpop.f32.mrb[0].mxu0
    %v7744 = vadd.f32 %v7651, %v7743
    %v7745 = vpop.f32.mrb[0].mxu0
    %v7746 = vadd.f32 %v7653, %v7745
    %v7747 = vpop.f32.mrb[0].mxu0
    %v7748 = vadd.f32 %v7655, %v7747
    %7749 = vmatprep.mubr.bf16.mxu0 %v7523
    %7750 = vmatmul.mubr.bf16.gmra.mrb[0].mxu0 %v7522
    %v7751 = vpop.f32.mrb[0].mxu0
    %v7752 = vadd.f32 %v7659, %v7751
    %v7753 = vpop.f32.mrb[0].mxu0
    %v7754 = vadd.f32 %v7661, %v7753
    %v7755 = vpop.f32.mrb[0].mxu0
    %v7756 = vadd.f32 %v7663, %v7755
    %v7757 = vpop.f32.mrb[0].mxu0
    %v7758 = vadd.f32 %v7665, %v7757
    %7759 = vmatprep.mubr.bf16.mxu0 %v7531
    %7760 = vmatmul.mubr.bf16.gmra.mrb[0].mxu0 %v7530
    %v7761 = vpop.f32.mrb[0].mxu0
    %v7762 = vadd.f32 %v7669, %v7761
    %v7763 = vpop.f32.mrb[0].mxu0
    %v7764 = vadd.f32 %v7671, %v7763
    %v7765 = vpop.f32.mrb[0].mxu0
    %v7766 = vadd.f32 %v7673, %v7765
    %v7767 = vpop.f32.mrb[0].mxu0
    %v7768 = vadd.f32 %v7675, %v7767
    %7769 = vdwg.mxu0
    %7770 = vmatprep.subr.bf16.mxu0 %v2414
    %7771 = vmatpush1.bf16.msra.mxu0 %v2413
    %7772 = vmatprep.subr.bf16.mxu0 %v2419
    %7773 = vmatpush1.bf16.msra.mxu0 %v2418
    %7774 = vmatprep.subr.bf16.mxu0 %v2424
    %7775 = vmatpush1.bf16.msra.mxu0 %v2423
    %7776 = vmatprep.subr.bf16.mxu0 %v2429
    %7777 = vmatpush1.bf16.msra.mxu0 %v2428
    %7778 = vmatprep.subr.bf16.mxu0 %v2434
    %7779 = vmatpush1.bf16.msra.mxu0 %v2433
    %7780 = vmatprep.subr.bf16.mxu0 %v2439
    %7781 = vmatpush1.bf16.msra.mxu0 %v2438
    %7782 = vmatprep.subr.bf16.mxu0 %v2444
    %7783 = vmatpush1.bf16.msra.mxu0 %v2443
    %7784 = vmatprep.subr.bf16.mxu0 %v2449
    %7785 = vmatpush1.bf16.msra.mxu0 %v2448
    %7786 = vmatprep.subr.bf16.mxu0 %v2454
    %7787 = vmatpush1.bf16.msra.mxu0 %v2453
    %7788 = vmatprep.subr.bf16.mxu0 %v2459
    %7789 = vmatpush1.bf16.msra.mxu0 %v2458
    %7790 = vmatprep.subr.bf16.mxu0 %v2464
    %7791 = vmatpush1.bf16.msra.mxu0 %v2463
    %7792 = vmatprep.subr.bf16.mxu0 %v2469
    %7793 = vmatpush1.bf16.msra.mxu0 %v2468
    %7794 = vmatprep.subr.bf16.mxu0 %v2474
    %7795 = vmatpush1.bf16.msra.mxu0 %v2473
    %7796 = vmatprep.subr.bf16.mxu0 %v2479
    %7797 = vmatpush1.bf16.msra.mxu0 %v2478
    %7798 = vmatprep.subr.bf16.mxu0 %v2484
    %7799 = vmatpush1.bf16.msra.mxu0 %v2483
    %7800 = vmatprep.subr.bf16.mxu0 %v2489
    %7801 = vmatpush1.bf16.msra.mxu0 %v2488
    %7802 = vmatprep.mubr.bf16.mxu0 %v7493
    %7803 = vmatmul.mubr.bf16.gmra.mrb[0].mxu0 %v7492
    %v7804 = vpop.f32.mrb[0].mxu0
    %v7805 = vadd.f32 %v7712, %v7804
    %v7806 = vpop.f32.mrb[0].mxu0
    %v7807 = vadd.f32 %v7714, %v7806
    %v7808 = vpop.f32.mrb[0].mxu0
    %v7809 = vadd.f32 %v7716, %v7808
    %v7810 = vpop.f32.mrb[0].mxu0
    %v7811 = vadd.f32 %v7718, %v7810
    %7812 = vmatprep.mubr.bf16.mxu0 %v7501
    %7813 = vmatmul.mubr.bf16.gmra.mrb[0].mxu0 %v7500
    %v7814 = vpop.f32.mrb[0].mxu0
    %v7815 = vadd.f32 %v7722, %v7814
    %v7816 = vpop.f32.mrb[0].mxu0
    %v7817 = vadd.f32 %v7724, %v7816
    %v7818 = vpop.f32.mrb[0].mxu0
    %v7819 = vadd.f32 %v7726, %v7818
    %v7820 = vpop.f32.mrb[0].mxu0
    %v7821 = vadd.f32 %v7728, %v7820
    %7822 = vmatprep.mubr.bf16.mxu0 %v7509
    %7823 = vmatmul.mubr.bf16.gmra.mrb[0].mxu0 %v7508
    %v7824 = vpop.f32.mrb[0].mxu0
    %v7825 = vadd.f32 %v7732, %v7824
    %v7826 = vpop.f32.mrb[0].mxu0
    %v7827 = vadd.f32 %v7734, %v7826
    %v7828 = vpop.f32.mrb[0].mxu0
    %v7829 = vadd.f32 %v7736, %v7828
    %v7830 = vpop.f32.mrb[0].mxu0
    %v7831 = vadd.f32 %v7738, %v7830
    %7832 = vmatprep.mubr.bf16.mxu0 %v7517
    %7833 = vmatmul.mubr.bf16.gmra.mrb[0].mxu0 %v7516
    %v7834 = vpop.f32.mrb[0].mxu0
    %v7835 = vadd.f32 %v7742, %v7834
    %v7836 = vpop.f32.mrb[0].mxu0
    %v7837 = vadd.f32 %v7744, %v7836
    %v7838 = vpop.f32.mrb[0].mxu0
    %v7839 = vadd.f32 %v7746, %v7838
    %v7840 = vpop.f32.mrb[0].mxu0
    %v7841 = vadd.f32 %v7748, %v7840
    %7842 = vmatprep.mubr.bf16.mxu0 %v7525
    %7843 = vmatmul.mubr.bf16.gmra.mrb[0].mxu0 %v7524
    %v7844 = vpop.f32.mrb[0].mxu0
    %v7845 = vadd.f32 %v7752, %v7844
    %v7846 = vpop.f32.mrb[0].mxu0
    %v7847 = vadd.f32 %v7754, %v7846
    %v7848 = vpop.f32.mrb[0].mxu0
    %v7849 = vadd.f32 %v7756, %v7848
    %v7850 = vpop.f32.mrb[0].mxu0
    %v7851 = vadd.f32 %v7758, %v7850
    %7852 = vmatprep.mubr.bf16.mxu0 %v7533
    %7853 = vmatmul.mubr.bf16.gmra.mrb[0].mxu0 %v7532
    %v7854 = vpop.f32.mrb[0].mxu0
    %v7855 = vadd.f32 %v7762, %v7854
    %v7856 = vpop.f32.mrb[0].mxu0
    %v7857 = vadd.f32 %v7764, %v7856
    %v7858 = vpop.f32.mrb[0].mxu0
    %v7859 = vadd.f32 %v7766, %v7858
    %v7860 = vpop.f32.mrb[0].mxu0
    %v7861 = vadd.f32 %v7768, %v7860
    %7862 = vdwg.mxu0
    %7863 = vmatprep.subr.bf16.mxu0 %v2494
    %7864 = vmatpush1.bf16.msra.mxu0 %v2493
    %7865 = vmatprep.subr.bf16.mxu0 %v2499
    %7866 = vmatpush1.bf16.msra.mxu0 %v2498
    %7867 = vmatprep.subr.bf16.mxu0 %v2504
    %7868 = vmatpush1.bf16.msra.mxu0 %v2503
    %7869 = vmatprep.subr.bf16.mxu0 %v2509
    %7870 = vmatpush1.bf16.msra.mxu0 %v2508
    %7871 = vmatprep.subr.bf16.mxu0 %v2514
    %7872 = vmatpush1.bf16.msra.mxu0 %v2513
    %7873 = vmatprep.subr.bf16.mxu0 %v2519
    %7874 = vmatpush1.bf16.msra.mxu0 %v2518
    %7875 = vmatprep.subr.bf16.mxu0 %v2524
    %7876 = vmatpush1.bf16.msra.mxu0 %v2523
    %7877 = vmatprep.subr.bf16.mxu0 %v2529
    %7878 = vmatpush1.bf16.msra.mxu0 %v2528
    %7879 = vmatprep.subr.bf16.mxu0 %v2534
    %7880 = vmatpush1.bf16.msra.mxu0 %v2533
    %7881 = vmatprep.subr.bf16.mxu0 %v2539
    %7882 = vmatpush1.bf16.msra.mxu0 %v2538
    %7883 = vmatprep.subr.bf16.mxu0 %v2544
    %7884 = vmatpush1.bf16.msra.mxu0 %v2543
    %7885 = vmatprep.subr.bf16.mxu0 %v2549
    %7886 = vmatpush1.bf16.msra.mxu0 %v2548
    %7887 = vmatprep.subr.bf16.mxu0 %v2554
    %7888 = vmatpush1.bf16.msra.mxu0 %v2553
    %7889 = vmatprep.subr.bf16.mxu0 %v2559
    %7890 = vmatpush1.bf16.msra.mxu0 %v2558
    %7891 = vmatprep.subr.bf16.mxu0 %v2564
    %7892 = vmatpush1.bf16.msra.mxu0 %v2563
    %7893 = vmatprep.subr.bf16.mxu0 %v2569
    %7894 = vmatpush1.bf16.msra.mxu0 %v2568
    %7895 = vmatprep.mubr.bf16.mxu0 %v7495
    %7896 = vmatmul.mubr.bf16.gmra.mrb[0].mxu0 %v7494
    %v7897 = vpop.f32.mrb[0].mxu0
    %v7898 = vadd.f32 %v7805, %v7897
    %v7899 = vpop.f32.mrb[0].mxu0
    %v7900 = vadd.f32 %v7807, %v7899
    %v7901 = vpop.f32.mrb[0].mxu0
    %v7902 = vadd.f32 %v7809, %v7901
    %v7903 = vpop.f32.mrb[0].mxu0
    %v7904 = vadd.f32 %v7811, %v7903
    %7905 = vmatprep.mubr.bf16.mxu0 %v7503
    %7906 = vmatmul.mubr.bf16.gmra.mrb[0].mxu0 %v7502
    %v7907 = vpop.f32.mrb[0].mxu0
    %v7908 = vadd.f32 %v7815, %v7907
    %v7909 = vpop.f32.mrb[0].mxu0
    %v7910 = vadd.f32 %v7817, %v7909
    %v7911 = vpop.f32.mrb[0].mxu0
    %v7912 = vadd.f32 %v7819, %v7911
    %v7913 = vpop.f32.mrb[0].mxu0
    %v7914 = vadd.f32 %v7821, %v7913
    %7915 = vmatprep.mubr.bf16.mxu0 %v7511
    %7916 = vmatmul.mubr.bf16.gmra.mrb[0].mxu0 %v7510
    %v7917 = vpop.f32.mrb[0].mxu0
    %v7918 = vadd.f32 %v7825, %v7917
    %v7919 = vpop.f32.mrb[0].mxu0
    %v7920 = vadd.f32 %v7827, %v7919
    %v7921 = vpop.f32.mrb[0].mxu0
    %v7922 = vadd.f32 %v7829, %v7921
    %v7923 = vpop.f32.mrb[0].mxu0
    %v7924 = vadd.f32 %v7831, %v7923
    %7925 = vmatprep.mubr.bf16.mxu0 %v7519
    %7926 = vmatmul.mubr.bf16.gmra.mrb[0].mxu0 %v7518
    %v7927 = vpop.f32.mrb[0].mxu0
    %v7928 = vadd.f32 %v7835, %v7927
    %v7929 = vpop.f32.mrb[0].mxu0
    %v7930 = vadd.f32 %v7837, %v7929
    %v7931 = vpop.f32.mrb[0].mxu0
    %v7932 = vadd.f32 %v7839, %v7931
    %v7933 = vpop.f32.mrb[0].mxu0
    %v7934 = vadd.f32 %v7841, %v7933
    %7935 = vmatprep.mubr.bf16.mxu0 %v7527
    %7936 = vmatmul.mubr.bf16.gmra.mrb[0].mxu0 %v7526
    %v7937 = vpop.f32.mrb[0].mxu0
    %v7938 = vadd.f32 %v7845, %v7937
    %v7939 = vpop.f32.mrb[0].mxu0
    %v7940 = vadd.f32 %v7847, %v7939
    %v7941 = vpop.f32.mrb[0].mxu0
    %v7942 = vadd.f32 %v7849, %v7941
    %v7943 = vpop.f32.mrb[0].mxu0
    %v7944 = vadd.f32 %v7851, %v7943
    %7945 = vmatprep.mubr.bf16.mxu0 %v7535
    %7946 = vmatmul.mubr.bf16.gmra.mrb[0].mxu0 %v7534
    %v7947 = vpop.f32.mrb[0].mxu0
    %v7948 = vadd.f32 %v7855, %v7947
    %v7949 = vpop.f32.mrb[0].mxu0
    %v7950 = vadd.f32 %v7857, %v7949
    %v7951 = vpop.f32.mrb[0].mxu0
    %v7952 = vadd.f32 %v7859, %v7951
    %v7953 = vpop.f32.mrb[0].mxu0
    %v7954 = vadd.f32 %v7861, %v7953
    %7955 = vdwg.mxu0
    %7956 = vmatprep.subr.bf16.mxu0 %v2256
    %7957 = vmatpush1.bf16.msra.mxu0 %v2255
    %7958 = vmatprep.subr.bf16.mxu0 %v2261
    %7959 = vmatpush1.bf16.msra.mxu0 %v2260
    %7960 = vmatprep.subr.bf16.mxu0 %v2266
    %7961 = vmatpush1.bf16.msra.mxu0 %v2265
    %7962 = vmatprep.subr.bf16.mxu0 %v2271
    %7963 = vmatpush1.bf16.msra.mxu0 %v2270
    %7964 = vmatprep.subr.bf16.mxu0 %v2276
    %7965 = vmatpush1.bf16.msra.mxu0 %v2275
    %7966 = vmatprep.subr.bf16.mxu0 %v2281
    %7967 = vmatpush1.bf16.msra.mxu0 %v2280
    %7968 = vmatprep.subr.bf16.mxu0 %v2286
    %7969 = vmatpush1.bf16.msra.mxu0 %v2285
    %7970 = vmatprep.subr.bf16.mxu0 %v2291
    %7971 = vmatpush1.bf16.msra.mxu0 %v2290
    %7972 = vmatprep.subr.bf16.mxu0 %v2296
    %7973 = vmatpush1.bf16.msra.mxu0 %v2295
    %7974 = vmatprep.subr.bf16.mxu0 %v2301
    %7975 = vmatpush1.bf16.msra.mxu0 %v2300
    %7976 = vmatprep.subr.bf16.mxu0 %v2306
    %7977 = vmatpush1.bf16.msra.mxu0 %v2305
    %7978 = vmatprep.subr.bf16.mxu0 %v2311
    %7979 = vmatpush1.bf16.msra.mxu0 %v2310
    %7980 = vmatprep.subr.bf16.mxu0 %v2316
    %7981 = vmatpush1.bf16.msra.mxu0 %v2315
    %7982 = vmatprep.subr.bf16.mxu0 %v2321
    %7983 = vmatpush1.bf16.msra.mxu0 %v2320
    %7984 = vmatprep.subr.bf16.mxu0 %v2326
    %7985 = vmatpush1.bf16.msra.mxu0 %v2325
    %7986 = vmatprep.subr.bf16.mxu0 %v2331
    %7987 = vmatpush1.bf16.msra.mxu0 %v2330
    %7988 = vmatprep.mubr.bf16.mxu0 %v7489
    %7989 = vmatmul.mubr.bf16.gmra.mrb[0].mxu0 %v7488
    %v7990 = vpop.f32.mrb[0].mxu0
    %v7991 = vadd.f32 0.0, %v7990
    %v7992 = vpop.f32.mrb[0].mxu0
    %v7993 = vadd.f32 0.0, %v7992
    %v7994 = vpop.f32.mrb[0].mxu0
    %v7995 = vadd.f32 0.0, %v7994
    %v7996 = vpop.f32.mrb[0].mxu0
    %v7997 = vadd.f32 0.0, %v7996
    %7998 = vmatprep.mubr.bf16.mxu0 %v7497
    %7999 = vmatmul.mubr.bf16.gmra.mrb[0].mxu0 %v7496
    %v8000 = vpop.f32.mrb[0].mxu0
    %v8001 = vadd.f32 0.0, %v8000
    %v8002 = vpop.f32.mrb[0].mxu0
    %v8003 = vadd.f32 0.0, %v8002
    %v8004 = vpop.f32.mrb[0].mxu0
    %v8005 = vadd.f32 0.0, %v8004
    %v8006 = vpop.f32.mrb[0].mxu0
    %v8007 = vadd.f32 0.0, %v8006
    %8008 = vmatprep.mubr.bf16.mxu0 %v7505
    %8009 = vmatmul.mubr.bf16.gmra.mrb[0].mxu0 %v7504
    %v8010 = vpop.f32.mrb[0].mxu0
    %v8011 = vadd.f32 0.0, %v8010
    %v8012 = vpop.f32.mrb[0].mxu0
    %v8013 = vadd.f32 0.0, %v8012
    %v8014 = vpop.f32.mrb[0].mxu0
    %v8015 = vadd.f32 0.0, %v8014
    %v8016 = vpop.f32.mrb[0].mxu0
    %v8017 = vadd.f32 0.0, %v8016
    %8018 = vmatprep.mubr.bf16.mxu0 %v7513
    %8019 = vmatmul.mubr.bf16.gmra.mrb[0].mxu0 %v7512
    %v8020 = vpop.f32.mrb[0].mxu0
    %v8021 = vadd.f32 0.0, %v8020
    %v8022 = vpop.f32.mrb[0].mxu0
    %v8023 = vadd.f32 0.0, %v8022
    %v8024 = vpop.f32.mrb[0].mxu0
    %v8025 = vadd.f32 0.0, %v8024
    %v8026 = vpop.f32.mrb[0].mxu0
    %v8027 = vadd.f32 0.0, %v8026
    %8028 = vmatprep.mubr.bf16.mxu0 %v7521
    %8029 = vmatmul.mubr.bf16.gmra.mrb[0].mxu0 %v7520
    %v8030 = vpop.f32.mrb[0].mxu0
    %v8031 = vadd.f32 0.0, %v8030
    %v8032 = vpop.f32.mrb[0].mxu0
    %v8033 = vadd.f32 0.0, %v8032
    %v8034 = vpop.f32.mrb[0].mxu0
    %v8035 = vadd.f32 0.0, %v8034
    %v8036 = vpop.f32.mrb[0].mxu0
    %v8037 = vadd.f32 0.0, %v8036
    %8038 = vmatprep.mubr.bf16.mxu0 %v7529
    %8039 = vmatmul.mubr.bf16.gmra.mrb[0].mxu0 %v7528
    %v8040 = vpop.f32.mrb[0].mxu0
    %v8041 = vadd.f32 0.0, %v8040
    %v8042 = vpop.f32.mrb[0].mxu0
    %v8043 = vadd.f32 0.0, %v8042
    %v8044 = vpop.f32.mrb[0].mxu0
    %v8045 = vadd.f32 0.0, %v8044
    %v8046 = vpop.f32.mrb[0].mxu0
    %v8047 = vadd.f32 0.0, %v8046
    %8048 = vdwg.mxu0
    %8049 = vmatprep.subr.bf16.mxu0 %v2336
    %8050 = vmatpush1.bf16.msra.mxu0 %v2335
    %8051 = vmatprep.subr.bf16.mxu0 %v2341
    %8052 = vmatpush1.bf16.msra.mxu0 %v2340
    %8053 = vmatprep.subr.bf16.mxu0 %v2346
    %8054 = vmatpush1.bf16.msra.mxu0 %v2345
    %8055 = vmatprep.subr.bf16.mxu0 %v2351
    %8056 = vmatpush1.bf16.msra.mxu0 %v2350
    %8057 = vmatprep.subr.bf16.mxu0 %v2356
    %8058 = vmatpush1.bf16.msra.mxu0 %v2355
    %8059 = vmatprep.subr.bf16.mxu0 %v2361
    %8060 = vmatpush1.bf16.msra.mxu0 %v2360
    %8061 = vmatprep.subr.bf16.mxu0 %v2366
    %8062 = vmatpush1.bf16.msra.mxu0 %v2365
    %8063 = vmatprep.subr.bf16.mxu0 %v2371
    %8064 = vmatpush1.bf16.msra.mxu0 %v2370
    %8065 = vmatprep.subr.bf16.mxu0 %v2376
    %8066 = vmatpush1.bf16.msra.mxu0 %v2375
    %8067 = vmatprep.subr.bf16.mxu0 %v2381
    %8068 = vmatpush1.bf16.msra.mxu0 %v2380
    %8069 = vmatprep.subr.bf16.mxu0 %v2386
    %8070 = vmatpush1.bf16.msra.mxu0 %v2385
    %8071 = vmatprep.subr.bf16.mxu0 %v2391
    %8072 = vmatpush1.bf16.msra.mxu0 %v2390
    %8073 = vmatprep.subr.bf16.mxu0 %v2396
    %8074 = vmatpush1.bf16.msra.mxu0 %v2395
    %8075 = vmatprep.subr.bf16.mxu0 %v2401
    %8076 = vmatpush1.bf16.msra.mxu0 %v2400
    %8077 = vmatprep.subr.bf16.mxu0 %v2406
    %8078 = vmatpush1.bf16.msra.mxu0 %v2405
    %8079 = vmatprep.subr.bf16.mxu0 %v2411
    %8080 = vmatpush1.bf16.msra.mxu0 %v2410
    %8081 = vmatprep.mubr.bf16.mxu0 %v7491
    %8082 = vmatmul.mubr.bf16.gmra.mrb[0].mxu0 %v7490
    %v8083 = vpop.f32.mrb[0].mxu0
    %v8084 = vadd.f32 %v7991, %v8083
    %v8085 = vpop.f32.mrb[0].mxu0
    %v8086 = vadd.f32 %v7993, %v8085
    %v8087 = vpop.f32.mrb[0].mxu0
    %v8088 = vadd.f32 %v7995, %v8087
    %v8089 = vpop.f32.mrb[0].mxu0
    %v8090 = vadd.f32 %v7997, %v8089
    %8091 = vmatprep.mubr.bf16.mxu0 %v7499
    %8092 = vmatmul.mubr.bf16.gmra.mrb[0].mxu0 %v7498
    %v8093 = vpop.f32.mrb[0].mxu0
    %v8094 = vadd.f32 %v8001, %v8093
    %v8095 = vpop.f32.mrb[0].mxu0
    %v8096 = vadd.f32 %v8003, %v8095
    %v8097 = vpop.f32.mrb[0].mxu0
    %v8098 = vadd.f32 %v8005, %v8097
    %v8099 = vpop.f32.mrb[0].mxu0
    %v8100 = vadd.f32 %v8007, %v8099
    %8101 = vmatprep.mubr.bf16.mxu0 %v7507
    %8102 = vmatmul.mubr.bf16.gmra.mrb[0].mxu0 %v7506
    %v8103 = vpop.f32.mrb[0].mxu0
    %v8104 = vadd.f32 %v8011, %v8103
    %v8105 = vpop.f32.mrb[0].mxu0
    %v8106 = vadd.f32 %v8013, %v8105
    %v8107 = vpop.f32.mrb[0].mxu0
    %v8108 = vadd.f32 %v8015, %v8107
    %v8109 = vpop.f32.mrb[0].mxu0
    %v8110 = vadd.f32 %v8017, %v8109
    %8111 = vmatprep.mubr.bf16.mxu0 %v7515
    %8112 = vmatmul.mubr.bf16.gmra.mrb[0].mxu0 %v7514
    %v8113 = vpop.f32.mrb[0].mxu0
    %v8114 = vadd.f32 %v8021, %v8113
    %v8115 = vpop.f32.mrb[0].mxu0
    %v8116 = vadd.f32 %v8023, %v8115
    %v8117 = vpop.f32.mrb[0].mxu0
    %v8118 = vadd.f32 %v8025, %v8117
    %v8119 = vpop.f32.mrb[0].mxu0
    %v8120 = vadd.f32 %v8027, %v8119
    %8121 = vmatprep.mubr.bf16.mxu0 %v7523
    %8122 = vmatmul.mubr.bf16.gmra.mrb[0].mxu0 %v7522
    %v8123 = vpop.f32.mrb[0].mxu0
    %v8124 = vadd.f32 %v8031, %v8123
    %v8125 = vpop.f32.mrb[0].mxu0
    %v8126 = vadd.f32 %v8033, %v8125
    %v8127 = vpop.f32.mrb[0].mxu0
    %v8128 = vadd.f32 %v8035, %v8127
    %v8129 = vpop.f32.mrb[0].mxu0
    %v8130 = vadd.f32 %v8037, %v8129
    %8131 = vmatprep.mubr.bf16.mxu0 %v7531
    %8132 = vmatmul.mubr.bf16.gmra.mrb[0].mxu0 %v7530
    %v8133 = vpop.f32.mrb[0].mxu0
    %v8134 = vadd.f32 %v8041, %v8133
    %v8135 = vpop.f32.mrb[0].mxu0
    %v8136 = vadd.f32 %v8043, %v8135
    %v8137 = vpop.f32.mrb[0].mxu0
    %v8138 = vadd.f32 %v8045, %v8137
    %v8139 = vpop.f32.mrb[0].mxu0
    %v8140 = vadd.f32 %v8047, %v8139
    %8141 = vdwg.mxu0
    %8142 = vmatprep.subr.bf16.mxu0 %v2416
    %8143 = vmatpush1.bf16.msra.mxu0 %v2415
    %8144 = vmatprep.subr.bf16.mxu0 %v2421
    %8145 = vmatpush1.bf16.msra.mxu0 %v2420
    %8146 = vmatprep.subr.bf16.mxu0 %v2426
    %8147 = vmatpush1.bf16.msra.mxu0 %v2425
    %8148 = vmatprep.subr.bf16.mxu0 %v2431
    %8149 = vmatpush1.bf16.msra.mxu0 %v2430
    %8150 = vmatprep.subr.bf16.mxu0 %v2436
    %8151 = vmatpush1.bf16.msra.mxu0 %v2435
    %8152 = vmatprep.subr.bf16.mxu0 %v2441
    %8153 = vmatpush1.bf16.msra.mxu0 %v2440
    %8154 = vmatprep.subr.bf16.mxu0 %v2446
    %8155 = vmatpush1.bf16.msra.mxu0 %v2445
    %8156 = vmatprep.subr.bf16.mxu0 %v2451
    %8157 = vmatpush1.bf16.msra.mxu0 %v2450
    %8158 = vmatprep.subr.bf16.mxu0 %v2456
    %8159 = vmatpush1.bf16.msra.mxu0 %v2455
    %8160 = vmatprep.subr.bf16.mxu0 %v2461
    %8161 = vmatpush1.bf16.msra.mxu0 %v2460
    %8162 = vmatprep.subr.bf16.mxu0 %v2466
    %8163 = vmatpush1.bf16.msra.mxu0 %v2465
    %8164 = vmatprep.subr.bf16.mxu0 %v2471
    %8165 = vmatpush1.bf16.msra.mxu0 %v2470
    %8166 = vmatprep.subr.bf16.mxu0 %v2476
    %8167 = vmatpush1.bf16.msra.mxu0 %v2475
    %8168 = vmatprep.subr.bf16.mxu0 %v2481
    %8169 = vmatpush1.bf16.msra.mxu0 %v2480
    %8170 = vmatprep.subr.bf16.mxu0 %v2486
    %8171 = vmatpush1.bf16.msra.mxu0 %v2485
    %8172 = vmatprep.subr.bf16.mxu0 %v2491
    %8173 = vmatpush1.bf16.msra.mxu0 %v2490
    %8174 = vmatprep.mubr.bf16.mxu0 %v7493
    %8175 = vmatmul.mubr.bf16.gmra.mrb[0].mxu0 %v7492
    %v8176 = vpop.f32.mrb[0].mxu0
    %v8177 = vadd.f32 %v8084, %v8176
    %v8178 = vpop.f32.mrb[0].mxu0
    %v8179 = vadd.f32 %v8086, %v8178
    %v8180 = vpop.f32.mrb[0].mxu0
    %v8181 = vadd.f32 %v8088, %v8180
    %v8182 = vpop.f32.mrb[0].mxu0
    %v8183 = vadd.f32 %v8090, %v8182
    %8184 = vmatprep.mubr.bf16.mxu0 %v7501
    %8185 = vmatmul.mubr.bf16.gmra.mrb[0].mxu0 %v7500
    %v8186 = vpop.f32.mrb[0].mxu0
    %v8187 = vadd.f32 %v8094, %v8186
    %v8188 = vpop.f32.mrb[0].mxu0
    %v8189 = vadd.f32 %v8096, %v8188
    %v8190 = vpop.f32.mrb[0].mxu0
    %v8191 = vadd.f32 %v8098, %v8190
    %v8192 = vpop.f32.mrb[0].mxu0
    %v8193 = vadd.f32 %v8100, %v8192
    %8194 = vmatprep.mubr.bf16.mxu0 %v7509
    %8195 = vmatmul.mubr.bf16.gmra.mrb[0].mxu0 %v7508
    %v8196 = vpop.f32.mrb[0].mxu0
    %v8197 = vadd.f32 %v8104, %v8196
    %v8198 = vpop.f32.mrb[0].mxu0
    %v8199 = vadd.f32 %v8106, %v8198
    %v8200 = vpop.f32.mrb[0].mxu0
    %v8201 = vadd.f32 %v8108, %v8200
    %v8202 = vpop.f32.mrb[0].mxu0
    %v8203 = vadd.f32 %v8110, %v8202
    %8204 = vmatprep.mubr.bf16.mxu0 %v7517
    %8205 = vmatmul.mubr.bf16.gmra.mrb[0].mxu0 %v7516
    %v8206 = vpop.f32.mrb[0].mxu0
    %v8207 = vadd.f32 %v8114, %v8206
    %v8208 = vpop.f32.mrb[0].mxu0
    %v8209 = vadd.f32 %v8116, %v8208
    %v8210 = vpop.f32.mrb[0].mxu0
    %v8211 = vadd.f32 %v8118, %v8210
    %v8212 = vpop.f32.mrb[0].mxu0
    %v8213 = vadd.f32 %v8120, %v8212
    %8214 = vmatprep.mubr.bf16.mxu0 %v7525
    %8215 = vmatmul.mubr.bf16.gmra.mrb[0].mxu0 %v7524
    %v8216 = vpop.f32.mrb[0].mxu0
    %v8217 = vadd.f32 %v8124, %v8216
    %v8218 = vpop.f32.mrb[0].mxu0
    %v8219 = vadd.f32 %v8126, %v8218
    %v8220 = vpop.f32.mrb[0].mxu0
    %v8221 = vadd.f32 %v8128, %v8220
    %v8222 = vpop.f32.mrb[0].mxu0
    %v8223 = vadd.f32 %v8130, %v8222
    %8224 = vmatprep.mubr.bf16.mxu0 %v7533
    %8225 = vmatmul.mubr.bf16.gmra.mrb[0].mxu0 %v7532
    %v8226 = vpop.f32.mrb[0].mxu0
    %v8227 = vadd.f32 %v8134, %v8226
    %v8228 = vpop.f32.mrb[0].mxu0
    %v8229 = vadd.f32 %v8136, %v8228
    %v8230 = vpop.f32.mrb[0].mxu0
    %v8231 = vadd.f32 %v8138, %v8230
    %v8232 = vpop.f32.mrb[0].mxu0
    %v8233 = vadd.f32 %v8140, %v8232
    %8234 = vdwg.mxu0
    %8235 = vmatprep.subr.bf16.mxu0 %v2496
    %8236 = vmatpush1.bf16.msra.mxu0 %v2495
    %8237 = vmatprep.subr.bf16.mxu0 %v2501
    %8238 = vmatpush1.bf16.msra.mxu0 %v2500
    %8239 = vmatprep.subr.bf16.mxu0 %v2506
    %8240 = vmatpush1.bf16.msra.mxu0 %v2505
    %8241 = vmatprep.subr.bf16.mxu0 %v2511
    %8242 = vmatpush1.bf16.msra.mxu0 %v2510
    %8243 = vmatprep.subr.bf16.mxu0 %v2516
    %8244 = vmatpush1.bf16.msra.mxu0 %v2515
    %8245 = vmatprep.subr.bf16.mxu0 %v2521
    %8246 = vmatpush1.bf16.msra.mxu0 %v2520
    %8247 = vmatprep.subr.bf16.mxu0 %v2526
    %8248 = vmatpush1.bf16.msra.mxu0 %v2525
    %8249 = vmatprep.subr.bf16.mxu0 %v2531
    %8250 = vmatpush1.bf16.msra.mxu0 %v2530
    %8251 = vmatprep.subr.bf16.mxu0 %v2536
    %8252 = vmatpush1.bf16.msra.mxu0 %v2535
    %8253 = vmatprep.subr.bf16.mxu0 %v2541
    %8254 = vmatpush1.bf16.msra.mxu0 %v2540
    %8255 = vmatprep.subr.bf16.mxu0 %v2546
    %8256 = vmatpush1.bf16.msra.mxu0 %v2545
    %8257 = vmatprep.subr.bf16.mxu0 %v2551
    %8258 = vmatpush1.bf16.msra.mxu0 %v2550
    %8259 = vmatprep.subr.bf16.mxu0 %v2556
    %8260 = vmatpush1.bf16.msra.mxu0 %v2555
    %8261 = vmatprep.subr.bf16.mxu0 %v2561
    %8262 = vmatpush1.bf16.msra.mxu0 %v2560
    %8263 = vmatprep.subr.bf16.mxu0 %v2566
    %8264 = vmatpush1.bf16.msra.mxu0 %v2565
    %8265 = vmatprep.subr.bf16.mxu0 %v2571
    %8266 = vmatpush1.bf16.msra.mxu0 %v2570
    %8267 = vmatprep.mubr.bf16.mxu0 %v7495
    %8268 = vmatmul.mubr.bf16.gmra.mrb[0].mxu0 %v7494
    %v8269 = vpop.f32.mrb[0].mxu0
    %v8270 = vadd.f32 %v8177, %v8269
    %v8271 = vpop.f32.mrb[0].mxu0
    %v8272 = vadd.f32 %v8179, %v8271
    %v8273 = vpop.f32.mrb[0].mxu0
    %v8274 = vadd.f32 %v8181, %v8273
    %v8275 = vpop.f32.mrb[0].mxu0
    %v8276 = vadd.f32 %v8183, %v8275
    %8277 = vmatprep.mubr.bf16.mxu0 %v7503
    %8278 = vmatmul.mubr.bf16.gmra.mrb[0].mxu0 %v7502
    %v8279 = vpop.f32.mrb[0].mxu0
    %v8280 = vadd.f32 %v8187, %v8279
    %v8281 = vpop.f32.mrb[0].mxu0
    %v8282 = vadd.f32 %v8189, %v8281
    %v8283 = vpop.f32.mrb[0].mxu0
    %v8284 = vadd.f32 %v8191, %v8283
    %v8285 = vpop.f32.mrb[0].mxu0
    %v8286 = vadd.f32 %v8193, %v8285
    %8287 = vmatprep.mubr.bf16.mxu0 %v7511
    %8288 = vmatmul.mubr.bf16.gmra.mrb[0].mxu0 %v7510
    %v8289 = vpop.f32.mrb[0].mxu0
    %v8290 = vadd.f32 %v8197, %v8289
    %v8291 = vpop.f32.mrb[0].mxu0
    %v8292 = vadd.f32 %v8199, %v8291
    %v8293 = vpop.f32.mrb[0].mxu0
    %v8294 = vadd.f32 %v8201, %v8293
    %v8295 = vpop.f32.mrb[0].mxu0
    %v8296 = vadd.f32 %v8203, %v8295
    %8297 = vmatprep.mubr.bf16.mxu0 %v7519
    %8298 = vmatmul.mubr.bf16.gmra.mrb[0].mxu0 %v7518
    %v8299 = vpop.f32.mrb[0].mxu0
    %v8300 = vadd.f32 %v8207, %v8299
    %v8301 = vpop.f32.mrb[0].mxu0
    %v8302 = vadd.f32 %v8209, %v8301
    %v8303 = vpop.f32.mrb[0].mxu0
    %v8304 = vadd.f32 %v8211, %v8303
    %v8305 = vpop.f32.mrb[0].mxu0
    %v8306 = vadd.f32 %v8213, %v8305
    %8307 = vmatprep.mubr.bf16.mxu0 %v7527
    %8308 = vmatmul.mubr.bf16.gmra.mrb[0].mxu0 %v7526
    %v8309 = vpop.f32.mrb[0].mxu0
    %v8310 = vadd.f32 %v8217, %v8309
    %v8311 = vpop.f32.mrb[0].mxu0
    %v8312 = vadd.f32 %v8219, %v8311
    %v8313 = vpop.f32.mrb[0].mxu0
    %v8314 = vadd.f32 %v8221, %v8313
    %v8315 = vpop.f32.mrb[0].mxu0
    %v8316 = vadd.f32 %v8223, %v8315
    %8317 = vmatprep.mubr.bf16.mxu0 %v7535
    %8318 = vmatmul.mubr.bf16.gmra.mrb[0].mxu0 %v7534
    %v8319 = vpop.f32.mrb[0].mxu0
    %v8320 = vadd.f32 %v8227, %v8319
    %v8321 = vpop.f32.mrb[0].mxu0
    %v8322 = vadd.f32 %v8229, %v8321
    %v8323 = vpop.f32.mrb[0].mxu0
    %v8324 = vadd.f32 %v8231, %v8323
    %v8325 = vpop.f32.mrb[0].mxu0
    %v8326 = vadd.f32 %v8233, %v8325
    %8327 = vdwg.mxu0
    %8328 = vmatprep.subr.bf16.mxu0 0
    %8329 = vmatpush1.bf16.msra.mxu0 %v2257
    %8330 = vmatprep.subr.bf16.mxu0 0
    %8331 = vmatpush1.bf16.msra.mxu0 %v2262
    %8332 = vmatprep.subr.bf16.mxu0 0
    %8333 = vmatpush1.bf16.msra.mxu0 %v2267
    %8334 = vmatprep.subr.bf16.mxu0 0
    %8335 = vmatpush1.bf16.msra.mxu0 %v2272
    %8336 = vmatprep.subr.bf16.mxu0 0
    %8337 = vmatpush1.bf16.msra.mxu0 %v2277
    %8338 = vmatprep.subr.bf16.mxu0 0
    %8339 = vmatpush1.bf16.msra.mxu0 %v2282
    %8340 = vmatprep.subr.bf16.mxu0 0
    %8341 = vmatpush1.bf16.msra.mxu0 %v2287
    %8342 = vmatprep.subr.bf16.mxu0 0
    %8343 = vmatpush1.bf16.msra.mxu0 %v2292
    %8344 = vmatprep.subr.bf16.mxu0 0
    %8345 = vmatpush1.bf16.msra.mxu0 %v2297
    %8346 = vmatprep.subr.bf16.mxu0 0
    %8347 = vmatpush1.bf16.msra.mxu0 %v2302
    %8348 = vmatprep.subr.bf16.mxu0 0
    %8349 = vmatpush1.bf16.msra.mxu0 %v2307
    %8350 = vmatprep.subr.bf16.mxu0 0
    %8351 = vmatpush1.bf16.msra.mxu0 %v2312
    %8352 = vmatprep.subr.bf16.mxu0 0
    %8353 = vmatpush1.bf16.msra.mxu0 %v2317
    %8354 = vmatprep.subr.bf16.mxu0 0
    %8355 = vmatpush1.bf16.msra.mxu0 %v2322
    %8356 = vmatprep.subr.bf16.mxu0 0
    %8357 = vmatpush1.bf16.msra.mxu0 %v2327
    %8358 = vmatprep.subr.bf16.mxu0 0
    %8359 = vmatpush1.bf16.msra.mxu0 %v2332
    %8360 = vmatprep.mubr.bf16.mxu0 %v7489
    %8361 = vmatmul.mubr.bf16.gmra.mrb[0].mxu0 %v7488
    %v8362 = vpop.f32.mrb[0].mxu0
    %v8363 = vadd.f32 0.0, %v8362
    %v8364 = vpop.f32.mrb[0].mxu0
    %v8365 = vpop.f32.mrb[0].mxu0
    %v8366 = vadd.f32 0.0, %v8365
    %v8367 = vpop.f32.mrb[0].mxu0
    %8368 = vmatprep.mubr.bf16.mxu0 %v7497
    %8369 = vmatmul.mubr.bf16.gmra.mrb[0].mxu0 %v7496
    %v8370 = vpop.f32.mrb[0].mxu0
    %v8371 = vadd.f32 0.0, %v8370
    %v8372 = vpop.f32.mrb[0].mxu0
    %v8373 = vpop.f32.mrb[0].mxu0
    %v8374 = vadd.f32 0.0, %v8373
    %v8375 = vpop.f32.mrb[0].mxu0
    %8376 = vmatprep.mubr.bf16.mxu0 %v7505
    %8377 = vmatmul.mubr.bf16.gmra.mrb[0].mxu0 %v7504
    %v8378 = vpop.f32.mrb[0].mxu0
    %v8379 = vadd.f32 0.0, %v8378
    %v8380 = vpop.f32.mrb[0].mxu0
    %v8381 = vpop.f32.mrb[0].mxu0
    %v8382 = vadd.f32 0.0, %v8381
    %v8383 = vpop.f32.mrb[0].mxu0
    %8384 = vmatprep.mubr.bf16.mxu0 %v7513
    %8385 = vmatmul.mubr.bf16.gmra.mrb[0].mxu0 %v7512
    %v8386 = vpop.f32.mrb[0].mxu0
    %v8387 = vadd.f32 0.0, %v8386
    %v8388 = vpop.f32.mrb[0].mxu0
    %v8389 = vpop.f32.mrb[0].mxu0
    %v8390 = vadd.f32 0.0, %v8389
    %v8391 = vpop.f32.mrb[0].mxu0
    %8392 = vmatprep.mubr.bf16.mxu0 %v7521
    %8393 = vmatmul.mubr.bf16.gmra.mrb[0].mxu0 %v7520
    %v8394 = vpop.f32.mrb[0].mxu0
    %v8395 = vadd.f32 0.0, %v8394
    %v8396 = vpop.f32.mrb[0].mxu0
    %v8397 = vpop.f32.mrb[0].mxu0
    %v8398 = vadd.f32 0.0, %v8397
    %v8399 = vpop.f32.mrb[0].mxu0
    %8400 = vmatprep.mubr.bf16.mxu0 %v7529
    %8401 = vmatmul.mubr.bf16.gmra.mrb[0].mxu0 %v7528
    %v8402 = vpop.f32.mrb[0].mxu0
    %v8403 = vadd.f32 0.0, %v8402
    %v8404 = vpop.f32.mrb[0].mxu0
    %v8405 = vpop.f32.mrb[0].mxu0
    %v8406 = vadd.f32 0.0, %v8405
    %v8407 = vpop.f32.mrb[0].mxu0
    %8408 = vdwg.mxu0
    %8409 = vmatprep.subr.bf16.mxu0 0
    %8410 = vmatpush1.bf16.msra.mxu0 %v2337
    %8411 = vmatprep.subr.bf16.mxu0 0
    %8412 = vmatpush1.bf16.msra.mxu0 %v2342
    %8413 = vmatprep.subr.bf16.mxu0 0
    %8414 = vmatpush1.bf16.msra.mxu0 %v2347
    %8415 = vmatprep.subr.bf16.mxu0 0
    %8416 = vmatpush1.bf16.msra.mxu0 %v2352
    %8417 = vmatprep.subr.bf16.mxu0 0
    %8418 = vmatpush1.bf16.msra.mxu0 %v2357
    %8419 = vmatprep.subr.bf16.mxu0 0
    %8420 = vmatpush1.bf16.msra.mxu0 %v2362
    %8421 = vmatprep.subr.bf16.mxu0 0
    %8422 = vmatpush1.bf16.msra.mxu0 %v2367
    %8423 = vmatprep.subr.bf16.mxu0 0
    %8424 = vmatpush1.bf16.msra.mxu0 %v2372
    %8425 = vmatprep.subr.bf16.mxu0 0
    %8426 = vmatpush1.bf16.msra.mxu0 %v2377
    %8427 = vmatprep.subr.bf16.mxu0 0
    %8428 = vmatpush1.bf16.msra.mxu0 %v2382
    %8429 = vmatprep.subr.bf16.mxu0 0
    %8430 = vmatpush1.bf16.msra.mxu0 %v2387
    %8431 = vmatprep.subr.bf16.mxu0 0
    %8432 = vmatpush1.bf16.msra.mxu0 %v2392
    %8433 = vmatprep.subr.bf16.mxu0 0
    %8434 = vmatpush1.bf16.msra.mxu0 %v2397
    %8435 = vmatprep.subr.bf16.mxu0 0
    %8436 = vmatpush1.bf16.msra.mxu0 %v2402
    %8437 = vmatprep.subr.bf16.mxu0 0
    %8438 = vmatpush1.bf16.msra.mxu0 %v2407
    %8439 = vmatprep.subr.bf16.mxu0 0
    %8440 = vmatpush1.bf16.msra.mxu0 %v2412
    %8441 = vmatprep.mubr.bf16.mxu0 %v7491
    %8442 = vmatmul.mubr.bf16.gmra.mrb[0].mxu0 %v7490
    %v8443 = vpop.f32.mrb[0].mxu0
    %v8444 = vadd.f32 %v8363, %v8443
    %v8445 = vpop.f32.mrb[0].mxu0
    %v8446 = vpop.f32.mrb[0].mxu0
    %v8447 = vadd.f32 %v8366, %v8446
    %v8448 = vpop.f32.mrb[0].mxu0
    %8449 = vmatprep.mubr.bf16.mxu0 %v7499
    %8450 = vmatmul.mubr.bf16.gmra.mrb[0].mxu0 %v7498
    %v8451 = vpop.f32.mrb[0].mxu0
    %v8452 = vadd.f32 %v8371, %v8451
    %v8453 = vpop.f32.mrb[0].mxu0
    %v8454 = vpop.f32.mrb[0].mxu0
    %v8455 = vadd.f32 %v8374, %v8454
    %v8456 = vpop.f32.mrb[0].mxu0
    %8457 = vmatprep.mubr.bf16.mxu0 %v7507
    %8458 = vmatmul.mubr.bf16.gmra.mrb[0].mxu0 %v7506
    %v8459 = vpop.f32.mrb[0].mxu0
    %v8460 = vadd.f32 %v8379, %v8459
    %v8461 = vpop.f32.mrb[0].mxu0
    %v8462 = vpop.f32.mrb[0].mxu0
    %v8463 = vadd.f32 %v8382, %v8462
    %v8464 = vpop.f32.mrb[0].mxu0
    %8465 = vmatprep.mubr.bf16.mxu0 %v7515
    %8466 = vmatmul.mubr.bf16.gmra.mrb[0].mxu0 %v7514
    %v8467 = vpop.f32.mrb[0].mxu0
    %v8468 = vadd.f32 %v8387, %v8467
    %v8469 = vpop.f32.mrb[0].mxu0
    %v8470 = vpop.f32.mrb[0].mxu0
    %v8471 = vadd.f32 %v8390, %v8470
    %v8472 = vpop.f32.mrb[0].mxu0
    %8473 = vmatprep.mubr.bf16.mxu0 %v7523
    %8474 = vmatmul.mubr.bf16.gmra.mrb[0].mxu0 %v7522
    %v8475 = vpop.f32.mrb[0].mxu0
    %v8476 = vadd.f32 %v8395, %v8475
    %v8477 = vpop.f32.mrb[0].mxu0
    %v8478 = vpop.f32.mrb[0].mxu0
    %v8479 = vadd.f32 %v8398, %v8478
    %v8480 = vpop.f32.mrb[0].mxu0
    %8481 = vmatprep.mubr.bf16.mxu0 %v7531
    %8482 = vmatmul.mubr.bf16.gmra.mrb[0].mxu0 %v7530
    %v8483 = vpop.f32.mrb[0].mxu0
    %v8484 = vadd.f32 %v8403, %v8483
    %v8485 = vpop.f32.mrb[0].mxu0
    %v8486 = vpop.f32.mrb[0].mxu0
    %v8487 = vadd.f32 %v8406, %v8486
    %v8488 = vpop.f32.mrb[0].mxu0
    %8489 = vdwg.mxu0
    %8490 = vmatprep.subr.bf16.mxu0 0
    %8491 = vmatpush1.bf16.msra.mxu0 %v2417
    %8492 = vmatprep.subr.bf16.mxu0 0
    %8493 = vmatpush1.bf16.msra.mxu0 %v2422
    %8494 = vmatprep.subr.bf16.mxu0 0
    %8495 = vmatpush1.bf16.msra.mxu0 %v2427
    %8496 = vmatprep.subr.bf16.mxu0 0
    %8497 = vmatpush1.bf16.msra.mxu0 %v2432
    %8498 = vmatprep.subr.bf16.mxu0 0
    %8499 = vmatpush1.bf16.msra.mxu0 %v2437
    %8500 = vmatprep.subr.bf16.mxu0 0
    %8501 = vmatpush1.bf16.msra.mxu0 %v2442
    %8502 = vmatprep.subr.bf16.mxu0 0
    %8503 = vmatpush1.bf16.msra.mxu0 %v2447
    %8504 = vmatprep.subr.bf16.mxu0 0
    %8505 = vmatpush1.bf16.msra.mxu0 %v2452
    %8506 = vmatprep.subr.bf16.mxu0 0
    %8507 = vmatpush1.bf16.msra.mxu0 %v2457
    %8508 = vmatprep.subr.bf16.mxu0 0
    %8509 = vmatpush1.bf16.msra.mxu0 %v2462
    %8510 = vmatprep.subr.bf16.mxu0 0
    %8511 = vmatpush1.bf16.msra.mxu0 %v2467
    %8512 = vmatprep.subr.bf16.mxu0 0
    %8513 = vmatpush1.bf16.msra.mxu0 %v2472
    %8514 = vmatprep.subr.bf16.mxu0 0
    %8515 = vmatpush1.bf16.msra.mxu0 %v2477
    %8516 = vmatprep.subr.bf16.mxu0 0
    %8517 = vmatpush1.bf16.msra.mxu0 %v2482
    %8518 = vmatprep.subr.bf16.mxu0 0
    %8519 = vmatpush1.bf16.msra.mxu0 %v2487
    %8520 = vmatprep.subr.bf16.mxu0 0
    %8521 = vmatpush1.bf16.msra.mxu0 %v2492
    %8522 = vmatprep.mubr.bf16.mxu0 %v7493
    %8523 = vmatmul.mubr.bf16.gmra.mrb[0].mxu0 %v7492
    %v8524 = vpop.f32.mrb[0].mxu0
    %v8525 = vadd.f32 %v8444, %v8524
    %v8526 = vpop.f32.mrb[0].mxu0
    %v8527 = vpop.f32.mrb[0].mxu0
    %v8528 = vadd.f32 %v8447, %v8527
    %v8529 = vpop.f32.mrb[0].mxu0
    %8530 = vmatprep.mubr.bf16.mxu0 %v7501
    %8531 = vmatmul.mubr.bf16.gmra.mrb[0].mxu0 %v7500
    %v8532 = vpop.f32.mrb[0].mxu0
    %v8533 = vadd.f32 %v8452, %v8532
    %v8534 = vpop.f32.mrb[0].mxu0
    %v8535 = vpop.f32.mrb[0].mxu0
    %v8536 = vadd.f32 %v8455, %v8535
    %v8537 = vpop.f32.mrb[0].mxu0
    %8538 = vmatprep.mubr.bf16.mxu0 %v7509
    %8539 = vmatmul.mubr.bf16.gmra.mrb[0].mxu0 %v7508
    %v8540 = vpop.f32.mrb[0].mxu0
    %v8541 = vadd.f32 %v8460, %v8540
    %v8542 = vpop.f32.mrb[0].mxu0
    %v8543 = vpop.f32.mrb[0].mxu0
    %v8544 = vadd.f32 %v8463, %v8543
    %v8545 = vpop.f32.mrb[0].mxu0
    %8546 = vmatprep.mubr.bf16.mxu0 %v7517
    %8547 = vmatmul.mubr.bf16.gmra.mrb[0].mxu0 %v7516
    %v8548 = vpop.f32.mrb[0].mxu0
    %v8549 = vadd.f32 %v8468, %v8548
    %v8550 = vpop.f32.mrb[0].mxu0
    %v8551 = vpop.f32.mrb[0].mxu0
    %v8552 = vadd.f32 %v8471, %v8551
    %v8553 = vpop.f32.mrb[0].mxu0
    %8554 = vmatprep.mubr.bf16.mxu0 %v7525
    %8555 = vmatmul.mubr.bf16.gmra.mrb[0].mxu0 %v7524
    %v8556 = vpop.f32.mrb[0].mxu0
    %v8557 = vadd.f32 %v8476, %v8556
    %v8558 = vpop.f32.mrb[0].mxu0
    %v8559 = vpop.f32.mrb[0].mxu0
    %v8560 = vadd.f32 %v8479, %v8559
    %v8561 = vpop.f32.mrb[0].mxu0
    %8562 = vmatprep.mubr.bf16.mxu0 %v7533
    %8563 = vmatmul.mubr.bf16.gmra.mrb[0].mxu0 %v7532
    %v8564 = vpop.f32.mrb[0].mxu0
    %v8565 = vadd.f32 %v8484, %v8564
    %v8566 = vpop.f32.mrb[0].mxu0
    %v8567 = vpop.f32.mrb[0].mxu0
    %v8568 = vadd.f32 %v8487, %v8567
    %v8569 = vpop.f32.mrb[0].mxu0
    %8570 = vdwg.mxu0
    %8571 = vmatprep.subr.bf16.mxu0 0
    %8572 = vmatpush1.bf16.msra.mxu0 %v2497
    %8573 = vmatprep.subr.bf16.mxu0 0
    %8574 = vmatpush1.bf16.msra.mxu0 %v2502
    %8575 = vmatprep.subr.bf16.mxu0 0
    %8576 = vmatpush1.bf16.msra.mxu0 %v2507
    %8577 = vmatprep.subr.bf16.mxu0 0
    %8578 = vmatpush1.bf16.msra.mxu0 %v2512
    %8579 = vmatprep.subr.bf16.mxu0 0
    %8580 = vmatpush1.bf16.msra.mxu0 %v2517
    %8581 = vmatprep.subr.bf16.mxu0 0
    %8582 = vmatpush1.bf16.msra.mxu0 %v2522
    %8583 = vmatprep.subr.bf16.mxu0 0
    %8584 = vmatpush1.bf16.msra.mxu0 %v2527
    %8585 = vmatprep.subr.bf16.mxu0 0
    %8586 = vmatpush1.bf16.msra.mxu0 %v2532
    %8587 = vmatprep.subr.bf16.mxu0 0
    %8588 = vmatpush1.bf16.msra.mxu0 %v2537
    %8589 = vmatprep.subr.bf16.mxu0 0
    %8590 = vmatpush1.bf16.msra.mxu0 %v2542
    %8591 = vmatprep.subr.bf16.mxu0 0
    %8592 = vmatpush1.bf16.msra.mxu0 %v2547
    %8593 = vmatprep.subr.bf16.mxu0 0
    %8594 = vmatpush1.bf16.msra.mxu0 %v2552
    %8595 = vmatprep.subr.bf16.mxu0 0
    %8596 = vmatpush1.bf16.msra.mxu0 %v2557
    %8597 = vmatprep.subr.bf16.mxu0 0
    %8598 = vmatpush1.bf16.msra.mxu0 %v2562
    %8599 = vmatprep.subr.bf16.mxu0 0
    %8600 = vmatpush1.bf16.msra.mxu0 %v2567
    %8601 = vmatprep.subr.bf16.mxu0 0
    %8602 = vmatpush1.bf16.msra.mxu0 %v2572
    %8603 = vmatprep.mubr.bf16.mxu0 %v7495
    %8604 = vmatmul.mubr.bf16.gmra.mrb[0].mxu0 %v7494
    %v8605 = vpop.f32.mrb[0].mxu0
    %v8606 = vadd.f32 %v8525, %v8605
    %v8607 = vpop.f32.mrb[0].mxu0
    %v8608 = vpop.f32.mrb[0].mxu0
    %v8609 = vadd.f32 %v8528, %v8608
    %v8610 = vpop.f32.mrb[0].mxu0
    %8611 = vmatprep.mubr.bf16.mxu0 %v7503
    %8612 = vmatmul.mubr.bf16.gmra.mrb[0].mxu0 %v7502
    %v8613 = vpop.f32.mrb[0].mxu0
    %v8614 = vadd.f32 %v8533, %v8613
    %v8615 = vpop.f32.mrb[0].mxu0
    %v8616 = vpop.f32.mrb[0].mxu0
    %v8617 = vadd.f32 %v8536, %v8616
    %v8618 = vpop.f32.mrb[0].mxu0
    %8619 = vmatprep.mubr.bf16.mxu0 %v7511
    %8620 = vmatmul.mubr.bf16.gmra.mrb[0].mxu0 %v7510
    %v8621 = vpop.f32.mrb[0].mxu0
    %v8622 = vadd.f32 %v8541, %v8621
    %v8623 = vpop.f32.mrb[0].mxu0
    %v8624 = vpop.f32.mrb[0].mxu0
    %v8625 = vadd.f32 %v8544, %v8624
    %v8626 = vpop.f32.mrb[0].mxu0
    %8627 = vmatprep.mubr.bf16.mxu0 %v7519
    %8628 = vmatmul.mubr.bf16.gmra.mrb[0].mxu0 %v7518
    %v8629 = vpop.f32.mrb[0].mxu0
    %v8630 = vadd.f32 %v8549, %v8629
    %v8631 = vpop.f32.mrb[0].mxu0
    %v8632 = vpop.f32.mrb[0].mxu0
    %v8633 = vadd.f32 %v8552, %v8632
    %v8634 = vpop.f32.mrb[0].mxu0
    %8635 = vmatprep.mubr.bf16.mxu0 %v7527
    %8636 = vmatmul.mubr.bf16.gmra.mrb[0].mxu0 %v7526
    %v8637 = vpop.f32.mrb[0].mxu0
    %v8638 = vadd.f32 %v8557, %v8637
    %v8639 = vpop.f32.mrb[0].mxu0
    %v8640 = vpop.f32.mrb[0].mxu0
    %v8641 = vadd.f32 %v8560, %v8640
    %v8642 = vpop.f32.mrb[0].mxu0
    %8643 = vmatprep.mubr.bf16.mxu0 %v7535
    %8644 = vmatmul.mubr.bf16.gmra.mrb[0].mxu0 %v7534
    %v8645 = vpop.f32.mrb[0].mxu0
    %v8646 = vadd.f32 %v8565, %v8645
    %v8647 = vpop.f32.mrb[0].mxu0
    %v8648 = vpop.f32.mrb[0].mxu0
    %v8649 = vadd.f32 %v8568, %v8648
    %v8650 = vpop.f32.mrb[0].mxu0
    %8651 = vdwg.mxu0
    %8652 = vmatprep.subr.bf16.mxu0 %v4986
    %8653 = vmatpush1.bf16.msra.mxu0 %v4985
    %8654 = vmatprep.subr.bf16.mxu0 %v4991
    %8655 = vmatpush1.bf16.msra.mxu0 %v4990
    %8656 = vmatprep.subr.bf16.mxu0 %v4996
    %8657 = vmatpush1.bf16.msra.mxu0 %v4995
    %8658 = vmatprep.subr.bf16.mxu0 %v5001
    %8659 = vmatpush1.bf16.msra.mxu0 %v5000
    %8660 = vmatprep.subr.bf16.mxu0 %v5006
    %8661 = vmatpush1.bf16.msra.mxu0 %v5005
    %8662 = vmatprep.subr.bf16.mxu0 %v5011
    %8663 = vmatpush1.bf16.msra.mxu0 %v5010
    %8664 = vmatprep.subr.bf16.mxu0 %v5016
    %8665 = vmatpush1.bf16.msra.mxu0 %v5015
    %8666 = vmatprep.subr.bf16.mxu0 %v5021
    %8667 = vmatpush1.bf16.msra.mxu0 %v5020
    %8668 = vmatprep.subr.bf16.mxu0 %v5026
    %8669 = vmatpush1.bf16.msra.mxu0 %v5025
    %8670 = vmatprep.subr.bf16.mxu0 %v5031
    %8671 = vmatpush1.bf16.msra.mxu0 %v5030
    %8672 = vmatprep.subr.bf16.mxu0 %v5036
    %8673 = vmatpush1.bf16.msra.mxu0 %v5035
    %8674 = vmatprep.subr.bf16.mxu0 %v5041
    %8675 = vmatpush1.bf16.msra.mxu0 %v5040
    %8676 = vmatprep.subr.bf16.mxu0 %v5046
    %8677 = vmatpush1.bf16.msra.mxu0 %v5045
    %8678 = vmatprep.subr.bf16.mxu0 %v5051
    %8679 = vmatpush1.bf16.msra.mxu0 %v5050
    %8680 = vmatprep.subr.bf16.mxu0 %v5056
    %8681 = vmatpush1.bf16.msra.mxu0 %v5055
    %8682 = vmatprep.subr.bf16.mxu0 %v5061
    %8683 = vmatpush1.bf16.msra.mxu0 %v5060
    %8684 = vmatprep.mubr.bf16.mxu0 %v7489
    %8685 = vmatmul.mubr.bf16.gmra.mrb[0].mxu0 %v7488
    %v8686 = vpop.f32.mrb[0].mxu0
    %v8687 = vadd.f32 0.0, %v8686
    %v8688 = vpop.f32.mrb[0].mxu0
    %v8689 = vadd.f32 0.0, %v8688
    %v8690 = vpop.f32.mrb[0].mxu0
    %v8691 = vadd.f32 0.0, %v8690
    %v8692 = vpop.f32.mrb[0].mxu0
    %v8693 = vadd.f32 0.0, %v8692
    %8694 = vmatprep.mubr.bf16.mxu0 %v7497
    %8695 = vmatmul.mubr.bf16.gmra.mrb[0].mxu0 %v7496
    %v8696 = vpop.f32.mrb[0].mxu0
    %v8697 = vadd.f32 0.0, %v8696
    %v8698 = vpop.f32.mrb[0].mxu0
    %v8699 = vadd.f32 0.0, %v8698
    %v8700 = vpop.f32.mrb[0].mxu0
    %v8701 = vadd.f32 0.0, %v8700
    %v8702 = vpop.f32.mrb[0].mxu0
    %v8703 = vadd.f32 0.0, %v8702
    %8704 = vmatprep.mubr.bf16.mxu0 %v7505
    %8705 = vmatmul.mubr.bf16.gmra.mrb[0].mxu0 %v7504
    %v8706 = vpop.f32.mrb[0].mxu0
    %v8707 = vadd.f32 0.0, %v8706
    %v8708 = vpop.f32.mrb[0].mxu0
    %v8709 = vadd.f32 0.0, %v8708
    %v8710 = vpop.f32.mrb[0].mxu0
    %v8711 = vadd.f32 0.0, %v8710
    %v8712 = vpop.f32.mrb[0].mxu0
    %v8713 = vadd.f32 0.0, %v8712
    %8714 = vmatprep.mubr.bf16.mxu0 %v7513
    %8715 = vmatmul.mubr.bf16.gmra.mrb[0].mxu0 %v7512
    %v8716 = vpop.f32.mrb[0].mxu0
    %v8717 = vadd.f32 0.0, %v8716
    %v8718 = vpop.f32.mrb[0].mxu0
    %v8719 = vadd.f32 0.0, %v8718
    %v8720 = vpop.f32.mrb[0].mxu0
    %v8721 = vadd.f32 0.0, %v8720
    %v8722 = vpop.f32.mrb[0].mxu0
    %v8723 = vadd.f32 0.0, %v8722
    %8724 = vmatprep.mubr.bf16.mxu0 %v7521
    %8725 = vmatmul.mubr.bf16.gmra.mrb[0].mxu0 %v7520
    %v8726 = vpop.f32.mrb[0].mxu0
    %v8727 = vadd.f32 0.0, %v8726
    %v8728 = vpop.f32.mrb[0].mxu0
    %v8729 = vadd.f32 0.0, %v8728
    %v8730 = vpop.f32.mrb[0].mxu0
    %v8731 = vadd.f32 0.0, %v8730
    %v8732 = vpop.f32.mrb[0].mxu0
    %v8733 = vadd.f32 0.0, %v8732
    %8734 = vmatprep.mubr.bf16.mxu0 %v7529
    %8735 = vmatmul.mubr.bf16.gmra.mrb[0].mxu0 %v7528
    %v8736 = vpop.f32.mrb[0].mxu0
    %v8737 = vadd.f32 0.0, %v8736
    %v8738 = vpop.f32.mrb[0].mxu0
    %v8739 = vadd.f32 0.0, %v8738
    %v8740 = vpop.f32.mrb[0].mxu0
    %v8741 = vadd.f32 0.0, %v8740
    %v8742 = vpop.f32.mrb[0].mxu0
    %v8743 = vadd.f32 0.0, %v8742
    %8744 = vdwg.mxu0
    %8745 = vmatprep.subr.bf16.mxu0 %v5066
    %8746 = vmatpush1.bf16.msra.mxu0 %v5065
    %8747 = vmatprep.subr.bf16.mxu0 %v5071
    %8748 = vmatpush1.bf16.msra.mxu0 %v5070
    %8749 = vmatprep.subr.bf16.mxu0 %v5076
    %8750 = vmatpush1.bf16.msra.mxu0 %v5075
    %8751 = vmatprep.subr.bf16.mxu0 %v5081
    %8752 = vmatpush1.bf16.msra.mxu0 %v5080
    %8753 = vmatprep.subr.bf16.mxu0 %v5086
    %8754 = vmatpush1.bf16.msra.mxu0 %v5085
    %8755 = vmatprep.subr.bf16.mxu0 %v5091
    %8756 = vmatpush1.bf16.msra.mxu0 %v5090
    %8757 = vmatprep.subr.bf16.mxu0 %v5096
    %8758 = vmatpush1.bf16.msra.mxu0 %v5095
    %8759 = vmatprep.subr.bf16.mxu0 %v5101
    %8760 = vmatpush1.bf16.msra.mxu0 %v5100
    %8761 = vmatprep.subr.bf16.mxu0 %v5106
    %8762 = vmatpush1.bf16.msra.mxu0 %v5105
    %8763 = vmatprep.subr.bf16.mxu0 %v5111
    %8764 = vmatpush1.bf16.msra.mxu0 %v5110
    %8765 = vmatprep.subr.bf16.mxu0 %v5116
    %8766 = vmatpush1.bf16.msra.mxu0 %v5115
    %8767 = vmatprep.subr.bf16.mxu0 %v5121
    %8768 = vmatpush1.bf16.msra.mxu0 %v5120
    %8769 = vmatprep.subr.bf16.mxu0 %v5126
    %8770 = vmatpush1.bf16.msra.mxu0 %v5125
    %8771 = vmatprep.subr.bf16.mxu0 %v5131
    %8772 = vmatpush1.bf16.msra.mxu0 %v5130
    %8773 = vmatprep.subr.bf16.mxu0 %v5136
    %8774 = vmatpush1.bf16.msra.mxu0 %v5135
    %8775 = vmatprep.subr.bf16.mxu0 %v5141
    %8776 = vmatpush1.bf16.msra.mxu0 %v5140
    %8777 = vmatprep.mubr.bf16.mxu0 %v7491
    %8778 = vmatmul.mubr.bf16.gmra.mrb[0].mxu0 %v7490
    %v8779 = vpop.f32.mrb[0].mxu0
    %v8780 = vadd.f32 %v8687, %v8779
    %v8781 = vpop.f32.mrb[0].mxu0
    %v8782 = vadd.f32 %v8689, %v8781
    %v8783 = vpop.f32.mrb[0].mxu0
    %v8784 = vadd.f32 %v8691, %v8783
    %v8785 = vpop.f32.mrb[0].mxu0
    %v8786 = vadd.f32 %v8693, %v8785
    %8787 = vmatprep.mubr.bf16.mxu0 %v7499
    %8788 = vmatmul.mubr.bf16.gmra.mrb[0].mxu0 %v7498
    %v8789 = vpop.f32.mrb[0].mxu0
    %v8790 = vadd.f32 %v8697, %v8789
    %v8791 = vpop.f32.mrb[0].mxu0
    %v8792 = vadd.f32 %v8699, %v8791
    %v8793 = vpop.f32.mrb[0].mxu0
    %v8794 = vadd.f32 %v8701, %v8793
    %v8795 = vpop.f32.mrb[0].mxu0
    %v8796 = vadd.f32 %v8703, %v8795
    %8797 = vmatprep.mubr.bf16.mxu0 %v7507
    %8798 = vmatmul.mubr.bf16.gmra.mrb[0].mxu0 %v7506
    %v8799 = vpop.f32.mrb[0].mxu0
    %v8800 = vadd.f32 %v8707, %v8799
    %v8801 = vpop.f32.mrb[0].mxu0
    %v8802 = vadd.f32 %v8709, %v8801
    %v8803 = vpop.f32.mrb[0].mxu0
    %v8804 = vadd.f32 %v8711, %v8803
    %v8805 = vpop.f32.mrb[0].mxu0
    %v8806 = vadd.f32 %v8713, %v8805
    %8807 = vmatprep.mubr.bf16.mxu0 %v7515
    %8808 = vmatmul.mubr.bf16.gmra.mrb[0].mxu0 %v7514
    %v8809 = vpop.f32.mrb[0].mxu0
    %v8810 = vadd.f32 %v8717, %v8809
    %v8811 = vpop.f32.mrb[0].mxu0
    %v8812 = vadd.f32 %v8719, %v8811
    %v8813 = vpop.f32.mrb[0].mxu0
    %v8814 = vadd.f32 %v8721, %v8813
    %v8815 = vpop.f32.mrb[0].mxu0
    %v8816 = vadd.f32 %v8723, %v8815
    %8817 = vmatprep.mubr.bf16.mxu0 %v7523
    %8818 = vmatmul.mubr.bf16.gmra.mrb[0].mxu0 %v7522
    %v8819 = vpop.f32.mrb[0].mxu0
    %v8820 = vadd.f32 %v8727, %v8819
    %v8821 = vpop.f32.mrb[0].mxu0
    %v8822 = vadd.f32 %v8729, %v8821
    %v8823 = vpop.f32.mrb[0].mxu0
    %v8824 = vadd.f32 %v8731, %v8823
    %v8825 = vpop.f32.mrb[0].mxu0
    %v8826 = vadd.f32 %v8733, %v8825
    %8827 = vmatprep.mubr.bf16.mxu0 %v7531
    %8828 = vmatmul.mubr.bf16.gmra.mrb[0].mxu0 %v7530
    %v8829 = vpop.f32.mrb[0].mxu0
    %v8830 = vadd.f32 %v8737, %v8829
    %v8831 = vpop.f32.mrb[0].mxu0
    %v8832 = vadd.f32 %v8739, %v8831
    %v8833 = vpop.f32.mrb[0].mxu0
    %v8834 = vadd.f32 %v8741, %v8833
    %v8835 = vpop.f32.mrb[0].mxu0
    %v8836 = vadd.f32 %v8743, %v8835
    %8837 = vdwg.mxu0
    %8838 = vmatprep.subr.bf16.mxu0 %v5146
    %8839 = vmatpush1.bf16.msra.mxu0 %v5145
    %8840 = vmatprep.subr.bf16.mxu0 %v5151
    %8841 = vmatpush1.bf16.msra.mxu0 %v5150
    %8842 = vmatprep.subr.bf16.mxu0 %v5156
    %8843 = vmatpush1.bf16.msra.mxu0 %v5155
    %8844 = vmatprep.subr.bf16.mxu0 %v5161
    %8845 = vmatpush1.bf16.msra.mxu0 %v5160
    %8846 = vmatprep.subr.bf16.mxu0 %v5166
    %8847 = vmatpush1.bf16.msra.mxu0 %v5165
    %8848 = vmatprep.subr.bf16.mxu0 %v5171
    %8849 = vmatpush1.bf16.msra.mxu0 %v5170
    %8850 = vmatprep.subr.bf16.mxu0 %v5176
    %8851 = vmatpush1.bf16.msra.mxu0 %v5175
    %8852 = vmatprep.subr.bf16.mxu0 %v5181
    %8853 = vmatpush1.bf16.msra.mxu0 %v5180
    %8854 = vmatprep.subr.bf16.mxu0 %v5186
    %8855 = vmatpush1.bf16.msra.mxu0 %v5185
    %8856 = vmatprep.subr.bf16.mxu0 %v5191
    %8857 = vmatpush1.bf16.msra.mxu0 %v5190
    %8858 = vmatprep.subr.bf16.mxu0 %v5196
    %8859 = vmatpush1.bf16.msra.mxu0 %v5195
    %8860 = vmatprep.subr.bf16.mxu0 %v5201
    %8861 = vmatpush1.bf16.msra.mxu0 %v5200
    %8862 = vmatprep.subr.bf16.mxu0 %v5206
    %8863 = vmatpush1.bf16.msra.mxu0 %v5205
    %8864 = vmatprep.subr.bf16.mxu0 %v5211
    %8865 = vmatpush1.bf16.msra.mxu0 %v5210
    %8866 = vmatprep.subr.bf16.mxu0 %v5216
    %8867 = vmatpush1.bf16.msra.mxu0 %v5215
    %8868 = vmatprep.subr.bf16.mxu0 %v5221
    %8869 = vmatpush1.bf16.msra.mxu0 %v5220
    %8870 = vmatprep.mubr.bf16.mxu0 %v7493
    %8871 = vmatmul.mubr.bf16.gmra.mrb[0].mxu0 %v7492
    %v8872 = vpop.f32.mrb[0].mxu0
    %v8873 = vadd.f32 %v8780, %v8872
    %v8874 = vpop.f32.mrb[0].mxu0
    %v8875 = vadd.f32 %v8782, %v8874
    %v8876 = vpop.f32.mrb[0].mxu0
    %v8877 = vadd.f32 %v8784, %v8876
    %v8878 = vpop.f32.mrb[0].mxu0
    %v8879 = vadd.f32 %v8786, %v8878
    %8880 = vmatprep.mubr.bf16.mxu0 %v7501
    %8881 = vmatmul.mubr.bf16.gmra.mrb[0].mxu0 %v7500
    %v8882 = vpop.f32.mrb[0].mxu0
    %v8883 = vadd.f32 %v8790, %v8882
    %v8884 = vpop.f32.mrb[0].mxu0
    %v8885 = vadd.f32 %v8792, %v8884
    %v8886 = vpop.f32.mrb[0].mxu0
    %v8887 = vadd.f32 %v8794, %v8886
    %v8888 = vpop.f32.mrb[0].mxu0
    %v8889 = vadd.f32 %v8796, %v8888
    %8890 = vmatprep.mubr.bf16.mxu0 %v7509
    %8891 = vmatmul.mubr.bf16.gmra.mrb[0].mxu0 %v7508
    %v8892 = vpop.f32.mrb[0].mxu0
    %v8893 = vadd.f32 %v8800, %v8892
    %v8894 = vpop.f32.mrb[0].mxu0
    %v8895 = vadd.f32 %v8802, %v8894
    %v8896 = vpop.f32.mrb[0].mxu0
    %v8897 = vadd.f32 %v8804, %v8896
    %v8898 = vpop.f32.mrb[0].mxu0
    %v8899 = vadd.f32 %v8806, %v8898
    %8900 = vmatprep.mubr.bf16.mxu0 %v7517
    %8901 = vmatmul.mubr.bf16.gmra.mrb[0].mxu0 %v7516
    %v8902 = vpop.f32.mrb[0].mxu0
    %v8903 = vadd.f32 %v8810, %v8902
    %v8904 = vpop.f32.mrb[0].mxu0
    %v8905 = vadd.f32 %v8812, %v8904
    %v8906 = vpop.f32.mrb[0].mxu0
    %v8907 = vadd.f32 %v8814, %v8906
    %v8908 = vpop.f32.mrb[0].mxu0
    %v8909 = vadd.f32 %v8816, %v8908
    %8910 = vmatprep.mubr.bf16.mxu0 %v7525
    %8911 = vmatmul.mubr.bf16.gmra.mrb[0].mxu0 %v7524
    %v8912 = vpop.f32.mrb[0].mxu0
    %v8913 = vadd.f32 %v8820, %v8912
    %v8914 = vpop.f32.mrb[0].mxu0
    %v8915 = vadd.f32 %v8822, %v8914
    %v8916 = vpop.f32.mrb[0].mxu0
    %v8917 = vadd.f32 %v8824, %v8916
    %v8918 = vpop.f32.mrb[0].mxu0
    %v8919 = vadd.f32 %v8826, %v8918
    %8920 = vmatprep.mubr.bf16.mxu0 %v7533
    %8921 = vmatmul.mubr.bf16.gmra.mrb[0].mxu0 %v7532
    %v8922 = vpop.f32.mrb[0].mxu0
    %v8923 = vadd.f32 %v8830, %v8922
    %v8924 = vpop.f32.mrb[0].mxu0
    %v8925 = vadd.f32 %v8832, %v8924
    %v8926 = vpop.f32.mrb[0].mxu0
    %v8927 = vadd.f32 %v8834, %v8926
    %v8928 = vpop.f32.mrb[0].mxu0
    %v8929 = vadd.f32 %v8836, %v8928
    %8930 = vdwg.mxu0
    %8931 = vmatprep.subr.bf16.mxu0 %v5226
    %8932 = vmatpush1.bf16.msra.mxu0 %v5225
    %8933 = vmatprep.subr.bf16.mxu0 %v5231
    %8934 = vmatpush1.bf16.msra.mxu0 %v5230
    %8935 = vmatprep.subr.bf16.mxu0 %v5236
    %8936 = vmatpush1.bf16.msra.mxu0 %v5235
    %8937 = vmatprep.subr.bf16.mxu0 %v5241
    %8938 = vmatpush1.bf16.msra.mxu0 %v5240
    %8939 = vmatprep.subr.bf16.mxu0 %v5246
    %8940 = vmatpush1.bf16.msra.mxu0 %v5245
    %8941 = vmatprep.subr.bf16.mxu0 %v5251
    %8942 = vmatpush1.bf16.msra.mxu0 %v5250
    %8943 = vmatprep.subr.bf16.mxu0 %v5256
    %8944 = vmatpush1.bf16.msra.mxu0 %v5255
    %8945 = vmatprep.subr.bf16.mxu0 %v5261
    %8946 = vmatpush1.bf16.msra.mxu0 %v5260
    %8947 = vmatprep.subr.bf16.mxu0 %v5266
    %8948 = vmatpush1.bf16.msra.mxu0 %v5265
    %8949 = vmatprep.subr.bf16.mxu0 %v5271
    %8950 = vmatpush1.bf16.msra.mxu0 %v5270
    %8951 = vmatprep.subr.bf16.mxu0 %v5276
    %8952 = vmatpush1.bf16.msra.mxu0 %v5275
    %8953 = vmatprep.subr.bf16.mxu0 %v5281
    %8954 = vmatpush1.bf16.msra.mxu0 %v5280
    %8955 = vmatprep.subr.bf16.mxu0 %v5286
    %8956 = vmatpush1.bf16.msra.mxu0 %v5285
    %8957 = vmatprep.subr.bf16.mxu0 %v5291
    %8958 = vmatpush1.bf16.msra.mxu0 %v5290
    %8959 = vmatprep.subr.bf16.mxu0 %v5296
    %8960 = vmatpush1.bf16.msra.mxu0 %v5295
    %8961 = vmatprep.subr.bf16.mxu0 %v5301
    %8962 = vmatpush1.bf16.msra.mxu0 %v5300
    %8963 = vmatprep.mubr.bf16.mxu0 %v7495
    %8964 = vmatmul.mubr.bf16.gmra.mrb[0].mxu0 %v7494
    %v8965 = vpop.f32.mrb[0].mxu0
    %v8966 = vadd.f32 %v8873, %v8965
    %v8967 = vpop.f32.mrb[0].mxu0
    %v8968 = vadd.f32 %v8875, %v8967
    %v8969 = vpop.f32.mrb[0].mxu0
    %v8970 = vadd.f32 %v8877, %v8969
    %v8971 = vpop.f32.mrb[0].mxu0
    %v8972 = vadd.f32 %v8879, %v8971
    %8973 = vmatprep.mubr.bf16.mxu0 %v7503
    %8974 = vmatmul.mubr.bf16.gmra.mrb[0].mxu0 %v7502
    %v8975 = vpop.f32.mrb[0].mxu0
    %v8976 = vadd.f32 %v8883, %v8975
    %v8977 = vpop.f32.mrb[0].mxu0
    %v8978 = vadd.f32 %v8885, %v8977
    %v8979 = vpop.f32.mrb[0].mxu0
    %v8980 = vadd.f32 %v8887, %v8979
    %v8981 = vpop.f32.mrb[0].mxu0
    %v8982 = vadd.f32 %v8889, %v8981
    %8983 = vmatprep.mubr.bf16.mxu0 %v7511
    %8984 = vmatmul.mubr.bf16.gmra.mrb[0].mxu0 %v7510
    %v8985 = vpop.f32.mrb[0].mxu0
    %v8986 = vadd.f32 %v8893, %v8985
    %v8987 = vpop.f32.mrb[0].mxu0
    %v8988 = vadd.f32 %v8895, %v8987
    %v8989 = vpop.f32.mrb[0].mxu0
    %v8990 = vadd.f32 %v8897, %v8989
    %v8991 = vpop.f32.mrb[0].mxu0
    %v8992 = vadd.f32 %v8899, %v8991
    %8993 = vmatprep.mubr.bf16.mxu0 %v7519
    %8994 = vmatmul.mubr.bf16.gmra.mrb[0].mxu0 %v7518
    %v8995 = vpop.f32.mrb[0].mxu0
    %v8996 = vadd.f32 %v8903, %v8995
    %v8997 = vpop.f32.mrb[0].mxu0
    %v8998 = vadd.f32 %v8905, %v8997
    %v8999 = vpop.f32.mrb[0].mxu0
    %v9000 = vadd.f32 %v8907, %v8999
    %v9001 = vpop.f32.mrb[0].mxu0
    %v9002 = vadd.f32 %v8909, %v9001
    %9003 = vmatprep.mubr.bf16.mxu0 %v7527
    %9004 = vmatmul.mubr.bf16.gmra.mrb[0].mxu0 %v7526
    %v9005 = vpop.f32.mrb[0].mxu0
    %v9006 = vadd.f32 %v8913, %v9005
    %v9007 = vpop.f32.mrb[0].mxu0
    %v9008 = vadd.f32 %v8915, %v9007
    %v9009 = vpop.f32.mrb[0].mxu0
    %v9010 = vadd.f32 %v8917, %v9009
    %v9011 = vpop.f32.mrb[0].mxu0
    %v9012 = vadd.f32 %v8919, %v9011
    %9013 = vmatprep.mubr.bf16.mxu0 %v7535
    %9014 = vmatmul.mubr.bf16.gmra.mrb[0].mxu0 %v7534
    %v9015 = vpop.f32.mrb[0].mxu0
    %v9016 = vadd.f32 %v8923, %v9015
    %v9017 = vpop.f32.mrb[0].mxu0
    %v9018 = vadd.f32 %v8925, %v9017
    %v9019 = vpop.f32.mrb[0].mxu0
    %v9020 = vadd.f32 %v8927, %v9019
    %v9021 = vpop.f32.mrb[0].mxu0
    %v9022 = vadd.f32 %v8929, %v9021
    %9023 = vdwg.mxu0
    %9024 = vmatprep.subr.bf16.mxu0 %v4988
    %9025 = vmatpush1.bf16.msra.mxu0 %v4987
    %9026 = vmatprep.subr.bf16.mxu0 %v4993
    %9027 = vmatpush1.bf16.msra.mxu0 %v4992
    %9028 = vmatprep.subr.bf16.mxu0 %v4998
    %9029 = vmatpush1.bf16.msra.mxu0 %v4997
    %9030 = vmatprep.subr.bf16.mxu0 %v5003
    %9031 = vmatpush1.bf16.msra.mxu0 %v5002
    %9032 = vmatprep.subr.bf16.mxu0 %v5008
    %9033 = vmatpush1.bf16.msra.mxu0 %v5007
    %9034 = vmatprep.subr.bf16.mxu0 %v5013
    %9035 = vmatpush1.bf16.msra.mxu0 %v5012
    %9036 = vmatprep.subr.bf16.mxu0 %v5018
    %9037 = vmatpush1.bf16.msra.mxu0 %v5017
    %9038 = vmatprep.subr.bf16.mxu0 %v5023
    %9039 = vmatpush1.bf16.msra.mxu0 %v5022
    %9040 = vmatprep.subr.bf16.mxu0 %v5028
    %9041 = vmatpush1.bf16.msra.mxu0 %v5027
    %9042 = vmatprep.subr.bf16.mxu0 %v5033
    %9043 = vmatpush1.bf16.msra.mxu0 %v5032
    %9044 = vmatprep.subr.bf16.mxu0 %v5038
    %9045 = vmatpush1.bf16.msra.mxu0 %v5037
    %9046 = vmatprep.subr.bf16.mxu0 %v5043
    %9047 = vmatpush1.bf16.msra.mxu0 %v5042
    %9048 = vmatprep.subr.bf16.mxu0 %v5048
    %9049 = vmatpush1.bf16.msra.mxu0 %v5047
    %9050 = vmatprep.subr.bf16.mxu0 %v5053
    %9051 = vmatpush1.bf16.msra.mxu0 %v5052
    %9052 = vmatprep.subr.bf16.mxu0 %v5058
    %9053 = vmatpush1.bf16.msra.mxu0 %v5057
    %9054 = vmatprep.subr.bf16.mxu0 %v5063
    %9055 = vmatpush1.bf16.msra.mxu0 %v5062
    %9056 = vmatprep.mubr.bf16.mxu0 %v7489
    %9057 = vmatmul.mubr.bf16.gmra.mrb[0].mxu0 %v7488
    %v9058 = vpop.f32.mrb[0].mxu0
    %v9059 = vadd.f32 0.0, %v9058
    %v9060 = vpop.f32.mrb[0].mxu0
    %v9061 = vadd.f32 0.0, %v9060
    %v9062 = vpop.f32.mrb[0].mxu0
    %v9063 = vadd.f32 0.0, %v9062
    %v9064 = vpop.f32.mrb[0].mxu0
    %v9065 = vadd.f32 0.0, %v9064
    %9066 = vmatprep.mubr.bf16.mxu0 %v7497
    %9067 = vmatmul.mubr.bf16.gmra.mrb[0].mxu0 %v7496
    %v9068 = vpop.f32.mrb[0].mxu0
    %v9069 = vadd.f32 0.0, %v9068
    %v9070 = vpop.f32.mrb[0].mxu0
    %v9071 = vadd.f32 0.0, %v9070
    %v9072 = vpop.f32.mrb[0].mxu0
    %v9073 = vadd.f32 0.0, %v9072
    %v9074 = vpop.f32.mrb[0].mxu0
    %v9075 = vadd.f32 0.0, %v9074
    %9076 = vmatprep.mubr.bf16.mxu0 %v7505
    %9077 = vmatmul.mubr.bf16.gmra.mrb[0].mxu0 %v7504
    %v9078 = vpop.f32.mrb[0].mxu0
    %v9079 = vadd.f32 0.0, %v9078
    %v9080 = vpop.f32.mrb[0].mxu0
    %v9081 = vadd.f32 0.0, %v9080
    %v9082 = vpop.f32.mrb[0].mxu0
    %v9083 = vadd.f32 0.0, %v9082
    %v9084 = vpop.f32.mrb[0].mxu0
    %v9085 = vadd.f32 0.0, %v9084
    %9086 = vmatprep.mubr.bf16.mxu0 %v7513
    %9087 = vmatmul.mubr.bf16.gmra.mrb[0].mxu0 %v7512
    %v9088 = vpop.f32.mrb[0].mxu0
    %v9089 = vadd.f32 0.0, %v9088
    %v9090 = vpop.f32.mrb[0].mxu0
    %v9091 = vadd.f32 0.0, %v9090
    %v9092 = vpop.f32.mrb[0].mxu0
    %v9093 = vadd.f32 0.0, %v9092
    %v9094 = vpop.f32.mrb[0].mxu0
    %v9095 = vadd.f32 0.0, %v9094
    %9096 = vmatprep.mubr.bf16.mxu0 %v7521
    %9097 = vmatmul.mubr.bf16.gmra.mrb[0].mxu0 %v7520
    %v9098 = vpop.f32.mrb[0].mxu0
    %v9099 = vadd.f32 0.0, %v9098
    %v9100 = vpop.f32.mrb[0].mxu0
    %v9101 = vadd.f32 0.0, %v9100
    %v9102 = vpop.f32.mrb[0].mxu0
    %v9103 = vadd.f32 0.0, %v9102
    %v9104 = vpop.f32.mrb[0].mxu0
    %v9105 = vadd.f32 0.0, %v9104
    %9106 = vmatprep.mubr.bf16.mxu0 %v7529
    %9107 = vmatmul.mubr.bf16.gmra.mrb[0].mxu0 %v7528
    %v9108 = vpop.f32.mrb[0].mxu0
    %v9109 = vadd.f32 0.0, %v9108
    %v9110 = vpop.f32.mrb[0].mxu0
    %v9111 = vadd.f32 0.0, %v9110
    %v9112 = vpop.f32.mrb[0].mxu0
    %v9113 = vadd.f32 0.0, %v9112
    %v9114 = vpop.f32.mrb[0].mxu0
    %v9115 = vadd.f32 0.0, %v9114
    %9116 = vdwg.mxu0
    %9117 = vmatprep.subr.bf16.mxu0 %v5068
    %9118 = vmatpush1.bf16.msra.mxu0 %v5067
    %9119 = vmatprep.subr.bf16.mxu0 %v5073
    %9120 = vmatpush1.bf16.msra.mxu0 %v5072
    %9121 = vmatprep.subr.bf16.mxu0 %v5078
    %9122 = vmatpush1.bf16.msra.mxu0 %v5077
    %9123 = vmatprep.subr.bf16.mxu0 %v5083
    %9124 = vmatpush1.bf16.msra.mxu0 %v5082
    %9125 = vmatprep.subr.bf16.mxu0 %v5088
    %9126 = vmatpush1.bf16.msra.mxu0 %v5087
    %9127 = vmatprep.subr.bf16.mxu0 %v5093
    %9128 = vmatpush1.bf16.msra.mxu0 %v5092
    %9129 = vmatprep.subr.bf16.mxu0 %v5098
    %9130 = vmatpush1.bf16.msra.mxu0 %v5097
    %9131 = vmatprep.subr.bf16.mxu0 %v5103
    %9132 = vmatpush1.bf16.msra.mxu0 %v5102
    %9133 = vmatprep.subr.bf16.mxu0 %v5108
    %9134 = vmatpush1.bf16.msra.mxu0 %v5107
    %9135 = vmatprep.subr.bf16.mxu0 %v5113
    %9136 = vmatpush1.bf16.msra.mxu0 %v5112
    %9137 = vmatprep.subr.bf16.mxu0 %v5118
    %9138 = vmatpush1.bf16.msra.mxu0 %v5117
    %9139 = vmatprep.subr.bf16.mxu0 %v5123
    %9140 = vmatpush1.bf16.msra.mxu0 %v5122
    %9141 = vmatprep.subr.bf16.mxu0 %v5128
    %9142 = vmatpush1.bf16.msra.mxu0 %v5127
    %9143 = vmatprep.subr.bf16.mxu0 %v5133
    %9144 = vmatpush1.bf16.msra.mxu0 %v5132
    %9145 = vmatprep.subr.bf16.mxu0 %v5138
    %9146 = vmatpush1.bf16.msra.mxu0 %v5137
    %9147 = vmatprep.subr.bf16.mxu0 %v5143
    %9148 = vmatpush1.bf16.msra.mxu0 %v5142
    %9149 = vmatprep.mubr.bf16.mxu0 %v7491
    %9150 = vmatmul.mubr.bf16.gmra.mrb[0].mxu0 %v7490
    %v9151 = vpop.f32.mrb[0].mxu0
    %v9152 = vadd.f32 %v9059, %v9151
    %v9153 = vpop.f32.mrb[0].mxu0
    %v9154 = vadd.f32 %v9061, %v9153
    %v9155 = vpop.f32.mrb[0].mxu0
    %v9156 = vadd.f32 %v9063, %v9155
    %v9157 = vpop.f32.mrb[0].mxu0
    %v9158 = vadd.f32 %v9065, %v9157
    %9159 = vmatprep.mubr.bf16.mxu0 %v7499
    %9160 = vmatmul.mubr.bf16.gmra.mrb[0].mxu0 %v7498
    %v9161 = vpop.f32.mrb[0].mxu0
    %v9162 = vadd.f32 %v9069, %v9161
    %v9163 = vpop.f32.mrb[0].mxu0
    %v9164 = vadd.f32 %v9071, %v9163
    %v9165 = vpop.f32.mrb[0].mxu0
    %v9166 = vadd.f32 %v9073, %v9165
    %v9167 = vpop.f32.mrb[0].mxu0
    %v9168 = vadd.f32 %v9075, %v9167
    %9169 = vmatprep.mubr.bf16.mxu0 %v7507
    %9170 = vmatmul.mubr.bf16.gmra.mrb[0].mxu0 %v7506
    %v9171 = vpop.f32.mrb[0].mxu0
    %v9172 = vadd.f32 %v9079, %v9171
    %v9173 = vpop.f32.mrb[0].mxu0
    %v9174 = vadd.f32 %v9081, %v9173
    %v9175 = vpop.f32.mrb[0].mxu0
    %v9176 = vadd.f32 %v9083, %v9175
    %v9177 = vpop.f32.mrb[0].mxu0
    %v9178 = vadd.f32 %v9085, %v9177
    %9179 = vmatprep.mubr.bf16.mxu0 %v7515
    %9180 = vmatmul.mubr.bf16.gmra.mrb[0].mxu0 %v7514
    %v9181 = vpop.f32.mrb[0].mxu0
    %v9182 = vadd.f32 %v9089, %v9181
    %v9183 = vpop.f32.mrb[0].mxu0
    %v9184 = vadd.f32 %v9091, %v9183
    %v9185 = vpop.f32.mrb[0].mxu0
    %v9186 = vadd.f32 %v9093, %v9185
    %v9187 = vpop.f32.mrb[0].mxu0
    %v9188 = vadd.f32 %v9095, %v9187
    %9189 = vmatprep.mubr.bf16.mxu0 %v7523
    %9190 = vmatmul.mubr.bf16.gmra.mrb[0].mxu0 %v7522
    %v9191 = vpop.f32.mrb[0].mxu0
    %v9192 = vadd.f32 %v9099, %v9191
    %v9193 = vpop.f32.mrb[0].mxu0
    %v9194 = vadd.f32 %v9101, %v9193
    %v9195 = vpop.f32.mrb[0].mxu0
    %v9196 = vadd.f32 %v9103, %v9195
    %v9197 = vpop.f32.mrb[0].mxu0
    %v9198 = vadd.f32 %v9105, %v9197
    %9199 = vmatprep.mubr.bf16.mxu0 %v7531
    %9200 = vmatmul.mubr.bf16.gmra.mrb[0].mxu0 %v7530
    %v9201 = vpop.f32.mrb[0].mxu0
    %v9202 = vadd.f32 %v9109, %v9201
    %v9203 = vpop.f32.mrb[0].mxu0
    %v9204 = vadd.f32 %v9111, %v9203
    %v9205 = vpop.f32.mrb[0].mxu0
    %v9206 = vadd.f32 %v9113, %v9205
    %v9207 = vpop.f32.mrb[0].mxu0
    %v9208 = vadd.f32 %v9115, %v9207
    %9209 = vdwg.mxu0
    %9210 = vmatprep.subr.bf16.mxu0 %v5148
    %9211 = vmatpush1.bf16.msra.mxu0 %v5147
    %9212 = vmatprep.subr.bf16.mxu0 %v5153
    %9213 = vmatpush1.bf16.msra.mxu0 %v5152
    %9214 = vmatprep.subr.bf16.mxu0 %v5158
    %9215 = vmatpush1.bf16.msra.mxu0 %v5157
    %9216 = vmatprep.subr.bf16.mxu0 %v5163
    %9217 = vmatpush1.bf16.msra.mxu0 %v5162
    %9218 = vmatprep.subr.bf16.mxu0 %v5168
    %9219 = vmatpush1.bf16.msra.mxu0 %v5167
    %9220 = vmatprep.subr.bf16.mxu0 %v5173
    %9221 = vmatpush1.bf16.msra.mxu0 %v5172
    %9222 = vmatprep.subr.bf16.mxu0 %v5178
    %9223 = vmatpush1.bf16.msra.mxu0 %v5177
    %9224 = vmatprep.subr.bf16.mxu0 %v5183
    %9225 = vmatpush1.bf16.msra.mxu0 %v5182
    %9226 = vmatprep.subr.bf16.mxu0 %v5188
    %9227 = vmatpush1.bf16.msra.mxu0 %v5187
    %9228 = vmatprep.subr.bf16.mxu0 %v5193
    %9229 = vmatpush1.bf16.msra.mxu0 %v5192
    %9230 = vmatprep.subr.bf16.mxu0 %v5198
    %9231 = vmatpush1.bf16.msra.mxu0 %v5197
    %9232 = vmatprep.subr.bf16.mxu0 %v5203
    %9233 = vmatpush1.bf16.msra.mxu0 %v5202
    %9234 = vmatprep.subr.bf16.mxu0 %v5208
    %9235 = vmatpush1.bf16.msra.mxu0 %v5207
    %9236 = vmatprep.subr.bf16.mxu0 %v5213
    %9237 = vmatpush1.bf16.msra.mxu0 %v5212
    %9238 = vmatprep.subr.bf16.mxu0 %v5218
    %9239 = vmatpush1.bf16.msra.mxu0 %v5217
    %9240 = vmatprep.subr.bf16.mxu0 %v5223
    %9241 = vmatpush1.bf16.msra.mxu0 %v5222
    %9242 = vmatprep.mubr.bf16.mxu0 %v7493
    %9243 = vmatmul.mubr.bf16.gmra.mrb[0].mxu0 %v7492
    %v9244 = vpop.f32.mrb[0].mxu0
    %v9245 = vadd.f32 %v9152, %v9244
    %v9246 = vpop.f32.mrb[0].mxu0
    %v9247 = vadd.f32 %v9154, %v9246
    %v9248 = vpop.f32.mrb[0].mxu0
    %v9249 = vadd.f32 %v9156, %v9248
    %v9250 = vpop.f32.mrb[0].mxu0
    %v9251 = vadd.f32 %v9158, %v9250
    %9252 = vmatprep.mubr.bf16.mxu0 %v7501
    %9253 = vmatmul.mubr.bf16.gmra.mrb[0].mxu0 %v7500
    %v9254 = vpop.f32.mrb[0].mxu0
    %v9255 = vadd.f32 %v9162, %v9254
    %v9256 = vpop.f32.mrb[0].mxu0
    %v9257 = vadd.f32 %v9164, %v9256
    %v9258 = vpop.f32.mrb[0].mxu0
    %v9259 = vadd.f32 %v9166, %v9258
    %v9260 = vpop.f32.mrb[0].mxu0
    %v9261 = vadd.f32 %v9168, %v9260
    %9262 = vmatprep.mubr.bf16.mxu0 %v7509
    %9263 = vmatmul.mubr.bf16.gmra.mrb[0].mxu0 %v7508
    %v9264 = vpop.f32.mrb[0].mxu0
    %v9265 = vadd.f32 %v9172, %v9264
    %v9266 = vpop.f32.mrb[0].mxu0
    %v9267 = vadd.f32 %v9174, %v9266
    %v9268 = vpop.f32.mrb[0].mxu0
    %v9269 = vadd.f32 %v9176, %v9268
    %v9270 = vpop.f32.mrb[0].mxu0
    %v9271 = vadd.f32 %v9178, %v9270
    %9272 = vmatprep.mubr.bf16.mxu0 %v7517
    %9273 = vmatmul.mubr.bf16.gmra.mrb[0].mxu0 %v7516
    %v9274 = vpop.f32.mrb[0].mxu0
    %v9275 = vadd.f32 %v9182, %v9274
    %v9276 = vpop.f32.mrb[0].mxu0
    %v9277 = vadd.f32 %v9184, %v9276
    %v9278 = vpop.f32.mrb[0].mxu0
    %v9279 = vadd.f32 %v9186, %v9278
    %v9280 = vpop.f32.mrb[0].mxu0
    %v9281 = vadd.f32 %v9188, %v9280
    %9282 = vmatprep.mubr.bf16.mxu0 %v7525
    %9283 = vmatmul.mubr.bf16.gmra.mrb[0].mxu0 %v7524
    %v9284 = vpop.f32.mrb[0].mxu0
    %v9285 = vadd.f32 %v9192, %v9284
    %v9286 = vpop.f32.mrb[0].mxu0
    %v9287 = vadd.f32 %v9194, %v9286
    %v9288 = vpop.f32.mrb[0].mxu0
    %v9289 = vadd.f32 %v9196, %v9288
    %v9290 = vpop.f32.mrb[0].mxu0
    %v9291 = vadd.f32 %v9198, %v9290
    %9292 = vmatprep.mubr.bf16.mxu0 %v7533
    %9293 = vmatmul.mubr.bf16.gmra.mrb[0].mxu0 %v7532
    %v9294 = vpop.f32.mrb[0].mxu0
    %v9295 = vadd.f32 %v9202, %v9294
    %v9296 = vpop.f32.mrb[0].mxu0
    %v9297 = vadd.f32 %v9204, %v9296
    %v9298 = vpop.f32.mrb[0].mxu0
    %v9299 = vadd.f32 %v9206, %v9298
    %v9300 = vpop.f32.mrb[0].mxu0
    %v9301 = vadd.f32 %v9208, %v9300
    %9302 = vdwg.mxu0
    %9303 = vmatprep.subr.bf16.mxu0 %v5228
    %9304 = vmatpush1.bf16.msra.mxu0 %v5227
    %9305 = vmatprep.subr.bf16.mxu0 %v5233
    %9306 = vmatpush1.bf16.msra.mxu0 %v5232
    %9307 = vmatprep.subr.bf16.mxu0 %v5238
    %9308 = vmatpush1.bf16.msra.mxu0 %v5237
    %9309 = vmatprep.subr.bf16.mxu0 %v5243
    %9310 = vmatpush1.bf16.msra.mxu0 %v5242
    %9311 = vmatprep.subr.bf16.mxu0 %v5248
    %9312 = vmatpush1.bf16.msra.mxu0 %v5247
    %9313 = vmatprep.subr.bf16.mxu0 %v5253
    %9314 = vmatpush1.bf16.msra.mxu0 %v5252
    %9315 = vmatprep.subr.bf16.mxu0 %v5258
    %9316 = vmatpush1.bf16.msra.mxu0 %v5257
    %9317 = vmatprep.subr.bf16.mxu0 %v5263
    %9318 = vmatpush1.bf16.msra.mxu0 %v5262
    %9319 = vmatprep.subr.bf16.mxu0 %v5268
    %9320 = vmatpush1.bf16.msra.mxu0 %v5267
    %9321 = vmatprep.subr.bf16.mxu0 %v5273
    %9322 = vmatpush1.bf16.msra.mxu0 %v5272
    %9323 = vmatprep.subr.bf16.mxu0 %v5278
    %9324 = vmatpush1.bf16.msra.mxu0 %v5277
    %9325 = vmatprep.subr.bf16.mxu0 %v5283
    %9326 = vmatpush1.bf16.msra.mxu0 %v5282
    %9327 = vmatprep.subr.bf16.mxu0 %v5288
    %9328 = vmatpush1.bf16.msra.mxu0 %v5287
    %9329 = vmatprep.subr.bf16.mxu0 %v5293
    %9330 = vmatpush1.bf16.msra.mxu0 %v5292
    %9331 = vmatprep.subr.bf16.mxu0 %v5298
    %9332 = vmatpush1.bf16.msra.mxu0 %v5297
    %9333 = vmatprep.subr.bf16.mxu0 %v5303
    %9334 = vmatpush1.bf16.msra.mxu0 %v5302
    %9335 = vmatprep.mubr.bf16.mxu0 %v7495
    %9336 = vmatmul.mubr.bf16.gmra.mrb[0].mxu0 %v7494
    %v9337 = vpop.f32.mrb[0].mxu0
    %v9338 = vadd.f32 %v9245, %v9337
    %v9339 = vpop.f32.mrb[0].mxu0
    %v9340 = vadd.f32 %v9247, %v9339
    %v9341 = vpop.f32.mrb[0].mxu0
    %v9342 = vadd.f32 %v9249, %v9341
    %v9343 = vpop.f32.mrb[0].mxu0
    %v9344 = vadd.f32 %v9251, %v9343
    %9345 = vmatprep.mubr.bf16.mxu0 %v7503
    %9346 = vmatmul.mubr.bf16.gmra.mrb[0].mxu0 %v7502
    %v9347 = vpop.f32.mrb[0].mxu0
    %v9348 = vadd.f32 %v9255, %v9347
    %v9349 = vpop.f32.mrb[0].mxu0
    %v9350 = vadd.f32 %v9257, %v9349
    %v9351 = vpop.f32.mrb[0].mxu0
    %v9352 = vadd.f32 %v9259, %v9351
    %v9353 = vpop.f32.mrb[0].mxu0
    %v9354 = vadd.f32 %v9261, %v9353
    %9355 = vmatprep.mubr.bf16.mxu0 %v7511
    %9356 = vmatmul.mubr.bf16.gmra.mrb[0].mxu0 %v7510
    %v9357 = vpop.f32.mrb[0].mxu0
    %v9358 = vadd.f32 %v9265, %v9357
    %v9359 = vpop.f32.mrb[0].mxu0
    %v9360 = vadd.f32 %v9267, %v9359
    %v9361 = vpop.f32.mrb[0].mxu0
    %v9362 = vadd.f32 %v9269, %v9361
    %v9363 = vpop.f32.mrb[0].mxu0
    %v9364 = vadd.f32 %v9271, %v9363
    %9365 = vmatprep.mubr.bf16.mxu0 %v7519
    %9366 = vmatmul.mubr.bf16.gmra.mrb[0].mxu0 %v7518
    %v9367 = vpop.f32.mrb[0].mxu0
    %v9368 = vadd.f32 %v9275, %v9367
    %v9369 = vpop.f32.mrb[0].mxu0
    %v9370 = vadd.f32 %v9277, %v9369
    %v9371 = vpop.f32.mrb[0].mxu0
    %v9372 = vadd.f32 %v9279, %v9371
    %v9373 = vpop.f32.mrb[0].mxu0
    %v9374 = vadd.f32 %v9281, %v9373
    %9375 = vmatprep.mubr.bf16.mxu0 %v7527
    %9376 = vmatmul.mubr.bf16.gmra.mrb[0].mxu0 %v7526
    %v9377 = vpop.f32.mrb[0].mxu0
    %v9378 = vadd.f32 %v9285, %v9377
    %v9379 = vpop.f32.mrb[0].mxu0
    %v9380 = vadd.f32 %v9287, %v9379
    %v9381 = vpop.f32.mrb[0].mxu0
    %v9382 = vadd.f32 %v9289, %v9381
    %v9383 = vpop.f32.mrb[0].mxu0
    %v9384 = vadd.f32 %v9291, %v9383
    %9385 = vmatprep.mubr.bf16.mxu0 %v7535
    %9386 = vmatmul.mubr.bf16.gmra.mrb[0].mxu0 %v7534
    %v9387 = vpop.f32.mrb[0].mxu0
    %v9388 = vadd.f32 %v9295, %v9387
    %v9389 = vpop.f32.mrb[0].mxu0
    %v9390 = vadd.f32 %v9297, %v9389
    %v9391 = vpop.f32.mrb[0].mxu0
    %v9392 = vadd.f32 %v9299, %v9391
    %v9393 = vpop.f32.mrb[0].mxu0
    %v9394 = vadd.f32 %v9301, %v9393
    %9395 = vdwg.mxu0
    %9396 = vmatprep.subr.bf16.mxu0 0
    %9397 = vmatpush1.bf16.msra.mxu0 %v4989
    %9398 = vmatprep.subr.bf16.mxu0 0
    %9399 = vmatpush1.bf16.msra.mxu0 %v4994
    %9400 = vmatprep.subr.bf16.mxu0 0
    %9401 = vmatpush1.bf16.msra.mxu0 %v4999
    %9402 = vmatprep.subr.bf16.mxu0 0
    %9403 = vmatpush1.bf16.msra.mxu0 %v5004
    %9404 = vmatprep.subr.bf16.mxu0 0
    %9405 = vmatpush1.bf16.msra.mxu0 %v5009
    %9406 = vmatprep.subr.bf16.mxu0 0
    %9407 = vmatpush1.bf16.msra.mxu0 %v5014
    %9408 = vmatprep.subr.bf16.mxu0 0
    %9409 = vmatpush1.bf16.msra.mxu0 %v5019
    %9410 = vmatprep.subr.bf16.mxu0 0
    %9411 = vmatpush1.bf16.msra.mxu0 %v5024
    %9412 = vmatprep.subr.bf16.mxu0 0
    %9413 = vmatpush1.bf16.msra.mxu0 %v5029
    %9414 = vmatprep.subr.bf16.mxu0 0
    %9415 = vmatpush1.bf16.msra.mxu0 %v5034
    %9416 = vmatprep.subr.bf16.mxu0 0
    %9417 = vmatpush1.bf16.msra.mxu0 %v5039
    %9418 = vmatprep.subr.bf16.mxu0 0
    %9419 = vmatpush1.bf16.msra.mxu0 %v5044
    %9420 = vmatprep.subr.bf16.mxu0 0
    %9421 = vmatpush1.bf16.msra.mxu0 %v5049
    %9422 = vmatprep.subr.bf16.mxu0 0
    %9423 = vmatpush1.bf16.msra.mxu0 %v5054
    %9424 = vmatprep.subr.bf16.mxu0 0
    %9425 = vmatpush1.bf16.msra.mxu0 %v5059
    %9426 = vmatprep.subr.bf16.mxu0 0
    %9427 = vmatpush1.bf16.msra.mxu0 %v5064
    %9428 = vmatprep.mubr.bf16.mxu0 %v7489
    %9429 = vmatmul.mubr.bf16.gmra.mrb[0].mxu0 %v7488
    %v9430 = vpop.f32.mrb[0].mxu0
    %v9431 = vadd.f32 0.0, %v9430
    %v9432 = vpop.f32.mrb[0].mxu0
    %v9433 = vpop.f32.mrb[0].mxu0
    %v9434 = vadd.f32 0.0, %v9433
    %v9435 = vpop.f32.mrb[0].mxu0
    %9436 = vmatprep.mubr.bf16.mxu0 %v7497
    %9437 = vmatmul.mubr.bf16.gmra.mrb[0].mxu0 %v7496
    %v9438 = vpop.f32.mrb[0].mxu0
    %v9439 = vadd.f32 0.0, %v9438
    %v9440 = vpop.f32.mrb[0].mxu0
    %v9441 = vpop.f32.mrb[0].mxu0
    %v9442 = vadd.f32 0.0, %v9441
    %v9443 = vpop.f32.mrb[0].mxu0
    %9444 = vmatprep.mubr.bf16.mxu0 %v7505
    %9445 = vmatmul.mubr.bf16.gmra.mrb[0].mxu0 %v7504
    %v9446 = vpop.f32.mrb[0].mxu0
    %v9447 = vadd.f32 0.0, %v9446
    %v9448 = vpop.f32.mrb[0].mxu0
    %v9449 = vpop.f32.mrb[0].mxu0
    %v9450 = vadd.f32 0.0, %v9449
    %v9451 = vpop.f32.mrb[0].mxu0
    %9452 = vmatprep.mubr.bf16.mxu0 %v7513
    %9453 = vmatmul.mubr.bf16.gmra.mrb[0].mxu0 %v7512
    %v9454 = vpop.f32.mrb[0].mxu0
    %v9455 = vadd.f32 0.0, %v9454
    %v9456 = vpop.f32.mrb[0].mxu0
    %v9457 = vpop.f32.mrb[0].mxu0
    %v9458 = vadd.f32 0.0, %v9457
    %v9459 = vpop.f32.mrb[0].mxu0
    %9460 = vmatprep.mubr.bf16.mxu0 %v7521
    %9461 = vmatmul.mubr.bf16.gmra.mrb[0].mxu0 %v7520
    %v9462 = vpop.f32.mrb[0].mxu0
    %v9463 = vadd.f32 0.0, %v9462
    %v9464 = vpop.f32.mrb[0].mxu0
    %v9465 = vpop.f32.mrb[0].mxu0
    %v9466 = vadd.f32 0.0, %v9465
    %v9467 = vpop.f32.mrb[0].mxu0
    %9468 = vmatprep.mubr.bf16.mxu0 %v7529
    %9469 = vmatmul.mubr.bf16.gmra.mrb[0].mxu0 %v7528
    %v9470 = vpop.f32.mrb[0].mxu0
    %v9471 = vadd.f32 0.0, %v9470
    %v9472 = vpop.f32.mrb[0].mxu0
    %v9473 = vpop.f32.mrb[0].mxu0
    %v9474 = vadd.f32 0.0, %v9473
    %v9475 = vpop.f32.mrb[0].mxu0
    %9476 = vdwg.mxu0
    %9477 = vmatprep.subr.bf16.mxu0 0
    %9478 = vmatpush1.bf16.msra.mxu0 %v5069
    %9479 = vmatprep.subr.bf16.mxu0 0
    %9480 = vmatpush1.bf16.msra.mxu0 %v5074
    %9481 = vmatprep.subr.bf16.mxu0 0
    %9482 = vmatpush1.bf16.msra.mxu0 %v5079
    %9483 = vmatprep.subr.bf16.mxu0 0
    %9484 = vmatpush1.bf16.msra.mxu0 %v5084
    %9485 = vmatprep.subr.bf16.mxu0 0
    %9486 = vmatpush1.bf16.msra.mxu0 %v5089
    %9487 = vmatprep.subr.bf16.mxu0 0
    %9488 = vmatpush1.bf16.msra.mxu0 %v5094
    %9489 = vmatprep.subr.bf16.mxu0 0
    %9490 = vmatpush1.bf16.msra.mxu0 %v5099
    %9491 = vmatprep.subr.bf16.mxu0 0
    %9492 = vmatpush1.bf16.msra.mxu0 %v5104
    %9493 = vmatprep.subr.bf16.mxu0 0
    %9494 = vmatpush1.bf16.msra.mxu0 %v5109
    %9495 = vmatprep.subr.bf16.mxu0 0
    %9496 = vmatpush1.bf16.msra.mxu0 %v5114
    %9497 = vmatprep.subr.bf16.mxu0 0
    %9498 = vmatpush1.bf16.msra.mxu0 %v5119
    %9499 = vmatprep.subr.bf16.mxu0 0
    %9500 = vmatpush1.bf16.msra.mxu0 %v5124
    %9501 = vmatprep.subr.bf16.mxu0 0
    %9502 = vmatpush1.bf16.msra.mxu0 %v5129
    %9503 = vmatprep.subr.bf16.mxu0 0
    %9504 = vmatpush1.bf16.msra.mxu0 %v5134
    %9505 = vmatprep.subr.bf16.mxu0 0
    %9506 = vmatpush1.bf16.msra.mxu0 %v5139
    %9507 = vmatprep.subr.bf16.mxu0 0
    %9508 = vmatpush1.bf16.msra.mxu0 %v5144
    %9509 = vmatprep.mubr.bf16.mxu0 %v7491
    %9510 = vmatmul.mubr.bf16.gmra.mrb[0].mxu0 %v7490
    %v9511 = vpop.f32.mrb[0].mxu0
    %v9512 = vadd.f32 %v9431, %v9511
    %v9513 = vpop.f32.mrb[0].mxu0
    %v9514 = vpop.f32.mrb[0].mxu0
    %v9515 = vadd.f32 %v9434, %v9514
    %v9516 = vpop.f32.mrb[0].mxu0
    %9517 = vmatprep.mubr.bf16.mxu0 %v7499
    %9518 = vmatmul.mubr.bf16.gmra.mrb[0].mxu0 %v7498
    %v9519 = vpop.f32.mrb[0].mxu0
    %v9520 = vadd.f32 %v9439, %v9519
    %v9521 = vpop.f32.mrb[0].mxu0
    %v9522 = vpop.f32.mrb[0].mxu0
    %v9523 = vadd.f32 %v9442, %v9522
    %v9524 = vpop.f32.mrb[0].mxu0
    %9525 = vmatprep.mubr.bf16.mxu0 %v7507
    %9526 = vmatmul.mubr.bf16.gmra.mrb[0].mxu0 %v7506
    %v9527 = vpop.f32.mrb[0].mxu0
    %v9528 = vadd.f32 %v9447, %v9527
    %v9529 = vpop.f32.mrb[0].mxu0
    %v9530 = vpop.f32.mrb[0].mxu0
    %v9531 = vadd.f32 %v9450, %v9530
    %v9532 = vpop.f32.mrb[0].mxu0
    %9533 = vmatprep.mubr.bf16.mxu0 %v7515
    %9534 = vmatmul.mubr.bf16.gmra.mrb[0].mxu0 %v7514
    %v9535 = vpop.f32.mrb[0].mxu0
    %v9536 = vadd.f32 %v9455, %v9535
    %v9537 = vpop.f32.mrb[0].mxu0
    %v9538 = vpop.f32.mrb[0].mxu0
    %v9539 = vadd.f32 %v9458, %v9538
    %v9540 = vpop.f32.mrb[0].mxu0
    %9541 = vmatprep.mubr.bf16.mxu0 %v7523
    %9542 = vmatmul.mubr.bf16.gmra.mrb[0].mxu0 %v7522
    %v9543 = vpop.f32.mrb[0].mxu0
    %v9544 = vadd.f32 %v9463, %v9543
    %v9545 = vpop.f32.mrb[0].mxu0
    %v9546 = vpop.f32.mrb[0].mxu0
    %v9547 = vadd.f32 %v9466, %v9546
    %v9548 = vpop.f32.mrb[0].mxu0
    %9549 = vmatprep.mubr.bf16.mxu0 %v7531
    %9550 = vmatmul.mubr.bf16.gmra.mrb[0].mxu0 %v7530
    %v9551 = vpop.f32.mrb[0].mxu0
    %v9552 = vadd.f32 %v9471, %v9551
    %v9553 = vpop.f32.mrb[0].mxu0
    %v9554 = vpop.f32.mrb[0].mxu0
    %v9555 = vadd.f32 %v9474, %v9554
    %v9556 = vpop.f32.mrb[0].mxu0
    %9557 = vdwg.mxu0
    %9558 = vmatprep.subr.bf16.mxu0 0
    %9559 = vmatpush1.bf16.msra.mxu0 %v5149
    %9560 = vmatprep.subr.bf16.mxu0 0
    %9561 = vmatpush1.bf16.msra.mxu0 %v5154
    %9562 = vmatprep.subr.bf16.mxu0 0
    %9563 = vmatpush1.bf16.msra.mxu0 %v5159
    %9564 = vmatprep.subr.bf16.mxu0 0
    %9565 = vmatpush1.bf16.msra.mxu0 %v5164
    %9566 = vmatprep.subr.bf16.mxu0 0
    %9567 = vmatpush1.bf16.msra.mxu0 %v5169
    %9568 = vmatprep.subr.bf16.mxu0 0
    %9569 = vmatpush1.bf16.msra.mxu0 %v5174
    %9570 = vmatprep.subr.bf16.mxu0 0
    %9571 = vmatpush1.bf16.msra.mxu0 %v5179
    %9572 = vmatprep.subr.bf16.mxu0 0
    %9573 = vmatpush1.bf16.msra.mxu0 %v5184
    %9574 = vmatprep.subr.bf16.mxu0 0
    %9575 = vmatpush1.bf16.msra.mxu0 %v5189
    %9576 = vmatprep.subr.bf16.mxu0 0
    %9577 = vmatpush1.bf16.msra.mxu0 %v5194
    %9578 = vmatprep.subr.bf16.mxu0 0
    %9579 = vmatpush1.bf16.msra.mxu0 %v5199
    %9580 = vmatprep.subr.bf16.mxu0 0
    %9581 = vmatpush1.bf16.msra.mxu0 %v5204
    %9582 = vmatprep.subr.bf16.mxu0 0
    %9583 = vmatpush1.bf16.msra.mxu0 %v5209
    %9584 = vmatprep.subr.bf16.mxu0 0
    %9585 = vmatpush1.bf16.msra.mxu0 %v5214
    %9586 = vmatprep.subr.bf16.mxu0 0
    %9587 = vmatpush1.bf16.msra.mxu0 %v5219
    %9588 = vmatprep.subr.bf16.mxu0 0
    %9589 = vmatpush1.bf16.msra.mxu0 %v5224
    %9590 = vmatprep.mubr.bf16.mxu0 %v7493
    %9591 = vmatmul.mubr.bf16.gmra.mrb[0].mxu0 %v7492
    %v9592 = vpop.f32.mrb[0].mxu0
    %v9593 = vadd.f32 %v9512, %v9592
    %v9594 = vpop.f32.mrb[0].mxu0
    %v9595 = vpop.f32.mrb[0].mxu0
    %v9596 = vadd.f32 %v9515, %v9595
    %v9597 = vpop.f32.mrb[0].mxu0
    %9598 = vmatprep.mubr.bf16.mxu0 %v7501
    %9599 = vmatmul.mubr.bf16.gmra.mrb[0].mxu0 %v7500
    %v9600 = vpop.f32.mrb[0].mxu0
    %v9601 = vadd.f32 %v9520, %v9600
    %v9602 = vpop.f32.mrb[0].mxu0
    %v9603 = vpop.f32.mrb[0].mxu0
    %v9604 = vadd.f32 %v9523, %v9603
    %v9605 = vpop.f32.mrb[0].mxu0
    %9606 = vmatprep.mubr.bf16.mxu0 %v7509
    %9607 = vmatmul.mubr.bf16.gmra.mrb[0].mxu0 %v7508
    %v9608 = vpop.f32.mrb[0].mxu0
    %v9609 = vadd.f32 %v9528, %v9608
    %v9610 = vpop.f32.mrb[0].mxu0
    %v9611 = vpop.f32.mrb[0].mxu0
    %v9612 = vadd.f32 %v9531, %v9611
    %v9613 = vpop.f32.mrb[0].mxu0
    %9614 = vmatprep.mubr.bf16.mxu0 %v7517
    %9615 = vmatmul.mubr.bf16.gmra.mrb[0].mxu0 %v7516
    %v9616 = vpop.f32.mrb[0].mxu0
    %v9617 = vadd.f32 %v9536, %v9616
    %v9618 = vpop.f32.mrb[0].mxu0
    %v9619 = vpop.f32.mrb[0].mxu0
    %v9620 = vadd.f32 %v9539, %v9619
    %v9621 = vpop.f32.mrb[0].mxu0
    %9622 = vmatprep.mubr.bf16.mxu0 %v7525
    %9623 = vmatmul.mubr.bf16.gmra.mrb[0].mxu0 %v7524
    %v9624 = vpop.f32.mrb[0].mxu0
    %v9625 = vadd.f32 %v9544, %v9624
    %v9626 = vpop.f32.mrb[0].mxu0
    %v9627 = vpop.f32.mrb[0].mxu0
    %v9628 = vadd.f32 %v9547, %v9627
    %v9629 = vpop.f32.mrb[0].mxu0
    %9630 = vmatprep.mubr.bf16.mxu0 %v7533
    %9631 = vmatmul.mubr.bf16.gmra.mrb[0].mxu0 %v7532
    %v9632 = vpop.f32.mrb[0].mxu0
    %v9633 = vadd.f32 %v9552, %v9632
    %v9634 = vpop.f32.mrb[0].mxu0
    %v9635 = vpop.f32.mrb[0].mxu0
    %v9636 = vadd.f32 %v9555, %v9635
    %v9637 = vpop.f32.mrb[0].mxu0
    %9638 = vdwg.mxu0
    %9639 = vmatprep.subr.bf16.mxu0 0
    %9640 = vmatpush1.bf16.msra.mxu0 %v5229
    %9641 = vmatprep.subr.bf16.mxu0 0
    %9642 = vmatpush1.bf16.msra.mxu0 %v5234
    %9643 = vmatprep.subr.bf16.mxu0 0
    %9644 = vmatpush1.bf16.msra.mxu0 %v5239
    %9645 = vmatprep.subr.bf16.mxu0 0
    %9646 = vmatpush1.bf16.msra.mxu0 %v5244
    %9647 = vmatprep.subr.bf16.mxu0 0
    %9648 = vmatpush1.bf16.msra.mxu0 %v5249
    %9649 = vmatprep.subr.bf16.mxu0 0
    %9650 = vmatpush1.bf16.msra.mxu0 %v5254
    %9651 = vmatprep.subr.bf16.mxu0 0
    %9652 = vmatpush1.bf16.msra.mxu0 %v5259
    %9653 = vmatprep.subr.bf16.mxu0 0
    %9654 = vmatpush1.bf16.msra.mxu0 %v5264
    %9655 = vmatprep.subr.bf16.mxu0 0
    %9656 = vmatpush1.bf16.msra.mxu0 %v5269
    %9657 = vmatprep.subr.bf16.mxu0 0
    %9658 = vmatpush1.bf16.msra.mxu0 %v5274
    %9659 = vmatprep.subr.bf16.mxu0 0
    %9660 = vmatpush1.bf16.msra.mxu0 %v5279
    %9661 = vmatprep.subr.bf16.mxu0 0
    %9662 = vmatpush1.bf16.msra.mxu0 %v5284
    %9663 = vmatprep.subr.bf16.mxu0 0
    %9664 = vmatpush1.bf16.msra.mxu0 %v5289
    %9665 = vmatprep.subr.bf16.mxu0 0
    %9666 = vmatpush1.bf16.msra.mxu0 %v5294
    %9667 = vmatprep.subr.bf16.mxu0 0
    %9668 = vmatpush1.bf16.msra.mxu0 %v5299
    %9669 = vmatprep.subr.bf16.mxu0 0
    %9670 = vmatpush1.bf16.msra.mxu0 %v5304
    %9671 = vmatprep.mubr.bf16.mxu0 %v7495
    %9672 = vmatmul.mubr.bf16.gmra.mrb[0].mxu0 %v7494
    %v9673 = vpop.f32.mrb[0].mxu0
    %v9674 = vadd.f32 %v9593, %v9673
    %v9675 = vpop.f32.mrb[0].mxu0
    %v9676 = vpop.f32.mrb[0].mxu0
    %v9677 = vadd.f32 %v9596, %v9676
    %v9678 = vpop.f32.mrb[0].mxu0
    %9679 = vmatprep.mubr.bf16.mxu0 %v7503
    %9680 = vmatmul.mubr.bf16.gmra.mrb[0].mxu0 %v7502
    %v9681 = vpop.f32.mrb[0].mxu0
    %v9682 = vadd.f32 %v9601, %v9681
    %v9683 = vpop.f32.mrb[0].mxu0
    %v9684 = vpop.f32.mrb[0].mxu0
    %v9685 = vadd.f32 %v9604, %v9684
    %v9686 = vpop.f32.mrb[0].mxu0
    %9687 = vmatprep.mubr.bf16.mxu0 %v7511
    %9688 = vmatmul.mubr.bf16.gmra.mrb[0].mxu0 %v7510
    %v9689 = vpop.f32.mrb[0].mxu0
    %v9690 = vadd.f32 %v9609, %v9689
    %v9691 = vpop.f32.mrb[0].mxu0
    %v9692 = vpop.f32.mrb[0].mxu0
    %v9693 = vadd.f32 %v9612, %v9692
    %v9694 = vpop.f32.mrb[0].mxu0
    %9695 = vmatprep.mubr.bf16.mxu0 %v7519
    %9696 = vmatmul.mubr.bf16.gmra.mrb[0].mxu0 %v7518
    %v9697 = vpop.f32.mrb[0].mxu0
    %v9698 = vadd.f32 %v9617, %v9697
    %v9699 = vpop.f32.mrb[0].mxu0
    %v9700 = vpop.f32.mrb[0].mxu0
    %v9701 = vadd.f32 %v9620, %v9700
    %v9702 = vpop.f32.mrb[0].mxu0
    %9703 = vmatprep.mubr.bf16.mxu0 %v7527
    %9704 = vmatmul.mubr.bf16.gmra.mrb[0].mxu0 %v7526
    %v9705 = vpop.f32.mrb[0].mxu0
    %v9706 = vadd.f32 %v9625, %v9705
    %v9707 = vpop.f32.mrb[0].mxu0
    %v9708 = vpop.f32.mrb[0].mxu0
    %v9709 = vadd.f32 %v9628, %v9708
    %v9710 = vpop.f32.mrb[0].mxu0
    %9711 = vmatprep.mubr.bf16.mxu0 %v7535
    %9712 = vmatmul.mubr.bf16.gmra.mrb[0].mxu0 %v7534
    %v9713 = vpop.f32.mrb[0].mxu0
    %v9714 = vadd.f32 %v9633, %v9713
    %v9715 = vpop.f32.mrb[0].mxu0
    %v9716 = vpop.f32.mrb[0].mxu0
    %v9717 = vadd.f32 %v9636, %v9716
    %v9718 = vpop.f32.mrb[0].mxu0
    %9719 = vdwg.mxu0
    %v9720 = vmul.f32 %v7898, %v7898
    %v9721 = vmul.f32 %v7900, %v7900
    %v9722 = vmul.f32 %v8270, %v8270
    %v9723 = vmul.f32 %v8272, %v8272
    %v9724 = vmul.f32 %v8606, %v8606
    %v9725 = vmul.f32 %v7902, %v7902
    %v9726 = vmul.f32 %v7904, %v7904
    %v9727 = vmul.f32 %v8274, %v8274
    %v9728 = vmul.f32 %v8276, %v8276
    %v9729 = vmul.f32 %v8609, %v8609
    %v9730 = vmul.f32 %v7908, %v7908
    %v9731 = vmul.f32 %v7910, %v7910
    %v9732 = vmul.f32 %v8280, %v8280
    %v9733 = vmul.f32 %v8282, %v8282
    %v9734 = vmul.f32 %v8614, %v8614
    %v9735 = vmul.f32 %v7912, %v7912
    %v9736 = vmul.f32 %v7914, %v7914
    %v9737 = vmul.f32 %v8284, %v8284
    %v9738 = vmul.f32 %v8286, %v8286
    %v9739 = vmul.f32 %v8617, %v8617
    %v9740 = vmul.f32 %v7918, %v7918
    %v9741 = vmul.f32 %v7920, %v7920
    %v9742 = vmul.f32 %v8290, %v8290
    %v9743 = vmul.f32 %v8292, %v8292
    %v9744 = vmul.f32 %v8622, %v8622
    %v9745 = vmul.f32 %v7922, %v7922
    %v9746 = vmul.f32 %v7924, %v7924
    %v9747 = vmul.f32 %v8294, %v8294
    %v9748 = vmul.f32 %v8296, %v8296
    %v9749 = vmul.f32 %v8625, %v8625
    %v9750 = vmul.f32 %v7928, %v7928
    %v9751 = vmul.f32 %v7930, %v7930
    %v9752 = vmul.f32 %v8300, %v8300
    %v9753 = vmul.f32 %v8302, %v8302
    %v9754 = vmul.f32 %v8630, %v8630
    %v9755 = vmul.f32 %v7932, %v7932
    %v9756 = vmul.f32 %v7934, %v7934
    %v9757 = vmul.f32 %v8304, %v8304
    %v9758 = vmul.f32 %v8306, %v8306
    %v9759 = vmul.f32 %v8633, %v8633
    %v9760 = vmul.f32 %v7938, %v7938
    %v9761 = vmul.f32 %v7940, %v7940
    %v9762 = vmul.f32 %v8310, %v8310
    %v9763 = vmul.f32 %v8312, %v8312
    %v9764 = vmul.f32 %v8638, %v8638
    %v9765 = vmul.f32 %v7942, %v7942
    %v9766 = vmul.f32 %v7944, %v7944
    %v9767 = vmul.f32 %v8314, %v8314
    %v9768 = vmul.f32 %v8316, %v8316
    %v9769 = vmul.f32 %v8641, %v8641
    %v9770 = vmul.f32 %v7948, %v7948
    %v9771 = vmul.f32 %v7950, %v7950
    %v9772 = vmul.f32 %v8320, %v8320
    %v9773 = vmul.f32 %v8322, %v8322
    %v9774 = vmul.f32 %v8646, %v8646
    %v9775 = vmul.f32 %v7952, %v7952
    %v9776 = vmul.f32 %v7954, %v7954
    %v9777 = vmul.f32 %v8324, %v8324
    %v9778 = vmul.f32 %v8326, %v8326
    %v9779 = vmul.f32 %v8649, %v8649
    %v9780 = vmul.f32 %v8966, %v8966
    %v9781 = vmul.f32 %v8968, %v8968
    %v9782 = vmul.f32 %v9338, %v9338
    %v9783 = vmul.f32 %v9340, %v9340
    %v9784 = vmul.f32 %v9674, %v9674
    %v9785 = vmul.f32 %v8970, %v8970
    %v9786 = vmul.f32 %v8972, %v8972
    %v9787 = vmul.f32 %v9342, %v9342
    %v9788 = vmul.f32 %v9344, %v9344
    %v9789 = vmul.f32 %v9677, %v9677
    %v9790 = vmul.f32 %v8976, %v8976
    %v9791 = vmul.f32 %v8978, %v8978
    %v9792 = vmul.f32 %v9348, %v9348
    %v9793 = vmul.f32 %v9350, %v9350
    %v9794 = vmul.f32 %v9682, %v9682
    %v9795 = vmul.f32 %v8980, %v8980
    %v9796 = vmul.f32 %v8982, %v8982
    %v9797 = vmul.f32 %v9352, %v9352
    %v9798 = vmul.f32 %v9354, %v9354
    %v9799 = vmul.f32 %v9685, %v9685
    %v9800 = vmul.f32 %v8986, %v8986
    %v9801 = vmul.f32 %v8988, %v8988
    %v9802 = vmul.f32 %v9358, %v9358
    %v9803 = vmul.f32 %v9360, %v9360
    %v9804 = vmul.f32 %v9690, %v9690
    %v9805 = vmul.f32 %v8990, %v8990
    %v9806 = vmul.f32 %v8992, %v8992
    %v9807 = vmul.f32 %v9362, %v9362
    %v9808 = vmul.f32 %v9364, %v9364
    %v9809 = vmul.f32 %v9693, %v9693
    %v9810 = vmul.f32 %v8996, %v8996
    %v9811 = vmul.f32 %v8998, %v8998
    %v9812 = vmul.f32 %v9368, %v9368
    %v9813 = vmul.f32 %v9370, %v9370
    %v9814 = vmul.f32 %v9698, %v9698
    %v9815 = vmul.f32 %v9000, %v9000
    %v9816 = vmul.f32 %v9002, %v9002
    %v9817 = vmul.f32 %v9372, %v9372
    %v9818 = vmul.f32 %v9374, %v9374
    %v9819 = vmul.f32 %v9701, %v9701
    %v9820 = vmul.f32 %v9006, %v9006
    %v9821 = vmul.f32 %v9008, %v9008
    %v9822 = vmul.f32 %v9378, %v9378
    %v9823 = vmul.f32 %v9380, %v9380
    %v9824 = vmul.f32 %v9706, %v9706
    %v9825 = vmul.f32 %v9010, %v9010
    %v9826 = vmul.f32 %v9012, %v9012
    %v9827 = vmul.f32 %v9382, %v9382
    %v9828 = vmul.f32 %v9384, %v9384
    %v9829 = vmul.f32 %v9709, %v9709
    %v9830 = vmul.f32 %v9016, %v9016
    %v9831 = vmul.f32 %v9018, %v9018
    %v9832 = vmul.f32 %v9388, %v9388
    %v9833 = vmul.f32 %v9390, %v9390
    %v9834 = vmul.f32 %v9714, %v9714
    %v9835 = vmul.f32 %v9020, %v9020
    %v9836 = vmul.f32 %v9022, %v9022
    %v9837 = vmul.f32 %v9392, %v9392
    %v9838 = vmul.f32 %v9394, %v9394
    %v9839 = vmul.f32 %v9717, %v9717
    %v9840 = vadd.f32 %v9720, %v9780
    %v9841 = vadd.f32 %v9721, %v9781
    %v9842 = vadd.f32 %v9722, %v9782
    %v9843 = vadd.f32 %v9723, %v9783
    %v9844 = vadd.f32 %v9724, %v9784
    %v9845 = vadd.f32 %v9725, %v9785
    %v9846 = vadd.f32 %v9726, %v9786
    %v9847 = vadd.f32 %v9727, %v9787
    %v9848 = vadd.f32 %v9728, %v9788
    %v9849 = vadd.f32 %v9729, %v9789
    %v9850 = vadd.f32 %v9730, %v9790
    %v9851 = vadd.f32 %v9731, %v9791
    %v9852 = vadd.f32 %v9732, %v9792
    %v9853 = vadd.f32 %v9733, %v9793
    %v9854 = vadd.f32 %v9734, %v9794
    %v9855 = vadd.f32 %v9735, %v9795
    %v9856 = vadd.f32 %v9736, %v9796
    %v9857 = vadd.f32 %v9737, %v9797
    %v9858 = vadd.f32 %v9738, %v9798
    %v9859 = vadd.f32 %v9739, %v9799
    %v9860 = vadd.f32 %v9740, %v9800
    %v9861 = vadd.f32 %v9741, %v9801
    %v9862 = vadd.f32 %v9742, %v9802
    %v9863 = vadd.f32 %v9743, %v9803
    %v9864 = vadd.f32 %v9744, %v9804
    %v9865 = vadd.f32 %v9745, %v9805
    %v9866 = vadd.f32 %v9746, %v9806
    %v9867 = vadd.f32 %v9747, %v9807
    %v9868 = vadd.f32 %v9748, %v9808
    %v9869 = vadd.f32 %v9749, %v9809
    %v9870 = vadd.f32 %v9750, %v9810
    %v9871 = vadd.f32 %v9751, %v9811
    %v9872 = vadd.f32 %v9752, %v9812
    %v9873 = vadd.f32 %v9753, %v9813
    %v9874 = vadd.f32 %v9754, %v9814
    %v9875 = vadd.f32 %v9755, %v9815
    %v9876 = vadd.f32 %v9756, %v9816
    %v9877 = vadd.f32 %v9757, %v9817
    %v9878 = vadd.f32 %v9758, %v9818
    %v9879 = vadd.f32 %v9759, %v9819
    %v9880 = vadd.f32 %v9760, %v9820
    %v9881 = vadd.f32 %v9761, %v9821
    %v9882 = vadd.f32 %v9762, %v9822
    %v9883 = vadd.f32 %v9763, %v9823
    %v9884 = vadd.f32 %v9764, %v9824
    %v9885 = vadd.f32 %v9765, %v9825
    %v9886 = vadd.f32 %v9766, %v9826
    %v9887 = vadd.f32 %v9767, %v9827
    %v9888 = vadd.f32 %v9768, %v9828
    %v9889 = vadd.f32 %v9769, %v9829
    %v9890 = vadd.f32 %v9770, %v9830
    %v9891 = vadd.f32 %v9771, %v9831
    %v9892 = vadd.f32 %v9772, %v9832
    %v9893 = vadd.f32 %v9773, %v9833
    %v9894 = vadd.f32 %v9774, %v9834
    %v9895 = vadd.f32 %v9775, %v9835
    %v9896 = vadd.f32 %v9776, %v9836
    %v9897 = vadd.f32 %v9777, %v9837
    %v9898 = vadd.f32 %v9778, %v9838
    %v9899 = vadd.f32 %v9779, %v9839
    %9900 = vmatprep.subr.mxu0 0.0
    %9901 = vmatpush1.msra.mxu0 %v861
    %9902 = vmatprep.subr.mxu0 0.0
    %9903 = vmatpush1.msra.mxu0 %v862
    %9904 = vmatprep.subr.mxu0 0.0
    %9905 = vmatpush1.msra.mxu0 %v863
    %9906 = vmatprep.subr.mxu0 0.0
    %9907 = vmatpush1.msra.mxu0 %v864
    %9908 = vmatprep.subr.mxu0 0.0
    %9909 = vmatpush1.msra.mxu0 %v865
    %9910 = vmatprep.subr.mxu0 0.0
    %9911 = vmatpush1.msra.mxu0 %v866
    %9912 = vmatprep.subr.mxu0 0.0
    %9913 = vmatpush1.msra.mxu0 %v867
    %9914 = vmatprep.subr.mxu0 0.0
    %9915 = vmatpush1.msra.mxu0 %v868
    %9916 = vmatprep.subr.mxu0 0.0
    %9917 = vmatpush1.msra.mxu0 %v869
    %9918 = vmatprep.subr.mxu0 0.0
    %9919 = vmatpush1.msra.mxu0 %v870
    %9920 = vmatprep.subr.mxu0 0.0
    %9921 = vmatpush1.msra.mxu0 %v871
    %9922 = vmatprep.subr.mxu0 0.0
    %9923 = vmatpush1.msra.mxu0 %v872
    %9924 = vmatprep.subr.mxu0 0.0
    %9925 = vmatpush1.msra.mxu0 %v873
    %9926 = vmatprep.subr.mxu0 0.0
    %9927 = vmatpush1.msra.mxu0 %v874
    %9928 = vmatprep.subr.mxu0 0.0
    %9929 = vmatpush1.msra.mxu0 %v875
    %9930 = vmatprep.subr.mxu0 0.0
    %9931 = vmatpush1.msra.mxu0 %v876
    %9932 = vmatprep.subr.mxu0 0.0
    %9933 = vmatpush1.msra.mxu0 %v877
    %9934 = vmatprep.subr.mxu0 0.0
    %9935 = vmatpush1.msra.mxu0 %v878
    %9936 = vmatprep.subr.mxu0 0.0
    %9937 = vmatpush1.msra.mxu0 %v879
    %9938 = vmatprep.subr.mxu0 0.0
    %9939 = vmatpush1.msra.mxu0 %v880
    %9940 = vmatprep.subr.mxu0 0.0
    %9941 = vmatpush1.msra.mxu0 %v881
    %9942 = vmatprep.subr.mxu0 0.0
    %9943 = vmatpush1.msra.mxu0 %v882
    %9944 = vmatprep.subr.mxu0 0.0
    %9945 = vmatpush1.msra.mxu0 %v883
    %9946 = vmatprep.subr.mxu0 0.0
    %9947 = vmatpush1.msra.mxu0 %v884
    %9948 = vmatprep.subr.mxu0 0.0
    %9949 = vmatpush1.msra.mxu0 %v885
    %9950 = vmatprep.subr.mxu0 0.0
    %9951 = vmatpush1.msra.mxu0 %v886
    %9952 = vmatprep.subr.mxu0 0.0
    %9953 = vmatpush1.msra.mxu0 %v887
    %9954 = vmatprep.subr.mxu0 0.0
    %9955 = vmatpush1.msra.mxu0 %v888
    %9956 = vmatprep.subr.mxu0 0.0
    %9957 = vmatpush1.msra.mxu0 %v889
    %9958 = vmatprep.subr.mxu0 0.0
    %9959 = vmatpush1.msra.mxu0 %v890
    %9960 = vmatprep.subr.mxu0 0.0
    %9961 = vmatpush1.msra.mxu0 %v891
    %9962 = vmatprep.subr.mxu0 0.0
    %9963 = vmatpush1.msra.mxu0 %v892
    %9964 = vmatprep.mubr.f32.mxu0 %v9841
    %9965 = vmatmul.mubr.f32.gmra.mrb[0].mxu0 %v9840
    %v9966 = vpop.f32.mrb[0].mxu0
    %v9967 = vadd.f32 1e-05, %v9966
    %v9968 = vpop.f32.mrb[0].mxu0
    %9969 = vmatprep.mubr.f32.mxu0 %v9846
    %9970 = vmatmul.mubr.f32.gmra.mrb[0].mxu0 %v9845
    %v9971 = vpop.f32.mrb[0].mxu0
    %v9972 = vadd.f32 1e-05, %v9971
    %v9973 = vpop.f32.mrb[0].mxu0
    %9974 = vmatprep.mubr.f32.mxu0 %v9851
    %9975 = vmatmul.mubr.f32.gmra.mrb[0].mxu0 %v9850
    %v9976 = vpop.f32.mrb[0].mxu0
    %v9977 = vadd.f32 1e-05, %v9976
    %v9978 = vpop.f32.mrb[0].mxu0
    %9979 = vmatprep.mubr.f32.mxu0 %v9856
    %9980 = vmatmul.mubr.f32.gmra.mrb[0].mxu0 %v9855
    %v9981 = vpop.f32.mrb[0].mxu0
    %v9982 = vadd.f32 1e-05, %v9981
    %v9983 = vpop.f32.mrb[0].mxu0
    %9984 = vmatprep.mubr.f32.mxu0 %v9861
    %9985 = vmatmul.mubr.f32.gmra.mrb[0].mxu0 %v9860
    %v9986 = vpop.f32.mrb[0].mxu0
    %v9987 = vadd.f32 1e-05, %v9986
    %v9988 = vpop.f32.mrb[0].mxu0
    %9989 = vmatprep.mubr.f32.mxu0 %v9866
    %9990 = vmatmul.mubr.f32.gmra.mrb[0].mxu0 %v9865
    %v9991 = vpop.f32.mrb[0].mxu0
    %v9992 = vadd.f32 1e-05, %v9991
    %v9993 = vpop.f32.mrb[0].mxu0
    %9994 = vmatprep.mubr.f32.mxu0 %v9871
    %9995 = vmatmul.mubr.f32.gmra.mrb[0].mxu0 %v9870
    %v9996 = vpop.f32.mrb[0].mxu0
    %v9997 = vadd.f32 1e-05, %v9996
    %v9998 = vpop.f32.mrb[0].mxu0
    %9999 = vmatprep.mubr.f32.mxu0 %v9876
    %10000 = vmatmul.mubr.f32.gmra.mrb[0].mxu0 %v9875
    %v10001 = vpop.f32.mrb[0].mxu0
    %v10002 = vadd.f32 1e-05, %v10001
    %v10003 = vpop.f32.mrb[0].mxu0
    %10004 = vmatprep.mubr.f32.mxu0 %v9881
    %10005 = vmatmul.mubr.f32.gmra.mrb[0].mxu0 %v9880
    %v10006 = vpop.f32.mrb[0].mxu0
    %v10007 = vadd.f32 1e-05, %v10006
    %v10008 = vpop.f32.mrb[0].mxu0
    %10009 = vmatprep.mubr.f32.mxu0 %v9886
    %10010 = vmatmul.mubr.f32.gmra.mrb[0].mxu0 %v9885
    %v10011 = vpop.f32.mrb[0].mxu0
    %v10012 = vadd.f32 1e-05, %v10011
    %v10013 = vpop.f32.mrb[0].mxu0
    %10014 = vmatprep.mubr.f32.mxu0 %v9891
    %10015 = vmatmul.mubr.f32.gmra.mrb[0].mxu0 %v9890
    %v10016 = vpop.f32.mrb[0].mxu0
    %v10017 = vadd.f32 1e-05, %v10016
    %v10018 = vpop.f32.mrb[0].mxu0
    %10019 = vmatprep.mubr.f32.mxu0 %v9896
    %10020 = vmatmul.mubr.f32.gmra.mrb[0].mxu0 %v9895
    %v10021 = vpop.f32.mrb[0].mxu0
    %v10022 = vadd.f32 1e-05, %v10021
    %v10023 = vpop.f32.mrb[0].mxu0
    %10024 = vdwg.mxu0
    %10025 = vmatprep.subr.mxu0 0.0
    %10026 = vmatpush1.msra.mxu0 %v893
    %10027 = vmatprep.subr.mxu0 0.0
    %10028 = vmatpush1.msra.mxu0 %v894
    %10029 = vmatprep.subr.mxu0 0.0
    %10030 = vmatpush1.msra.mxu0 %v895
    %10031 = vmatprep.subr.mxu0 0.0
    %10032 = vmatpush1.msra.mxu0 %v896
    %10033 = vmatprep.subr.mxu0 0.0
    %10034 = vmatpush1.msra.mxu0 %v897
    %10035 = vmatprep.subr.mxu0 0.0
    %10036 = vmatpush1.msra.mxu0 %v898
    %10037 = vmatprep.subr.mxu0 0.0
    %10038 = vmatpush1.msra.mxu0 %v899
    %10039 = vmatprep.subr.mxu0 0.0
    %10040 = vmatpush1.msra.mxu0 %v900
    %10041 = vmatprep.subr.mxu0 0.0
    %10042 = vmatpush1.msra.mxu0 %v901
    %10043 = vmatprep.subr.mxu0 0.0
    %10044 = vmatpush1.msra.mxu0 %v902
    %10045 = vmatprep.subr.mxu0 0.0
    %10046 = vmatpush1.msra.mxu0 %v903
    %10047 = vmatprep.subr.mxu0 0.0
    %10048 = vmatpush1.msra.mxu0 %v904
    %10049 = vmatprep.subr.mxu0 0.0
    %10050 = vmatpush1.msra.mxu0 %v905
    %10051 = vmatprep.subr.mxu0 0.0
    %10052 = vmatpush1.msra.mxu0 %v906
    %10053 = vmatprep.subr.mxu0 0.0
    %10054 = vmatpush1.msra.mxu0 %v907
    %10055 = vmatprep.subr.mxu0 0.0
    %10056 = vmatpush1.msra.mxu0 %v908
    %10057 = vmatprep.subr.mxu0 0.0
    %10058 = vmatpush1.msra.mxu0 %v909
    %10059 = vmatprep.subr.mxu0 0.0
    %10060 = vmatpush1.msra.mxu0 %v910
    %10061 = vmatprep.subr.mxu0 0.0
    %10062 = vmatpush1.msra.mxu0 %v911
    %10063 = vmatprep.subr.mxu0 0.0
    %10064 = vmatpush1.msra.mxu0 %v912
    %10065 = vmatprep.subr.mxu0 0.0
    %10066 = vmatpush1.msra.mxu0 %v913
    %10067 = vmatprep.subr.mxu0 0.0
    %10068 = vmatpush1.msra.mxu0 %v914
    %10069 = vmatprep.subr.mxu0 0.0
    %10070 = vmatpush1.msra.mxu0 %v915
    %10071 = vmatprep.subr.mxu0 0.0
    %10072 = vmatpush1.msra.mxu0 %v916
    %10073 = vmatprep.subr.mxu0 0.0
    %10074 = vmatpush1.msra.mxu0 %v917
    %10075 = vmatprep.subr.mxu0 0.0
    %10076 = vmatpush1.msra.mxu0 %v918
    %10077 = vmatprep.subr.mxu0 0.0
    %10078 = vmatpush1.msra.mxu0 %v919
    %10079 = vmatprep.subr.mxu0 0.0
    %10080 = vmatpush1.msra.mxu0 %v920
    %10081 = vmatprep.subr.mxu0 0.0
    %10082 = vmatpush1.msra.mxu0 %v921
    %10083 = vmatprep.subr.mxu0 0.0
    %10084 = vmatpush1.msra.mxu0 %v922
    %10085 = vmatprep.subr.mxu0 0.0
    %10086 = vmatpush1.msra.mxu0 %v923
    %10087 = vmatprep.subr.mxu0 0.0
    %10088 = vmatpush1.msra.mxu0 %v924
    %10089 = vmatprep.mubr.f32.mxu0 %v9843
    %10090 = vmatmul.mubr.f32.gmra.mrb[0].mxu0 %v9842
    %v10091 = vpop.f32.mrb[0].mxu0
    %v10092 = vadd.f32 %v9967, %v10091
    %v10093 = vpop.f32.mrb[0].mxu0
    %10094 = vmatprep.mubr.f32.mxu0 %v9848
    %10095 = vmatmul.mubr.f32.gmra.mrb[0].mxu0 %v9847
    %v10096 = vpop.f32.mrb[0].mxu0
    %v10097 = vadd.f32 %v9972, %v10096
    %v10098 = vpop.f32.mrb[0].mxu0
    %10099 = vmatprep.mubr.f32.mxu0 %v9853
    %10100 = vmatmul.mubr.f32.gmra.mrb[0].mxu0 %v9852
    %v10101 = vpop.f32.mrb[0].mxu0
    %v10102 = vadd.f32 %v9977, %v10101
    %v10103 = vpop.f32.mrb[0].mxu0
    %10104 = vmatprep.mubr.f32.mxu0 %v9858
    %10105 = vmatmul.mubr.f32.gmra.mrb[0].mxu0 %v9857
    %v10106 = vpop.f32.mrb[0].mxu0
    %v10107 = vadd.f32 %v9982, %v10106
    %v10108 = vpop.f32.mrb[0].mxu0
    %10109 = vmatprep.mubr.f32.mxu0 %v9863
    %10110 = vmatmul.mubr.f32.gmra.mrb[0].mxu0 %v9862
    %v10111 = vpop.f32.mrb[0].mxu0
    %v10112 = vadd.f32 %v9987, %v10111
    %v10113 = vpop.f32.mrb[0].mxu0
    %10114 = vmatprep.mubr.f32.mxu0 %v9868
    %10115 = vmatmul.mubr.f32.gmra.mrb[0].mxu0 %v9867
    %v10116 = vpop.f32.mrb[0].mxu0
    %v10117 = vadd.f32 %v9992, %v10116
    %v10118 = vpop.f32.mrb[0].mxu0
    %10119 = vmatprep.mubr.f32.mxu0 %v9873
    %10120 = vmatmul.mubr.f32.gmra.mrb[0].mxu0 %v9872
    %v10121 = vpop.f32.mrb[0].mxu0
    %v10122 = vadd.f32 %v9997, %v10121
    %v10123 = vpop.f32.mrb[0].mxu0
    %10124 = vmatprep.mubr.f32.mxu0 %v9878
    %10125 = vmatmul.mubr.f32.gmra.mrb[0].mxu0 %v9877
    %v10126 = vpop.f32.mrb[0].mxu0
    %v10127 = vadd.f32 %v10002, %v10126
    %v10128 = vpop.f32.mrb[0].mxu0
    %10129 = vmatprep.mubr.f32.mxu0 %v9883
    %10130 = vmatmul.mubr.f32.gmra.mrb[0].mxu0 %v9882
    %v10131 = vpop.f32.mrb[0].mxu0
    %v10132 = vadd.f32 %v10007, %v10131
    %v10133 = vpop.f32.mrb[0].mxu0
    %10134 = vmatprep.mubr.f32.mxu0 %v9888
    %10135 = vmatmul.mubr.f32.gmra.mrb[0].mxu0 %v9887
    %v10136 = vpop.f32.mrb[0].mxu0
    %v10137 = vadd.f32 %v10012, %v10136
    %v10138 = vpop.f32.mrb[0].mxu0
    %10139 = vmatprep.mubr.f32.mxu0 %v9893
    %10140 = vmatmul.mubr.f32.gmra.mrb[0].mxu0 %v9892
    %v10141 = vpop.f32.mrb[0].mxu0
    %v10142 = vadd.f32 %v10017, %v10141
    %v10143 = vpop.f32.mrb[0].mxu0
    %10144 = vmatprep.mubr.f32.mxu0 %v9898
    %10145 = vmatmul.mubr.f32.gmra.mrb[0].mxu0 %v9897
    %v10146 = vpop.f32.mrb[0].mxu0
    %v10147 = vadd.f32 %v10022, %v10146
    %v10148 = vpop.f32.mrb[0].mxu0
    %10149 = vdwg.mxu0
    %10150 = vmatprep.subr.mxu0 0.0
    %10151 = vmatpush1.msra.mxu0 %v925
    %10152 = vmatprep.subr.mxu0 0.0
    %10153 = vmatpush1.msra.mxu0 %v926
    %10154 = vmatprep.subr.mxu0 0.0
    %10155 = vmatpush1.msra.mxu0 %v927
    %10156 = vmatprep.subr.mxu0 0.0
    %10157 = vmatpush1.msra.mxu0 %v928
    %10158 = vmatprep.subr.mxu0 0.0
    %10159 = vmatpush1.msra.mxu0 %v929
    %10160 = vmatprep.subr.mxu0 0.0
    %10161 = vmatpush1.msra.mxu0 %v930
    %10162 = vmatprep.subr.mxu0 0.0
    %10163 = vmatpush1.msra.mxu0 %v931
    %10164 = vmatprep.subr.mxu0 0.0
    %10165 = vmatpush1.msra.mxu0 %v932
    %10166 = vmatprep.subr.mxu0 0.0
    %10167 = vmatpush1.msra.mxu0 %v933
    %10168 = vmatprep.subr.mxu0 0.0
    %10169 = vmatpush1.msra.mxu0 %v934
    %10170 = vmatprep.subr.mxu0 0.0
    %10171 = vmatpush1.msra.mxu0 %v935
    %10172 = vmatprep.subr.mxu0 0.0
    %10173 = vmatpush1.msra.mxu0 %v936
    %10174 = vmatprep.subr.mxu0 0.0
    %10175 = vmatpush1.msra.mxu0 %v937
    %10176 = vmatprep.subr.mxu0 0.0
    %10177 = vmatpush1.msra.mxu0 %v938
    %10178 = vmatprep.subr.mxu0 0.0
    %10179 = vmatpush1.msra.mxu0 %v939
    %10180 = vmatprep.subr.mxu0 0.0
    %10181 = vmatpush1.msra.mxu0 %v940
    %10182 = vmatprep.subr.mxu0 0.0
    %10183 = vmatpush1.msra.mxu0 0.0
    %10184 = vmatprep.subr.mxu0 0.0
    %10185 = vmatpush1.msra.mxu0 0.0
    %10186 = vmatprep.subr.mxu0 0.0
    %10187 = vmatpush1.msra.mxu0 0.0
    %10188 = vmatprep.subr.mxu0 0.0
    %10189 = vmatpush1.msra.mxu0 0.0
    %10190 = vmatprep.subr.mxu0 0.0
    %10191 = vmatpush1.msra.mxu0 0.0
    %10192 = vmatprep.subr.mxu0 0.0
    %10193 = vmatpush1.msra.mxu0 0.0
    %10194 = vmatprep.subr.mxu0 0.0
    %10195 = vmatpush1.msra.mxu0 0.0
    %10196 = vmatprep.subr.mxu0 0.0
    %10197 = vmatpush1.msra.mxu0 0.0
    %10198 = vmatprep.subr.mxu0 0.0
    %10199 = vmatpush1.msra.mxu0 0.0
    %10200 = vmatprep.subr.mxu0 0.0
    %10201 = vmatpush1.msra.mxu0 0.0
    %10202 = vmatprep.subr.mxu0 0.0
    %10203 = vmatpush1.msra.mxu0 0.0
    %10204 = vmatprep.subr.mxu0 0.0
    %10205 = vmatpush1.msra.mxu0 0.0
    %10206 = vmatprep.subr.mxu0 0.0
    %10207 = vmatpush1.msra.mxu0 0.0
    %10208 = vmatprep.subr.mxu0 0.0
    %10209 = vmatpush1.msra.mxu0 0.0
    %10210 = vmatprep.subr.mxu0 0.0
    %10211 = vmatpush1.msra.mxu0 0.0
    %10212 = vmatprep.subr.mxu0 0.0
    %10213 = vmatpush1.msra.mxu0 0.0
    %10214 = vmatprep.mubr.f32.mxu0 0.0
    %10215 = vmatmul.mubr.f32.gmra.mrb[0].mxu0 %v9844
    %v10216 = vpop.f32.mrb[0].mxu0
    %v10217 = vadd.f32 %v10092, %v10216
    %v10218 = vpop.f32.mrb[0].mxu0
    %10219 = vmatprep.mubr.f32.mxu0 0.0
    %10220 = vmatmul.mubr.f32.gmra.mrb[0].mxu0 %v9849
    %v10221 = vpop.f32.mrb[0].mxu0
    %v10222 = vadd.f32 %v10097, %v10221
    %v10223 = vpop.f32.mrb[0].mxu0
    %10224 = vmatprep.mubr.f32.mxu0 0.0
    %10225 = vmatmul.mubr.f32.gmra.mrb[0].mxu0 %v9854
    %v10226 = vpop.f32.mrb[0].mxu0
    %v10227 = vadd.f32 %v10102, %v10226
    %v10228 = vpop.f32.mrb[0].mxu0
    %10229 = vmatprep.mubr.f32.mxu0 0.0
    %10230 = vmatmul.mubr.f32.gmra.mrb[0].mxu0 %v9859
    %v10231 = vpop.f32.mrb[0].mxu0
    %v10232 = vadd.f32 %v10107, %v10231
    %v10233 = vpop.f32.mrb[0].mxu0
    %10234 = vmatprep.mubr.f32.mxu0 0.0
    %10235 = vmatmul.mubr.f32.gmra.mrb[0].mxu0 %v9864
    %v10236 = vpop.f32.mrb[0].mxu0
    %v10237 = vadd.f32 %v10112, %v10236
    %v10238 = vpop.f32.mrb[0].mxu0
    %10239 = vmatprep.mubr.f32.mxu0 0.0
    %10240 = vmatmul.mubr.f32.gmra.mrb[0].mxu0 %v9869
    %v10241 = vpop.f32.mrb[0].mxu0
    %v10242 = vadd.f32 %v10117, %v10241
    %v10243 = vpop.f32.mrb[0].mxu0
    %10244 = vmatprep.mubr.f32.mxu0 0.0
    %10245 = vmatmul.mubr.f32.gmra.mrb[0].mxu0 %v9874
    %v10246 = vpop.f32.mrb[0].mxu0
    %v10247 = vadd.f32 %v10122, %v10246
    %v10248 = vpop.f32.mrb[0].mxu0
    %10249 = vmatprep.mubr.f32.mxu0 0.0
    %10250 = vmatmul.mubr.f32.gmra.mrb[0].mxu0 %v9879
    %v10251 = vpop.f32.mrb[0].mxu0
    %v10252 = vadd.f32 %v10127, %v10251
    %v10253 = vpop.f32.mrb[0].mxu0
    %10254 = vmatprep.mubr.f32.mxu0 0.0
    %10255 = vmatmul.mubr.f32.gmra.mrb[0].mxu0 %v9884
    %v10256 = vpop.f32.mrb[0].mxu0
    %v10257 = vadd.f32 %v10132, %v10256
    %v10258 = vpop.f32.mrb[0].mxu0
    %10259 = vmatprep.mubr.f32.mxu0 0.0
    %10260 = vmatmul.mubr.f32.gmra.mrb[0].mxu0 %v9889
    %v10261 = vpop.f32.mrb[0].mxu0
    %v10262 = vadd.f32 %v10137, %v10261
    %v10263 = vpop.f32.mrb[0].mxu0
    %10264 = vmatprep.mubr.f32.mxu0 0.0
    %10265 = vmatmul.mubr.f32.gmra.mrb[0].mxu0 %v9894
    %v10266 = vpop.f32.mrb[0].mxu0
    %v10267 = vadd.f32 %v10142, %v10266
    %v10268 = vpop.f32.mrb[0].mxu0
    %10269 = vmatprep.mubr.f32.mxu0 0.0
    %10270 = vmatmul.mubr.f32.gmra.mrb[0].mxu0 %v9899
    %v10271 = vpop.f32.mrb[0].mxu0
    %v10272 = vadd.f32 %v10147, %v10271
    %v10273 = vpop.f32.mrb[0].mxu0
    %10274 = vdwg.mxu0
    %v10275 = vlog2.pop %v10217
    %v10276 = vmul.f32 %v10275, 0.6931472
    %v10277 = vlog2.pop %v10222
    %v10278 = vmul.f32 %v10277, 0.6931472
    %v10279 = vlog2.pop %v10227
    %v10280 = vmul.f32 %v10279, 0.6931472
    %v10281 = vlog2.pop %v10232
    %v10282 = vmul.f32 %v10281, 0.6931472
    %v10283 = vlog2.pop %v10237
    %v10284 = vmul.f32 %v10283, 0.6931472
    %v10285 = vlog2.pop %v10242
    %v10286 = vmul.f32 %v10285, 0.6931472
    %v10287 = vlog2.pop %v10247
    %v10288 = vmul.f32 %v10287, 0.6931472
    %v10289 = vlog2.pop %v10252
    %v10290 = vmul.f32 %v10289, 0.6931472
    %v10291 = vlog2.pop %v10257
    %v10292 = vmul.f32 %v10291, 0.6931472
    %v10293 = vlog2.pop %v10262
    %v10294 = vmul.f32 %v10293, 0.6931472
    %v10295 = vlog2.pop %v10267
    %v10296 = vmul.f32 %v10295, 0.6931472
    %v10297 = vlog2.pop %v10272
    %v10298 = vmul.f32 %v10297, 0.6931472
    %v10299 = vsub.f32 %v10276, -4.0
    %v10300 = vsub.f32 %v10278, -4.0
    %v10301 = vsub.f32 %v10280, -4.0
    %v10302 = vsub.f32 %v10282, -4.0
    %v10303 = vsub.f32 %v10284, -4.0
    %v10304 = vsub.f32 %v10286, -4.0
    %v10305 = vsub.f32 %v10288, -4.0
    %v10306 = vsub.f32 %v10290, -4.0
    %v10307 = vsub.f32 %v10292, -4.0
    %v10308 = vsub.f32 %v10294, -4.0
    %v10309 = vsub.f32 %v10296, -4.0
    %v10310 = vsub.f32 %v10298, -4.0
    %v10311 = vmul.f32 %v10299, 0.25
    %v10312 = vmul.f32 %v10300, 0.25
    %v10313 = vmul.f32 %v10301, 0.25
    %v10314 = vmul.f32 %v10302, 0.25
    %v10315 = vmul.f32 %v10303, 0.25
    %v10316 = vmul.f32 %v10304, 0.25
    %v10317 = vmul.f32 %v10305, 0.25
    %v10318 = vmul.f32 %v10306, 0.25
    %v10319 = vmul.f32 %v10307, 0.25
    %v10320 = vmul.f32 %v10308, 0.25
    %v10321 = vmul.f32 %v10309, 0.25
    %v10322 = vmul.f32 %v10310, 0.25
    %s10323 = smul.u32 0, 96
    %v10324 = vlaneseq
    %v10325 = vshrl.u32 %v10324, 7
    %v10326 = vadd.s32 %v10325, 8
    %v10327 = vadd.s32 %v10325, 16
    %v10328 = vadd.s32 %v10325, 24
    %v10329 = vadd.s32 %v10325, 32
    %v10330 = vadd.s32 %v10325, 40
    %v10331 = vadd.s32 %v10325, 48
    %v10332 = vadd.s32 %v10325, 56
    %v10333 = vadd.s32 %v10325, 64
    %v10334 = vadd.s32 %v10325, 72
    %v10335 = vadd.s32 %v10325, 80
    %v10336 = vadd.s32 %v10325, 88
    %v10337 = vstv %s10323
    %v10338 = vadd.s32 %v10337, %v10325
    %v10339 = vadd.s32 %v10337, %v10326
    %v10340 = vadd.s32 %v10337, %v10327
    %v10341 = vadd.s32 %v10337, %v10328
    %v10342 = vadd.s32 %v10337, %v10329
    %v10343 = vadd.s32 %v10337, %v10330
    %v10344 = vadd.s32 %v10337, %v10331
    %v10345 = vadd.s32 %v10337, %v10332
    %v10346 = vadd.s32 %v10337, %v10333
    %v10347 = vadd.s32 %v10337, %v10334
    %v10348 = vadd.s32 %v10337, %v10335
    %v10349 = vadd.s32 %v10337, %v10336
    %vm10350 = vcmp.lt.s32.totalorder %v10338, 82
    %vm10351 = vcmp.lt.s32.totalorder %v10339, 82
    %vm10352 = vcmp.lt.s32.totalorder %v10340, 82
    %vm10353 = vcmp.lt.s32.totalorder %v10341, 82
    %vm10354 = vcmp.lt.s32.totalorder %v10342, 82
    %vm10355 = vcmp.lt.s32.totalorder %v10343, 82
    %vm10356 = vcmp.lt.s32.totalorder %v10344, 82
    %vm10357 = vcmp.lt.s32.totalorder %v10345, 82
    %vm10358 = vcmp.lt.s32.totalorder %v10346, 82
    %vm10359 = vcmp.lt.s32.totalorder %v10347, 82
    %vm10360 = vcmp.lt.s32.totalorder %v10348, 82
    %vm10361 = vcmp.lt.s32.totalorder %v10349, 82
    %v10362 = vsub.f32 %v10311, %v7284
    %v10363 = vsub.f32 %v10312, %v7285
    %v10364 = vsub.f32 %v10313, %v7286
    %v10365 = vsub.f32 %v10314, %v7287
    %v10366 = vsub.f32 %v10315, %v7288
    %v10367 = vsub.f32 %v10316, %v7289
    %v10368 = vsub.f32 %v10317, %v7290
    %v10369 = vsub.f32 %v10318, %v7291
    %v10370 = vsub.f32 %v10319, %v7292
    %v10371 = vsub.f32 %v10320, %v7293
    %v10372 = vsub.f32 %v10321, %v7294
    %v10373 = vsub.f32 %v10322, %v7295
    %v10374 = vand.u32 2147483647, %v10362
    %v10375 = vand.u32 2147483647, %v10363
    %v10376 = vand.u32 2147483647, %v10364
    %v10377 = vand.u32 2147483647, %v10365
    %v10378 = vand.u32 2147483647, %v10366
    %v10379 = vand.u32 2147483647, %v10367
    %v10380 = vand.u32 2147483647, %v10368
    %v10381 = vand.u32 2147483647, %v10369
    %v10382 = vand.u32 2147483647, %v10370
    %v10383 = vand.u32 2147483647, %v10371
    %v10384 = vand.u32 2147483647, %v10372
    %v10385 = vand.u32 2147483647, %v10373
    %v10386 = vsel %vm10350, 1, 0
    %v10387 = vsel %vm10351, 1, 0
    %v10388 = vsel %vm10352, 1, 0
    %v10389 = vsel %vm10353, 1, 0
    %v10390 = vsel %vm10354, 1, 0
    %v10391 = vsel %vm10355, 1, 0
    %v10392 = vsel %vm10356, 1, 0
    %v10393 = vsel %vm10357, 1, 0
    %v10394 = vsel %vm10358, 1, 0
    %v10395 = vsel %vm10359, 1, 0
    %v10396 = vsel %vm10360, 1, 0
    %v10397 = vsel %vm10361, 1, 0
    %vm10398 = vcmp.eq.s32.totalorder %v10386, 1
    %vm10399 = vcmp.eq.s32.totalorder %v10387, 1
    %vm10400 = vcmp.eq.s32.totalorder %v10388, 1
    %vm10401 = vcmp.eq.s32.totalorder %v10389, 1
    %vm10402 = vcmp.eq.s32.totalorder %v10390, 1
    %vm10403 = vcmp.eq.s32.totalorder %v10391, 1
    %vm10404 = vcmp.eq.s32.totalorder %v10392, 1
    %vm10405 = vcmp.eq.s32.totalorder %v10393, 1
    %vm10406 = vcmp.eq.s32.totalorder %v10394, 1
    %vm10407 = vcmp.eq.s32.totalorder %v10395, 1
    %vm10408 = vcmp.eq.s32.totalorder %v10396, 1
    %vm10409 = vcmp.eq.s32.totalorder %v10397, 1
    %v10410 = vsel %vm10398, %v10374, 0.0
    %v10411 = vsel %vm10399, %v10375, 0.0
    %v10412 = vsel %vm10400, %v10376, 0.0
    %v10413 = vsel %vm10401, %v10377, 0.0
    %v10414 = vsel %vm10402, %v10378, 0.0
    %v10415 = vsel %vm10403, %v10379, 0.0
    %v10416 = vsel %vm10404, %v10380, 0.0
    %v10417 = vsel %vm10405, %v10381, 0.0
    %v10418 = vsel %vm10406, %v10382, 0.0
    %v10419 = vsel %vm10407, %v10383, 0.0
    %v10420 = vsel %vm10408, %v10384, 0.0
    %v10421 = vsel %vm10409, %v10385, 0.0
    %v10422 = vadd.f32 %v10410, %v10411
    %v10423 = vadd.f32 %v10422, %v10412
    %v10424 = vadd.f32 %v10423, %v10413
    %v10425 = vadd.f32 %v10424, %v10414
    %v10426 = vadd.f32 %v10425, %v10415
    %v10427 = vadd.f32 %v10426, %v10416
    %v10428 = vadd.f32 %v10427, %v10417
    %v10429 = vadd.f32 %v10428, %v10418
    %v10430 = vadd.f32 %v10429, %v10419
    %v10431 = vadd.f32 %v10430, %v10420
    %v10432 = vadd.f32 %v10431, %v10421
    %v10433 = vrot.slane %v10432, 4
    %v10434 = vadd.f32 %v10432, %v10433
    %v10435 = vrot.slane %v10434, 2
    %v10436 = vadd.f32 %v10434, %v10435
    %v10437 = vrot.slane %v10436, 1
    %v10438 = vadd.f32 %v10436, %v10437
    %v10439 = vand.u32 2147483647, %v10311
    %v10440 = vand.u32 2147483647, %v10312
    %v10441 = vand.u32 2147483647, %v10313
    %v10442 = vand.u32 2147483647, %v10314
    %v10443 = vand.u32 2147483647, %v10315
    %v10444 = vand.u32 2147483647, %v10316
    %v10445 = vand.u32 2147483647, %v10317
    %v10446 = vand.u32 2147483647, %v10318
    %v10447 = vand.u32 2147483647, %v10319
    %v10448 = vand.u32 2147483647, %v10320
    %v10449 = vand.u32 2147483647, %v10321
    %v10450 = vand.u32 2147483647, %v10322
    %v10451 = vsel %vm10398, %v10439, 0.0
    %v10452 = vsel %vm10399, %v10440, 0.0
    %v10453 = vsel %vm10400, %v10441, 0.0
    %v10454 = vsel %vm10401, %v10442, 0.0
    %v10455 = vsel %vm10402, %v10443, 0.0
    %v10456 = vsel %vm10403, %v10444, 0.0
    %v10457 = vsel %vm10404, %v10445, 0.0
    %v10458 = vsel %vm10405, %v10446, 0.0
    %v10459 = vsel %vm10406, %v10447, 0.0
    %v10460 = vsel %vm10407, %v10448, 0.0
    %v10461 = vsel %vm10408, %v10449, 0.0
    %v10462 = vsel %vm10409, %v10450, 0.0
    %v10463 = vadd.f32 %v10451, %v10452
    %v10464 = vadd.f32 %v10463, %v10453
    %v10465 = vadd.f32 %v10464, %v10454
    %v10466 = vadd.f32 %v10465, %v10455
    %v10467 = vadd.f32 %v10466, %v10456
    %v10468 = vadd.f32 %v10467, %v10457
    %v10469 = vadd.f32 %v10468, %v10458
    %v10470 = vadd.f32 %v10469, %v10459
    %v10471 = vadd.f32 %v10470, %v10460
    %v10472 = vadd.f32 %v10471, %v10461
    %v10473 = vadd.f32 %v10472, %v10462
    %v10474 = vrot.slane %v10473, 4
    %v10475 = vadd.f32 %v10473, %v10474
    %v10476 = vrot.slane %v10475, 2
    %v10477 = vadd.f32 %v10475, %v10476
    %v10478 = vrot.slane %v10477, 1
    %v10479 = vadd.f32 %v10477, %v10478
    %10480 = vst [vmem:[#allocation11] sm:$0x1] %v10438
    %10481 = vst [vmem:[#allocation12] sm:$0x1] %v10479
    // Predicated region
    $region42: #{tpu_custom_call.1} parent=1 // pred_check
      _
    $region43: #{tpu_custom_call.1} parent=1 // pred_check_branch
      %10483 = sbr.rel (0) target = $region45
    $region44: #{tpu_custom_call.1} parent=1 // pred_region
      %s10485 = ssub.s32 16, 16
      %10486 = vsyncadd [#allocation4], %s10485
      %s10488 = sshll.u32 [#allocation11], 4
      %s10489 = int_to_ptr.vmem [resolvable:$true] %s10488
      %10491 = dma.vmem_to_hbm [thread:$0]  %s10489, 16, %s5, [#allocation4]
    $region45: #{tpu_custom_call.1} parent=1 // pred_fallthru
      _
    // Predicated region
    $region46: #{tpu_custom_call.1} parent=1 // pred_check
      _
    $region47: #{tpu_custom_call.1} parent=1 // pred_check_branch
      %10493 = sbr.rel (0) target = $region49
    $region48: #{tpu_custom_call.1} parent=1 // pred_region
      %s10495 = ssub.s32 16, 16
      %10496 = vsyncadd [#allocation13], %s10495
      %s10498 = sshll.u32 [#allocation12], 4
      %s10499 = int_to_ptr.vmem [resolvable:$true] %s10498
      %10501 = dma.vmem_to_hbm [thread:$0]  %s10499, 16, %s6, [#allocation13]
    $region49: #{tpu_custom_call.1} parent=1 // pred_fallthru
      _
    // Predicated region
    $region50: #{tpu_custom_call.1} parent=1 // pred_check
      _
    $region51: #{tpu_custom_call.1} parent=1 // pred_check_branch
      %10503 = sbr.rel (0) target = $region53
    $region52: #{tpu_custom_call.1} parent=1 // pred_region
      %10504 = dma.done [#allocation4], 16
    $region53: #{tpu_custom_call.1} parent=1 // pred_fallthru
      _
    // Predicated region
    $region54: #{tpu_custom_call.1} parent=1 // pred_check
      _
    $region55: #{tpu_custom_call.1} parent=1 // pred_check_branch
      %10506 = sbr.rel (0) target = $region57
    $region56: #{tpu_custom_call.1} parent=1 // pred_region
      %10507 = dma.done [#allocation13], 16
    $region57: #{tpu_custom_call.1} parent=1 // pred_fallthru
      _
    %10508 = vsyncpa [#allocation3], 1
    %10509 = vsyncpa [#allocation6], 1
    %10510 = vsyncpa [#allocation9], 1
    %10511 = vsyncpa [#allocation4], 1
    %10512 = vsyncpa [#allocation13], 1

</llo_original>
